<compile_context>
chip_gen: v7x
topology: tpu7x:2x2x1
jax: 0.10.0
libtpu: 0.0.40
codegen_flags: <defaults>
</compile_context>

<pallas_src>
import functools

import jax
import jax.numpy as jnp
from jax.experimental import pallas as pl
from jax.experimental.pallas import tpu as pltpu


# ----------------------------------------------------------------------------
# VMEM-aware sizing helpers
# ----------------------------------------------------------------------------
def _tpu_vmem_capacity():
    try:
        info = pltpu.get_tpu_info()
        cap = getattr(info, "vmem_capacity_bytes", None)
        if cap:
            return int(cap)
    except Exception:
        pass
    return 64 * 1024 * 1024          # conservative default (v7x per-TC)


def _vmem_budgets():
    cap = _tpu_vmem_capacity()
    vmem_limit = min(int(cap * 0.70), 96 * 1024 * 1024)   # ~45 MiB v7x, ~90 MiB v5e/v6e
    temp_budget = min(int(cap * 0.30), 40 * 1024 * 1024)  # live temporaries per tile
    return vmem_limit, temp_budget


def _choose_row_tile(n, f, k, budget_bytes):
    """Largest multiple-of-8 divisor of n whose per-tile temporaries fit budget."""
    if n % 8 != 0:
        return n                      # small / awkward N: take all rows at once

    def est(tn):
        # d, dwork, inner (f32) + col (i32) + stacked one-hot (bf16) + sel/qt/acc
        return tn * n * (16 + 2 * k) + 8 * tn * f * 4

    cands = [t for t in range(8, min(n, 512) + 1, 8) if n % t == 0]
    fitting = [t for t in cands if est(t) <= budget_bytes]
    return max(fitting) if fitting else min(cands)


def _pool_row_tile(n):
    if n <= 1024 or n % 8 != 0:
        return n
    for t in range(1024, 7, -8):
        if n % t == 0:
            return t
    return n


# ----------------------------------------------------------------------------
# Fused EdgeConv kernel:
#   dist -> kNN -> stacked one-hot gather (bf16 MXU) -> +centre -> LeakyReLU -> max_k
# Neighbour-side projection persisted across row tiles in VMEM scratch.
# ----------------------------------------------------------------------------
def _edgeconv_kernel(x_ref, w_ref, t_ref, o_ref, p_scr, q_scr, aa_scr, *, k, tn):
    r = pl.program_id(1)
    n = x_ref.shape[1]
    f = t_ref.shape[1]

    xa = x_ref[0]                                     # (N, C) all points, f32

    @pl.when(r == 0)
    def _():
        # Once per batch: [p | q] = x @ [Wn*s | Wd*s]  (BN scale already folded
        # into the weight columns).  p is only consumed by the bf16 gather.
        pq = jnp.dot(xa.astype(jnp.bfloat16), w_ref[...].astype(jnp.bfloat16),
                     preferred_element_type=jnp.float32)            # (N, 2F)
        p_scr[...] = pq[:, :f].astype(jnp.bfloat16)                 # neighbour term
        q_scr[...] = pq[:, f:]                                      # centre term
        aa_scr[...] = jnp.sum(xa * xa, axis=-1, keepdims=True).T    # (1, N)

    row0 = pl.multiple_of(r * tn, tn)
    xr = x_ref[0, pl.ds(row0, tn), :]                 # (TN, C) query rows

    # kNN scores: per-row ranking of -||xi - xj||^2.  The row-constant
    # -||x_i||^2 term does not change the per-row top-k, so it is dropped.
    # f32 so neighbour selection is exact.
    inner = jax.lax.dot_general(xr, xa, (((1,), (1,)), ((), ())),
                                preferred_element_type=jnp.float32)  # (TN, N)
    d = 2.0 * inner - aa_scr[...]

    # Phase 1: k argmax passes -> stacked one-hot (k*TN, N) in bf16.
    col = jax.lax.broadcasted_iota(jnp.int32, (tn, n), 1)
    neg = jnp.float32(-1e30)
    dwork = d
    onehots = []
    for _ in range(k):                                # k is small and static
        rmax = jnp.max(dwork, axis=-1, keepdims=True)
        arg = jnp.min(jnp.where(dwork == rmax, col, n), axis=-1, keepdims=True)
        m = col == arg                                # single compare, reused
        onehots.append(m.astype(jnp.bfloat16))
        dwork = jnp.where(m, neg, dwork)
    oh = jnp.concatenate(onehots, axis=0)             # (k*TN, N) bf16

    # Phase 2: ONE bf16 gather matmul (exact 0/1 one-hot), f32 accumulation.
    sel = jnp.dot(oh, p_scr[...], preferred_element_type=jnp.float32)  # (k*TN, F)

    qt = q_scr[pl.ds(row0, tn), :] + t_ref[...]       # centre term + BN shift
    acc = None
    for i in range(k):
        h = sel[i * tn:(i + 1) * tn] + qt
        h = jnp.where(h > 0, h, 0.2 * h)              # LeakyReLU(0.2)
        acc = h if acc is None else jnp.maximum(acc, h)
    o_ref[0] = acc


def edge_conv(x_bnc, w, scale, shift, *, k, temp_budget, vmem_limit):
    """x_bnc: (B, N, C) -> (B, N, F).  w: (2C, F) conv weight; BN folded."""
    B, N, C = x_bnc.shape
    F_out = w.shape[1]
    if k > N:
        raise ValueError(f"k={k} must be <= number of points N={N}")
    wn = w[:C] * scale                    # acts on x_j (neighbour)
    wd = (w[C:] - w[:C]) * scale          # combined weight acting on x_i
    w_fused = jnp.concatenate([wn, wd], axis=1).astype(jnp.float32)   # (C, 2F)

    tn = _choose_row_tile(N, F_out, k, temp_budget)
    kernel = functools.partial(_edgeconv_kernel, k=k, tn=tn)
    return pl.pallas_call(
        kernel,
        out_shape=jax.ShapeDtypeStruct((B, N, F_out), jnp.float32),
        grid=(B, N // tn),
        in_specs=[
            pl.BlockSpec((1, N, C), lambda b, r: (b, 0, 0)),        # all points
            pl.BlockSpec((C, 2 * F_out), lambda b, r: (0, 0)),      # fused weight
            pl.BlockSpec((1, F_out), lambda b, r: (0, 0)),          # BN shift
        ],
        out_specs=pl.BlockSpec((1, tn, F_out), lambda b, r: (b, r, 0)),
        scratch_shapes=[
            pltpu.VMEM((N, F_out), jnp.bfloat16),   # p (neighbour projection)
            pltpu.VMEM((N, F_out), jnp.float32),    # q (centre projection)
            pltpu.VMEM((1, N), jnp.float32),        # ||x_j||^2 row
        ],
        compiler_params=pltpu.CompilerParams(
            dimension_semantics=("parallel", "arbitrary"),
            vmem_limit_bytes=vmem_limit),
    )(x_bnc, w_fused, shift)


# ----------------------------------------------------------------------------
# conv5 + BN + LeakyReLU + max/avg pool, fused, row-tiled over N.
# x1..x4 are concatenated in VMEM -> single 192-deep MXU contraction.
# ----------------------------------------------------------------------------
def _conv5_pool_kernel(x1_ref, x2_ref, x3_ref, x4_ref, w_ref, t_ref,
                       o_ref, mx_scr, sm_scr, *, inv_n):
    r = pl.program_id(1)

    @pl.when(r == 0)
    def _():
        mx_scr[...] = jnp.full_like(mx_scr, -jnp.inf)
        sm_scr[...] = jnp.zeros_like(sm_scr)

    xcat = jnp.concatenate(
        [x1_ref[0], x2_ref[0], x3_ref[0], x4_ref[0]], axis=-1)       # (TN, 192)
    h = jnp.dot(xcat.astype(jnp.bfloat16), w_ref[...].astype(jnp.bfloat16),
                preferred_element_type=jnp.float32)                  # (TN, emb)
    h = h + t_ref[...]                                               # scale folded in W
    h = jnp.where(h > 0, h, 0.2 * h)

    mx_scr[...] = jnp.maximum(mx_scr[...], jnp.max(h, axis=0, keepdims=True))
    sm_scr[...] = sm_scr[...] + jnp.sum(h, axis=0, keepdims=True)

    @pl.when(r == pl.num_programs(1) - 1)
    def _():
        o_ref[0] = jnp.concatenate([mx_scr[...], sm_scr[...] * inv_n], axis=-1)


def conv5_pool(x1, x2, x3, x4, w5, scale, shift, *, vmem_limit):
    B, N, c1 = x1.shape
    c2, c3, c4 = x2.shape[-1], x3.shape[-1], x4.shape[-1]
    emb = w5.shape[1]
    w5s = (w5 * scale).astype(jnp.float32)   # fold BN scale into the weight
    tn = _pool_row_tile(N)
    kernel = functools.partial(_conv5_pool_kernel, inv_n=1.0 / N)
    out = pl.pallas_call(
        kernel,
        out_shape=jax.ShapeDtypeStruct((B, 1, 2 * emb), jnp.float32),
        grid=(B, N // tn),
        in_specs=[
            pl.BlockSpec((1, tn, c1), lambda b, r: (b, r, 0)),
            pl.BlockSpec((1, tn, c2), lambda b, r: (b, r, 0)),
            pl.BlockSpec((1, tn, c3), lambda b, r: (b, r, 0)),
            pl.BlockSpec((1, tn, c4), lambda b, r: (b, r, 0)),
            pl.BlockSpec((c1 + c2 + c3 + c4, emb), lambda b, r: (0, 0)),
            pl.BlockSpec((1, emb), lambda b, r: (0, 0)),
        ],
        out_specs=pl.BlockSpec((1, 1, 2 * emb), lambda b, r: (b, 0, 0)),
        scratch_shapes=[pltpu.VMEM((1, emb), jnp.float32),   # running max
                        pltpu.VMEM((1, emb), jnp.float32)],  # running sum
        compiler_params=pltpu.CompilerParams(
            dimension_semantics=("parallel", "arbitrary"),
            vmem_limit_bytes=vmem_limit),
    )(x1, x2, x3, x4, w5s, shift)
    return out.reshape(B, 2 * emb)


# ----------------------------------------------------------------------------
# Both classifier heads fused into ONE kernel (tiny matmuls, launch-bound)
# ----------------------------------------------------------------------------
def _heads_kernel(x_ref,
                  ow1, os6, ot6, ow2, os7, ot7, ow3, ob3,
                  nw1, ns6, nt6, nw2, ns7, nt7, nw3, nb3,
                  old_ref, new_ref):
    x = x_ref[...]

    def head(w1, s6, t6, w2, s7, t7, w3, b3):
        h = jnp.dot(x, w1[...], preferred_element_type=jnp.float32)
        h = h * s6[...] + t6[...]
        h = jnp.where(h > 0, h, 0.2 * h)
        # dp1: Dropout -> identity (eval)
        h = jnp.dot(h, w2[...], preferred_element_type=jnp.float32)
        h = h * s7[...] + t7[...]        # linear2 bias folded into BN shift
        h = jnp.where(h > 0, h, 0.2 * h)
        # dp2: Dropout -> identity (eval)
        return jnp.dot(h, w3[...], preferred_element_type=jnp.float32) + b3[...]

    old_ref[...] = head(ow1, os6, ot6, ow2, os7, ot7, ow3, ob3)
    new_ref[...] = head(nw1, ns6, nt6, nw2, ns7, nt7, nw3, nb3)


def heads(pooled, p_old, p_new):
    B = pooled.shape[0]
    nc = p_old['w_l3'].shape[1]
    return pl.pallas_call(
        _heads_kernel,
        out_shape=(jax.ShapeDtypeStruct((B, nc), jnp.float32),
                   jax.ShapeDtypeStruct((B, nc), jnp.float32)),
    )(pooled,
      p_old['w_l1'], p_old['s6'], p_old['t6'], p_old['w_l2'], p_old['s7'],
      p_old['t7'], p_old['w_l3'], p_old['b_l3'],
      p_new['w_l1'], p_new['s6'], p_new['t6'], p_new['w_l2'], p_new['s7'],
      p_new['t7'], p_new['w_l3'], p_new['b_l3'])


# ----------------------------------------------------------------------------
# Parameters (deterministic synthetic init, BatchNorm folded into scale/shift)
# ----------------------------------------------------------------------------
def _bn_fold(key, c, eps=1e-5):
    k1, k2, k3, k4 = jax.random.split(key, 4)
    gamma = jax.random.uniform(k1, (c,), minval=0.5, maxval=1.5)
    beta = 0.1 * jax.random.normal(k2, (c,))
    mean = 0.1 * jax.random.normal(k3, (c,))
    var = jax.random.uniform(k4, (c,), minval=0.5, maxval=1.5)
    scale = gamma / jnp.sqrt(var + eps)
    shift = beta - mean * scale
    return (scale.reshape(1, c).astype(jnp.float32),
            shift.reshape(1, c).astype(jnp.float32))


def make_params(key, cin=3, num_classes=10):
    ks = iter(jax.random.split(key, 32))

    def w(shape):
        return (0.1 * jax.random.normal(next(ks), shape)).astype(jnp.float32)

    p = {}
    # shared DGCNN trunk (scaled-down channel widths)
    p['w1'] = w((2 * cin, 32)); p['bn1'] = _bn_fold(next(ks), 32)
    p['w2'] = w((64, 32));      p['bn2'] = _bn_fold(next(ks), 32)
    p['w3'] = w((64, 64));      p['bn3'] = _bn_fold(next(ks), 64)
    p['w4'] = w((128, 64));     p['bn4'] = _bn_fold(next(ks), 64)
    p['w5'] = w((192, 128));    p['bn5'] = _bn_fold(next(ks), 128)

    feat_dim = 2 * 128  # pooled feature = [max | avg]

    def head(d1, d2, d3):
        hp = {}
        hp['w_l1'] = w((feat_dim, d1))               # linear1, bias=False
        hp['s6'], hp['t6'] = _bn_fold(next(ks), d1)  # bn6
        hp['w_l2'] = w((d1, d2))                     # linear2 (with bias)
        b2 = w((1, d2))
        s7, t7 = _bn_fold(next(ks), d2)              # bn7
        hp['s7'], hp['t7'] = s7, s7 * b2 + t7        # fold linear2 bias into BN shift
        hp['w_l3'] = w((d2, d3))                     # linear3
        hp['b_l3'] = w((1, d3))
        return hp

    p['old'] = head(128, 64, num_classes)   # shared_model classifier (scaled)
    p['new'] = head(512, 256, num_classes)  # new classifier (512/256 in module)
    return p


# ----------------------------------------------------------------------------
# Forward
# ----------------------------------------------------------------------------
def forward(x_bcn, params, k=4):
    x = jnp.transpose(x_bcn, (0, 2, 1))                 # (B, N, C) channels-last
    vmem_limit, temp_budget = _vmem_budgets()
    ec = functools.partial(edge_conv, k=k,
                           temp_budget=temp_budget, vmem_limit=vmem_limit)

    x1 = ec(x,  params['w1'], *params['bn1'])            # (B, N, 32)
    x2 = ec(x1, params['w2'], *params['bn2'])            # (B, N, 32)
    x3 = ec(x2, params['w3'], *params['bn3'])            # (B, N, 64)
    x4 = ec(x3, params['w4'], *params['bn4'])            # (B, N, 64)

    pooled = conv5_pool(x1, x2, x3, x4, params['w5'], *params['bn5'],
                        vmem_limit=vmem_limit)            # (B, 256)
    return heads(pooled, params['old'], params['new'])


# ----------------------------------------------------------------------------
# Pure-JAX reference (original DGCNN formulation) used to validate the refactor
# ----------------------------------------------------------------------------
def reference_forward(x_bcn, params, k):
    x = jnp.transpose(x_bcn, (0, 2, 1))

    def graph_feature(xb):
        sq = jnp.sum(xb * xb, axis=-1)
        inner = jnp.einsum('bic,bjc->bij', xb, xb)
        d = 2.0 * inner - sq[:, :, None] - sq[:, None, :]
        idx = jax.lax.top_k(d, k)[1]
        nbr = jax.vmap(lambda pts, ii: pts[ii])(xb, idx)
        ctr = jnp.broadcast_to(xb[:, :, None, :], nbr.shape)
        return jnp.concatenate([nbr - ctr, ctr], axis=-1)

    def edge(xb, w, s, t):
        f = graph_feature(xb)
        h = jnp.einsum('bnkc,cf->bnkf', f, w)
        h = h * s[0] + t[0]
        h = jnp.where(h > 0, h, 0.2 * h)
        return jnp.max(h, axis=2)

    x1 = edge(x, params['w1'], *params['bn1'])
    x2 = edge(x1, params['w2'], *params['bn2'])
    x3 = edge(x2, params['w3'], *params['bn3'])
    x4 = edge(x3, params['w4'], *params['bn4'])
    xc = jnp.concatenate([x1, x2, x3, x4], axis=-1)
    s5, t5 = params['bn5']
    h = jnp.einsum('bnc,cf->bnf', xc, params['w5']) * s5[0] + t5[0]
    h = jnp.where(h > 0, h, 0.2 * h)
    pooled = jnp.concatenate([jnp.max(h, axis=1), jnp.mean(h, axis=1)], axis=-1)

    def head(p):
        hh = pooled @ p['w_l1'] * p['s6'] + p['t6']
        hh = jnp.where(hh > 0, hh, 0.2 * hh)
        hh = hh @ p['w_l2'] * p['s7'] + p['t7']
        hh = jnp.where(hh > 0, hh, 0.2 * hh)
        return hh @ p['w_l3'] + p['b_l3']

    return head(params['old']), head(params['new'])


if __name__ == "__main__":
    B, C, N, K, NUM_CLASSES = 2, 3, 16, 4, 10
    key = jax.random.PRNGKey(0)
    pkey, xkey = jax.random.split(key)
    params = make_params(pkey, cin=C, num_classes=NUM_CLASSES)
    x = jax.random.normal(xkey, (B, C, N), dtype=jnp.float32)   # PyTorch NCW input

    fwd = jax.jit(functools.partial(forward, k=K))
    old, new = fwd(x, params)
    jax.block_until_ready((old, new))

    assert old.shape == (B, NUM_CLASSES) and new.shape == (B, NUM_CLASSES)
    assert bool(jnp.all(jnp.isfinite(old))) and bool(jnp.all(jnp.isfinite(new)))

    # Validate the fused/refactored kernels against the original formulation.
    old_ref, new_ref = jax.jit(functools.partial(reference_forward, k=K))(x, params)

    def rel_err(a, b):
        return float(jnp.max(jnp.abs(a - b)) / (jnp.max(jnp.abs(b)) + 1e-6))

    e_old, e_new = rel_err(old, old_ref), rel_err(new, new_ref)
    # bf16 matmul operands (f32 accumulation) -> loose tolerance on logits.
    assert e_old < 0.15 and e_new < 0.15, (e_old, e_new)
    print("KERNEL_OK")
</pallas_src>

<mosaic_0001>
module attributes {stable_mosaic.version = 11 : i64} {
  func.func @_edgeconv_kernel(%arg0: i32, %arg1: i32, %arg2: memref<1x16x3xf32, #tpu.memory_space<vmem>>, %arg3: memref<3x64xf32, #tpu.memory_space<vmem>>, %arg4: memref<1x32xf32, #tpu.memory_space<vmem>>, %arg5: memref<1x16x32xf32, #tpu.memory_space<vmem>>, %arg6: memref<16x32xbf16, #tpu.memory_space<vmem>>, %arg7: memref<16x32xf32, #tpu.memory_space<vmem>>, %arg8: memref<1x16xf32, #tpu.memory_space<vmem>>) attributes {dimension_semantics = [#tpu.dimension_semantics<parallel>, #tpu.dimension_semantics<arbitrary>], iteration_bounds = array<i64: 2, 1>, scalar_prefetch = 0 : i64, scratch_operands = 3 : i64, tpu.core_type = #tpu.core_type<tc>, window_params = [{transform_indices = @transform_0, window_bounds = array<i64: 1, 16, 3>}, {pipeline_mode = #tpu.pipeline_mode<synchronous>, transform_indices = @transform_1, window_bounds = array<i64: 3, 64>}, {pipeline_mode = #tpu.pipeline_mode<synchronous>, transform_indices = @transform_2, window_bounds = array<i64: 1, 32>}, {transform_indices = @transform_3, window_bounds = array<i64: 1, 16, 32>}]} {
    %c0 = arith.constant 0 : index
    %c0_0 = arith.constant 0 : index
    %c0_1 = arith.constant 0 : index
    %0 = vector.load %arg2[%c0, %c0_0, %c0_1] : memref<1x16x3xf32, #tpu.memory_space<vmem>>, vector<1x16x3xf32>
    %1 = vector.shape_cast %0 : vector<1x16x3xf32> to vector<16x3xf32>
    %c0_i32 = arith.constant 0 : i32
    %2 = arith.cmpi eq, %arg1, %c0_i32 : i32
    %3 = arith.extui %2 : i1 to i32
    %c0_i32_2 = arith.constant 0 : i32
    %4 = arith.cmpi ne, %3, %c0_i32_2 : i32
    scf.if %4 {
      %117 = arith.truncf %1 : vector<16x3xf32> to vector<16x3xbf16>
      %c0_40 = arith.constant 0 : index
      %c0_41 = arith.constant 0 : index
      %118 = vector.load %arg3[%c0_40, %c0_41] : memref<3x64xf32, #tpu.memory_space<vmem>>, vector<3x64xf32>
      %119 = arith.truncf %118 : vector<3x64xf32> to vector<3x64xbf16>
      %cst_42 = arith.constant dense<0.000000e+00> : vector<16x64xf32>
      %120 = tpu.matmul %117, %119, %cst_42 {dimension_numbers = #tpu.dot_dimension_numbers<[1], [0], [0], [1], [0, 0, 1, 1], [], []>} : vector<16x3xbf16>, vector<3x64xbf16>, vector<16x64xf32> -> vector<16x64xf32>
      %121 = vector.extract_strided_slice %120 {offsets = [0, 0], sizes = [16, 32], strides = [1, 1]} : vector<16x64xf32> to vector<16x32xf32>
      %122 = arith.truncf %121 : vector<16x32xf32> to vector<16x32xbf16>
      %c0_43 = arith.constant 0 : index
      %c0_44 = arith.constant 0 : index
      %123 = vector.load %arg6[%c0_43, %c0_44] : memref<16x32xbf16, #tpu.memory_space<vmem>>, vector<16x32xbf16>
      tpu.vector_store %arg6[%c0_43, %c0_44], %122 {strides = array<i32>} : memref<16x32xbf16, #tpu.memory_space<vmem>>, vector<16x32xbf16>,
      %124 = vector.extract_strided_slice %120 {offsets = [0, 32], sizes = [16, 32], strides = [1, 1]} : vector<16x64xf32> to vector<16x32xf32>
      %c0_45 = arith.constant 0 : index
      %c0_46 = arith.constant 0 : index
      %125 = vector.load %arg7[%c0_45, %c0_46] : memref<16x32xf32, #tpu.memory_space<vmem>>, vector<16x32xf32>
      tpu.vector_store %arg7[%c0_45, %c0_46], %124 {strides = array<i32>} : memref<16x32xf32, #tpu.memory_space<vmem>>, vector<16x32xf32>,
      %126 = arith.mulf %1, %1 : vector<16x3xf32>
      %cst_47 = arith.constant dense<0.000000e+00> : vector<16xf32>
      %127 = vector.multi_reduction <add>, %126, %cst_47 [1] : vector<16x3xf32> to vector<16xf32>
      %128 = vector.shape_cast %127 : vector<16xf32> to vector<16x1xf32>
      %129 = tpu.transpose %128, [1, 0] : vector<16x1xf32> -> vector<1x16xf32>
      %c0_48 = arith.constant 0 : index
      %c0_49 = arith.constant 0 : index
      %130 = vector.load %arg8[%c0_48, %c0_49] : memref<1x16xf32, #tpu.memory_space<vmem>>, vector<1x16xf32>
      tpu.vector_store %arg8[%c0_48, %c0_49], %129 {strides = array<i32>} : memref<1x16xf32, #tpu.memory_space<vmem>>, vector<1x16xf32>,
    } else {
    }
    %c16_i32 = arith.constant 16 : i32
    %5 = arith.muli %arg1, %c16_i32 : i32
    %6 = tpu.assume_multiple %5, 16 : i32
    %c0_3 = arith.constant 0 : index
    %7 = arith.index_cast %6 : i32 to index
    %c0_4 = arith.constant 0 : index
    %8 = vector.load %arg2[%c0_3, %7, %c0_4] : memref<1x16x3xf32, #tpu.memory_space<vmem>>, vector<1x16x3xf32>
    %9 = vector.shape_cast %8 : vector<1x16x3xf32> to vector<16x3xf32>
    %cst = arith.constant dense<0.000000e+00> : vector<16x16xf32>
    %10 = tpu.matmul %9, %1, %cst {dimension_numbers = #tpu.dot_dimension_numbers<[1], [1], [0], [0], [0, 0, 1, 0], [], []>} : vector<16x3xf32>, vector<16x3xf32>, vector<16x16xf32> -> vector<16x16xf32>
    %cst_5 = arith.constant 2.000000e+00 : f32
    %11 = vector.broadcast %cst_5 : f32 to vector<16x16xf32>
    %12 = arith.mulf %11, %10 : vector<16x16xf32>
    %c0_6 = arith.constant 0 : index
    %c0_7 = arith.constant 0 : index
    %13 = vector.load %arg8[%c0_6, %c0_7] : memref<1x16xf32, #tpu.memory_space<vmem>>, vector<1x16xf32>
    %14 = vector.broadcast %13 : vector<1x16xf32> to vector<16x16xf32>
    %15 = arith.subf %12, %14 : vector<16x16xf32>
    %16 = tpu.iota {dimensions = array<i32: 1>} : vector<16x16xi32>
    %cst_8 = arith.constant dense<0xFF800000> : vector<16xf32>
    %17 = vector.multi_reduction <maximumf>, %15, %cst_8 [1] : vector<16x16xf32> to vector<16xf32>
    %18 = vector.shape_cast %17 : vector<16xf32> to vector<16x1xf32>
    %19 = vector.broadcast %18 : vector<16x1xf32> to vector<16x16xf32>
    %20 = arith.cmpf oeq, %15, %19 : vector<16x16xf32>
    %c16_i32_9 = arith.constant 16 : i32
    %21 = vector.broadcast %c16_i32_9 : i32 to vector<16x16xi32>
    %22 = arith.select %20, %16, %21 : vector<16x16xi1>, vector<16x16xi32>
    %cst_10 = arith.constant dense<2147483647> : vector<16xi32>
    %23 = vector.multi_reduction <minsi>, %22, %cst_10 [1] : vector<16x16xi32> to vector<16xi32>
    %24 = vector.shape_cast %23 : vector<16xi32> to vector<16x1xi32>
    %25 = vector.broadcast %24 : vector<16x1xi32> to vector<16x16xi32>
    %26 = arith.cmpi eq, %16, %25 : vector<16x16xi32>
    %27 = arith.extui %26 : vector<16x16xi1> to vector<16x16xi32>
    %28 = arith.sitofp %27 : vector<16x16xi32> to vector<16x16xf32>
    %29 = arith.truncf %28 : vector<16x16xf32> to vector<16x16xbf16>
    %cst_11 = arith.constant -1.000000e+30 : f32
    %30 = vector.broadcast %cst_11 : f32 to vector<16x16xf32>
    %31 = arith.select %26, %30, %15 : vector<16x16xi1>, vector<16x16xf32>
    %cst_12 = arith.constant dense<0xFF800000> : vector<16xf32>
    %32 = vector.multi_reduction <maximumf>, %31, %cst_12 [1] : vector<16x16xf32> to vector<16xf32>
    %33 = vector.shape_cast %32 : vector<16xf32> to vector<16x1xf32>
    %34 = vector.broadcast %33 : vector<16x1xf32> to vector<16x16xf32>
    %35 = arith.cmpf oeq, %31, %34 : vector<16x16xf32>
    %c16_i32_13 = arith.constant 16 : i32
    %36 = vector.broadcast %c16_i32_13 : i32 to vector<16x16xi32>
    %37 = arith.select %35, %16, %36 : vector<16x16xi1>, vector<16x16xi32>
    %cst_14 = arith.constant dense<2147483647> : vector<16xi32>
    %38 = vector.multi_reduction <minsi>, %37, %cst_14 [1] : vector<16x16xi32> to vector<16xi32>
    %39 = vector.shape_cast %38 : vector<16xi32> to vector<16x1xi32>
    %40 = vector.broadcast %39 : vector<16x1xi32> to vector<16x16xi32>
    %41 = arith.cmpi eq, %16, %40 : vector<16x16xi32>
    %42 = arith.extui %41 : vector<16x16xi1> to vector<16x16xi32>
    %43 = arith.sitofp %42 : vector<16x16xi32> to vector<16x16xf32>
    %44 = arith.truncf %43 : vector<16x16xf32> to vector<16x16xbf16>
    %cst_15 = arith.constant -1.000000e+30 : f32
    %45 = vector.broadcast %cst_15 : f32 to vector<16x16xf32>
    %46 = arith.select %41, %45, %31 : vector<16x16xi1>, vector<16x16xf32>
    %cst_16 = arith.constant dense<0xFF800000> : vector<16xf32>
    %47 = vector.multi_reduction <maximumf>, %46, %cst_16 [1] : vector<16x16xf32> to vector<16xf32>
    %48 = vector.shape_cast %47 : vector<16xf32> to vector<16x1xf32>
    %49 = vector.broadcast %48 : vector<16x1xf32> to vector<16x16xf32>
    %50 = arith.cmpf oeq, %46, %49 : vector<16x16xf32>
    %c16_i32_17 = arith.constant 16 : i32
    %51 = vector.broadcast %c16_i32_17 : i32 to vector<16x16xi32>
    %52 = arith.select %50, %16, %51 : vector<16x16xi1>, vector<16x16xi32>
    %cst_18 = arith.constant dense<2147483647> : vector<16xi32>
    %53 = vector.multi_reduction <minsi>, %52, %cst_18 [1] : vector<16x16xi32> to vector<16xi32>
    %54 = vector.shape_cast %53 : vector<16xi32> to vector<16x1xi32>
    %55 = vector.broadcast %54 : vector<16x1xi32> to vector<16x16xi32>
    %56 = arith.cmpi eq, %16, %55 : vector<16x16xi32>
    %57 = arith.extui %56 : vector<16x16xi1> to vector<16x16xi32>
    %58 = arith.sitofp %57 : vector<16x16xi32> to vector<16x16xf32>
    %59 = arith.truncf %58 : vector<16x16xf32> to vector<16x16xbf16>
    %cst_19 = arith.constant -1.000000e+30 : f32
    %60 = vector.broadcast %cst_19 : f32 to vector<16x16xf32>
    %61 = arith.select %56, %60, %46 : vector<16x16xi1>, vector<16x16xf32>
    %cst_20 = arith.constant dense<0xFF800000> : vector<16xf32>
    %62 = vector.multi_reduction <maximumf>, %61, %cst_20 [1] : vector<16x16xf32> to vector<16xf32>
    %63 = vector.shape_cast %62 : vector<16xf32> to vector<16x1xf32>
    %64 = vector.broadcast %63 : vector<16x1xf32> to vector<16x16xf32>
    %65 = arith.cmpf oeq, %61, %64 : vector<16x16xf32>
    %c16_i32_21 = arith.constant 16 : i32
    %66 = vector.broadcast %c16_i32_21 : i32 to vector<16x16xi32>
    %67 = arith.select %65, %16, %66 : vector<16x16xi1>, vector<16x16xi32>
    %cst_22 = arith.constant dense<2147483647> : vector<16xi32>
    %68 = vector.multi_reduction <minsi>, %67, %cst_22 [1] : vector<16x16xi32> to vector<16xi32>
    %69 = vector.shape_cast %68 : vector<16xi32> to vector<16x1xi32>
    %70 = vector.broadcast %69 : vector<16x1xi32> to vector<16x16xi32>
    %71 = arith.cmpi eq, %16, %70 : vector<16x16xi32>
    %72 = arith.extui %71 : vector<16x16xi1> to vector<16x16xi32>
    %73 = arith.sitofp %72 : vector<16x16xi32> to vector<16x16xf32>
    %74 = arith.truncf %73 : vector<16x16xf32> to vector<16x16xbf16>
    %75 = tpu.concatenate %29, %44, %59, %74 in 0 : vector<16x16xbf16>, vector<16x16xbf16>, vector<16x16xbf16>, vector<16x16xbf16> -> vector<64x16xbf16>
    %c0_23 = arith.constant 0 : index
    %c0_24 = arith.constant 0 : index
    %76 = vector.load %arg6[%c0_23, %c0_24] : memref<16x32xbf16, #tpu.memory_space<vmem>>, vector<16x32xbf16>
    %cst_25 = arith.constant dense<0.000000e+00> : vector<64x32xf32>
    %77 = tpu.matmul %75, %76, %cst_25 {dimension_numbers = #tpu.dot_dimension_numbers<[1], [0], [0], [1], [0, 0, 1, 1], [], []>} : vector<64x16xbf16>, vector<16x32xbf16>, vector<64x32xf32> -> vector<64x32xf32>
    %78 = arith.index_cast %6 : i32 to index
    %c0_26 = arith.constant 0 : index
    %79 = vector.load %arg7[%78, %c0_26] : memref<16x32xf32, #tpu.memory_space<vmem>>, vector<16x32xf32>
    %c0_27 = arith.constant 0 : index
    %c0_28 = arith.constant 0 : index
    %80 = vector.load %arg4[%c0_27, %c0_28] : memref<1x32xf32, #tpu.memory_space<vmem>>, vector<1x32xf32>
    %81 = vector.broadcast %80 : vector<1x32xf32> to vector<16x32xf32>
    %82 = arith.addf %79, %81 : vector<16x32xf32>
    %83 = vector.extract_strided_slice %77 {offsets = [0, 0], sizes = [16, 32], strides = [1, 1]} : vector<64x32xf32> to vector<16x32xf32>
    %84 = arith.addf %83, %82 : vector<16x32xf32>
    %cst_29 = arith.constant 0.000000e+00 : f32
    %85 = vector.broadcast %cst_29 : f32 to vector<16x32xf32>
    %86 = arith.cmpf ogt, %84, %85 : vector<16x32xf32>
    %cst_30 = arith.constant 2.000000e-01 : f32
    %87 = vector.broadcast %cst_30 : f32 to vector<16x32xf32>
    %88 = arith.mulf %87, %84 : vector<16x32xf32>
    %89 = arith.select %86, %84, %88 : vector<16x32xi1>, vector<16x32xf32>
    %90 = vector.extract_strided_slice %77 {offsets = [16, 0], sizes = [16, 32], strides = [1, 1]} : vector<64x32xf32> to vector<16x32xf32>
    %91 = arith.addf %90, %82 : vector<16x32xf32>
    %cst_31 = arith.constant 0.000000e+00 : f32
    %92 = vector.broadcast %cst_31 : f32 to vector<16x32xf32>
    %93 = arith.cmpf ogt, %91, %92 : vector<16x32xf32>
    %cst_32 = arith.constant 2.000000e-01 : f32
    %94 = vector.broadcast %cst_32 : f32 to vector<16x32xf32>
    %95 = arith.mulf %94, %91 : vector<16x32xf32>
    %96 = arith.select %93, %91, %95 : vector<16x32xi1>, vector<16x32xf32>
    %97 = arith.maximumf %89, %96 : vector<16x32xf32>
    %98 = vector.extract_strided_slice %77 {offsets = [32, 0], sizes = [16, 32], strides = [1, 1]} : vector<64x32xf32> to vector<16x32xf32>
    %99 = arith.addf %98, %82 : vector<16x32xf32>
    %cst_33 = arith.constant 0.000000e+00 : f32
    %100 = vector.broadcast %cst_33 : f32 to vector<16x32xf32>
    %101 = arith.cmpf ogt, %99, %100 : vector<16x32xf32>
    %cst_34 = arith.constant 2.000000e-01 : f32
    %102 = vector.broadcast %cst_34 : f32 to vector<16x32xf32>
    %103 = arith.mulf %102, %99 : vector<16x32xf32>
    %104 = arith.select %101, %99, %103 : vector<16x32xi1>, vector<16x32xf32>
    %105 = arith.maximumf %97, %104 : vector<16x32xf32>
    %106 = vector.extract_strided_slice %77 {offsets = [48, 0], sizes = [16, 32], strides = [1, 1]} : vector<64x32xf32> to vector<16x32xf32>
    %107 = arith.addf %106, %82 : vector<16x32xf32>
    %cst_35 = arith.constant 0.000000e+00 : f32
    %108 = vector.broadcast %cst_35 : f32 to vector<16x32xf32>
    %109 = arith.cmpf ogt, %107, %108 : vector<16x32xf32>
    %cst_36 = arith.constant 2.000000e-01 : f32
    %110 = vector.broadcast %cst_36 : f32 to vector<16x32xf32>
    %111 = arith.mulf %110, %107 : vector<16x32xf32>
    %112 = arith.select %109, %107, %111 : vector<16x32xi1>, vector<16x32xf32>
    %113 = arith.maximumf %105, %112 : vector<16x32xf32>
    %c0_37 = arith.constant 0 : index
    %c0_38 = arith.constant 0 : index
    %c0_39 = arith.constant 0 : index
    %114 = vector.load %arg5[%c0_37, %c0_38, %c0_39] : memref<1x16x32xf32, #tpu.memory_space<vmem>>, vector<1x16x32xf32>
    %115 = vector.shape_cast %114 : vector<1x16x32xf32> to vector<16x32xf32>
    %116 = vector.shape_cast %113 : vector<16x32xf32> to vector<1x16x32xf32>
    tpu.vector_store %arg5[%c0_37, %c0_38, %c0_39], %116 {strides = array<i32>} : memref<1x16x32xf32, #tpu.memory_space<vmem>>, vector<1x16x32xf32>,
    return
  }
  func.func @transform_0(%arg0: i32, %arg1: i32) -> (i32, i32, i32) {
    %c0_i32 = arith.constant 0 : i32
    %c0_i32_0 = arith.constant 0 : i32
    %c0_i32_1 = arith.constant 0 : i32
    return %arg0, %c0_i32, %c0_i32_0 : i32, i32, i32
  }
  func.func @transform_1(%arg0: i32, %arg1: i32) -> (i32, i32) {
    %c0_i32 = arith.constant 0 : i32
    %c0_i32_0 = arith.constant 0 : i32
    %c0_i32_1 = arith.constant 0 : i32
    return %c0_i32, %c0_i32_0 : i32, i32
  }
  func.func @transform_2(%arg0: i32, %arg1: i32) -> (i32, i32) {
    %c0_i32 = arith.constant 0 : i32
    %c0_i32_0 = arith.constant 0 : i32
    %c0_i32_1 = arith.constant 0 : i32
    return %c0_i32, %c0_i32_0 : i32, i32
  }
  func.func @transform_3(%arg0: i32, %arg1: i32) -> (i32, i32, i32) {
    %c0_i32 = arith.constant 0 : i32
    %c0_i32_0 = arith.constant 0 : i32
    return %arg0, %arg1, %c0_i32 : i32, i32, i32
  }
}

module attributes {stable_mosaic.version = 11 : i64} {
  func.func @_edgeconv_kernel(%arg0: i32, %arg1: i32, %arg2: memref<1x16x32xf32, #tpu.memory_space<vmem>>, %arg3: memref<32x64xf32, #tpu.memory_space<vmem>>, %arg4: memref<1x32xf32, #tpu.memory_space<vmem>>, %arg5: memref<1x16x32xf32, #tpu.memory_space<vmem>>, %arg6: memref<16x32xbf16, #tpu.memory_space<vmem>>, %arg7: memref<16x32xf32, #tpu.memory_space<vmem>>, %arg8: memref<1x16xf32, #tpu.memory_space<vmem>>) attributes {dimension_semantics = [#tpu.dimension_semantics<parallel>, #tpu.dimension_semantics<arbitrary>], iteration_bounds = array<i64: 2, 1>, scalar_prefetch = 0 : i64, scratch_operands = 3 : i64, tpu.core_type = #tpu.core_type<tc>, window_params = [{transform_indices = @transform_0, window_bounds = array<i64: 1, 16, 32>}, {pipeline_mode = #tpu.pipeline_mode<synchronous>, transform_indices = @transform_1, window_bounds = array<i64: 32, 64>}, {pipeline_mode = #tpu.pipeline_mode<synchronous>, transform_indices = @transform_2, window_bounds = array<i64: 1, 32>}, {transform_indices = @transform_3, window_bounds = array<i64: 1, 16, 32>}]} {
    %c0 = arith.constant 0 : index
    %c0_0 = arith.constant 0 : index
    %c0_1 = arith.constant 0 : index
    %0 = vector.load %arg2[%c0, %c0_0, %c0_1] : memref<1x16x32xf32, #tpu.memory_space<vmem>>, vector<1x16x32xf32>
    %1 = vector.shape_cast %0 : vector<1x16x32xf32> to vector<16x32xf32>
    %c0_i32 = arith.constant 0 : i32
    %2 = arith.cmpi eq, %arg1, %c0_i32 : i32
    %3 = arith.extui %2 : i1 to i32
    %c0_i32_2 = arith.constant 0 : i32
    %4 = arith.cmpi ne, %3, %c0_i32_2 : i32
    scf.if %4 {
      %117 = arith.truncf %1 : vector<16x32xf32> to vector<16x32xbf16>
      %c0_40 = arith.constant 0 : index
      %c0_41 = arith.constant 0 : index
      %118 = vector.load %arg3[%c0_40, %c0_41] : memref<32x64xf32, #tpu.memory_space<vmem>>, vector<32x64xf32>
      %119 = arith.truncf %118 : vector<32x64xf32> to vector<32x64xbf16>
      %cst_42 = arith.constant dense<0.000000e+00> : vector<16x64xf32>
      %120 = tpu.matmul %117, %119, %cst_42 {dimension_numbers = #tpu.dot_dimension_numbers<[1], [0], [0], [1], [0, 0, 1, 1], [], []>} : vector<16x32xbf16>, vector<32x64xbf16>, vector<16x64xf32> -> vector<16x64xf32>
      %121 = vector.extract_strided_slice %120 {offsets = [0, 0], sizes = [16, 32], strides = [1, 1]} : vector<16x64xf32> to vector<16x32xf32>
      %122 = arith.truncf %121 : vector<16x32xf32> to vector<16x32xbf16>
      %c0_43 = arith.constant 0 : index
      %c0_44 = arith.constant 0 : index
      %123 = vector.load %arg6[%c0_43, %c0_44] : memref<16x32xbf16, #tpu.memory_space<vmem>>, vector<16x32xbf16>
      tpu.vector_store %arg6[%c0_43, %c0_44], %122 {strides = array<i32>} : memref<16x32xbf16, #tpu.memory_space<vmem>>, vector<16x32xbf16>,
      %124 = vector.extract_strided_slice %120 {offsets = [0, 32], sizes = [16, 32], strides = [1, 1]} : vector<16x64xf32> to vector<16x32xf32>
      %c0_45 = arith.constant 0 : index
      %c0_46 = arith.constant 0 : index
      %125 = vector.load %arg7[%c0_45, %c0_46] : memref<16x32xf32, #tpu.memory_space<vmem>>, vector<16x32xf32>
      tpu.vector_store %arg7[%c0_45, %c0_46], %124 {strides = array<i32>} : memref<16x32xf32, #tpu.memory_space<vmem>>, vector<16x32xf32>,
      %126 = arith.mulf %1, %1 : vector<16x32xf32>
      %cst_47 = arith.constant dense<0.000000e+00> : vector<16xf32>
      %127 = vector.multi_reduction <add>, %126, %cst_47 [1] : vector<16x32xf32> to vector<16xf32>
      %128 = vector.shape_cast %127 : vector<16xf32> to vector<16x1xf32>
      %129 = tpu.transpose %128, [1, 0] : vector<16x1xf32> -> vector<1x16xf32>
      %c0_48 = arith.constant 0 : index
      %c0_49 = arith.constant 0 : index
      %130 = vector.load %arg8[%c0_48, %c0_49] : memref<1x16xf32, #tpu.memory_space<vmem>>, vector<1x16xf32>
      tpu.vector_store %arg8[%c0_48, %c0_49], %129 {strides = array<i32>} : memref<1x16xf32, #tpu.memory_space<vmem>>, vector<1x16xf32>,
    } else {
    }
    %c16_i32 = arith.constant 16 : i32
    %5 = arith.muli %arg1, %c16_i32 : i32
    %6 = tpu.assume_multiple %5, 16 : i32
    %c0_3 = arith.constant 0 : index
    %7 = arith.index_cast %6 : i32 to index
    %c0_4 = arith.constant 0 : index
    %8 = vector.load %arg2[%c0_3, %7, %c0_4] : memref<1x16x32xf32, #tpu.memory_space<vmem>>, vector<1x16x32xf32>
    %9 = vector.shape_cast %8 : vector<1x16x32xf32> to vector<16x32xf32>
    %cst = arith.constant dense<0.000000e+00> : vector<16x16xf32>
    %10 = tpu.matmul %9, %1, %cst {dimension_numbers = #tpu.dot_dimension_numbers<[1], [1], [0], [0], [0, 0, 1, 0], [], []>} : vector<16x32xf32>, vector<16x32xf32>, vector<16x16xf32> -> vector<16x16xf32>
    %cst_5 = arith.constant 2.000000e+00 : f32
    %11 = vector.broadcast %cst_5 : f32 to vector<16x16xf32>
    %12 = arith.mulf %11, %10 : vector<16x16xf32>
    %c0_6 = arith.constant 0 : index
    %c0_7 = arith.constant 0 : index
    %13 = vector.load %arg8[%c0_6, %c0_7] : memref<1x16xf32, #tpu.memory_space<vmem>>, vector<1x16xf32>
    %14 = vector.broadcast %13 : vector<1x16xf32> to vector<16x16xf32>
    %15 = arith.subf %12, %14 : vector<16x16xf32>
    %16 = tpu.iota {dimensions = array<i32: 1>} : vector<16x16xi32>
    %cst_8 = arith.constant dense<0xFF800000> : vector<16xf32>
    %17 = vector.multi_reduction <maximumf>, %15, %cst_8 [1] : vector<16x16xf32> to vector<16xf32>
    %18 = vector.shape_cast %17 : vector<16xf32> to vector<16x1xf32>
    %19 = vector.broadcast %18 : vector<16x1xf32> to vector<16x16xf32>
    %20 = arith.cmpf oeq, %15, %19 : vector<16x16xf32>
    %c16_i32_9 = arith.constant 16 : i32
    %21 = vector.broadcast %c16_i32_9 : i32 to vector<16x16xi32>
    %22 = arith.select %20, %16, %21 : vector<16x16xi1>, vector<16x16xi32>
    %cst_10 = arith.constant dense<2147483647> : vector<16xi32>
    %23 = vector.multi_reduction <minsi>, %22, %cst_10 [1] : vector<16x16xi32> to vector<16xi32>
    %24 = vector.shape_cast %23 : vector<16xi32> to vector<16x1xi32>
    %25 = vector.broadcast %24 : vector<16x1xi32> to vector<16x16xi32>
    %26 = arith.cmpi eq, %16, %25 : vector<16x16xi32>
    %27 = arith.extui %26 : vector<16x16xi1> to vector<16x16xi32>
    %28 = arith.sitofp %27 : vector<16x16xi32> to vector<16x16xf32>
    %29 = arith.truncf %28 : vector<16x16xf32> to vector<16x16xbf16>
    %cst_11 = arith.constant -1.000000e+30 : f32
    %30 = vector.broadcast %cst_11 : f32 to vector<16x16xf32>
    %31 = arith.select %26, %30, %15 : vector<16x16xi1>, vector<16x16xf32>
    %cst_12 = arith.constant dense<0xFF800000> : vector<16xf32>
    %32 = vector.multi_reduction <maximumf>, %31, %cst_12 [1] : vector<16x16xf32> to vector<16xf32>
    %33 = vector.shape_cast %32 : vector<16xf32> to vector<16x1xf32>
    %34 = vector.broadcast %33 : vector<16x1xf32> to vector<16x16xf32>
    %35 = arith.cmpf oeq, %31, %34 : vector<16x16xf32>
    %c16_i32_13 = arith.constant 16 : i32
    %36 = vector.broadcast %c16_i32_13 : i32 to vector<16x16xi32>
    %37 = arith.select %35, %16, %36 : vector<16x16xi1>, vector<16x16xi32>
    %cst_14 = arith.constant dense<2147483647> : vector<16xi32>
    %38 = vector.multi_reduction <minsi>, %37, %cst_14 [1] : vector<16x16xi32> to vector<16xi32>
    %39 = vector.shape_cast %38 : vector<16xi32> to vector<16x1xi32>
    %40 = vector.broadcast %39 : vector<16x1xi32> to vector<16x16xi32>
    %41 = arith.cmpi eq, %16, %40 : vector<16x16xi32>
    %42 = arith.extui %41 : vector<16x16xi1> to vector<16x16xi32>
    %43 = arith.sitofp %42 : vector<16x16xi32> to vector<16x16xf32>
    %44 = arith.truncf %43 : vector<16x16xf32> to vector<16x16xbf16>
    %cst_15 = arith.constant -1.000000e+30 : f32
    %45 = vector.broadcast %cst_15 : f32 to vector<16x16xf32>
    %46 = arith.select %41, %45, %31 : vector<16x16xi1>, vector<16x16xf32>
    %cst_16 = arith.constant dense<0xFF800000> : vector<16xf32>
    %47 = vector.multi_reduction <maximumf>, %46, %cst_16 [1] : vector<16x16xf32> to vector<16xf32>
    %48 = vector.shape_cast %47 : vector<16xf32> to vector<16x1xf32>
    %49 = vector.broadcast %48 : vector<16x1xf32> to vector<16x16xf32>
    %50 = arith.cmpf oeq, %46, %49 : vector<16x16xf32>
    %c16_i32_17 = arith.constant 16 : i32
    %51 = vector.broadcast %c16_i32_17 : i32 to vector<16x16xi32>
    %52 = arith.select %50, %16, %51 : vector<16x16xi1>, vector<16x16xi32>
    %cst_18 = arith.constant dense<2147483647> : vector<16xi32>
    %53 = vector.multi_reduction <minsi>, %52, %cst_18 [1] : vector<16x16xi32> to vector<16xi32>
    %54 = vector.shape_cast %53 : vector<16xi32> to vector<16x1xi32>
    %55 = vector.broadcast %54 : vector<16x1xi32> to vector<16x16xi32>
    %56 = arith.cmpi eq, %16, %55 : vector<16x16xi32>
    %57 = arith.extui %56 : vector<16x16xi1> to vector<16x16xi32>
    %58 = arith.sitofp %57 : vector<16x16xi32> to vector<16x16xf32>
    %59 = arith.truncf %58 : vector<16x16xf32> to vector<16x16xbf16>
    %cst_19 = arith.constant -1.000000e+30 : f32
    %60 = vector.broadcast %cst_19 : f32 to vector<16x16xf32>
    %61 = arith.select %56, %60, %46 : vector<16x16xi1>, vector<16x16xf32>
    %cst_20 = arith.constant dense<0xFF800000> : vector<16xf32>
    %62 = vector.multi_reduction <maximumf>, %61, %cst_20 [1] : vector<16x16xf32> to vector<16xf32>
    %63 = vector.shape_cast %62 : vector<16xf32> to vector<16x1xf32>
    %64 = vector.broadcast %63 : vector<16x1xf32> to vector<16x16xf32>
    %65 = arith.cmpf oeq, %61, %64 : vector<16x16xf32>
    %c16_i32_21 = arith.constant 16 : i32
    %66 = vector.broadcast %c16_i32_21 : i32 to vector<16x16xi32>
    %67 = arith.select %65, %16, %66 : vector<16x16xi1>, vector<16x16xi32>
    %cst_22 = arith.constant dense<2147483647> : vector<16xi32>
    %68 = vector.multi_reduction <minsi>, %67, %cst_22 [1] : vector<16x16xi32> to vector<16xi32>
    %69 = vector.shape_cast %68 : vector<16xi32> to vector<16x1xi32>
    %70 = vector.broadcast %69 : vector<16x1xi32> to vector<16x16xi32>
    %71 = arith.cmpi eq, %16, %70 : vector<16x16xi32>
    %72 = arith.extui %71 : vector<16x16xi1> to vector<16x16xi32>
    %73 = arith.sitofp %72 : vector<16x16xi32> to vector<16x16xf32>
    %74 = arith.truncf %73 : vector<16x16xf32> to vector<16x16xbf16>
    %75 = tpu.concatenate %29, %44, %59, %74 in 0 : vector<16x16xbf16>, vector<16x16xbf16>, vector<16x16xbf16>, vector<16x16xbf16> -> vector<64x16xbf16>
    %c0_23 = arith.constant 0 : index
    %c0_24 = arith.constant 0 : index
    %76 = vector.load %arg6[%c0_23, %c0_24] : memref<16x32xbf16, #tpu.memory_space<vmem>>, vector<16x32xbf16>
    %cst_25 = arith.constant dense<0.000000e+00> : vector<64x32xf32>
    %77 = tpu.matmul %75, %76, %cst_25 {dimension_numbers = #tpu.dot_dimension_numbers<[1], [0], [0], [1], [0, 0, 1, 1], [], []>} : vector<64x16xbf16>, vector<16x32xbf16>, vector<64x32xf32> -> vector<64x32xf32>
    %78 = arith.index_cast %6 : i32 to index
    %c0_26 = arith.constant 0 : index
    %79 = vector.load %arg7[%78, %c0_26] : memref<16x32xf32, #tpu.memory_space<vmem>>, vector<16x32xf32>
    %c0_27 = arith.constant 0 : index
    %c0_28 = arith.constant 0 : index
    %80 = vector.load %arg4[%c0_27, %c0_28] : memref<1x32xf32, #tpu.memory_space<vmem>>, vector<1x32xf32>
    %81 = vector.broadcast %80 : vector<1x32xf32> to vector<16x32xf32>
    %82 = arith.addf %79, %81 : vector<16x32xf32>
    %83 = vector.extract_strided_slice %77 {offsets = [0, 0], sizes = [16, 32], strides = [1, 1]} : vector<64x32xf32> to vector<16x32xf32>
    %84 = arith.addf %83, %82 : vector<16x32xf32>
    %cst_29 = arith.constant 0.000000e+00 : f32
    %85 = vector.broadcast %cst_29 : f32 to vector<16x32xf32>
    %86 = arith.cmpf ogt, %84, %85 : vector<16x32xf32>
    %cst_30 = arith.constant 2.000000e-01 : f32
    %87 = vector.broadcast %cst_30 : f32 to vector<16x32xf32>
    %88 = arith.mulf %87, %84 : vector<16x32xf32>
    %89 = arith.select %86, %84, %88 : vector<16x32xi1>, vector<16x32xf32>
    %90 = vector.extract_strided_slice %77 {offsets = [16, 0], sizes = [16, 32], strides = [1, 1]} : vector<64x32xf32> to vector<16x32xf32>
    %91 = arith.addf %90, %82 : vector<16x32xf32>
    %cst_31 = arith.constant 0.000000e+00 : f32
    %92 = vector.broadcast %cst_31 : f32 to vector<16x32xf32>
    %93 = arith.cmpf ogt, %91, %92 : vector<16x32xf32>
    %cst_32 = arith.constant 2.000000e-01 : f32
    %94 = vector.broadcast %cst_32 : f32 to vector<16x32xf32>
    %95 = arith.mulf %94, %91 : vector<16x32xf32>
    %96 = arith.select %93, %91, %95 : vector<16x32xi1>, vector<16x32xf32>
    %97 = arith.maximumf %89, %96 : vector<16x32xf32>
    %98 = vector.extract_strided_slice %77 {offsets = [32, 0], sizes = [16, 32], strides = [1, 1]} : vector<64x32xf32> to vector<16x32xf32>
    %99 = arith.addf %98, %82 : vector<16x32xf32>
    %cst_33 = arith.constant 0.000000e+00 : f32
    %100 = vector.broadcast %cst_33 : f32 to vector<16x32xf32>
    %101 = arith.cmpf ogt, %99, %100 : vector<16x32xf32>
    %cst_34 = arith.constant 2.000000e-01 : f32
    %102 = vector.broadcast %cst_34 : f32 to vector<16x32xf32>
    %103 = arith.mulf %102, %99 : vector<16x32xf32>
    %104 = arith.select %101, %99, %103 : vector<16x32xi1>, vector<16x32xf32>
    %105 = arith.maximumf %97, %104 : vector<16x32xf32>
    %106 = vector.extract_strided_slice %77 {offsets = [48, 0], sizes = [16, 32], strides = [1, 1]} : vector<64x32xf32> to vector<16x32xf32>
    %107 = arith.addf %106, %82 : vector<16x32xf32>
    %cst_35 = arith.constant 0.000000e+00 : f32
    %108 = vector.broadcast %cst_35 : f32 to vector<16x32xf32>
    %109 = arith.cmpf ogt, %107, %108 : vector<16x32xf32>
    %cst_36 = arith.constant 2.000000e-01 : f32
    %110 = vector.broadcast %cst_36 : f32 to vector<16x32xf32>
    %111 = arith.mulf %110, %107 : vector<16x32xf32>
    %112 = arith.select %109, %107, %111 : vector<16x32xi1>, vector<16x32xf32>
    %113 = arith.maximumf %105, %112 : vector<16x32xf32>
    %c0_37 = arith.constant 0 : index
    %c0_38 = arith.constant 0 : index
    %c0_39 = arith.constant 0 : index
    %114 = vector.load %arg5[%c0_37, %c0_38, %c0_39] : memref<1x16x32xf32, #tpu.memory_space<vmem>>, vector<1x16x32xf32>
    %115 = vector.shape_cast %114 : vector<1x16x32xf32> to vector<16x32xf32>
    %116 = vector.shape_cast %113 : vector<16x32xf32> to vector<1x16x32xf32>
    tpu.vector_store %arg5[%c0_37, %c0_38, %c0_39], %116 {strides = array<i32>} : memref<1x16x32xf32, #tpu.memory_space<vmem>>, vector<1x16x32xf32>,
    return
  }
  func.func @transform_0(%arg0: i32, %arg1: i32) -> (i32, i32, i32) {
    %c0_i32 = arith.constant 0 : i32
    %c0_i32_0 = arith.constant 0 : i32
    %c0_i32_1 = arith.constant 0 : i32
    return %arg0, %c0_i32, %c0_i32_0 : i32, i32, i32
  }
  func.func @transform_1(%arg0: i32, %arg1: i32) -> (i32, i32) {
    %c0_i32 = arith.constant 0 : i32
    %c0_i32_0 = arith.constant 0 : i32
    %c0_i32_1 = arith.constant 0 : i32
    return %c0_i32, %c0_i32_0 : i32, i32
  }
  func.func @transform_2(%arg0: i32, %arg1: i32) -> (i32, i32) {
    %c0_i32 = arith.constant 0 : i32
    %c0_i32_0 = arith.constant 0 : i32
    %c0_i32_1 = arith.constant 0 : i32
    return %c0_i32, %c0_i32_0 : i32, i32
  }
  func.func @transform_3(%arg0: i32, %arg1: i32) -> (i32, i32, i32) {
    %c0_i32 = arith.constant 0 : i32
    %c0_i32_0 = arith.constant 0 : i32
    return %arg0, %arg1, %c0_i32 : i32, i32, i32
  }
}

module attributes {stable_mosaic.version = 11 : i64} {
  func.func @_edgeconv_kernel(%arg0: i32, %arg1: i32, %arg2: memref<1x16x32xf32, #tpu.memory_space<vmem>>, %arg3: memref<32x128xf32, #tpu.memory_space<vmem>>, %arg4: memref<1x64xf32, #tpu.memory_space<vmem>>, %arg5: memref<1x16x64xf32, #tpu.memory_space<vmem>>, %arg6: memref<16x64xbf16, #tpu.memory_space<vmem>>, %arg7: memref<16x64xf32, #tpu.memory_space<vmem>>, %arg8: memref<1x16xf32, #tpu.memory_space<vmem>>) attributes {dimension_semantics = [#tpu.dimension_semantics<parallel>, #tpu.dimension_semantics<arbitrary>], iteration_bounds = array<i64: 2, 1>, scalar_prefetch = 0 : i64, scratch_operands = 3 : i64, tpu.core_type = #tpu.core_type<tc>, window_params = [{transform_indices = @transform_0, window_bounds = array<i64: 1, 16, 32>}, {pipeline_mode = #tpu.pipeline_mode<synchronous>, transform_indices = @transform_1, window_bounds = array<i64: 32, 128>}, {pipeline_mode = #tpu.pipeline_mode<synchronous>, transform_indices = @transform_2, window_bounds = array<i64: 1, 64>}, {transform_indices = @transform_3, window_bounds = array<i64: 1, 16, 64>}]} {
    %c0 = arith.constant 0 : index
    %c0_0 = arith.constant 0 : index
    %c0_1 = arith.constant 0 : index
    %0 = vector.load %arg2[%c0, %c0_0, %c0_1] : memref<1x16x32xf32, #tpu.memory_space<vmem>>, vector<1x16x32xf32>
    %1 = vector.shape_cast %0 : vector<1x16x32xf32> to vector<16x32xf32>
    %c0_i32 = arith.constant 0 : i32
    %2 = arith.cmpi eq, %arg1, %c0_i32 : i32
    %3 = arith.extui %2 : i1 to i32
    %c0_i32_2 = arith.constant 0 : i32
    %4 = arith.cmpi ne, %3, %c0_i32_2 : i32
    scf.if %4 {
      %117 = arith.truncf %1 : vector<16x32xf32> to vector<16x32xbf16>
      %c0_40 = arith.constant 0 : index
      %c0_41 = arith.constant 0 : index
      %118 = vector.load %arg3[%c0_40, %c0_41] : memref<32x128xf32, #tpu.memory_space<vmem>>, vector<32x128xf32>
      %119 = arith.truncf %118 : vector<32x128xf32> to vector<32x128xbf16>
      %cst_42 = arith.constant dense<0.000000e+00> : vector<16x128xf32>
      %120 = tpu.matmul %117, %119, %cst_42 {dimension_numbers = #tpu.dot_dimension_numbers<[1], [0], [0], [1], [0, 0, 1, 1], [], []>} : vector<16x32xbf16>, vector<32x128xbf16>, vector<16x128xf32> -> vector<16x128xf32>
      %121 = vector.extract_strided_slice %120 {offsets = [0, 0], sizes = [16, 64], strides = [1, 1]} : vector<16x128xf32> to vector<16x64xf32>
      %122 = arith.truncf %121 : vector<16x64xf32> to vector<16x64xbf16>
      %c0_43 = arith.constant 0 : index
      %c0_44 = arith.constant 0 : index
      %123 = vector.load %arg6[%c0_43, %c0_44] : memref<16x64xbf16, #tpu.memory_space<vmem>>, vector<16x64xbf16>
      tpu.vector_store %arg6[%c0_43, %c0_44], %122 {strides = array<i32>} : memref<16x64xbf16, #tpu.memory_space<vmem>>, vector<16x64xbf16>,
      %124 = vector.extract_strided_slice %120 {offsets = [0, 64], sizes = [16, 64], strides = [1, 1]} : vector<16x128xf32> to vector<16x64xf32>
      %c0_45 = arith.constant 0 : index
      %c0_46 = arith.constant 0 : index
      %125 = vector.load %arg7[%c0_45, %c0_46] : memref<16x64xf32, #tpu.memory_space<vmem>>, vector<16x64xf32>
      tpu.vector_store %arg7[%c0_45, %c0_46], %124 {strides = array<i32>} : memref<16x64xf32, #tpu.memory_space<vmem>>, vector<16x64xf32>,
      %126 = arith.mulf %1, %1 : vector<16x32xf32>
      %cst_47 = arith.constant dense<0.000000e+00> : vector<16xf32>
      %127 = vector.multi_reduction <add>, %126, %cst_47 [1] : vector<16x32xf32> to vector<16xf32>
      %128 = vector.shape_cast %127 : vector<16xf32> to vector<16x1xf32>
      %129 = tpu.transpose %128, [1, 0] : vector<16x1xf32> -> vector<1x16xf32>
      %c0_48 = arith.constant 0 : index
      %c0_49 = arith.constant 0 : index
      %130 = vector.load %arg8[%c0_48, %c0_49] : memref<1x16xf32, #tpu.memory_space<vmem>>, vector<1x16xf32>
      tpu.vector_store %arg8[%c0_48, %c0_49], %129 {strides = array<i32>} : memref<1x16xf32, #tpu.memory_space<vmem>>, vector<1x16xf32>,
    } else {
    }
    %c16_i32 = arith.constant 16 : i32
    %5 = arith.muli %arg1, %c16_i32 : i32
    %6 = tpu.assume_multiple %5, 16 : i32
    %c0_3 = arith.constant 0 : index
    %7 = arith.index_cast %6 : i32 to index
    %c0_4 = arith.constant 0 : index
    %8 = vector.load %arg2[%c0_3, %7, %c0_4] : memref<1x16x32xf32, #tpu.memory_space<vmem>>, vector<1x16x32xf32>
    %9 = vector.shape_cast %8 : vector<1x16x32xf32> to vector<16x32xf32>
    %cst = arith.constant dense<0.000000e+00> : vector<16x16xf32>
    %10 = tpu.matmul %9, %1, %cst {dimension_numbers = #tpu.dot_dimension_numbers<[1], [1], [0], [0], [0, 0, 1, 0], [], []>} : vector<16x32xf32>, vector<16x32xf32>, vector<16x16xf32> -> vector<16x16xf32>
    %cst_5 = arith.constant 2.000000e+00 : f32
    %11 = vector.broadcast %cst_5 : f32 to vector<16x16xf32>
    %12 = arith.mulf %11, %10 : vector<16x16xf32>
    %c0_6 = arith.constant 0 : index
    %c0_7 = arith.constant 0 : index
    %13 = vector.load %arg8[%c0_6, %c0_7] : memref<1x16xf32, #tpu.memory_space<vmem>>, vector<1x16xf32>
    %14 = vector.broadcast %13 : vector<1x16xf32> to vector<16x16xf32>
    %15 = arith.subf %12, %14 : vector<16x16xf32>
    %16 = tpu.iota {dimensions = array<i32: 1>} : vector<16x16xi32>
    %cst_8 = arith.constant dense<0xFF800000> : vector<16xf32>
    %17 = vector.multi_reduction <maximumf>, %15, %cst_8 [1] : vector<16x16xf32> to vector<16xf32>
    %18 = vector.shape_cast %17 : vector<16xf32> to vector<16x1xf32>
    %19 = vector.broadcast %18 : vector<16x1xf32> to vector<16x16xf32>
    %20 = arith.cmpf oeq, %15, %19 : vector<16x16xf32>
    %c16_i32_9 = arith.constant 16 : i32
    %21 = vector.broadcast %c16_i32_9 : i32 to vector<16x16xi32>
    %22 = arith.select %20, %16, %21 : vector<16x16xi1>, vector<16x16xi32>
    %cst_10 = arith.constant dense<2147483647> : vector<16xi32>
    %23 = vector.multi_reduction <minsi>, %22, %cst_10 [1] : vector<16x16xi32> to vector<16xi32>
    %24 = vector.shape_cast %23 : vector<16xi32> to vector<16x1xi32>
    %25 = vector.broadcast %24 : vector<16x1xi32> to vector<16x16xi32>
    %26 = arith.cmpi eq, %16, %25 : vector<16x16xi32>
    %27 = arith.extui %26 : vector<16x16xi1> to vector<16x16xi32>
    %28 = arith.sitofp %27 : vector<16x16xi32> to vector<16x16xf32>
    %29 = arith.truncf %28 : vector<16x16xf32> to vector<16x16xbf16>
    %cst_11 = arith.constant -1.000000e+30 : f32
    %30 = vector.broadcast %cst_11 : f32 to vector<16x16xf32>
    %31 = arith.select %26, %30, %15 : vector<16x16xi1>, vector<16x16xf32>
    %cst_12 = arith.constant dense<0xFF800000> : vector<16xf32>
    %32 = vector.multi_reduction <maximumf>, %31, %cst_12 [1] : vector<16x16xf32> to vector<16xf32>
    %33 = vector.shape_cast %32 : vector<16xf32> to vector<16x1xf32>
    %34 = vector.broadcast %33 : vector<16x1xf32> to vector<16x16xf32>
    %35 = arith.cmpf oeq, %31, %34 : vector<16x16xf32>
    %c16_i32_13 = arith.constant 16 : i32
    %36 = vector.broadcast %c16_i32_13 : i32 to vector<16x16xi32>
    %37 = arith.select %35, %16, %36 : vector<16x16xi1>, vector<16x16xi32>
    %cst_14 = arith.constant dense<2147483647> : vector<16xi32>
    %38 = vector.multi_reduction <minsi>, %37, %cst_14 [1] : vector<16x16xi32> to vector<16xi32>
    %39 = vector.shape_cast %38 : vector<16xi32> to vector<16x1xi32>
    %40 = vector.broadcast %39 : vector<16x1xi32> to vector<16x16xi32>
    %41 = arith.cmpi eq, %16, %40 : vector<16x16xi32>
    %42 = arith.extui %41 : vector<16x16xi1> to vector<16x16xi32>
    %43 = arith.sitofp %42 : vector<16x16xi32> to vector<16x16xf32>
    %44 = arith.truncf %43 : vector<16x16xf32> to vector<16x16xbf16>
    %cst_15 = arith.constant -1.000000e+30 : f32
    %45 = vector.broadcast %cst_15 : f32 to vector<16x16xf32>
    %46 = arith.select %41, %45, %31 : vector<16x16xi1>, vector<16x16xf32>
    %cst_16 = arith.constant dense<0xFF800000> : vector<16xf32>
    %47 = vector.multi_reduction <maximumf>, %46, %cst_16 [1] : vector<16x16xf32> to vector<16xf32>
    %48 = vector.shape_cast %47 : vector<16xf32> to vector<16x1xf32>
    %49 = vector.broadcast %48 : vector<16x1xf32> to vector<16x16xf32>
    %50 = arith.cmpf oeq, %46, %49 : vector<16x16xf32>
    %c16_i32_17 = arith.constant 16 : i32
    %51 = vector.broadcast %c16_i32_17 : i32 to vector<16x16xi32>
    %52 = arith.select %50, %16, %51 : vector<16x16xi1>, vector<16x16xi32>
    %cst_18 = arith.constant dense<2147483647> : vector<16xi32>
    %53 = vector.multi_reduction <minsi>, %52, %cst_18 [1] : vector<16x16xi32> to vector<16xi32>
    %54 = vector.shape_cast %53 : vector<16xi32> to vector<16x1xi32>
    %55 = vector.broadcast %54 : vector<16x1xi32> to vector<16x16xi32>
    %56 = arith.cmpi eq, %16, %55 : vector<16x16xi32>
    %57 = arith.extui %56 : vector<16x16xi1> to vector<16x16xi32>
    %58 = arith.sitofp %57 : vector<16x16xi32> to vector<16x16xf32>
    %59 = arith.truncf %58 : vector<16x16xf32> to vector<16x16xbf16>
    %cst_19 = arith.constant -1.000000e+30 : f32
    %60 = vector.broadcast %cst_19 : f32 to vector<16x16xf32>
    %61 = arith.select %56, %60, %46 : vector<16x16xi1>, vector<16x16xf32>
    %cst_20 = arith.constant dense<0xFF800000> : vector<16xf32>
    %62 = vector.multi_reduction <maximumf>, %61, %cst_20 [1] : vector<16x16xf32> to vector<16xf32>
    %63 = vector.shape_cast %62 : vector<16xf32> to vector<16x1xf32>
    %64 = vector.broadcast %63 : vector<16x1xf32> to vector<16x16xf32>
    %65 = arith.cmpf oeq, %61, %64 : vector<16x16xf32>
    %c16_i32_21 = arith.constant 16 : i32
    %66 = vector.broadcast %c16_i32_21 : i32 to vector<16x16xi32>
    %67 = arith.select %65, %16, %66 : vector<16x16xi1>, vector<16x16xi32>
    %cst_22 = arith.constant dense<2147483647> : vector<16xi32>
    %68 = vector.multi_reduction <minsi>, %67, %cst_22 [1] : vector<16x16xi32> to vector<16xi32>
    %69 = vector.shape_cast %68 : vector<16xi32> to vector<16x1xi32>
    %70 = vector.broadcast %69 : vector<16x1xi32> to vector<16x16xi32>
    %71 = arith.cmpi eq, %16, %70 : vector<16x16xi32>
    %72 = arith.extui %71 : vector<16x16xi1> to vector<16x16xi32>
    %73 = arith.sitofp %72 : vector<16x16xi32> to vector<16x16xf32>
    %74 = arith.truncf %73 : vector<16x16xf32> to vector<16x16xbf16>
    %75 = tpu.concatenate %29, %44, %59, %74 in 0 : vector<16x16xbf16>, vector<16x16xbf16>, vector<16x16xbf16>, vector<16x16xbf16> -> vector<64x16xbf16>
    %c0_23 = arith.constant 0 : index
    %c0_24 = arith.constant 0 : index
    %76 = vector.load %arg6[%c0_23, %c0_24] : memref<16x64xbf16, #tpu.memory_space<vmem>>, vector<16x64xbf16>
    %cst_25 = arith.constant dense<0.000000e+00> : vector<64x64xf32>
    %77 = tpu.matmul %75, %76, %cst_25 {dimension_numbers = #tpu.dot_dimension_numbers<[1], [0], [0], [1], [0, 0, 1, 1], [], []>} : vector<64x16xbf16>, vector<16x64xbf16>, vector<64x64xf32> -> vector<64x64xf32>
    %78 = arith.index_cast %6 : i32 to index
    %c0_26 = arith.constant 0 : index
    %79 = vector.load %arg7[%78, %c0_26] : memref<16x64xf32, #tpu.memory_space<vmem>>, vector<16x64xf32>
    %c0_27 = arith.constant 0 : index
    %c0_28 = arith.constant 0 : index
    %80 = vector.load %arg4[%c0_27, %c0_28] : memref<1x64xf32, #tpu.memory_space<vmem>>, vector<1x64xf32>
    %81 = vector.broadcast %80 : vector<1x64xf32> to vector<16x64xf32>
    %82 = arith.addf %79, %81 : vector<16x64xf32>
    %83 = vector.extract_strided_slice %77 {offsets = [0, 0], sizes = [16, 64], strides = [1, 1]} : vector<64x64xf32> to vector<16x64xf32>
    %84 = arith.addf %83, %82 : vector<16x64xf32>
    %cst_29 = arith.constant 0.000000e+00 : f32
    %85 = vector.broadcast %cst_29 : f32 to vector<16x64xf32>
    %86 = arith.cmpf ogt, %84, %85 : vector<16x64xf32>
    %cst_30 = arith.constant 2.000000e-01 : f32
    %87 = vector.broadcast %cst_30 : f32 to vector<16x64xf32>
    %88 = arith.mulf %87, %84 : vector<16x64xf32>
    %89 = arith.select %86, %84, %88 : vector<16x64xi1>, vector<16x64xf32>
    %90 = vector.extract_strided_slice %77 {offsets = [16, 0], sizes = [16, 64], strides = [1, 1]} : vector<64x64xf32> to vector<16x64xf32>
    %91 = arith.addf %90, %82 : vector<16x64xf32>
    %cst_31 = arith.constant 0.000000e+00 : f32
    %92 = vector.broadcast %cst_31 : f32 to vector<16x64xf32>
    %93 = arith.cmpf ogt, %91, %92 : vector<16x64xf32>
    %cst_32 = arith.constant 2.000000e-01 : f32
    %94 = vector.broadcast %cst_32 : f32 to vector<16x64xf32>
    %95 = arith.mulf %94, %91 : vector<16x64xf32>
    %96 = arith.select %93, %91, %95 : vector<16x64xi1>, vector<16x64xf32>
    %97 = arith.maximumf %89, %96 : vector<16x64xf32>
    %98 = vector.extract_strided_slice %77 {offsets = [32, 0], sizes = [16, 64], strides = [1, 1]} : vector<64x64xf32> to vector<16x64xf32>
    %99 = arith.addf %98, %82 : vector<16x64xf32>
    %cst_33 = arith.constant 0.000000e+00 : f32
    %100 = vector.broadcast %cst_33 : f32 to vector<16x64xf32>
    %101 = arith.cmpf ogt, %99, %100 : vector<16x64xf32>
    %cst_34 = arith.constant 2.000000e-01 : f32
    %102 = vector.broadcast %cst_34 : f32 to vector<16x64xf32>
    %103 = arith.mulf %102, %99 : vector<16x64xf32>
    %104 = arith.select %101, %99, %103 : vector<16x64xi1>, vector<16x64xf32>
    %105 = arith.maximumf %97, %104 : vector<16x64xf32>
    %106 = vector.extract_strided_slice %77 {offsets = [48, 0], sizes = [16, 64], strides = [1, 1]} : vector<64x64xf32> to vector<16x64xf32>
    %107 = arith.addf %106, %82 : vector<16x64xf32>
    %cst_35 = arith.constant 0.000000e+00 : f32
    %108 = vector.broadcast %cst_35 : f32 to vector<16x64xf32>
    %109 = arith.cmpf ogt, %107, %108 : vector<16x64xf32>
    %cst_36 = arith.constant 2.000000e-01 : f32
    %110 = vector.broadcast %cst_36 : f32 to vector<16x64xf32>
    %111 = arith.mulf %110, %107 : vector<16x64xf32>
    %112 = arith.select %109, %107, %111 : vector<16x64xi1>, vector<16x64xf32>
    %113 = arith.maximumf %105, %112 : vector<16x64xf32>
    %c0_37 = arith.constant 0 : index
    %c0_38 = arith.constant 0 : index
    %c0_39 = arith.constant 0 : index
    %114 = vector.load %arg5[%c0_37, %c0_38, %c0_39] : memref<1x16x64xf32, #tpu.memory_space<vmem>>, vector<1x16x64xf32>
    %115 = vector.shape_cast %114 : vector<1x16x64xf32> to vector<16x64xf32>
    %116 = vector.shape_cast %113 : vector<16x64xf32> to vector<1x16x64xf32>
    tpu.vector_store %arg5[%c0_37, %c0_38, %c0_39], %116 {strides = array<i32>} : memref<1x16x64xf32, #tpu.memory_space<vmem>>, vector<1x16x64xf32>,
    return
  }
  func.func @transform_0(%arg0: i32, %arg1: i32) -> (i32, i32, i32) {
    %c0_i32 = arith.constant 0 : i32
    %c0_i32_0 = arith.constant 0 : i32
    %c0_i32_1 = arith.constant 0 : i32
    return %arg0, %c0_i32, %c0_i32_0 : i32, i32, i32
  }
  func.func @transform_1(%arg0: i32, %arg1: i32) -> (i32, i32) {
    %c0_i32 = arith.constant 0 : i32
    %c0_i32_0 = arith.constant 0 : i32
    %c0_i32_1 = arith.constant 0 : i32
    return %c0_i32, %c0_i32_0 : i32, i32
  }
  func.func @transform_2(%arg0: i32, %arg1: i32) -> (i32, i32) {
    %c0_i32 = arith.constant 0 : i32
    %c0_i32_0 = arith.constant 0 : i32
    %c0_i32_1 = arith.constant 0 : i32
    return %c0_i32, %c0_i32_0 : i32, i32
  }
  func.func @transform_3(%arg0: i32, %arg1: i32) -> (i32, i32, i32) {
    %c0_i32 = arith.constant 0 : i32
    %c0_i32_0 = arith.constant 0 : i32
    return %arg0, %arg1, %c0_i32 : i32, i32, i32
  }
}

module attributes {stable_mosaic.version = 11 : i64} {
  func.func @_edgeconv_kernel(%arg0: i32, %arg1: i32, %arg2: memref<1x16x64xf32, #tpu.memory_space<vmem>>, %arg3: memref<64x128xf32, #tpu.memory_space<vmem>>, %arg4: memref<1x64xf32, #tpu.memory_space<vmem>>, %arg5: memref<1x16x64xf32, #tpu.memory_space<vmem>>, %arg6: memref<16x64xbf16, #tpu.memory_space<vmem>>, %arg7: memref<16x64xf32, #tpu.memory_space<vmem>>, %arg8: memref<1x16xf32, #tpu.memory_space<vmem>>) attributes {dimension_semantics = [#tpu.dimension_semantics<parallel>, #tpu.dimension_semantics<arbitrary>], iteration_bounds = array<i64: 2, 1>, scalar_prefetch = 0 : i64, scratch_operands = 3 : i64, tpu.core_type = #tpu.core_type<tc>, window_params = [{transform_indices = @transform_0, window_bounds = array<i64: 1, 16, 64>}, {pipeline_mode = #tpu.pipeline_mode<synchronous>, transform_indices = @transform_1, window_bounds = array<i64: 64, 128>}, {pipeline_mode = #tpu.pipeline_mode<synchronous>, transform_indices = @transform_2, window_bounds = array<i64: 1, 64>}, {transform_indices = @transform_3, window_bounds = array<i64: 1, 16, 64>}]} {
    %c0 = arith.constant 0 : index
    %c0_0 = arith.constant 0 : index
    %c0_1 = arith.constant 0 : index
    %0 = vector.load %arg2[%c0, %c0_0, %c0_1] : memref<1x16x64xf32, #tpu.memory_space<vmem>>, vector<1x16x64xf32>
    %1 = vector.shape_cast %0 : vector<1x16x64xf32> to vector<16x64xf32>
    %c0_i32 = arith.constant 0 : i32
    %2 = arith.cmpi eq, %arg1, %c0_i32 : i32
    %3 = arith.extui %2 : i1 to i32
    %c0_i32_2 = arith.constant 0 : i32
    %4 = arith.cmpi ne, %3, %c0_i32_2 : i32
    scf.if %4 {
      %117 = arith.truncf %1 : vector<16x64xf32> to vector<16x64xbf16>
      %c0_40 = arith.constant 0 : index
      %c0_41 = arith.constant 0 : index
      %118 = vector.load %arg3[%c0_40, %c0_41] : memref<64x128xf32, #tpu.memory_space<vmem>>, vector<64x128xf32>
      %119 = arith.truncf %118 : vector<64x128xf32> to vector<64x128xbf16>
      %cst_42 = arith.constant dense<0.000000e+00> : vector<16x128xf32>
      %120 = tpu.matmul %117, %119, %cst_42 {dimension_numbers = #tpu.dot_dimension_numbers<[1], [0], [0], [1], [0, 0, 1, 1], [], []>} : vector<16x64xbf16>, vector<64x128xbf16>, vector<16x128xf32> -> vector<16x128xf32>
      %121 = vector.extract_strided_slice %120 {offsets = [0, 0], sizes = [16, 64], strides = [1, 1]} : vector<16x128xf32> to vector<16x64xf32>
      %122 = arith.truncf %121 : vector<16x64xf32> to vector<16x64xbf16>
      %c0_43 = arith.constant 0 : index
      %c0_44 = arith.constant 0 : index
      %123 = vector.load %arg6[%c0_43, %c0_44] : memref<16x64xbf16, #tpu.memory_space<vmem>>, vector<16x64xbf16>
      tpu.vector_store %arg6[%c0_43, %c0_44], %122 {strides = array<i32>} : memref<16x64xbf16, #tpu.memory_space<vmem>>, vector<16x64xbf16>,
      %124 = vector.extract_strided_slice %120 {offsets = [0, 64], sizes = [16, 64], strides = [1, 1]} : vector<16x128xf32> to vector<16x64xf32>
      %c0_45 = arith.constant 0 : index
      %c0_46 = arith.constant 0 : index
      %125 = vector.load %arg7[%c0_45, %c0_46] : memref<16x64xf32, #tpu.memory_space<vmem>>, vector<16x64xf32>
      tpu.vector_store %arg7[%c0_45, %c0_46], %124 {strides = array<i32>} : memref<16x64xf32, #tpu.memory_space<vmem>>, vector<16x64xf32>,
      %126 = arith.mulf %1, %1 : vector<16x64xf32>
      %cst_47 = arith.constant dense<0.000000e+00> : vector<16xf32>
      %127 = vector.multi_reduction <add>, %126, %cst_47 [1] : vector<16x64xf32> to vector<16xf32>
      %128 = vector.shape_cast %127 : vector<16xf32> to vector<16x1xf32>
      %129 = tpu.transpose %128, [1, 0] : vector<16x1xf32> -> vector<1x16xf32>
      %c0_48 = arith.constant 0 : index
      %c0_49 = arith.constant 0 : index
      %130 = vector.load %arg8[%c0_48, %c0_49] : memref<1x16xf32, #tpu.memory_space<vmem>>, vector<1x16xf32>
      tpu.vector_store %arg8[%c0_48, %c0_49], %129 {strides = array<i32>} : memref<1x16xf32, #tpu.memory_space<vmem>>, vector<1x16xf32>,
    } else {
    }
    %c16_i32 = arith.constant 16 : i32
    %5 = arith.muli %arg1, %c16_i32 : i32
    %6 = tpu.assume_multiple %5, 16 : i32
    %c0_3 = arith.constant 0 : index
    %7 = arith.index_cast %6 : i32 to index
    %c0_4 = arith.constant 0 : index
    %8 = vector.load %arg2[%c0_3, %7, %c0_4] : memref<1x16x64xf32, #tpu.memory_space<vmem>>, vector<1x16x64xf32>
    %9 = vector.shape_cast %8 : vector<1x16x64xf32> to vector<16x64xf32>
    %cst = arith.constant dense<0.000000e+00> : vector<16x16xf32>
    %10 = tpu.matmul %9, %1, %cst {dimension_numbers = #tpu.dot_dimension_numbers<[1], [1], [0], [0], [0, 0, 1, 0], [], []>} : vector<16x64xf32>, vector<16x64xf32>, vector<16x16xf32> -> vector<16x16xf32>
    %cst_5 = arith.constant 2.000000e+00 : f32
    %11 = vector.broadcast %cst_5 : f32 to vector<16x16xf32>
    %12 = arith.mulf %11, %10 : vector<16x16xf32>
    %c0_6 = arith.constant 0 : index
    %c0_7 = arith.constant 0 : index
    %13 = vector.load %arg8[%c0_6, %c0_7] : memref<1x16xf32, #tpu.memory_space<vmem>>, vector<1x16xf32>
    %14 = vector.broadcast %13 : vector<1x16xf32> to vector<16x16xf32>
    %15 = arith.subf %12, %14 : vector<16x16xf32>
    %16 = tpu.iota {dimensions = array<i32: 1>} : vector<16x16xi32>
    %cst_8 = arith.constant dense<0xFF800000> : vector<16xf32>
    %17 = vector.multi_reduction <maximumf>, %15, %cst_8 [1] : vector<16x16xf32> to vector<16xf32>
    %18 = vector.shape_cast %17 : vector<16xf32> to vector<16x1xf32>
    %19 = vector.broadcast %18 : vector<16x1xf32> to vector<16x16xf32>
    %20 = arith.cmpf oeq, %15, %19 : vector<16x16xf32>
    %c16_i32_9 = arith.constant 16 : i32
    %21 = vector.broadcast %c16_i32_9 : i32 to vector<16x16xi32>
    %22 = arith.select %20, %16, %21 : vector<16x16xi1>, vector<16x16xi32>
    %cst_10 = arith.constant dense<2147483647> : vector<16xi32>
    %23 = vector.multi_reduction <minsi>, %22, %cst_10 [1] : vector<16x16xi32> to vector<16xi32>
    %24 = vector.shape_cast %23 : vector<16xi32> to vector<16x1xi32>
    %25 = vector.broadcast %24 : vector<16x1xi32> to vector<16x16xi32>
    %26 = arith.cmpi eq, %16, %25 : vector<16x16xi32>
    %27 = arith.extui %26 : vector<16x16xi1> to vector<16x16xi32>
    %28 = arith.sitofp %27 : vector<16x16xi32> to vector<16x16xf32>
    %29 = arith.truncf %28 : vector<16x16xf32> to vector<16x16xbf16>
    %cst_11 = arith.constant -1.000000e+30 : f32
    %30 = vector.broadcast %cst_11 : f32 to vector<16x16xf32>
    %31 = arith.select %26, %30, %15 : vector<16x16xi1>, vector<16x16xf32>
    %cst_12 = arith.constant dense<0xFF800000> : vector<16xf32>
    %32 = vector.multi_reduction <maximumf>, %31, %cst_12 [1] : vector<16x16xf32> to vector<16xf32>
    %33 = vector.shape_cast %32 : vector<16xf32> to vector<16x1xf32>
    %34 = vector.broadcast %33 : vector<16x1xf32> to vector<16x16xf32>
    %35 = arith.cmpf oeq, %31, %34 : vector<16x16xf32>
    %c16_i32_13 = arith.constant 16 : i32
    %36 = vector.broadcast %c16_i32_13 : i32 to vector<16x16xi32>
    %37 = arith.select %35, %16, %36 : vector<16x16xi1>, vector<16x16xi32>
    %cst_14 = arith.constant dense<2147483647> : vector<16xi32>
    %38 = vector.multi_reduction <minsi>, %37, %cst_14 [1] : vector<16x16xi32> to vector<16xi32>
    %39 = vector.shape_cast %38 : vector<16xi32> to vector<16x1xi32>
    %40 = vector.broadcast %39 : vector<16x1xi32> to vector<16x16xi32>
    %41 = arith.cmpi eq, %16, %40 : vector<16x16xi32>
    %42 = arith.extui %41 : vector<16x16xi1> to vector<16x16xi32>
    %43 = arith.sitofp %42 : vector<16x16xi32> to vector<16x16xf32>
    %44 = arith.truncf %43 : vector<16x16xf32> to vector<16x16xbf16>
    %cst_15 = arith.constant -1.000000e+30 : f32
    %45 = vector.broadcast %cst_15 : f32 to vector<16x16xf32>
    %46 = arith.select %41, %45, %31 : vector<16x16xi1>, vector<16x16xf32>
    %cst_16 = arith.constant dense<0xFF800000> : vector<16xf32>
    %47 = vector.multi_reduction <maximumf>, %46, %cst_16 [1] : vector<16x16xf32> to vector<16xf32>
    %48 = vector.shape_cast %47 : vector<16xf32> to vector<16x1xf32>
    %49 = vector.broadcast %48 : vector<16x1xf32> to vector<16x16xf32>
    %50 = arith.cmpf oeq, %46, %49 : vector<16x16xf32>
    %c16_i32_17 = arith.constant 16 : i32
    %51 = vector.broadcast %c16_i32_17 : i32 to vector<16x16xi32>
    %52 = arith.select %50, %16, %51 : vector<16x16xi1>, vector<16x16xi32>
    %cst_18 = arith.constant dense<2147483647> : vector<16xi32>
    %53 = vector.multi_reduction <minsi>, %52, %cst_18 [1] : vector<16x16xi32> to vector<16xi32>
    %54 = vector.shape_cast %53 : vector<16xi32> to vector<16x1xi32>
    %55 = vector.broadcast %54 : vector<16x1xi32> to vector<16x16xi32>
    %56 = arith.cmpi eq, %16, %55 : vector<16x16xi32>
    %57 = arith.extui %56 : vector<16x16xi1> to vector<16x16xi32>
    %58 = arith.sitofp %57 : vector<16x16xi32> to vector<16x16xf32>
    %59 = arith.truncf %58 : vector<16x16xf32> to vector<16x16xbf16>
    %cst_19 = arith.constant -1.000000e+30 : f32
    %60 = vector.broadcast %cst_19 : f32 to vector<16x16xf32>
    %61 = arith.select %56, %60, %46 : vector<16x16xi1>, vector<16x16xf32>
    %cst_20 = arith.constant dense<0xFF800000> : vector<16xf32>
    %62 = vector.multi_reduction <maximumf>, %61, %cst_20 [1] : vector<16x16xf32> to vector<16xf32>
    %63 = vector.shape_cast %62 : vector<16xf32> to vector<16x1xf32>
    %64 = vector.broadcast %63 : vector<16x1xf32> to vector<16x16xf32>
    %65 = arith.cmpf oeq, %61, %64 : vector<16x16xf32>
    %c16_i32_21 = arith.constant 16 : i32
    %66 = vector.broadcast %c16_i32_21 : i32 to vector<16x16xi32>
    %67 = arith.select %65, %16, %66 : vector<16x16xi1>, vector<16x16xi32>
    %cst_22 = arith.constant dense<2147483647> : vector<16xi32>
    %68 = vector.multi_reduction <minsi>, %67, %cst_22 [1] : vector<16x16xi32> to vector<16xi32>
    %69 = vector.shape_cast %68 : vector<16xi32> to vector<16x1xi32>
    %70 = vector.broadcast %69 : vector<16x1xi32> to vector<16x16xi32>
    %71 = arith.cmpi eq, %16, %70 : vector<16x16xi32>
    %72 = arith.extui %71 : vector<16x16xi1> to vector<16x16xi32>
    %73 = arith.sitofp %72 : vector<16x16xi32> to vector<16x16xf32>
    %74 = arith.truncf %73 : vector<16x16xf32> to vector<16x16xbf16>
    %75 = tpu.concatenate %29, %44, %59, %74 in 0 : vector<16x16xbf16>, vector<16x16xbf16>, vector<16x16xbf16>, vector<16x16xbf16> -> vector<64x16xbf16>
    %c0_23 = arith.constant 0 : index
    %c0_24 = arith.constant 0 : index
    %76 = vector.load %arg6[%c0_23, %c0_24] : memref<16x64xbf16, #tpu.memory_space<vmem>>, vector<16x64xbf16>
    %cst_25 = arith.constant dense<0.000000e+00> : vector<64x64xf32>
    %77 = tpu.matmul %75, %76, %cst_25 {dimension_numbers = #tpu.dot_dimension_numbers<[1], [0], [0], [1], [0, 0, 1, 1], [], []>} : vector<64x16xbf16>, vector<16x64xbf16>, vector<64x64xf32> -> vector<64x64xf32>
    %78 = arith.index_cast %6 : i32 to index
    %c0_26 = arith.constant 0 : index
    %79 = vector.load %arg7[%78, %c0_26] : memref<16x64xf32, #tpu.memory_space<vmem>>, vector<16x64xf32>
    %c0_27 = arith.constant 0 : index
    %c0_28 = arith.constant 0 : index
    %80 = vector.load %arg4[%c0_27, %c0_28] : memref<1x64xf32, #tpu.memory_space<vmem>>, vector<1x64xf32>
    %81 = vector.broadcast %80 : vector<1x64xf32> to vector<16x64xf32>
    %82 = arith.addf %79, %81 : vector<16x64xf32>
    %83 = vector.extract_strided_slice %77 {offsets = [0, 0], sizes = [16, 64], strides = [1, 1]} : vector<64x64xf32> to vector<16x64xf32>
    %84 = arith.addf %83, %82 : vector<16x64xf32>
    %cst_29 = arith.constant 0.000000e+00 : f32
    %85 = vector.broadcast %cst_29 : f32 to vector<16x64xf32>
    %86 = arith.cmpf ogt, %84, %85 : vector<16x64xf32>
    %cst_30 = arith.constant 2.000000e-01 : f32
    %87 = vector.broadcast %cst_30 : f32 to vector<16x64xf32>
    %88 = arith.mulf %87, %84 : vector<16x64xf32>
    %89 = arith.select %86, %84, %88 : vector<16x64xi1>, vector<16x64xf32>
    %90 = vector.extract_strided_slice %77 {offsets = [16, 0], sizes = [16, 64], strides = [1, 1]} : vector<64x64xf32> to vector<16x64xf32>
    %91 = arith.addf %90, %82 : vector<16x64xf32>
    %cst_31 = arith.constant 0.000000e+00 : f32
    %92 = vector.broadcast %cst_31 : f32 to vector<16x64xf32>
    %93 = arith.cmpf ogt, %91, %92 : vector<16x64xf32>
    %cst_32 = arith.constant 2.000000e-01 : f32
    %94 = vector.broadcast %cst_32 : f32 to vector<16x64xf32>
    %95 = arith.mulf %94, %91 : vector<16x64xf32>
    %96 = arith.select %93, %91, %95 : vector<16x64xi1>, vector<16x64xf32>
    %97 = arith.maximumf %89, %96 : vector<16x64xf32>
    %98 = vector.extract_strided_slice %77 {offsets = [32, 0], sizes = [16, 64], strides = [1, 1]} : vector<64x64xf32> to vector<16x64xf32>
    %99 = arith.addf %98, %82 : vector<16x64xf32>
    %cst_33 = arith.constant 0.000000e+00 : f32
    %100 = vector.broadcast %cst_33 : f32 to vector<16x64xf32>
    %101 = arith.cmpf ogt, %99, %100 : vector<16x64xf32>
    %cst_34 = arith.constant 2.000000e-01 : f32
    %102 = vector.broadcast %cst_34 : f32 to vector<16x64xf32>
    %103 = arith.mulf %102, %99 : vector<16x64xf32>
    %104 = arith.select %101, %99, %103 : vector<16x64xi1>, vector<16x64xf32>
    %105 = arith.maximumf %97, %104 : vector<16x64xf32>
    %106 = vector.extract_strided_slice %77 {offsets = [48, 0], sizes = [16, 64], strides = [1, 1]} : vector<64x64xf32> to vector<16x64xf32>
    %107 = arith.addf %106, %82 : vector<16x64xf32>
    %cst_35 = arith.constant 0.000000e+00 : f32
    %108 = vector.broadcast %cst_35 : f32 to vector<16x64xf32>
    %109 = arith.cmpf ogt, %107, %108 : vector<16x64xf32>
    %cst_36 = arith.constant 2.000000e-01 : f32
    %110 = vector.broadcast %cst_36 : f32 to vector<16x64xf32>
    %111 = arith.mulf %110, %107 : vector<16x64xf32>
    %112 = arith.select %109, %107, %111 : vector<16x64xi1>, vector<16x64xf32>
    %113 = arith.maximumf %105, %112 : vector<16x64xf32>
    %c0_37 = arith.constant 0 : index
    %c0_38 = arith.constant 0 : index
    %c0_39 = arith.constant 0 : index
    %114 = vector.load %arg5[%c0_37, %c0_38, %c0_39] : memref<1x16x64xf32, #tpu.memory_space<vmem>>, vector<1x16x64xf32>
    %115 = vector.shape_cast %114 : vector<1x16x64xf32> to vector<16x64xf32>
    %116 = vector.shape_cast %113 : vector<16x64xf32> to vector<1x16x64xf32>
    tpu.vector_store %arg5[%c0_37, %c0_38, %c0_39], %116 {strides = array<i32>} : memref<1x16x64xf32, #tpu.memory_space<vmem>>, vector<1x16x64xf32>,
    return
  }
  func.func @transform_0(%arg0: i32, %arg1: i32) -> (i32, i32, i32) {
    %c0_i32 = arith.constant 0 : i32
    %c0_i32_0 = arith.constant 0 : i32
    %c0_i32_1 = arith.constant 0 : i32
    return %arg0, %c0_i32, %c0_i32_0 : i32, i32, i32
  }
  func.func @transform_1(%arg0: i32, %arg1: i32) -> (i32, i32) {
    %c0_i32 = arith.constant 0 : i32
    %c0_i32_0 = arith.constant 0 : i32
    %c0_i32_1 = arith.constant 0 : i32
    return %c0_i32, %c0_i32_0 : i32, i32
  }
  func.func @transform_2(%arg0: i32, %arg1: i32) -> (i32, i32) {
    %c0_i32 = arith.constant 0 : i32
    %c0_i32_0 = arith.constant 0 : i32
    %c0_i32_1 = arith.constant 0 : i32
    return %c0_i32, %c0_i32_0 : i32, i32
  }
  func.func @transform_3(%arg0: i32, %arg1: i32) -> (i32, i32, i32) {
    %c0_i32 = arith.constant 0 : i32
    %c0_i32_0 = arith.constant 0 : i32
    return %arg0, %arg1, %c0_i32 : i32, i32, i32
  }
}

module attributes {stable_mosaic.version = 11 : i64} {
  func.func @_conv5_pool_kernel(%arg0: i32, %arg1: i32, %arg2: memref<1x16x32xf32, #tpu.memory_space<vmem>>, %arg3: memref<1x16x32xf32, #tpu.memory_space<vmem>>, %arg4: memref<1x16x64xf32, #tpu.memory_space<vmem>>, %arg5: memref<1x16x64xf32, #tpu.memory_space<vmem>>, %arg6: memref<192x128xf32, #tpu.memory_space<vmem>>, %arg7: memref<1x128xf32, #tpu.memory_space<vmem>>, %arg8: memref<1x1x256xf32, #tpu.memory_space<vmem>>, %arg9: memref<1x128xf32, #tpu.memory_space<vmem>>, %arg10: memref<1x128xf32, #tpu.memory_space<vmem>>) attributes {dimension_semantics = [#tpu.dimension_semantics<parallel>, #tpu.dimension_semantics<arbitrary>], iteration_bounds = array<i64: 2, 1>, scalar_prefetch = 0 : i64, scratch_operands = 2 : i64, tpu.core_type = #tpu.core_type<tc>, window_params = [{transform_indices = @transform_0, window_bounds = array<i64: 1, 16, 32>}, {transform_indices = @transform_1, window_bounds = array<i64: 1, 16, 32>}, {transform_indices = @transform_2, window_bounds = array<i64: 1, 16, 64>}, {transform_indices = @transform_3, window_bounds = array<i64: 1, 16, 64>}, {pipeline_mode = #tpu.pipeline_mode<synchronous>, transform_indices = @transform_4, window_bounds = array<i64: 192, 128>}, {pipeline_mode = #tpu.pipeline_mode<synchronous>, transform_indices = @transform_5, window_bounds = array<i64: 1, 128>}, {transform_indices = @transform_6, window_bounds = array<i64: 1, 1, 256>}]} {
    %c0_i32 = arith.constant 0 : i32
    %0 = arith.cmpi eq, %arg1, %c0_i32 : i32
    %1 = arith.extui %0 : i1 to i32
    %c0_i32_0 = arith.constant 0 : i32
    %2 = arith.cmpi ne, %1, %c0_i32_0 : i32
    scf.if %2 {
      %cst_30 = arith.constant 0xFF800000 : f32
      %37 = vector.broadcast %cst_30 : f32 to vector<1x128xf32>
      %c0_31 = arith.constant 0 : index
      %c0_32 = arith.constant 0 : index
      %38 = vector.load %arg9[%c0_31, %c0_32] : memref<1x128xf32, #tpu.memory_space<vmem>>, vector<1x128xf32>
      tpu.vector_store %arg9[%c0_31, %c0_32], %37 {strides = array<i32>} : memref<1x128xf32, #tpu.memory_space<vmem>>, vector<1x128xf32>,
      %cst_33 = arith.constant 0.000000e+00 : f32
      %39 = vector.broadcast %cst_33 : f32 to vector<1x128xf32>
      %c0_34 = arith.constant 0 : index
      %c0_35 = arith.constant 0 : index
      %40 = vector.load %arg10[%c0_34, %c0_35] : memref<1x128xf32, #tpu.memory_space<vmem>>, vector<1x128xf32>
      tpu.vector_store %arg10[%c0_34, %c0_35], %39 {strides = array<i32>} : memref<1x128xf32, #tpu.memory_space<vmem>>, vector<1x128xf32>,
    } else {
    }
    %c0 = arith.constant 0 : index
    %c0_1 = arith.constant 0 : index
    %c0_2 = arith.constant 0 : index
    %3 = vector.load %arg2[%c0, %c0_1, %c0_2] : memref<1x16x32xf32, #tpu.memory_space<vmem>>, vector<1x16x32xf32>
    %4 = vector.shape_cast %3 : vector<1x16x32xf32> to vector<16x32xf32>
    %c0_3 = arith.constant 0 : index
    %c0_4 = arith.constant 0 : index
    %c0_5 = arith.constant 0 : index
    %5 = vector.load %arg3[%c0_3, %c0_4, %c0_5] : memref<1x16x32xf32, #tpu.memory_space<vmem>>, vector<1x16x32xf32>
    %6 = vector.shape_cast %5 : vector<1x16x32xf32> to vector<16x32xf32>
    %c0_6 = arith.constant 0 : index
    %c0_7 = arith.constant 0 : index
    %c0_8 = arith.constant 0 : index
    %7 = vector.load %arg4[%c0_6, %c0_7, %c0_8] : memref<1x16x64xf32, #tpu.memory_space<vmem>>, vector<1x16x64xf32>
    %8 = vector.shape_cast %7 : vector<1x16x64xf32> to vector<16x64xf32>
    %c0_9 = arith.constant 0 : index
    %c0_10 = arith.constant 0 : index
    %c0_11 = arith.constant 0 : index
    %9 = vector.load %arg5[%c0_9, %c0_10, %c0_11] : memref<1x16x64xf32, #tpu.memory_space<vmem>>, vector<1x16x64xf32>
    %10 = vector.shape_cast %9 : vector<1x16x64xf32> to vector<16x64xf32>
    %11 = tpu.concatenate %4, %6, %8, %10 in 1 : vector<16x32xf32>, vector<16x32xf32>, vector<16x64xf32>, vector<16x64xf32> -> vector<16x192xf32>
    %12 = arith.truncf %11 : vector<16x192xf32> to vector<16x192xbf16>
    %c0_12 = arith.constant 0 : index
    %c0_13 = arith.constant 0 : index
    %13 = vector.load %arg6[%c0_12, %c0_13] : memref<192x128xf32, #tpu.memory_space<vmem>>, vector<192x128xf32>
    %14 = arith.truncf %13 : vector<192x128xf32> to vector<192x128xbf16>
    %cst = arith.constant dense<0.000000e+00> : vector<16x128xf32>
    %15 = tpu.matmul %12, %14, %cst {dimension_numbers = #tpu.dot_dimension_numbers<[1], [0], [0], [1], [0, 0, 1, 1], [], []>} : vector<16x192xbf16>, vector<192x128xbf16>, vector<16x128xf32> -> vector<16x128xf32>
    %c0_14 = arith.constant 0 : index
    %c0_15 = arith.constant 0 : index
    %16 = vector.load %arg7[%c0_14, %c0_15] : memref<1x128xf32, #tpu.memory_space<vmem>>, vector<1x128xf32>
    %17 = vector.broadcast %16 : vector<1x128xf32> to vector<16x128xf32>
    %18 = arith.addf %15, %17 : vector<16x128xf32>
    %cst_16 = arith.constant 0.000000e+00 : f32
    %19 = vector.broadcast %cst_16 : f32 to vector<16x128xf32>
    %20 = arith.cmpf ogt, %18, %19 : vector<16x128xf32>
    %cst_17 = arith.constant 2.000000e-01 : f32
    %21 = vector.broadcast %cst_17 : f32 to vector<16x128xf32>
    %22 = arith.mulf %21, %18 : vector<16x128xf32>
    %23 = arith.select %20, %18, %22 : vector<16x128xi1>, vector<16x128xf32>
    %c0_18 = arith.constant 0 : index
    %c0_19 = arith.constant 0 : index
    %24 = vector.load %arg9[%c0_18, %c0_19] : memref<1x128xf32, #tpu.memory_space<vmem>>, vector<1x128xf32>
    %cst_20 = arith.constant dense<0xFF800000> : vector<128xf32>
    %25 = vector.multi_reduction <maximumf>, %23, %cst_20 [0] : vector<16x128xf32> to vector<128xf32>
    %26 = vector.shape_cast %25 : vector<128xf32> to vector<1x128xf32>
    %27 = arith.maximumf %24, %26 : vector<1x128xf32>
    %c0_21 = arith.constant 0 : index
    %c0_22 = arith.constant 0 : index
    %28 = vector.load %arg9[%c0_21, %c0_22] : memref<1x128xf32, #tpu.memory_space<vmem>>, vector<1x128xf32>
    tpu.vector_store %arg9[%c0_21, %c0_22], %27 {strides = array<i32>} : memref<1x128xf32, #tpu.memory_space<vmem>>, vector<1x128xf32>,
    %c0_23 = arith.constant 0 : index
    %c0_24 = arith.constant 0 : index
    %29 = vector.load %arg10[%c0_23, %c0_24] : memref<1x128xf32, #tpu.memory_space<vmem>>, vector<1x128xf32>
    %cst_25 = arith.constant dense<0.000000e+00> : vector<128xf32>
    %30 = vector.multi_reduction <add>, %23, %cst_25 [0] : vector<16x128xf32> to vector<128xf32>
    %31 = vector.shape_cast %30 : vector<128xf32> to vector<1x128xf32>
    %32 = arith.addf %29, %31 : vector<1x128xf32>
    %c0_26 = arith.constant 0 : index
    %c0_27 = arith.constant 0 : index
    %33 = vector.load %arg10[%c0_26, %c0_27] : memref<1x128xf32, #tpu.memory_space<vmem>>, vector<1x128xf32>
    tpu.vector_store %arg10[%c0_26, %c0_27], %32 {strides = array<i32>} : memref<1x128xf32, #tpu.memory_space<vmem>>, vector<1x128xf32>,
    %c0_i32_28 = arith.constant 0 : i32
    %34 = arith.cmpi eq, %arg1, %c0_i32_28 : i32
    %35 = arith.extui %34 : i1 to i32
    %c0_i32_29 = arith.constant 0 : i32
    %36 = arith.cmpi ne, %35, %c0_i32_29 : i32
    scf.if %36 {
      %c0_30 = arith.constant 0 : index
      %c0_31 = arith.constant 0 : index
      %37 = vector.load %arg9[%c0_30, %c0_31] : memref<1x128xf32, #tpu.memory_space<vmem>>, vector<1x128xf32>
      %c0_32 = arith.constant 0 : index
      %c0_33 = arith.constant 0 : index
      %38 = vector.load %arg10[%c0_32, %c0_33] : memref<1x128xf32, #tpu.memory_space<vmem>>, vector<1x128xf32>
      %cst_34 = arith.constant 6.250000e-02 : f32
      %39 = vector.broadcast %cst_34 : f32 to vector<1x128xf32>
      %40 = arith.mulf %38, %39 : vector<1x128xf32>
      %41 = tpu.concatenate %37, %40 in 1 : vector<1x128xf32>, vector<1x128xf32> -> vector<1x256xf32>
      %c0_35 = arith.constant 0 : index
      %c0_36 = arith.constant 0 : index
      %c0_37 = arith.constant 0 : index
      %42 = vector.load %arg8[%c0_35, %c0_36, %c0_37] : memref<1x1x256xf32, #tpu.memory_space<vmem>>, vector<1x1x256xf32>
      %43 = vector.shape_cast %42 : vector<1x1x256xf32> to vector<1x256xf32>
      %44 = vector.shape_cast %41 : vector<1x256xf32> to vector<1x1x256xf32>
      tpu.vector_store %arg8[%c0_35, %c0_36, %c0_37], %44 {strides = array<i32>} : memref<1x1x256xf32, #tpu.memory_space<vmem>>, vector<1x1x256xf32>,
    } else {
    }
    return
  }
  func.func @transform_0(%arg0: i32, %arg1: i32) -> (i32, i32, i32) {
    %c0_i32 = arith.constant 0 : i32
    %c0_i32_0 = arith.constant 0 : i32
    return %arg0, %arg1, %c0_i32 : i32, i32, i32
  }
  func.func @transform_1(%arg0: i32, %arg1: i32) -> (i32, i32, i32) {
    %c0_i32 = arith.constant 0 : i32
    %c0_i32_0 = arith.constant 0 : i32
    return %arg0, %arg1, %c0_i32 : i32, i32, i32
  }
  func.func @transform_2(%arg0: i32, %arg1: i32) -> (i32, i32, i32) {
    %c0_i32 = arith.constant 0 : i32
    %c0_i32_0 = arith.constant 0 : i32
    return %arg0, %arg1, %c0_i32 : i32, i32, i32
  }
  func.func @transform_3(%arg0: i32, %arg1: i32) -> (i32, i32, i32) {
    %c0_i32 = arith.constant 0 : i32
    %c0_i32_0 = arith.constant 0 : i32
    return %arg0, %arg1, %c0_i32 : i32, i32, i32
  }
  func.func @transform_4(%arg0: i32, %arg1: i32) -> (i32, i32) {
    %c0_i32 = arith.constant 0 : i32
    %c0_i32_0 = arith.constant 0 : i32
    %c0_i32_1 = arith.constant 0 : i32
    return %c0_i32, %c0_i32_0 : i32, i32
  }
  func.func @transform_5(%arg0: i32, %arg1: i32) -> (i32, i32) {
    %c0_i32 = arith.constant 0 : i32
    %c0_i32_0 = arith.constant 0 : i32
    %c0_i32_1 = arith.constant 0 : i32
    return %c0_i32, %c0_i32_0 : i32, i32
  }
  func.func @transform_6(%arg0: i32, %arg1: i32) -> (i32, i32, i32) {
    %c0_i32 = arith.constant 0 : i32
    %c0_i32_0 = arith.constant 0 : i32
    %c0_i32_1 = arith.constant 0 : i32
    return %arg0, %c0_i32, %c0_i32_0 : i32, i32, i32
  }
}

module attributes {stable_mosaic.version = 11 : i64} {
  func.func @_heads_kernel(%arg0: memref<2x256xf32, #tpu.memory_space<vmem>>, %arg1: memref<256x128xf32, #tpu.memory_space<vmem>>, %arg2: memref<1x128xf32, #tpu.memory_space<vmem>>, %arg3: memref<1x128xf32, #tpu.memory_space<vmem>>, %arg4: memref<128x64xf32, #tpu.memory_space<vmem>>, %arg5: memref<1x64xf32, #tpu.memory_space<vmem>>, %arg6: memref<1x64xf32, #tpu.memory_space<vmem>>, %arg7: memref<64x10xf32, #tpu.memory_space<vmem>>, %arg8: memref<1x10xf32, #tpu.memory_space<vmem>>, %arg9: memref<256x512xf32, #tpu.memory_space<vmem>>, %arg10: memref<1x512xf32, #tpu.memory_space<vmem>>, %arg11: memref<1x512xf32, #tpu.memory_space<vmem>>, %arg12: memref<512x256xf32, #tpu.memory_space<vmem>>, %arg13: memref<1x256xf32, #tpu.memory_space<vmem>>, %arg14: memref<1x256xf32, #tpu.memory_space<vmem>>, %arg15: memref<256x10xf32, #tpu.memory_space<vmem>>, %arg16: memref<1x10xf32, #tpu.memory_space<vmem>>, %arg17: memref<2x10xf32, #tpu.memory_space<vmem>>, %arg18: memref<2x10xf32, #tpu.memory_space<vmem>>) attributes {dimension_semantics = [], scalar_prefetch = 0 : i64, scratch_operands = 0 : i64, tpu.core_type = #tpu.core_type<tc>} {
    %c0 = arith.constant 0 : index
    %c0_0 = arith.constant 0 : index
    %0 = vector.load %arg0[%c0, %c0_0] : memref<2x256xf32, #tpu.memory_space<vmem>>, vector<2x256xf32>
    %c0_1 = arith.constant 0 : index
    %c0_2 = arith.constant 0 : index
    %1 = vector.load %arg1[%c0_1, %c0_2] : memref<256x128xf32, #tpu.memory_space<vmem>>, vector<256x128xf32>
    %cst = arith.constant dense<0.000000e+00> : vector<2x128xf32>
    %2 = tpu.matmul %0, %1, %cst {dimension_numbers = #tpu.dot_dimension_numbers<[1], [0], [0], [1], [0, 0, 1, 1], [], []>} : vector<2x256xf32>, vector<256x128xf32>, vector<2x128xf32> -> vector<2x128xf32>
    %c0_3 = arith.constant 0 : index
    %c0_4 = arith.constant 0 : index
    %3 = vector.load %arg2[%c0_3, %c0_4] : memref<1x128xf32, #tpu.memory_space<vmem>>, vector<1x128xf32>
    %4 = vector.broadcast %3 : vector<1x128xf32> to vector<2x128xf32>
    %5 = arith.mulf %2, %4 : vector<2x128xf32>
    %c0_5 = arith.constant 0 : index
    %c0_6 = arith.constant 0 : index
    %6 = vector.load %arg3[%c0_5, %c0_6] : memref<1x128xf32, #tpu.memory_space<vmem>>, vector<1x128xf32>
    %7 = vector.broadcast %6 : vector<1x128xf32> to vector<2x128xf32>
    %8 = arith.addf %5, %7 : vector<2x128xf32>
    %cst_7 = arith.constant 0.000000e+00 : f32
    %9 = vector.broadcast %cst_7 : f32 to vector<2x128xf32>
    %10 = arith.cmpf ogt, %8, %9 : vector<2x128xf32>
    %cst_8 = arith.constant 2.000000e-01 : f32
    %11 = vector.broadcast %cst_8 : f32 to vector<2x128xf32>
    %12 = arith.mulf %11, %8 : vector<2x128xf32>
    %13 = arith.select %10, %8, %12 : vector<2x128xi1>, vector<2x128xf32>
    %c0_9 = arith.constant 0 : index
    %c0_10 = arith.constant 0 : index
    %14 = vector.load %arg4[%c0_9, %c0_10] : memref<128x64xf32, #tpu.memory_space<vmem>>, vector<128x64xf32>
    %cst_11 = arith.constant dense<0.000000e+00> : vector<2x64xf32>
    %15 = tpu.matmul %13, %14, %cst_11 {dimension_numbers = #tpu.dot_dimension_numbers<[1], [0], [0], [1], [0, 0, 1, 1], [], []>} : vector<2x128xf32>, vector<128x64xf32>, vector<2x64xf32> -> vector<2x64xf32>
    %c0_12 = arith.constant 0 : index
    %c0_13 = arith.constant 0 : index
    %16 = vector.load %arg5[%c0_12, %c0_13] : memref<1x64xf32, #tpu.memory_space<vmem>>, vector<1x64xf32>
    %17 = vector.broadcast %16 : vector<1x64xf32> to vector<2x64xf32>
    %18 = arith.mulf %15, %17 : vector<2x64xf32>
    %c0_14 = arith.constant 0 : index
    %c0_15 = arith.constant 0 : index
    %19 = vector.load %arg6[%c0_14, %c0_15] : memref<1x64xf32, #tpu.memory_space<vmem>>, vector<1x64xf32>
    %20 = vector.broadcast %19 : vector<1x64xf32> to vector<2x64xf32>
    %21 = arith.addf %18, %20 : vector<2x64xf32>
    %cst_16 = arith.constant 0.000000e+00 : f32
    %22 = vector.broadcast %cst_16 : f32 to vector<2x64xf32>
    %23 = arith.cmpf ogt, %21, %22 : vector<2x64xf32>
    %cst_17 = arith.constant 2.000000e-01 : f32
    %24 = vector.broadcast %cst_17 : f32 to vector<2x64xf32>
    %25 = arith.mulf %24, %21 : vector<2x64xf32>
    %26 = arith.select %23, %21, %25 : vector<2x64xi1>, vector<2x64xf32>
    %c0_18 = arith.constant 0 : index
    %c0_19 = arith.constant 0 : index
    %27 = vector.load %arg7[%c0_18, %c0_19] : memref<64x10xf32, #tpu.memory_space<vmem>>, vector<64x10xf32>
    %cst_20 = arith.constant dense<0.000000e+00> : vector<2x10xf32>
    %28 = tpu.matmul %26, %27, %cst_20 {dimension_numbers = #tpu.dot_dimension_numbers<[1], [0], [0], [1], [0, 0, 1, 1], [], []>} : vector<2x64xf32>, vector<64x10xf32>, vector<2x10xf32> -> vector<2x10xf32>
    %c0_21 = arith.constant 0 : index
    %c0_22 = arith.constant 0 : index
    %29 = vector.load %arg8[%c0_21, %c0_22] : memref<1x10xf32, #tpu.memory_space<vmem>>, vector<1x10xf32>
    %30 = vector.broadcast %29 : vector<1x10xf32> to vector<2x10xf32>
    %31 = arith.addf %28, %30 : vector<2x10xf32>
    %c0_23 = arith.constant 0 : index
    %c0_24 = arith.constant 0 : index
    %32 = vector.load %arg17[%c0_23, %c0_24] : memref<2x10xf32, #tpu.memory_space<vmem>>, vector<2x10xf32>
    tpu.vector_store %arg17[%c0_23, %c0_24], %31 {strides = array<i32>} : memref<2x10xf32, #tpu.memory_space<vmem>>, vector<2x10xf32>,
    %c0_25 = arith.constant 0 : index
    %c0_26 = arith.constant 0 : index
    %33 = vector.load %arg9[%c0_25, %c0_26] : memref<256x512xf32, #tpu.memory_space<vmem>>, vector<256x512xf32>
    %cst_27 = arith.constant dense<0.000000e+00> : vector<2x512xf32>
    %34 = tpu.matmul %0, %33, %cst_27 {dimension_numbers = #tpu.dot_dimension_numbers<[1], [0], [0], [1], [0, 0, 1, 1], [], []>} : vector<2x256xf32>, vector<256x512xf32>, vector<2x512xf32> -> vector<2x512xf32>
    %c0_28 = arith.constant 0 : index
    %c0_29 = arith.constant 0 : index
    %35 = vector.load %arg10[%c0_28, %c0_29] : memref<1x512xf32, #tpu.memory_space<vmem>>, vector<1x512xf32>
    %36 = vector.broadcast %35 : vector<1x512xf32> to vector<2x512xf32>
    %37 = arith.mulf %34, %36 : vector<2x512xf32>
    %c0_30 = arith.constant 0 : index
    %c0_31 = arith.constant 0 : index
    %38 = vector.load %arg11[%c0_30, %c0_31] : memref<1x512xf32, #tpu.memory_space<vmem>>, vector<1x512xf32>
    %39 = vector.broadcast %38 : vector<1x512xf32> to vector<2x512xf32>
    %40 = arith.addf %37, %39 : vector<2x512xf32>
    %cst_32 = arith.constant 0.000000e+00 : f32
    %41 = vector.broadcast %cst_32 : f32 to vector<2x512xf32>
    %42 = arith.cmpf ogt, %40, %41 : vector<2x512xf32>
    %cst_33 = arith.constant 2.000000e-01 : f32
    %43 = vector.broadcast %cst_33 : f32 to vector<2x512xf32>
    %44 = arith.mulf %43, %40 : vector<2x512xf32>
    %45 = arith.select %42, %40, %44 : vector<2x512xi1>, vector<2x512xf32>
    %c0_34 = arith.constant 0 : index
    %c0_35 = arith.constant 0 : index
    %46 = vector.load %arg12[%c0_34, %c0_35] : memref<512x256xf32, #tpu.memory_space<vmem>>, vector<512x256xf32>
    %cst_36 = arith.constant dense<0.000000e+00> : vector<2x256xf32>
    %47 = tpu.matmul %45, %46, %cst_36 {dimension_numbers = #tpu.dot_dimension_numbers<[1], [0], [0], [1], [0, 0, 1, 1], [], []>} : vector<2x512xf32>, vector<512x256xf32>, vector<2x256xf32> -> vector<2x256xf32>
    %c0_37 = arith.constant 0 : index
    %c0_38 = arith.constant 0 : index
    %48 = vector.load %arg13[%c0_37, %c0_38] : memref<1x256xf32, #tpu.memory_space<vmem>>, vector<1x256xf32>
    %49 = vector.broadcast %48 : vector<1x256xf32> to vector<2x256xf32>
    %50 = arith.mulf %47, %49 : vector<2x256xf32>
    %c0_39 = arith.constant 0 : index
    %c0_40 = arith.constant 0 : index
    %51 = vector.load %arg14[%c0_39, %c0_40] : memref<1x256xf32, #tpu.memory_space<vmem>>, vector<1x256xf32>
    %52 = vector.broadcast %51 : vector<1x256xf32> to vector<2x256xf32>
    %53 = arith.addf %50, %52 : vector<2x256xf32>
    %cst_41 = arith.constant 0.000000e+00 : f32
    %54 = vector.broadcast %cst_41 : f32 to vector<2x256xf32>
    %55 = arith.cmpf ogt, %53, %54 : vector<2x256xf32>
    %cst_42 = arith.constant 2.000000e-01 : f32
    %56 = vector.broadcast %cst_42 : f32 to vector<2x256xf32>
    %57 = arith.mulf %56, %53 : vector<2x256xf32>
    %58 = arith.select %55, %53, %57 : vector<2x256xi1>, vector<2x256xf32>
    %c0_43 = arith.constant 0 : index
    %c0_44 = arith.constant 0 : index
    %59 = vector.load %arg15[%c0_43, %c0_44] : memref<256x10xf32, #tpu.memory_space<vmem>>, vector<256x10xf32>
    %cst_45 = arith.constant dense<0.000000e+00> : vector<2x10xf32>
    %60 = tpu.matmul %58, %59, %cst_45 {dimension_numbers = #tpu.dot_dimension_numbers<[1], [0], [0], [1], [0, 0, 1, 1], [], []>} : vector<2x256xf32>, vector<256x10xf32>, vector<2x10xf32> -> vector<2x10xf32>
    %c0_46 = arith.constant 0 : index
    %c0_47 = arith.constant 0 : index
    %61 = vector.load %arg16[%c0_46, %c0_47] : memref<1x10xf32, #tpu.memory_space<vmem>>, vector<1x10xf32>
    %62 = vector.broadcast %61 : vector<1x10xf32> to vector<2x10xf32>
    %63 = arith.addf %60, %62 : vector<2x10xf32>
    %c0_48 = arith.constant 0 : index
    %c0_49 = arith.constant 0 : index
    %64 = vector.load %arg18[%c0_48, %c0_49] : memref<2x10xf32, #tpu.memory_space<vmem>>, vector<2x10xf32>
    tpu.vector_store %arg18[%c0_48, %c0_49], %63 {strides = array<i32>} : memref<2x10xf32, #tpu.memory_space<vmem>>, vector<2x10xf32>,
    return
  }
}

</mosaic_0001>

<llo_original>
// kernel: forward.7
$region0: #{forward.7}
  #allocation0 [shape = 'u32[]', space=smem, size = 0x4, offset = 0x4, fixed_abs, tag = 'smem constant byte address 0x4 - core index']
  #allocation1 [shape = 'u32[144,128]{1,0:T(1,128)}', space=vmem, size = 0x12000, scoped, tag = 'internal scratch']
  #allocation2 [shape = 'bf16[16,32]{1,0:T(16,128)(2,1)}', space=vmem, size = 0x1000, scoped, tag = 'scratch operand']
  #allocation3 [shape = 'f32[16,32]{1,0:T(8,128)}', space=vmem, size = 0x2000, scoped, tag = 'scratch operand']
  #allocation4 [shape = 'f32[1,16]{1,0:T(1,128)}', space=vmem, size = 0x200, scoped, tag = 'scratch operand']
  %s0 = inlined_call_operand.vmem [shape: f32[2,16,32], index: 0, kind: input, shape index: {}]
  %s1 = inlined_call_operand.vmem [shape: f32[32,64], index: 1, kind: input, shape index: {}]
  %s2 = inlined_call_operand.vmem [shape: f32[1,32], index: 2, kind: input, shape index: {}]
  %s3 = inlined_call_operand.vmem [shape: f32[2,16,32], index: 3, kind: output, shape index: {}]
  %s4 = sld [smem:[#allocation0]]
  $region49: #{forward.7} parent=0
    _
  %s6 = ssub.s32 1, %s4
  %s7 = scalar_select 0, %s6, %s4
  loop: start=0, step=1, limit=4
  $region2: #{forward.7} parent=0 // loop_pre_header
    _
  $region3: #{forward.7} parent=0 // loop_header
    %s9 = sphi 0, %s13
    %p10 = scmp.ge.s32.totalorder %s9, 4
    %s16 = sphi 0, %s28
    %s17 = sphi 0, %s24
    %s18 = sphi 0, %s16
    %s19 = sphi 0, %s17
    %s20 = sphi 0, %s18
    %s21 = sphi 0, %s19
    %s31 = sphi 0, %s33
    %s34 = sphi 0, %s31
    %s35 = sphi 0, %s34
    %s51 = sphi 0, %s35
    %s55 = sphi 0, %s55
    %s57 = sphi 0, %s55
    %s58 = sphi 0, %s57
    %s72 = sphi 0, %s58
    %s76 = sphi 0, %s76
    %s78 = sphi 0, %s76
    %s79 = sphi 0, %s78
    %s93 = sphi 0, %s79
    %s101 = sphi 0, %s103
    %s104 = sphi 0, %s101
    %s105 = sphi 0, %s104
    %s121 = sphi 0, %s105
  $region4: #{forward.7} parent=0 // loop_header_branch
    %12 = sbr.rel (%p10) target = $region8
  $region5: #{forward.7} parent=0 // loop_body
    %s14 = ssub.s32 %s9, 1
    %s15 = ssub.s32 %s9, 2
    %s22 = sadd.s32 1, %s17
    %p23 = scmp.ge.s32.totalorder %s22, 1
    %s24 = scalar_select %p23, 0, %s22
    %s25 = sadd.s32 1, %s16
    %s26 = scalar_select %p23, %s25, %s16
    %p27 = scmp.ge.s32.totalorder %s26, 2
    %s28 = scalar_select %p27, 0, %s26
    %s29 = ssub.s32 %s16, %s28
    %p30 = scmp.eq.s32.totalorder %s29, 0
    %s32 = sadd.s32 %s31, 1
    %s33 = scalar_select %p30, %s31, %s32
    %p36 = pneg %p30
    %p37 = scmp.eq.s32.totalorder %s9, 1
    %p38 = por %p36, %p37
    %p39 = scmp.ne.s32.totalorder %s31, %s34
    %p40 = scmp.eq.s32.totalorder %s9, 0
    %p41 = por %p39, %p40
    %p42 = scmp.ne.s32.totalorder %s31, %s34
    %p43 = scmp.eq.s32.totalorder %s14, 1
    %p44 = por %p42, %p43
    %p45 = scmp.ne.s32.totalorder %s34, %s35
    %p46 = scmp.eq.s32.totalorder %s14, 0
    %p47 = por %p45, %p46
    %p48 = scmp.ne.s32.totalorder %s34, %s35
    %p49 = scmp.eq.s32.totalorder %s15, 1
    %p50 = por %p48, %p49
    %p52 = scmp.ne.s32.totalorder %s35, %s51
    %p53 = scmp.eq.s32.totalorder %s15, 0
    %p54 = por %p52, %p53
    %s56 = sadd.s32 %s55, 1
    %p59 = scmp.eq.s32.totalorder %s9, 1
    %p60 = scmp.ne.s32.totalorder %s55, %s57
    %p61 = scmp.eq.s32.totalorder %s9, 0
    %p62 = por %p60, %p61
    %p63 = scmp.ne.s32.totalorder %s55, %s57
    %p64 = scmp.eq.s32.totalorder %s14, 1
    %p65 = por %p63, %p64
    %p66 = scmp.ne.s32.totalorder %s57, %s58
    %p67 = scmp.eq.s32.totalorder %s14, 0
    %p68 = por %p66, %p67
    %p69 = scmp.ne.s32.totalorder %s57, %s58
    %p70 = scmp.eq.s32.totalorder %s15, 1
    %p71 = por %p69, %p70
    %p73 = scmp.ne.s32.totalorder %s58, %s72
    %p74 = scmp.eq.s32.totalorder %s15, 0
    %p75 = por %p73, %p74
    %s77 = sadd.s32 %s76, 1
    %p80 = scmp.eq.s32.totalorder %s9, 1
    %p81 = scmp.ne.s32.totalorder %s76, %s78
    %p82 = scmp.eq.s32.totalorder %s9, 0
    %p83 = por %p81, %p82
    %p84 = scmp.ne.s32.totalorder %s76, %s78
    %p85 = scmp.eq.s32.totalorder %s14, 1
    %p86 = por %p84, %p85
    %p87 = scmp.ne.s32.totalorder %s78, %s79
    %p88 = scmp.eq.s32.totalorder %s14, 0
    %p89 = por %p87, %p88
    %p90 = scmp.ne.s32.totalorder %s78, %s79
    %p91 = scmp.eq.s32.totalorder %s15, 1
    %p92 = por %p90, %p91
    %p94 = scmp.ne.s32.totalorder %s79, %s93
    %p95 = scmp.eq.s32.totalorder %s15, 0
    %p96 = por %p94, %p95
    %s97 = ssub.s32 %s16, %s28
    %s98 = ssub.s32 %s17, %s24
    %s99 = sor.u32 %s97, %s98
    %p100 = scmp.eq.s32.totalorder %s99, 0
    %s102 = sadd.s32 %s101, 1
    %s103 = scalar_select %p100, %s101, %s102
    %p106 = pneg %p100
    %p107 = scmp.eq.s32.totalorder %s9, 1
    %p108 = por %p106, %p107
    %p109 = scmp.ne.s32.totalorder %s101, %s104
    %p110 = scmp.eq.s32.totalorder %s9, 0
    %p111 = por %p109, %p110
    %p112 = scmp.ne.s32.totalorder %s101, %s104
    %p113 = scmp.eq.s32.totalorder %s14, 1
    %p114 = por %p112, %p113
    %p115 = scmp.ne.s32.totalorder %s104, %s105
    %p116 = scmp.eq.s32.totalorder %s14, 0
    %p117 = por %p115, %p116
    %p118 = scmp.ne.s32.totalorder %s104, %s105
    %p119 = scmp.eq.s32.totalorder %s15, 1
    %p120 = por %p118, %p119
    %p122 = scmp.ne.s32.totalorder %s105, %s121
    %p123 = scmp.eq.s32.totalorder %s15, 0
    %p124 = por %p122, %p123
    %p125 = scmp.le.s32.totalorder 1, %s9
    %p126 = scmp.lt.s32.totalorder %s9, 3
    %p127 = pnand %p125, %p126
    %p128 = pneg %p127
    // Predicated region
    $region9: #{forward.7} parent=5 // pred_check
      _
    $region10: #{forward.7} parent=5 // pred_check_branch
      %130 = sbr.rel (%p127) target = $region12
    $region11: #{forward.7} parent=5 // pred_region
      %s131 = ssub.s32 %s9, 1
      // Predicated region
      $region13: #{forward.7} parent=11 // pred_check
        %p132 = pneg %p68
      $region14: #{forward.7} parent=11 // pred_check_branch
        %134 = sbr.rel (%p132) target = $region16
      $region15: #{forward.7} parent=11 // pred_region
        _
      $region16: #{forward.7} parent=11 // pred_fallthru
        _
      // Predicated region
      $region17: #{forward.7} parent=11 // pred_check
        %p135 = pneg %p89
      $region18: #{forward.7} parent=11 // pred_check_branch
        %137 = sbr.rel (%p135) target = $region20
      $region19: #{forward.7} parent=11 // pred_region
        _
      $region20: #{forward.7} parent=11 // pred_fallthru
        _
    $region12: #{forward.7} parent=5 // pred_fallthru
      _
    %p138 = scmp.lt.s32.totalorder %s9, 2
    // Predicated region
    $region21: #{forward.7} parent=5 // pred_check
      %p139 = pneg %p138
    $region22: #{forward.7} parent=5 // pred_check_branch
      %141 = sbr.rel (%p139) target = $region24
    $region23: #{forward.7} parent=5 // pred_region
      // Predicated region
      $region25: #{forward.7} parent=23 // pred_check
        %p142 = pneg %p41
      $region26: #{forward.7} parent=23 // pred_check_branch
        %144 = sbr.rel (%p142) target = $region28
      $region27: #{forward.7} parent=23 // pred_region
        %p145 = scmp.lt.s32.totalorder %s16, 1
        %s146 = scalar_select %p145, %s16, 1
        %s147 = smul.addr %s146, 2
        %s148 = smul.addr %s147, 8
        %s149 = scalar_lea.vmem %s0, %s148
      $region28: #{forward.7} parent=23 // pred_fallthru
        _
    $region24: #{forward.7} parent=5 // pred_fallthru
      _
    %p150 = scmp.le.s32.totalorder 1, %s9
    %p151 = scmp.lt.s32.totalorder %s9, 3
    %p152 = pnand %p150, %p151
    %p153 = pneg %p152
    // Predicated region
    $region29: #{forward.7} parent=5 // pred_check
      _
    $region30: #{forward.7} parent=5 // pred_check_branch
      %155 = sbr.rel (%p152) target = $region32
    $region31: #{forward.7} parent=5 // pred_region
      %s156 = ssub.s32 %s9, 1
      %p157 = scmp.lt.s32.totalorder %s18, 1
      %s158 = scalar_select %p157, %s18, 1
      %s159 = smul.addr %s158, 2
      %s160 = smul.addr %s159, 8
      %s161 = scalar_lea.vmem %s0, %s160
      %p162 = pneg %p47
      %p163 = pneg %p44
      %p164 = pneg %p68
      %p165 = pneg %p65
      %p166 = pneg %p89
      %p167 = pneg %p86
      %p168 = pneg %p117
      %p169 = pneg %p114
      %s170 = smul.u32 2, %s19
      %p171 = scmp.lt.s32.totalorder %s18, 1
      %s172 = scalar_select %p171, %s18, 1
      %p173 = scmp.lt.s32.totalorder %s170, 1
      %s174 = scalar_select %p173, %s170, 1
      %s175 = smul.addr %s172, 2
      %s176 = sadd.s32 %s174, %s175
      %s177 = smul.addr %s176, 8
      %s178 = scalar_lea.vmem %s3, %s177
      %p179 = scmp.lt.s32.totalorder %s18, 1
      %s180 = scalar_select %p179, %s18, 1
      %s181 = smul.addr %s180, 2
      %s182 = smul.addr %s181, 8
      %s183 = scalar_lea.vmem %s0, %s182
      %s184 = smul.u32 2, %s19
      %p185 = scmp.lt.s32.totalorder %s18, 1
      %s186 = scalar_select %p185, %s18, 1
      %p187 = scmp.lt.s32.totalorder %s184, 1
      %s188 = scalar_select %p187, %s184, 1
      %s189 = smul.addr %s186, 2
      %s190 = sadd.s32 %s188, %s189
      %s191 = smul.addr %s190, 8
      %s192 = scalar_lea.vmem %s3, %s191
      %s193 = smul.u32 2, %s19
      %v195 = vld [vmem:[%s183] sm:$0xff]
      %v196 = vld [vmem:[%s183 + $0x8] sm:$0xff]
      %p197 = scmp.eq.s32.totalorder %s19, 0
      // Predicated region
      $region33: #{forward.7} parent=31 // pred_check
        %p198 = pneg %p197
      $region34: #{forward.7} parent=31 // pred_check_branch
        %200 = sbr.rel (%p198) target = $region36
      $region35: #{forward.7} parent=31 // pred_region
        %v201 = vpack.c.bf16 %v196, %v195
        %v202 = vld [vmem:[%s1] sm:$0xff]
        %v203 = vld [vmem:[%s1 + $0x8] sm:$0xff]
        %v204 = vld [vmem:[%s1 + $0x10] sm:$0xff]
        %v205 = vld [vmem:[%s1 + $0x18] sm:$0xff]
        %v206 = vpack.c.bf16 %v203, %v202
        %v207 = vpack.c.bf16 %v205, %v204
        %vm208 = vcmask 261120
        %v210 = vsel %vm208, %v201, 0
        %212 = vmatprep.subr.bf16.mxu0 0
        %213 = vmatpush1.bf16.msra.mxu0 %v206
        %214 = vmatprep.subr.bf16.mxu0 0
        %215 = vmatpush1.bf16.msra.mxu0 %v207
        %216 = vmatprep.subr.bf16.mxu0 0
        %217 = vmatpush1.bf16.msra.mxu0 0
        %218 = vmatprep.subr.bf16.mxu0 0
        %219 = vmatpush1.bf16.msra.mxu0 0
        %220 = vmatprep.subr.bf16.mxu0 0
        %221 = vmatpush1.bf16.msra.mxu0 0
        %222 = vmatprep.subr.bf16.mxu0 0
        %223 = vmatpush1.bf16.msra.mxu0 0
        %224 = vmatprep.subr.bf16.mxu0 0
        %225 = vmatpush1.bf16.msra.mxu0 0
        %226 = vmatprep.subr.bf16.mxu0 0
        %227 = vmatpush1.bf16.msra.mxu0 0
        %228 = vmatprep.subr.bf16.mxu0 0
        %229 = vmatpush1.bf16.msra.mxu0 0
        %230 = vmatprep.subr.bf16.mxu0 0
        %231 = vmatpush1.bf16.msra.mxu0 0
        %232 = vmatprep.subr.bf16.mxu0 0
        %233 = vmatpush1.bf16.msra.mxu0 0
        %234 = vmatprep.subr.bf16.mxu0 0
        %235 = vmatpush1.bf16.msra.mxu0 0
        %236 = vmatprep.subr.bf16.mxu0 0
        %237 = vmatpush1.bf16.msra.mxu0 0
        %238 = vmatprep.subr.bf16.mxu0 0
        %239 = vmatpush1.bf16.msra.mxu0 0
        %240 = vmatprep.subr.bf16.mxu0 0
        %241 = vmatpush1.bf16.msra.mxu0 0
        %242 = vmatprep.subr.bf16.mxu0 0
        %243 = vmatpush1.bf16.msra.mxu0 0
        %244 = vmatprep.mubr.bf16.mxu0 0
        %245 = vmatmul.mubr.bf16.gmra.mrb[0].mxu0 %v210
        %v246 = vpop.f32.mrb[0].mxu0
        %v247 = vadd.f32 0.0, %v246
        %v248 = vpop.f32.mrb[0].mxu0
        %v249 = vpop.f32.mrb[0].mxu0
        %v250 = vadd.f32 0.0, %v249
        %v251 = vpop.f32.mrb[0].mxu0
        %252 = vdwg.mxu0
        %v253 = vpack.c.bf16 %v250, %v247
        %254 = vst.msk [vmem:[#allocation2] sm:$0xff] %vm208, %v253
        %257 = vrot.lane.b32.xlu0 %v247, 96
        %v258 = vpop.permute.xlu0 %257
        %259 = vrot.lane.b32.xlu0 %v250, 96
        %v260 = vpop.permute.xlu0 %259
        %263 = vst.msk [vmem:[#allocation3] sm:$0xff] %vm208, %v258
        %264 = vst.msk [vmem:[#allocation3 + $0x8] sm:$0xff] %vm208, %v260
        %v265 = vmul.f32 %v195, %v195
        %v266 = vmul.f32 %v196, %v196
        %v267 = vsel %vm208, %v265, 0.0
        %268 = vadd.xlane.f32.xlu0 %v267
        %v269 = vpop.xlane.xlu0 %268
        %v270 = vsel %vm208, %v266, 0.0
        %271 = vadd.xlane.f32.xlu0 %v270
        %v272 = vpop.xlane.xlu0 %271
        %273 = vxpose.xlu0.b32.start [1/16] %v269, 128
        %274 = vxpose.xlu0.b32.cont [2/16] %v272, 128
        %275 = vxpose.xlu0.b32.cont [3/16] 0.0, 128
        %276 = vxpose.xlu0.b32.cont [4/16] 0.0, 128
        %277 = vxpose.xlu0.b32.cont [5/16] 0.0, 128
        %278 = vxpose.xlu0.b32.cont [6/16] 0.0, 128
        %279 = vxpose.xlu0.b32.cont [7/16] 0.0, 128
        %280 = vxpose.xlu0.b32.cont [8/16] 0.0, 128
        %281 = vxpose.xlu0.b32.cont [9/16] 0.0, 128
        %282 = vxpose.xlu0.b32.cont [10/16] 0.0, 128
        %283 = vxpose.xlu0.b32.cont [11/16] 0.0, 128
        %284 = vxpose.xlu0.b32.cont [12/16] 0.0, 128
        %285 = vxpose.xlu0.b32.cont [13/16] 0.0, 128
        %286 = vxpose.xlu0.b32.cont [14/16] 0.0, 128
        %287 = vxpose.xlu0.b32.cont [15/16] 0.0, 128
        %288 = vxpose.xlu0.b32.end [16/16] 0.0, 128
        %v289 = vpop.trf.xlu0
        %v290 = vpop.trf.xlu0
        %v291 = vpop.trf.xlu0
        %v292 = vpop.trf.xlu0
        %v293 = vpop.trf.xlu0
        %v294 = vpop.trf.xlu0
        %v295 = vpop.trf.xlu0
        %v296 = vpop.trf.xlu0
        %v297 = vpop.trf.xlu0
        %v298 = vpop.trf.xlu0
        %v299 = vpop.trf.xlu0
        %v300 = vpop.trf.xlu0
        %v301 = vpop.trf.xlu0
        %v302 = vpop.trf.xlu0
        %v303 = vpop.trf.xlu0
        %v304 = vpop.trf.xlu0
        %vm305 = vcmask 122880
        %306 = vst.msk [vmem:[#allocation4] sm:$0x1] %vm305, %v289
      $region36: #{forward.7} parent=31 // pred_fallthru
        _
      %s307 = smul.u32 %s19, 16
      %s308 = scalar_lea.vmem %s183, %s307
      %v309 = vld [vmem:[%s308] sm:$0xff]
      %v310 = vld [vmem:[%s308 + $0x8] sm:$0xff]
      %vm311 = vcmask 261120
      %v313 = vsel %vm311, %v309, 0
      %v316 = vsel %vm311, %v310, 0
      %v319 = vsel %vm311, %v195, 0
      %v322 = vsel %vm311, %v196, 0
      %324 = vmatprep.subr.mxu0 0.0
      %325 = vmatpush1.xpose.msra.mxu0 %v319
      %326 = vmatprep.subr.mxu0 0.0
      %327 = vmatpush1.xpose.msra.mxu0 %v322
      %328 = vmatprep.subr.mxu0 0.0
      %329 = vmatpush1.xpose.msra.mxu0 0.0
      %330 = vmatprep.subr.mxu0 0.0
      %331 = vmatpush1.xpose.msra.mxu0 0.0
      %332 = vmatprep.subr.mxu0 0.0
      %333 = vmatpush1.xpose.msra.mxu0 0.0
      %334 = vmatprep.subr.mxu0 0.0
      %335 = vmatpush1.xpose.msra.mxu0 0.0
      %336 = vmatprep.subr.mxu0 0.0
      %337 = vmatpush1.xpose.msra.mxu0 0.0
      %338 = vmatprep.subr.mxu0 0.0
      %339 = vmatpush1.xpose.msra.mxu0 0.0
      %340 = vmatprep.subr.mxu0 0.0
      %341 = vmatpush1.xpose.msra.mxu0 0.0
      %342 = vmatprep.subr.mxu0 0.0
      %343 = vmatpush1.xpose.msra.mxu0 0.0
      %344 = vmatprep.subr.mxu0 0.0
      %345 = vmatpush1.xpose.msra.mxu0 0.0
      %346 = vmatprep.subr.mxu0 0.0
      %347 = vmatpush1.xpose.msra.mxu0 0.0
      %348 = vmatprep.subr.mxu0 0.0
      %349 = vmatpush1.xpose.msra.mxu0 0.0
      %350 = vmatprep.subr.mxu0 0.0
      %351 = vmatpush1.xpose.msra.mxu0 0.0
      %352 = vmatprep.subr.mxu0 0.0
      %353 = vmatpush1.xpose.msra.mxu0 0.0
      %354 = vmatprep.subr.mxu0 0.0
      %355 = vmatpush1.xpose.msra.mxu0 0.0
      %356 = vmatprep.subr.mxu0 0.0
      %357 = vmatpush1.xpose.msra.mxu0 0.0
      %358 = vmatprep.subr.mxu0 0.0
      %359 = vmatpush1.xpose.msra.mxu0 0.0
      %360 = vmatprep.subr.mxu0 0.0
      %361 = vmatpush1.xpose.msra.mxu0 0.0
      %362 = vmatprep.subr.mxu0 0.0
      %363 = vmatpush1.xpose.msra.mxu0 0.0
      %364 = vmatprep.subr.mxu0 0.0
      %365 = vmatpush1.xpose.msra.mxu0 0.0
      %366 = vmatprep.subr.mxu0 0.0
      %367 = vmatpush1.xpose.msra.mxu0 0.0
      %368 = vmatprep.subr.mxu0 0.0
      %369 = vmatpush1.xpose.msra.mxu0 0.0
      %370 = vmatprep.subr.mxu0 0.0
      %371 = vmatpush1.xpose.msra.mxu0 0.0
      %372 = vmatprep.subr.mxu0 0.0
      %373 = vmatpush1.xpose.msra.mxu0 0.0
      %374 = vmatprep.subr.mxu0 0.0
      %375 = vmatpush1.xpose.msra.mxu0 0.0
      %376 = vmatprep.subr.mxu0 0.0
      %377 = vmatpush1.xpose.msra.mxu0 0.0
      %378 = vmatprep.subr.mxu0 0.0
      %379 = vmatpush1.xpose.msra.mxu0 0.0
      %380 = vmatprep.subr.mxu0 0.0
      %381 = vmatpush1.xpose.msra.mxu0 0.0
      %382 = vmatprep.subr.mxu0 0.0
      %383 = vmatpush1.xpose.msra.mxu0 0.0
      %384 = vmatprep.subr.mxu0 0.0
      %385 = vmatpush1.xpose.msra.mxu0 0.0
      %386 = vmatprep.subr.mxu0 0.0
      %387 = vmatpush1.xpose.msra.mxu0 0.0
      %388 = vmatprep.mubr.f32.mxu0 0.0
      %389 = vmatmul.mubr.f32.gmra.mrb[0].mxu0 %v313
      %v390 = vpop.f32.mrb[0].mxu0
      %v391 = vadd.f32 0.0, %v390
      %v392 = vpop.f32.mrb[0].mxu0
      %393 = vmatprep.mubr.f32.mxu0 0.0
      %394 = vmatmul.mubr.f32.gmra.mrb[0].mxu0 %v316
      %v395 = vpop.f32.mrb[0].mxu0
      %v396 = vadd.f32 0.0, %v395
      %v397 = vpop.f32.mrb[0].mxu0
      %398 = vdwg.mxu0
      %v399 = vmul.f32 %v391, 2.0
      %v400 = vmul.f32 %v396, 2.0
      %v401 = vld [vmem:[#allocation4] sm:$0x1]
      %v403 = vlaneseq
      %v404 = vshrl.u32 %v403, 7
      %v405 = vsub.s32 0, %v404
      %v406 = vrot.slane %v401, %v405
      %v408 = vsub.f32 %v399, %v406
      %v409 = vsub.f32 %v400, %v406
      %v410 = vlaneseq
      %v411 = vand.u32 %v410, 127
      %vm412 = vcmask 130048
      %v413 = vsel %vm412, %v408, -inf
      %414 = vmax.xlane.f32.xlu0 %v413
      %v415 = vpop.xlane.xlu0 %414
      %v416 = vsel %vm412, %v409, -inf
      %417 = vmax.xlane.f32.xlu0 %v416
      %v418 = vpop.xlane.xlu0 %417
      %vm419 = vcmp.eq.f32.partialorder %v408, %v415
      %vm420 = vcmp.eq.f32.partialorder %v409, %v418
      %v421 = vsel %vm419, %v411, 16
      %v422 = vsel %vm420, %v411, 16
      %v423 = vsel %vm412, %v421, 2147483647
      %v424 = vand.u32 %v423, 65535
      %v425 = vshra.s32 %v423, 16
      %v426 = vcvt.s32.f32 %v424
      %v427 = vcvt.s32.f32 %v425
      %428 = vmin.xlane.f32.xlu0 %v427
      %v429 = vpop.xlane.xlu0 %428
      %vm430 = vcmp.eq.f32.partialorder %v427, %v429
      %v431 = vsel %vm430, %v426, inf
      %432 = vmin.xlane.f32.xlu0 %v431
      %v433 = vpop.xlane.xlu0 %432
      %v434 = vcvt.f32.s32 %v433
      %v435 = vcvt.f32.s32 %v429
      %v436 = vshll.u32 %v435, 16
      %v437 = vadd.s32 %v436, %v434
      %v438 = vsel %vm412, %v422, 2147483647
      %v439 = vand.u32 %v438, 65535
      %v440 = vshra.s32 %v438, 16
      %v441 = vcvt.s32.f32 %v439
      %v442 = vcvt.s32.f32 %v440
      %443 = vmin.xlane.f32.xlu0 %v442
      %v444 = vpop.xlane.xlu0 %443
      %vm445 = vcmp.eq.f32.partialorder %v442, %v444
      %v446 = vsel %vm445, %v441, inf
      %447 = vmin.xlane.f32.xlu0 %v446
      %v448 = vpop.xlane.xlu0 %447
      %v449 = vcvt.f32.s32 %v448
      %v450 = vcvt.f32.s32 %v444
      %v451 = vshll.u32 %v450, 16
      %v452 = vadd.s32 %v451, %v449
      %vm453 = vcmp.eq.s32.totalorder %v411, %v437
      %vm454 = vcmp.eq.s32.totalorder %v411, %v452
      %v455 = vsel %vm453, 1, 0
      %v456 = vsel %vm454, 1, 0
      %v457 = vcvt.s32.f32 %v455
      %v458 = vcvt.s32.f32 %v456
      %v459 = vpack.c.bf16 %v458, %v457
      %v460 = vsel %vm453, -1e+30, %v408
      %v461 = vsel %vm454, -1e+30, %v409
      %v462 = vsel %vm412, %v460, -inf
      %463 = vmax.xlane.f32.xlu0 %v462
      %v464 = vpop.xlane.xlu0 %463
      %v465 = vsel %vm412, %v461, -inf
      %466 = vmax.xlane.f32.xlu0 %v465
      %v467 = vpop.xlane.xlu0 %466
      %vm468 = vcmp.eq.f32.partialorder %v460, %v464
      %vm469 = vcmp.eq.f32.partialorder %v461, %v467
      %v470 = vsel %vm468, %v411, 16
      %v471 = vsel %vm469, %v411, 16
      %v472 = vsel %vm412, %v470, 2147483647
      %v473 = vand.u32 %v472, 65535
      %v474 = vshra.s32 %v472, 16
      %v475 = vcvt.s32.f32 %v473
      %v476 = vcvt.s32.f32 %v474
      %477 = vmin.xlane.f32.xlu0 %v476
      %v478 = vpop.xlane.xlu0 %477
      %vm479 = vcmp.eq.f32.partialorder %v476, %v478
      %v480 = vsel %vm479, %v475, inf
      %481 = vmin.xlane.f32.xlu0 %v480
      %v482 = vpop.xlane.xlu0 %481
      %v483 = vcvt.f32.s32 %v482
      %v484 = vcvt.f32.s32 %v478
      %v485 = vshll.u32 %v484, 16
      %v486 = vadd.s32 %v485, %v483
      %v487 = vsel %vm412, %v471, 2147483647
      %v488 = vand.u32 %v487, 65535
      %v489 = vshra.s32 %v487, 16
      %v490 = vcvt.s32.f32 %v488
      %v491 = vcvt.s32.f32 %v489
      %492 = vmin.xlane.f32.xlu0 %v491
      %v493 = vpop.xlane.xlu0 %492
      %vm494 = vcmp.eq.f32.partialorder %v491, %v493
      %v495 = vsel %vm494, %v490, inf
      %496 = vmin.xlane.f32.xlu0 %v495
      %v497 = vpop.xlane.xlu0 %496
      %v498 = vcvt.f32.s32 %v497
      %v499 = vcvt.f32.s32 %v493
      %v500 = vshll.u32 %v499, 16
      %v501 = vadd.s32 %v500, %v498
      %vm502 = vcmp.eq.s32.totalorder %v411, %v486
      %vm503 = vcmp.eq.s32.totalorder %v411, %v501
      %v504 = vsel %vm502, 1, 0
      %v505 = vsel %vm503, 1, 0
      %v506 = vcvt.s32.f32 %v504
      %v507 = vcvt.s32.f32 %v505
      %v508 = vpack.c.bf16 %v507, %v506
      %v509 = vsel %vm502, -1e+30, %v460
      %v510 = vsel %vm503, -1e+30, %v461
      %v511 = vsel %vm412, %v509, -inf
      %512 = vmax.xlane.f32.xlu0 %v511
      %v513 = vpop.xlane.xlu0 %512
      %v514 = vsel %vm412, %v510, -inf
      %515 = vmax.xlane.f32.xlu0 %v514
      %v516 = vpop.xlane.xlu0 %515
      %vm517 = vcmp.eq.f32.partialorder %v509, %v513
      %vm518 = vcmp.eq.f32.partialorder %v510, %v516
      %v519 = vsel %vm517, %v411, 16
      %v520 = vsel %vm518, %v411, 16
      %v521 = vsel %vm412, %v519, 2147483647
      %v522 = vand.u32 %v521, 65535
      %v523 = vshra.s32 %v521, 16
      %v524 = vcvt.s32.f32 %v522
      %v525 = vcvt.s32.f32 %v523
      %526 = vmin.xlane.f32.xlu0 %v525
      %v527 = vpop.xlane.xlu0 %526
      %vm528 = vcmp.eq.f32.partialorder %v525, %v527
      %v529 = vsel %vm528, %v524, inf
      %530 = vmin.xlane.f32.xlu0 %v529
      %v531 = vpop.xlane.xlu0 %530
      %v532 = vcvt.f32.s32 %v531
      %v533 = vcvt.f32.s32 %v527
      %v534 = vshll.u32 %v533, 16
      %v535 = vadd.s32 %v534, %v532
      %v536 = vsel %vm412, %v520, 2147483647
      %v537 = vand.u32 %v536, 65535
      %v538 = vshra.s32 %v536, 16
      %v539 = vcvt.s32.f32 %v537
      %v540 = vcvt.s32.f32 %v538
      %541 = vmin.xlane.f32.xlu0 %v540
      %v542 = vpop.xlane.xlu0 %541
      %vm543 = vcmp.eq.f32.partialorder %v540, %v542
      %v544 = vsel %vm543, %v539, inf
      %545 = vmin.xlane.f32.xlu0 %v544
      %v546 = vpop.xlane.xlu0 %545
      %v547 = vcvt.f32.s32 %v546
      %v548 = vcvt.f32.s32 %v542
      %v549 = vshll.u32 %v548, 16
      %v550 = vadd.s32 %v549, %v547
      %vm551 = vcmp.eq.s32.totalorder %v411, %v535
      %vm552 = vcmp.eq.s32.totalorder %v411, %v550
      %v553 = vsel %vm551, 1, 0
      %v554 = vsel %vm552, 1, 0
      %v555 = vcvt.s32.f32 %v553
      %v556 = vcvt.s32.f32 %v554
      %v557 = vpack.c.bf16 %v556, %v555
      %v558 = vsel %vm551, -1e+30, %v509
      %v559 = vsel %vm552, -1e+30, %v510
      %v560 = vsel %vm412, %v558, -inf
      %561 = vmax.xlane.f32.xlu0 %v560
      %v562 = vpop.xlane.xlu0 %561
      %v563 = vsel %vm412, %v559, -inf
      %564 = vmax.xlane.f32.xlu0 %v563
      %v565 = vpop.xlane.xlu0 %564
      %vm566 = vcmp.eq.f32.partialorder %v558, %v562
      %vm567 = vcmp.eq.f32.partialorder %v559, %v565
      %v568 = vsel %vm566, %v411, 16
      %v569 = vsel %vm567, %v411, 16
      %v570 = vsel %vm412, %v568, 2147483647
      %v571 = vand.u32 %v570, 65535
      %v572 = vshra.s32 %v570, 16
      %v573 = vcvt.s32.f32 %v571
      %v574 = vcvt.s32.f32 %v572
      %575 = vmin.xlane.f32.xlu0 %v574
      %v576 = vpop.xlane.xlu0 %575
      %vm577 = vcmp.eq.f32.partialorder %v574, %v576
      %v578 = vsel %vm577, %v573, inf
      %579 = vmin.xlane.f32.xlu0 %v578
      %v580 = vpop.xlane.xlu0 %579
      %v581 = vcvt.f32.s32 %v580
      %v582 = vcvt.f32.s32 %v576
      %v583 = vshll.u32 %v582, 16
      %v584 = vadd.s32 %v583, %v581
      %v585 = vsel %vm412, %v569, 2147483647
      %v586 = vand.u32 %v585, 65535
      %v587 = vshra.s32 %v585, 16
      %v588 = vcvt.s32.f32 %v586
      %v589 = vcvt.s32.f32 %v587
      %590 = vmin.xlane.f32.xlu0 %v589
      %v591 = vpop.xlane.xlu0 %590
      %vm592 = vcmp.eq.f32.partialorder %v589, %v591
      %v593 = vsel %vm592, %v588, inf
      %594 = vmin.xlane.f32.xlu0 %v593
      %v595 = vpop.xlane.xlu0 %594
      %v596 = vcvt.f32.s32 %v595
      %v597 = vcvt.f32.s32 %v591
      %v598 = vshll.u32 %v597, 16
      %v599 = vadd.s32 %v598, %v596
      %vm600 = vcmp.eq.s32.totalorder %v411, %v584
      %vm601 = vcmp.eq.s32.totalorder %v411, %v599
      %v602 = vsel %vm600, 1, 0
      %v603 = vsel %vm601, 1, 0
      %v604 = vcvt.s32.f32 %v602
      %v605 = vcvt.s32.f32 %v603
      %v606 = vpack.c.bf16 %v605, %v604
      %v607 = vld [vmem:[#allocation2] sm:$0xff]
      %v609 = vsel %vm412, %v459, 0
      %v612 = vsel %vm412, %v508, 0
      %v615 = vsel %vm412, %v557, 0
      %v618 = vsel %vm412, %v606, 0
      %620 = vmatprep.subr.bf16.mxu0 0
      %621 = vmatpush1.bf16.msra.mxu0 %v607
      %622 = vmatprep.subr.bf16.mxu0 0
      %623 = vmatpush1.bf16.msra.mxu0 0
      %624 = vmatprep.subr.bf16.mxu0 0
      %625 = vmatpush1.bf16.msra.mxu0 0
      %626 = vmatprep.subr.bf16.mxu0 0
      %627 = vmatpush1.bf16.msra.mxu0 0
      %628 = vmatprep.subr.bf16.mxu0 0
      %629 = vmatpush1.bf16.msra.mxu0 0
      %630 = vmatprep.subr.bf16.mxu0 0
      %631 = vmatpush1.bf16.msra.mxu0 0
      %632 = vmatprep.subr.bf16.mxu0 0
      %633 = vmatpush1.bf16.msra.mxu0 0
      %634 = vmatprep.subr.bf16.mxu0 0
      %635 = vmatpush1.bf16.msra.mxu0 0
      %636 = vmatprep.subr.bf16.mxu0 0
      %637 = vmatpush1.bf16.msra.mxu0 0
      %638 = vmatprep.subr.bf16.mxu0 0
      %639 = vmatpush1.bf16.msra.mxu0 0
      %640 = vmatprep.subr.bf16.mxu0 0
      %641 = vmatpush1.bf16.msra.mxu0 0
      %642 = vmatprep.subr.bf16.mxu0 0
      %643 = vmatpush1.bf16.msra.mxu0 0
      %644 = vmatprep.subr.bf16.mxu0 0
      %645 = vmatpush1.bf16.msra.mxu0 0
      %646 = vmatprep.subr.bf16.mxu0 0
      %647 = vmatpush1.bf16.msra.mxu0 0
      %648 = vmatprep.subr.bf16.mxu0 0
      %649 = vmatpush1.bf16.msra.mxu0 0
      %650 = vmatprep.subr.bf16.mxu0 0
      %651 = vmatpush1.bf16.msra.mxu0 0
      %652 = vmatprep.mubr.bf16.mxu0 0
      %653 = vmatmul.mubr.bf16.gmra.mrb[0].mxu0 %v609
      %v654 = vpop.f32.mrb[0].mxu0
      %v655 = vadd.f32 0.0, %v654
      %v656 = vpop.f32.mrb[0].mxu0
      %v657 = vpop.f32.mrb[0].mxu0
      %v658 = vadd.f32 0.0, %v657
      %v659 = vpop.f32.mrb[0].mxu0
      %660 = vmatprep.mubr.bf16.mxu0 0
      %661 = vmatmul.mubr.bf16.gmra.mrb[0].mxu0 %v612
      %v662 = vpop.f32.mrb[0].mxu0
      %v663 = vadd.f32 0.0, %v662
      %v664 = vpop.f32.mrb[0].mxu0
      %v665 = vpop.f32.mrb[0].mxu0
      %v666 = vadd.f32 0.0, %v665
      %v667 = vpop.f32.mrb[0].mxu0
      %668 = vmatprep.mubr.bf16.mxu0 0
      %669 = vmatmul.mubr.bf16.gmra.mrb[0].mxu0 %v615
      %v670 = vpop.f32.mrb[0].mxu0
      %v671 = vadd.f32 0.0, %v670
      %v672 = vpop.f32.mrb[0].mxu0
      %v673 = vpop.f32.mrb[0].mxu0
      %v674 = vadd.f32 0.0, %v673
      %v675 = vpop.f32.mrb[0].mxu0
      %676 = vmatprep.mubr.bf16.mxu0 0
      %677 = vmatmul.mubr.bf16.gmra.mrb[0].mxu0 %v618
      %v678 = vpop.f32.mrb[0].mxu0
      %v679 = vadd.f32 0.0, %v678
      %v680 = vpop.f32.mrb[0].mxu0
      %v681 = vpop.f32.mrb[0].mxu0
      %v682 = vadd.f32 0.0, %v681
      %v683 = vpop.f32.mrb[0].mxu0
      %684 = vdwg.mxu0
      %s685 = scalar_lea.vmem [#allocation3], %s307
      %v686 = vld [vmem:[%s685] sm:$0xff]
      %v687 = vld [vmem:[%s685 + $0x8] sm:$0xff]
      %v688 = vld [vmem:[%s2] sm:$0x1]
      %v690 = vlaneseq
      %v691 = vshrl.u32 %v690, 7
      %v692 = vsub.s32 0, %v691
      %v693 = vrot.slane %v688, %v692
      %v695 = vadd.f32 %v686, %v693
      %v696 = vadd.f32 %v687, %v693
      %v697 = vadd.f32 %v655, %v695
      %v698 = vadd.f32 %v658, %v696
      %vm699 = vcmp.gt.f32.partialorder %v697, 0.0
      %vm700 = vcmp.gt.f32.partialorder %v698, 0.0
      %v701 = vmul.f32 %v697, 0.2
      %v702 = vmul.f32 %v698, 0.2
      %v703 = vsel %vm699, %v697, %v701
      %v704 = vsel %vm700, %v698, %v702
      %v705 = vadd.f32 %v663, %v695
      %v706 = vadd.f32 %v666, %v696
      %vm707 = vcmp.gt.f32.partialorder %v705, 0.0
      %vm708 = vcmp.gt.f32.partialorder %v706, 0.0
      %v709 = vmul.f32 %v705, 0.2
      %v710 = vmul.f32 %v706, 0.2
      %v711 = vsel %vm707, %v705, %v709
      %v712 = vsel %vm708, %v706, %v710
      %v713 = vmax.f32 %v703, %v711
      %v714 = vmax.f32 %v704, %v712
      %v715 = vadd.f32 %v671, %v695
      %v716 = vadd.f32 %v674, %v696
      %vm717 = vcmp.gt.f32.partialorder %v715, 0.0
      %vm718 = vcmp.gt.f32.partialorder %v716, 0.0
      %v719 = vmul.f32 %v715, 0.2
      %v720 = vmul.f32 %v716, 0.2
      %v721 = vsel %vm717, %v715, %v719
      %v722 = vsel %vm718, %v716, %v720
      %v723 = vmax.f32 %v713, %v721
      %v724 = vmax.f32 %v714, %v722
      %v725 = vadd.f32 %v679, %v695
      %v726 = vadd.f32 %v682, %v696
      %vm727 = vcmp.gt.f32.partialorder %v725, 0.0
      %vm728 = vcmp.gt.f32.partialorder %v726, 0.0
      %v729 = vmul.f32 %v725, 0.2
      %v730 = vmul.f32 %v726, 0.2
      %v731 = vsel %vm727, %v725, %v729
      %v732 = vsel %vm728, %v726, %v730
      %v733 = vmax.f32 %v723, %v731
      %v734 = vmax.f32 %v724, %v732
      %735 = vst.msk [vmem:[%s192] sm:$0xff] %vm311, %v733
      %736 = vst.msk [vmem:[%s192 + $0x8] sm:$0xff] %vm311, %v734
      %s737 = smul.u32 2, %s19
      %p738 = scmp.lt.s32.totalorder %s18, 1
      %s739 = scalar_select %p738, %s18, 1
      %p740 = scmp.lt.s32.totalorder %s737, 1
      %s741 = scalar_select %p740, %s737, 1
      %s742 = smul.addr %s739, 2
      %s743 = sadd.s32 %s741, %s742
      %s744 = smul.addr %s743, 8
      %s745 = scalar_lea.vmem %s3, %s744
      // Predicated region
      $region37: #{forward.7} parent=31 // pred_check
        %p746 = pneg %p114
      $region38: #{forward.7} parent=31 // pred_check_branch
        %748 = sbr.rel (%p746) target = $region40
      $region39: #{forward.7} parent=31 // pred_region
        %s749 = smul.u32 2, %s19
      $region40: #{forward.7} parent=31 // pred_fallthru
        _
    $region32: #{forward.7} parent=5 // pred_fallthru
      _
    %p750 = scmp.le.s32.totalorder 2, %s9
    // Predicated region
    $region41: #{forward.7} parent=5 // pred_check
      %p751 = pneg %p750
    $region42: #{forward.7} parent=5 // pred_check_branch
      %753 = sbr.rel (%p751) target = $region44
    $region43: #{forward.7} parent=5 // pred_region
      %s754 = ssub.s32 %s9, 2
      // Predicated region
      $region45: #{forward.7} parent=43 // pred_check
        %p755 = pneg %p120
      $region46: #{forward.7} parent=43 // pred_check_branch
        %757 = sbr.rel (%p755) target = $region48
      $region47: #{forward.7} parent=43 // pred_region
        %s758 = smul.u32 2, %s21
        %p759 = scmp.lt.s32.totalorder %s20, 1
        %s760 = scalar_select %p759, %s20, 1
        %p761 = scmp.lt.s32.totalorder %s758, 1
        %s762 = scalar_select %p761, %s758, 1
        %s763 = smul.addr %s760, 2
        %s764 = sadd.s32 %s762, %s763
        %s765 = smul.addr %s764, 8
        %s766 = scalar_lea.vmem %s3, %s765
      $region48: #{forward.7} parent=43 // pred_fallthru
        _
    $region44: #{forward.7} parent=5 // pred_fallthru
      _
  $region6: #{forward.7} parent=0 // loop_footer
    %s13 = sadd.s32 1, %s9
  $region7: #{forward.7} parent=0 // loop_footer_branch
    %8 = sbr.rel target = $region3
  $region8: #{forward.7} parent=0 // loop_exit
    _

// kernel: forward.6
$region0: #{forward.6}
  #allocation0 [shape = 'u32[]', space=smem, size = 0x4, offset = 0x4, fixed_abs, tag = 'smem constant byte address 0x4 - core index']
  #allocation1 [shape = 'u32[144,128]{1,0:T(1,128)}', space=vmem, size = 0x12000, scoped, tag = 'internal scratch']
  #allocation2 [shape = 'bf16[16,32]{1,0:T(16,128)(2,1)}', space=vmem, size = 0x1000, scoped, tag = 'scratch operand']
  #allocation3 [shape = 'f32[16,32]{1,0:T(8,128)}', space=vmem, size = 0x2000, scoped, tag = 'scratch operand']
  #allocation4 [shape = 'f32[1,16]{1,0:T(1,128)}', space=vmem, size = 0x200, scoped, tag = 'scratch operand']
  %s0 = inlined_call_operand.vmem [shape: f32[2,16,3], index: 0, kind: input, shape index: {}]
  %s1 = inlined_call_operand.vmem [shape: f32[3,64], index: 1, kind: input, shape index: {}]
  %s2 = inlined_call_operand.vmem [shape: f32[1,32], index: 2, kind: input, shape index: {}]
  %s3 = inlined_call_operand.vmem [shape: f32[2,16,32], index: 3, kind: output, shape index: {}]
  %s4 = sld [smem:[#allocation0]]
  $region49: #{forward.6} parent=0
    _
  %s6 = ssub.s32 1, %s4
  %s7 = scalar_select 0, %s6, %s4
  loop: start=0, step=1, limit=4
  $region2: #{forward.6} parent=0 // loop_pre_header
    _
  $region3: #{forward.6} parent=0 // loop_header
    %s9 = sphi 0, %s13
    %p10 = scmp.ge.s32.totalorder %s9, 4
    %s16 = sphi 0, %s28
    %s17 = sphi 0, %s24
    %s18 = sphi 0, %s16
    %s19 = sphi 0, %s17
    %s20 = sphi 0, %s18
    %s21 = sphi 0, %s19
    %s31 = sphi 0, %s33
    %s34 = sphi 0, %s31
    %s35 = sphi 0, %s34
    %s51 = sphi 0, %s35
    %s55 = sphi 0, %s55
    %s57 = sphi 0, %s55
    %s58 = sphi 0, %s57
    %s72 = sphi 0, %s58
    %s76 = sphi 0, %s76
    %s78 = sphi 0, %s76
    %s79 = sphi 0, %s78
    %s93 = sphi 0, %s79
    %s101 = sphi 0, %s103
    %s104 = sphi 0, %s101
    %s105 = sphi 0, %s104
    %s121 = sphi 0, %s105
  $region4: #{forward.6} parent=0 // loop_header_branch
    %12 = sbr.rel (%p10) target = $region8
  $region5: #{forward.6} parent=0 // loop_body
    %s14 = ssub.s32 %s9, 1
    %s15 = ssub.s32 %s9, 2
    %s22 = sadd.s32 1, %s17
    %p23 = scmp.ge.s32.totalorder %s22, 1
    %s24 = scalar_select %p23, 0, %s22
    %s25 = sadd.s32 1, %s16
    %s26 = scalar_select %p23, %s25, %s16
    %p27 = scmp.ge.s32.totalorder %s26, 2
    %s28 = scalar_select %p27, 0, %s26
    %s29 = ssub.s32 %s16, %s28
    %p30 = scmp.eq.s32.totalorder %s29, 0
    %s32 = sadd.s32 %s31, 1
    %s33 = scalar_select %p30, %s31, %s32
    %p36 = pneg %p30
    %p37 = scmp.eq.s32.totalorder %s9, 1
    %p38 = por %p36, %p37
    %p39 = scmp.ne.s32.totalorder %s31, %s34
    %p40 = scmp.eq.s32.totalorder %s9, 0
    %p41 = por %p39, %p40
    %p42 = scmp.ne.s32.totalorder %s31, %s34
    %p43 = scmp.eq.s32.totalorder %s14, 1
    %p44 = por %p42, %p43
    %p45 = scmp.ne.s32.totalorder %s34, %s35
    %p46 = scmp.eq.s32.totalorder %s14, 0
    %p47 = por %p45, %p46
    %p48 = scmp.ne.s32.totalorder %s34, %s35
    %p49 = scmp.eq.s32.totalorder %s15, 1
    %p50 = por %p48, %p49
    %p52 = scmp.ne.s32.totalorder %s35, %s51
    %p53 = scmp.eq.s32.totalorder %s15, 0
    %p54 = por %p52, %p53
    %s56 = sadd.s32 %s55, 1
    %p59 = scmp.eq.s32.totalorder %s9, 1
    %p60 = scmp.ne.s32.totalorder %s55, %s57
    %p61 = scmp.eq.s32.totalorder %s9, 0
    %p62 = por %p60, %p61
    %p63 = scmp.ne.s32.totalorder %s55, %s57
    %p64 = scmp.eq.s32.totalorder %s14, 1
    %p65 = por %p63, %p64
    %p66 = scmp.ne.s32.totalorder %s57, %s58
    %p67 = scmp.eq.s32.totalorder %s14, 0
    %p68 = por %p66, %p67
    %p69 = scmp.ne.s32.totalorder %s57, %s58
    %p70 = scmp.eq.s32.totalorder %s15, 1
    %p71 = por %p69, %p70
    %p73 = scmp.ne.s32.totalorder %s58, %s72
    %p74 = scmp.eq.s32.totalorder %s15, 0
    %p75 = por %p73, %p74
    %s77 = sadd.s32 %s76, 1
    %p80 = scmp.eq.s32.totalorder %s9, 1
    %p81 = scmp.ne.s32.totalorder %s76, %s78
    %p82 = scmp.eq.s32.totalorder %s9, 0
    %p83 = por %p81, %p82
    %p84 = scmp.ne.s32.totalorder %s76, %s78
    %p85 = scmp.eq.s32.totalorder %s14, 1
    %p86 = por %p84, %p85
    %p87 = scmp.ne.s32.totalorder %s78, %s79
    %p88 = scmp.eq.s32.totalorder %s14, 0
    %p89 = por %p87, %p88
    %p90 = scmp.ne.s32.totalorder %s78, %s79
    %p91 = scmp.eq.s32.totalorder %s15, 1
    %p92 = por %p90, %p91
    %p94 = scmp.ne.s32.totalorder %s79, %s93
    %p95 = scmp.eq.s32.totalorder %s15, 0
    %p96 = por %p94, %p95
    %s97 = ssub.s32 %s16, %s28
    %s98 = ssub.s32 %s17, %s24
    %s99 = sor.u32 %s97, %s98
    %p100 = scmp.eq.s32.totalorder %s99, 0
    %s102 = sadd.s32 %s101, 1
    %s103 = scalar_select %p100, %s101, %s102
    %p106 = pneg %p100
    %p107 = scmp.eq.s32.totalorder %s9, 1
    %p108 = por %p106, %p107
    %p109 = scmp.ne.s32.totalorder %s101, %s104
    %p110 = scmp.eq.s32.totalorder %s9, 0
    %p111 = por %p109, %p110
    %p112 = scmp.ne.s32.totalorder %s101, %s104
    %p113 = scmp.eq.s32.totalorder %s14, 1
    %p114 = por %p112, %p113
    %p115 = scmp.ne.s32.totalorder %s104, %s105
    %p116 = scmp.eq.s32.totalorder %s14, 0
    %p117 = por %p115, %p116
    %p118 = scmp.ne.s32.totalorder %s104, %s105
    %p119 = scmp.eq.s32.totalorder %s15, 1
    %p120 = por %p118, %p119
    %p122 = scmp.ne.s32.totalorder %s105, %s121
    %p123 = scmp.eq.s32.totalorder %s15, 0
    %p124 = por %p122, %p123
    %p125 = scmp.le.s32.totalorder 1, %s9
    %p126 = scmp.lt.s32.totalorder %s9, 3
    %p127 = pnand %p125, %p126
    %p128 = pneg %p127
    // Predicated region
    $region9: #{forward.6} parent=5 // pred_check
      _
    $region10: #{forward.6} parent=5 // pred_check_branch
      %130 = sbr.rel (%p127) target = $region12
    $region11: #{forward.6} parent=5 // pred_region
      %s131 = ssub.s32 %s9, 1
      // Predicated region
      $region13: #{forward.6} parent=11 // pred_check
        %p132 = pneg %p68
      $region14: #{forward.6} parent=11 // pred_check_branch
        %134 = sbr.rel (%p132) target = $region16
      $region15: #{forward.6} parent=11 // pred_region
        _
      $region16: #{forward.6} parent=11 // pred_fallthru
        _
      // Predicated region
      $region17: #{forward.6} parent=11 // pred_check
        %p135 = pneg %p89
      $region18: #{forward.6} parent=11 // pred_check_branch
        %137 = sbr.rel (%p135) target = $region20
      $region19: #{forward.6} parent=11 // pred_region
        _
      $region20: #{forward.6} parent=11 // pred_fallthru
        _
    $region12: #{forward.6} parent=5 // pred_fallthru
      _
    %p138 = scmp.lt.s32.totalorder %s9, 2
    // Predicated region
    $region21: #{forward.6} parent=5 // pred_check
      %p139 = pneg %p138
    $region22: #{forward.6} parent=5 // pred_check_branch
      %141 = sbr.rel (%p139) target = $region24
    $region23: #{forward.6} parent=5 // pred_region
      // Predicated region
      $region25: #{forward.6} parent=23 // pred_check
        %p142 = pneg %p41
      $region26: #{forward.6} parent=23 // pred_check_branch
        %144 = sbr.rel (%p142) target = $region28
      $region27: #{forward.6} parent=23 // pred_region
        %p145 = scmp.lt.s32.totalorder %s16, 1
        %s146 = scalar_select %p145, %s16, 1
        %s147 = smul.addr %s146, 2
        %s148 = smul.addr %s147, 8
        %s149 = scalar_lea.vmem %s0, %s148
      $region28: #{forward.6} parent=23 // pred_fallthru
        _
    $region24: #{forward.6} parent=5 // pred_fallthru
      _
    %p150 = scmp.le.s32.totalorder 1, %s9
    %p151 = scmp.lt.s32.totalorder %s9, 3
    %p152 = pnand %p150, %p151
    %p153 = pneg %p152
    // Predicated region
    $region29: #{forward.6} parent=5 // pred_check
      _
    $region30: #{forward.6} parent=5 // pred_check_branch
      %155 = sbr.rel (%p152) target = $region32
    $region31: #{forward.6} parent=5 // pred_region
      %s156 = ssub.s32 %s9, 1
      %p157 = scmp.lt.s32.totalorder %s18, 1
      %s158 = scalar_select %p157, %s18, 1
      %s159 = smul.addr %s158, 2
      %s160 = smul.addr %s159, 8
      %s161 = scalar_lea.vmem %s0, %s160
      %p162 = pneg %p47
      %p163 = pneg %p44
      %p164 = pneg %p68
      %p165 = pneg %p65
      %p166 = pneg %p89
      %p167 = pneg %p86
      %p168 = pneg %p117
      %p169 = pneg %p114
      %s170 = smul.u32 2, %s19
      %p171 = scmp.lt.s32.totalorder %s18, 1
      %s172 = scalar_select %p171, %s18, 1
      %p173 = scmp.lt.s32.totalorder %s170, 1
      %s174 = scalar_select %p173, %s170, 1
      %s175 = smul.addr %s172, 2
      %s176 = sadd.s32 %s174, %s175
      %s177 = smul.addr %s176, 8
      %s178 = scalar_lea.vmem %s3, %s177
      %p179 = scmp.lt.s32.totalorder %s18, 1
      %s180 = scalar_select %p179, %s18, 1
      %s181 = smul.addr %s180, 2
      %s182 = smul.addr %s181, 8
      %s183 = scalar_lea.vmem %s0, %s182
      %s184 = smul.u32 2, %s19
      %p185 = scmp.lt.s32.totalorder %s18, 1
      %s186 = scalar_select %p185, %s18, 1
      %p187 = scmp.lt.s32.totalorder %s184, 1
      %s188 = scalar_select %p187, %s184, 1
      %s189 = smul.addr %s186, 2
      %s190 = sadd.s32 %s188, %s189
      %s191 = smul.addr %s190, 8
      %s192 = scalar_lea.vmem %s3, %s191
      %s193 = smul.u32 2, %s19
      %v195 = vld [vmem:[%s183] sm:$0xff]
      %v196 = vld [vmem:[%s183 + $0x8] sm:$0xff]
      %p197 = scmp.eq.s32.totalorder %s19, 0
      // Predicated region
      $region33: #{forward.6} parent=31 // pred_check
        %p198 = pneg %p197
      $region34: #{forward.6} parent=31 // pred_check_branch
        %200 = sbr.rel (%p198) target = $region36
      $region35: #{forward.6} parent=31 // pred_region
        %v201 = vpack.c.bf16 %v196, %v195
        %v202 = vld [vmem:[%s1] sm:$0x7]
        %v203 = vpack.c.bf16 %v202, %v202
        %vm204 = vcmask 23552
        %v206 = vsel %vm204, %v201, 0
        %vm208 = vcmask 1040384
        %vm209 = vcmask 1041408
        %v210 = vsel %vm208, 4294967295, 65535
        %v211 = vsel %vm209, %v210, 0
        %v213 = vand.u32 %v203, %v211
        %215 = vmatprep.subr.bf16.mxu0 0
        %216 = vmatpush1.bf16.msra.mxu0 %v213
        %217 = vmatprep.subr.bf16.mxu0 0
        %218 = vmatpush1.bf16.msra.mxu0 0
        %219 = vmatprep.subr.bf16.mxu0 0
        %220 = vmatpush1.bf16.msra.mxu0 0
        %221 = vmatprep.subr.bf16.mxu0 0
        %222 = vmatpush1.bf16.msra.mxu0 0
        %223 = vmatprep.subr.bf16.mxu0 0
        %224 = vmatpush1.bf16.msra.mxu0 0
        %225 = vmatprep.subr.bf16.mxu0 0
        %226 = vmatpush1.bf16.msra.mxu0 0
        %227 = vmatprep.subr.bf16.mxu0 0
        %228 = vmatpush1.bf16.msra.mxu0 0
        %229 = vmatprep.subr.bf16.mxu0 0
        %230 = vmatpush1.bf16.msra.mxu0 0
        %231 = vmatprep.subr.bf16.mxu0 0
        %232 = vmatpush1.bf16.msra.mxu0 0
        %233 = vmatprep.subr.bf16.mxu0 0
        %234 = vmatpush1.bf16.msra.mxu0 0
        %235 = vmatprep.subr.bf16.mxu0 0
        %236 = vmatpush1.bf16.msra.mxu0 0
        %237 = vmatprep.subr.bf16.mxu0 0
        %238 = vmatpush1.bf16.msra.mxu0 0
        %239 = vmatprep.subr.bf16.mxu0 0
        %240 = vmatpush1.bf16.msra.mxu0 0
        %241 = vmatprep.subr.bf16.mxu0 0
        %242 = vmatpush1.bf16.msra.mxu0 0
        %243 = vmatprep.subr.bf16.mxu0 0
        %244 = vmatpush1.bf16.msra.mxu0 0
        %245 = vmatprep.subr.bf16.mxu0 0
        %246 = vmatpush1.bf16.msra.mxu0 0
        %247 = vmatprep.mubr.bf16.mxu0 0
        %248 = vmatmul.mubr.bf16.gmra.mrb[0].mxu0 %v206
        %v249 = vpop.f32.mrb[0].mxu0
        %v250 = vadd.f32 0.0, %v249
        %v251 = vpop.f32.mrb[0].mxu0
        %v252 = vpop.f32.mrb[0].mxu0
        %v253 = vadd.f32 0.0, %v252
        %v254 = vpop.f32.mrb[0].mxu0
        %255 = vdwg.mxu0
        %v256 = vpack.c.bf16 %v253, %v250
        %vm257 = vcmask 261120
        %258 = vst.msk [vmem:[#allocation2] sm:$0xff] %vm257, %v256
        %261 = vrot.lane.b32.xlu0 %v250, 96
        %v262 = vpop.permute.xlu0 %261
        %263 = vrot.lane.b32.xlu0 %v253, 96
        %v264 = vpop.permute.xlu0 %263
        %267 = vst.msk [vmem:[#allocation3] sm:$0xff] %vm257, %v262
        %268 = vst.msk [vmem:[#allocation3 + $0x8] sm:$0xff] %vm257, %v264
        %v269 = vmul.f32 %v195, %v195
        %v270 = vmul.f32 %v196, %v196
        %v271 = vsel %vm204, %v269, 0.0
        %272 = vadd.xlane.f32.xlu0 %v271
        %v273 = vpop.xlane.xlu0 %272
        %v274 = vsel %vm204, %v270, 0.0
        %275 = vadd.xlane.f32.xlu0 %v274
        %v276 = vpop.xlane.xlu0 %275
        %277 = vxpose.xlu0.b32.start [1/16] %v273, 128
        %278 = vxpose.xlu0.b32.cont [2/16] %v276, 128
        %279 = vxpose.xlu0.b32.cont [3/16] 0.0, 128
        %280 = vxpose.xlu0.b32.cont [4/16] 0.0, 128
        %281 = vxpose.xlu0.b32.cont [5/16] 0.0, 128
        %282 = vxpose.xlu0.b32.cont [6/16] 0.0, 128
        %283 = vxpose.xlu0.b32.cont [7/16] 0.0, 128
        %284 = vxpose.xlu0.b32.cont [8/16] 0.0, 128
        %285 = vxpose.xlu0.b32.cont [9/16] 0.0, 128
        %286 = vxpose.xlu0.b32.cont [10/16] 0.0, 128
        %287 = vxpose.xlu0.b32.cont [11/16] 0.0, 128
        %288 = vxpose.xlu0.b32.cont [12/16] 0.0, 128
        %289 = vxpose.xlu0.b32.cont [13/16] 0.0, 128
        %290 = vxpose.xlu0.b32.cont [14/16] 0.0, 128
        %291 = vxpose.xlu0.b32.cont [15/16] 0.0, 128
        %292 = vxpose.xlu0.b32.end [16/16] 0.0, 128
        %v293 = vpop.trf.xlu0
        %v294 = vpop.trf.xlu0
        %v295 = vpop.trf.xlu0
        %v296 = vpop.trf.xlu0
        %v297 = vpop.trf.xlu0
        %v298 = vpop.trf.xlu0
        %v299 = vpop.trf.xlu0
        %v300 = vpop.trf.xlu0
        %v301 = vpop.trf.xlu0
        %v302 = vpop.trf.xlu0
        %v303 = vpop.trf.xlu0
        %v304 = vpop.trf.xlu0
        %v305 = vpop.trf.xlu0
        %v306 = vpop.trf.xlu0
        %v307 = vpop.trf.xlu0
        %v308 = vpop.trf.xlu0
        %vm309 = vcmask 122880
        %310 = vst.msk [vmem:[#allocation4] sm:$0x1] %vm309, %v293
      $region36: #{forward.6} parent=31 // pred_fallthru
        _
      %s311 = smul.u32 %s19, 16
      %s312 = scalar_lea.vmem %s183, %s311
      %v313 = vld [vmem:[%s312] sm:$0xff]
      %v314 = vld [vmem:[%s312 + $0x8] sm:$0xff]
      %vm315 = vcmask 23552
      %v317 = vsel %vm315, %v313, 0
      %v320 = vsel %vm315, %v314, 0
      %v323 = vsel %vm315, %v195, 0
      %v326 = vsel %vm315, %v196, 0
      %328 = vmatprep.subr.mxu0 0.0
      %329 = vmatpush1.xpose.msra.mxu0 %v323
      %330 = vmatprep.subr.mxu0 0.0
      %331 = vmatpush1.xpose.msra.mxu0 %v326
      %332 = vmatprep.subr.mxu0 0.0
      %333 = vmatpush1.xpose.msra.mxu0 0.0
      %334 = vmatprep.subr.mxu0 0.0
      %335 = vmatpush1.xpose.msra.mxu0 0.0
      %336 = vmatprep.subr.mxu0 0.0
      %337 = vmatpush1.xpose.msra.mxu0 0.0
      %338 = vmatprep.subr.mxu0 0.0
      %339 = vmatpush1.xpose.msra.mxu0 0.0
      %340 = vmatprep.subr.mxu0 0.0
      %341 = vmatpush1.xpose.msra.mxu0 0.0
      %342 = vmatprep.subr.mxu0 0.0
      %343 = vmatpush1.xpose.msra.mxu0 0.0
      %344 = vmatprep.subr.mxu0 0.0
      %345 = vmatpush1.xpose.msra.mxu0 0.0
      %346 = vmatprep.subr.mxu0 0.0
      %347 = vmatpush1.xpose.msra.mxu0 0.0
      %348 = vmatprep.subr.mxu0 0.0
      %349 = vmatpush1.xpose.msra.mxu0 0.0
      %350 = vmatprep.subr.mxu0 0.0
      %351 = vmatpush1.xpose.msra.mxu0 0.0
      %352 = vmatprep.subr.mxu0 0.0
      %353 = vmatpush1.xpose.msra.mxu0 0.0
      %354 = vmatprep.subr.mxu0 0.0
      %355 = vmatpush1.xpose.msra.mxu0 0.0
      %356 = vmatprep.subr.mxu0 0.0
      %357 = vmatpush1.xpose.msra.mxu0 0.0
      %358 = vmatprep.subr.mxu0 0.0
      %359 = vmatpush1.xpose.msra.mxu0 0.0
      %360 = vmatprep.subr.mxu0 0.0
      %361 = vmatpush1.xpose.msra.mxu0 0.0
      %362 = vmatprep.subr.mxu0 0.0
      %363 = vmatpush1.xpose.msra.mxu0 0.0
      %364 = vmatprep.subr.mxu0 0.0
      %365 = vmatpush1.xpose.msra.mxu0 0.0
      %366 = vmatprep.subr.mxu0 0.0
      %367 = vmatpush1.xpose.msra.mxu0 0.0
      %368 = vmatprep.subr.mxu0 0.0
      %369 = vmatpush1.xpose.msra.mxu0 0.0
      %370 = vmatprep.subr.mxu0 0.0
      %371 = vmatpush1.xpose.msra.mxu0 0.0
      %372 = vmatprep.subr.mxu0 0.0
      %373 = vmatpush1.xpose.msra.mxu0 0.0
      %374 = vmatprep.subr.mxu0 0.0
      %375 = vmatpush1.xpose.msra.mxu0 0.0
      %376 = vmatprep.subr.mxu0 0.0
      %377 = vmatpush1.xpose.msra.mxu0 0.0
      %378 = vmatprep.subr.mxu0 0.0
      %379 = vmatpush1.xpose.msra.mxu0 0.0
      %380 = vmatprep.subr.mxu0 0.0
      %381 = vmatpush1.xpose.msra.mxu0 0.0
      %382 = vmatprep.subr.mxu0 0.0
      %383 = vmatpush1.xpose.msra.mxu0 0.0
      %384 = vmatprep.subr.mxu0 0.0
      %385 = vmatpush1.xpose.msra.mxu0 0.0
      %386 = vmatprep.subr.mxu0 0.0
      %387 = vmatpush1.xpose.msra.mxu0 0.0
      %388 = vmatprep.subr.mxu0 0.0
      %389 = vmatpush1.xpose.msra.mxu0 0.0
      %390 = vmatprep.subr.mxu0 0.0
      %391 = vmatpush1.xpose.msra.mxu0 0.0
      %392 = vmatprep.mubr.f32.mxu0 0.0
      %393 = vmatmul.mubr.f32.gmra.mrb[0].mxu0 %v317
      %v394 = vpop.f32.mrb[0].mxu0
      %v395 = vadd.f32 0.0, %v394
      %v396 = vpop.f32.mrb[0].mxu0
      %397 = vmatprep.mubr.f32.mxu0 0.0
      %398 = vmatmul.mubr.f32.gmra.mrb[0].mxu0 %v320
      %v399 = vpop.f32.mrb[0].mxu0
      %v400 = vadd.f32 0.0, %v399
      %v401 = vpop.f32.mrb[0].mxu0
      %402 = vdwg.mxu0
      %v403 = vmul.f32 %v395, 2.0
      %v404 = vmul.f32 %v400, 2.0
      %v405 = vld [vmem:[#allocation4] sm:$0x1]
      %v407 = vlaneseq
      %v408 = vshrl.u32 %v407, 7
      %v409 = vsub.s32 0, %v408
      %v410 = vrot.slane %v405, %v409
      %v412 = vsub.f32 %v403, %v410
      %v413 = vsub.f32 %v404, %v410
      %v414 = vlaneseq
      %v415 = vand.u32 %v414, 127
      %vm416 = vcmask 130048
      %v417 = vsel %vm416, %v412, -inf
      %418 = vmax.xlane.f32.xlu0 %v417
      %v419 = vpop.xlane.xlu0 %418
      %v420 = vsel %vm416, %v413, -inf
      %421 = vmax.xlane.f32.xlu0 %v420
      %v422 = vpop.xlane.xlu0 %421
      %vm423 = vcmp.eq.f32.partialorder %v412, %v419
      %vm424 = vcmp.eq.f32.partialorder %v413, %v422
      %v425 = vsel %vm423, %v415, 16
      %v426 = vsel %vm424, %v415, 16
      %v427 = vsel %vm416, %v425, 2147483647
      %v428 = vand.u32 %v427, 65535
      %v429 = vshra.s32 %v427, 16
      %v430 = vcvt.s32.f32 %v428
      %v431 = vcvt.s32.f32 %v429
      %432 = vmin.xlane.f32.xlu0 %v431
      %v433 = vpop.xlane.xlu0 %432
      %vm434 = vcmp.eq.f32.partialorder %v431, %v433
      %v435 = vsel %vm434, %v430, inf
      %436 = vmin.xlane.f32.xlu0 %v435
      %v437 = vpop.xlane.xlu0 %436
      %v438 = vcvt.f32.s32 %v437
      %v439 = vcvt.f32.s32 %v433
      %v440 = vshll.u32 %v439, 16
      %v441 = vadd.s32 %v440, %v438
      %v442 = vsel %vm416, %v426, 2147483647
      %v443 = vand.u32 %v442, 65535
      %v444 = vshra.s32 %v442, 16
      %v445 = vcvt.s32.f32 %v443
      %v446 = vcvt.s32.f32 %v444
      %447 = vmin.xlane.f32.xlu0 %v446
      %v448 = vpop.xlane.xlu0 %447
      %vm449 = vcmp.eq.f32.partialorder %v446, %v448
      %v450 = vsel %vm449, %v445, inf
      %451 = vmin.xlane.f32.xlu0 %v450
      %v452 = vpop.xlane.xlu0 %451
      %v453 = vcvt.f32.s32 %v452
      %v454 = vcvt.f32.s32 %v448
      %v455 = vshll.u32 %v454, 16
      %v456 = vadd.s32 %v455, %v453
      %vm457 = vcmp.eq.s32.totalorder %v415, %v441
      %vm458 = vcmp.eq.s32.totalorder %v415, %v456
      %v459 = vsel %vm457, 1, 0
      %v460 = vsel %vm458, 1, 0
      %v461 = vcvt.s32.f32 %v459
      %v462 = vcvt.s32.f32 %v460
      %v463 = vpack.c.bf16 %v462, %v461
      %v464 = vsel %vm457, -1e+30, %v412
      %v465 = vsel %vm458, -1e+30, %v413
      %v466 = vsel %vm416, %v464, -inf
      %467 = vmax.xlane.f32.xlu0 %v466
      %v468 = vpop.xlane.xlu0 %467
      %v469 = vsel %vm416, %v465, -inf
      %470 = vmax.xlane.f32.xlu0 %v469
      %v471 = vpop.xlane.xlu0 %470
      %vm472 = vcmp.eq.f32.partialorder %v464, %v468
      %vm473 = vcmp.eq.f32.partialorder %v465, %v471
      %v474 = vsel %vm472, %v415, 16
      %v475 = vsel %vm473, %v415, 16
      %v476 = vsel %vm416, %v474, 2147483647
      %v477 = vand.u32 %v476, 65535
      %v478 = vshra.s32 %v476, 16
      %v479 = vcvt.s32.f32 %v477
      %v480 = vcvt.s32.f32 %v478
      %481 = vmin.xlane.f32.xlu0 %v480
      %v482 = vpop.xlane.xlu0 %481
      %vm483 = vcmp.eq.f32.partialorder %v480, %v482
      %v484 = vsel %vm483, %v479, inf
      %485 = vmin.xlane.f32.xlu0 %v484
      %v486 = vpop.xlane.xlu0 %485
      %v487 = vcvt.f32.s32 %v486
      %v488 = vcvt.f32.s32 %v482
      %v489 = vshll.u32 %v488, 16
      %v490 = vadd.s32 %v489, %v487
      %v491 = vsel %vm416, %v475, 2147483647
      %v492 = vand.u32 %v491, 65535
      %v493 = vshra.s32 %v491, 16
      %v494 = vcvt.s32.f32 %v492
      %v495 = vcvt.s32.f32 %v493
      %496 = vmin.xlane.f32.xlu0 %v495
      %v497 = vpop.xlane.xlu0 %496
      %vm498 = vcmp.eq.f32.partialorder %v495, %v497
      %v499 = vsel %vm498, %v494, inf
      %500 = vmin.xlane.f32.xlu0 %v499
      %v501 = vpop.xlane.xlu0 %500
      %v502 = vcvt.f32.s32 %v501
      %v503 = vcvt.f32.s32 %v497
      %v504 = vshll.u32 %v503, 16
      %v505 = vadd.s32 %v504, %v502
      %vm506 = vcmp.eq.s32.totalorder %v415, %v490
      %vm507 = vcmp.eq.s32.totalorder %v415, %v505
      %v508 = vsel %vm506, 1, 0
      %v509 = vsel %vm507, 1, 0
      %v510 = vcvt.s32.f32 %v508
      %v511 = vcvt.s32.f32 %v509
      %v512 = vpack.c.bf16 %v511, %v510
      %v513 = vsel %vm506, -1e+30, %v464
      %v514 = vsel %vm507, -1e+30, %v465
      %v515 = vsel %vm416, %v513, -inf
      %516 = vmax.xlane.f32.xlu0 %v515
      %v517 = vpop.xlane.xlu0 %516
      %v518 = vsel %vm416, %v514, -inf
      %519 = vmax.xlane.f32.xlu0 %v518
      %v520 = vpop.xlane.xlu0 %519
      %vm521 = vcmp.eq.f32.partialorder %v513, %v517
      %vm522 = vcmp.eq.f32.partialorder %v514, %v520
      %v523 = vsel %vm521, %v415, 16
      %v524 = vsel %vm522, %v415, 16
      %v525 = vsel %vm416, %v523, 2147483647
      %v526 = vand.u32 %v525, 65535
      %v527 = vshra.s32 %v525, 16
      %v528 = vcvt.s32.f32 %v526
      %v529 = vcvt.s32.f32 %v527
      %530 = vmin.xlane.f32.xlu0 %v529
      %v531 = vpop.xlane.xlu0 %530
      %vm532 = vcmp.eq.f32.partialorder %v529, %v531
      %v533 = vsel %vm532, %v528, inf
      %534 = vmin.xlane.f32.xlu0 %v533
      %v535 = vpop.xlane.xlu0 %534
      %v536 = vcvt.f32.s32 %v535
      %v537 = vcvt.f32.s32 %v531
      %v538 = vshll.u32 %v537, 16
      %v539 = vadd.s32 %v538, %v536
      %v540 = vsel %vm416, %v524, 2147483647
      %v541 = vand.u32 %v540, 65535
      %v542 = vshra.s32 %v540, 16
      %v543 = vcvt.s32.f32 %v541
      %v544 = vcvt.s32.f32 %v542
      %545 = vmin.xlane.f32.xlu0 %v544
      %v546 = vpop.xlane.xlu0 %545
      %vm547 = vcmp.eq.f32.partialorder %v544, %v546
      %v548 = vsel %vm547, %v543, inf
      %549 = vmin.xlane.f32.xlu0 %v548
      %v550 = vpop.xlane.xlu0 %549
      %v551 = vcvt.f32.s32 %v550
      %v552 = vcvt.f32.s32 %v546
      %v553 = vshll.u32 %v552, 16
      %v554 = vadd.s32 %v553, %v551
      %vm555 = vcmp.eq.s32.totalorder %v415, %v539
      %vm556 = vcmp.eq.s32.totalorder %v415, %v554
      %v557 = vsel %vm555, 1, 0
      %v558 = vsel %vm556, 1, 0
      %v559 = vcvt.s32.f32 %v557
      %v560 = vcvt.s32.f32 %v558
      %v561 = vpack.c.bf16 %v560, %v559
      %v562 = vsel %vm555, -1e+30, %v513
      %v563 = vsel %vm556, -1e+30, %v514
      %v564 = vsel %vm416, %v562, -inf
      %565 = vmax.xlane.f32.xlu0 %v564
      %v566 = vpop.xlane.xlu0 %565
      %v567 = vsel %vm416, %v563, -inf
      %568 = vmax.xlane.f32.xlu0 %v567
      %v569 = vpop.xlane.xlu0 %568
      %vm570 = vcmp.eq.f32.partialorder %v562, %v566
      %vm571 = vcmp.eq.f32.partialorder %v563, %v569
      %v572 = vsel %vm570, %v415, 16
      %v573 = vsel %vm571, %v415, 16
      %v574 = vsel %vm416, %v572, 2147483647
      %v575 = vand.u32 %v574, 65535
      %v576 = vshra.s32 %v574, 16
      %v577 = vcvt.s32.f32 %v575
      %v578 = vcvt.s32.f32 %v576
      %579 = vmin.xlane.f32.xlu0 %v578
      %v580 = vpop.xlane.xlu0 %579
      %vm581 = vcmp.eq.f32.partialorder %v578, %v580
      %v582 = vsel %vm581, %v577, inf
      %583 = vmin.xlane.f32.xlu0 %v582
      %v584 = vpop.xlane.xlu0 %583
      %v585 = vcvt.f32.s32 %v584
      %v586 = vcvt.f32.s32 %v580
      %v587 = vshll.u32 %v586, 16
      %v588 = vadd.s32 %v587, %v585
      %v589 = vsel %vm416, %v573, 2147483647
      %v590 = vand.u32 %v589, 65535
      %v591 = vshra.s32 %v589, 16
      %v592 = vcvt.s32.f32 %v590
      %v593 = vcvt.s32.f32 %v591
      %594 = vmin.xlane.f32.xlu0 %v593
      %v595 = vpop.xlane.xlu0 %594
      %vm596 = vcmp.eq.f32.partialorder %v593, %v595
      %v597 = vsel %vm596, %v592, inf
      %598 = vmin.xlane.f32.xlu0 %v597
      %v599 = vpop.xlane.xlu0 %598
      %v600 = vcvt.f32.s32 %v599
      %v601 = vcvt.f32.s32 %v595
      %v602 = vshll.u32 %v601, 16
      %v603 = vadd.s32 %v602, %v600
      %vm604 = vcmp.eq.s32.totalorder %v415, %v588
      %vm605 = vcmp.eq.s32.totalorder %v415, %v603
      %v606 = vsel %vm604, 1, 0
      %v607 = vsel %vm605, 1, 0
      %v608 = vcvt.s32.f32 %v606
      %v609 = vcvt.s32.f32 %v607
      %v610 = vpack.c.bf16 %v609, %v608
      %v611 = vld [vmem:[#allocation2] sm:$0xff]
      %v613 = vsel %vm416, %v463, 0
      %v616 = vsel %vm416, %v512, 0
      %v619 = vsel %vm416, %v561, 0
      %v622 = vsel %vm416, %v610, 0
      %624 = vmatprep.subr.bf16.mxu0 0
      %625 = vmatpush1.bf16.msra.mxu0 %v611
      %626 = vmatprep.subr.bf16.mxu0 0
      %627 = vmatpush1.bf16.msra.mxu0 0
      %628 = vmatprep.subr.bf16.mxu0 0
      %629 = vmatpush1.bf16.msra.mxu0 0
      %630 = vmatprep.subr.bf16.mxu0 0
      %631 = vmatpush1.bf16.msra.mxu0 0
      %632 = vmatprep.subr.bf16.mxu0 0
      %633 = vmatpush1.bf16.msra.mxu0 0
      %634 = vmatprep.subr.bf16.mxu0 0
      %635 = vmatpush1.bf16.msra.mxu0 0
      %636 = vmatprep.subr.bf16.mxu0 0
      %637 = vmatpush1.bf16.msra.mxu0 0
      %638 = vmatprep.subr.bf16.mxu0 0
      %639 = vmatpush1.bf16.msra.mxu0 0
      %640 = vmatprep.subr.bf16.mxu0 0
      %641 = vmatpush1.bf16.msra.mxu0 0
      %642 = vmatprep.subr.bf16.mxu0 0
      %643 = vmatpush1.bf16.msra.mxu0 0
      %644 = vmatprep.subr.bf16.mxu0 0
      %645 = vmatpush1.bf16.msra.mxu0 0
      %646 = vmatprep.subr.bf16.mxu0 0
      %647 = vmatpush1.bf16.msra.mxu0 0
      %648 = vmatprep.subr.bf16.mxu0 0
      %649 = vmatpush1.bf16.msra.mxu0 0
      %650 = vmatprep.subr.bf16.mxu0 0
      %651 = vmatpush1.bf16.msra.mxu0 0
      %652 = vmatprep.subr.bf16.mxu0 0
      %653 = vmatpush1.bf16.msra.mxu0 0
      %654 = vmatprep.subr.bf16.mxu0 0
      %655 = vmatpush1.bf16.msra.mxu0 0
      %656 = vmatprep.mubr.bf16.mxu0 0
      %657 = vmatmul.mubr.bf16.gmra.mrb[0].mxu0 %v613
      %v658 = vpop.f32.mrb[0].mxu0
      %v659 = vadd.f32 0.0, %v658
      %v660 = vpop.f32.mrb[0].mxu0
      %v661 = vpop.f32.mrb[0].mxu0
      %v662 = vadd.f32 0.0, %v661
      %v663 = vpop.f32.mrb[0].mxu0
      %664 = vmatprep.mubr.bf16.mxu0 0
      %665 = vmatmul.mubr.bf16.gmra.mrb[0].mxu0 %v616
      %v666 = vpop.f32.mrb[0].mxu0
      %v667 = vadd.f32 0.0, %v666
      %v668 = vpop.f32.mrb[0].mxu0
      %v669 = vpop.f32.mrb[0].mxu0
      %v670 = vadd.f32 0.0, %v669
      %v671 = vpop.f32.mrb[0].mxu0
      %672 = vmatprep.mubr.bf16.mxu0 0
      %673 = vmatmul.mubr.bf16.gmra.mrb[0].mxu0 %v619
      %v674 = vpop.f32.mrb[0].mxu0
      %v675 = vadd.f32 0.0, %v674
      %v676 = vpop.f32.mrb[0].mxu0
      %v677 = vpop.f32.mrb[0].mxu0
      %v678 = vadd.f32 0.0, %v677
      %v679 = vpop.f32.mrb[0].mxu0
      %680 = vmatprep.mubr.bf16.mxu0 0
      %681 = vmatmul.mubr.bf16.gmra.mrb[0].mxu0 %v622
      %v682 = vpop.f32.mrb[0].mxu0
      %v683 = vadd.f32 0.0, %v682
      %v684 = vpop.f32.mrb[0].mxu0
      %v685 = vpop.f32.mrb[0].mxu0
      %v686 = vadd.f32 0.0, %v685
      %v687 = vpop.f32.mrb[0].mxu0
      %688 = vdwg.mxu0
      %s689 = scalar_lea.vmem [#allocation3], %s311
      %v690 = vld [vmem:[%s689] sm:$0xff]
      %v691 = vld [vmem:[%s689 + $0x8] sm:$0xff]
      %v692 = vld [vmem:[%s2] sm:$0x1]
      %v694 = vlaneseq
      %v695 = vshrl.u32 %v694, 7
      %v696 = vsub.s32 0, %v695
      %v697 = vrot.slane %v692, %v696
      %v699 = vadd.f32 %v690, %v697
      %v700 = vadd.f32 %v691, %v697
      %v701 = vadd.f32 %v659, %v699
      %v702 = vadd.f32 %v662, %v700
      %vm703 = vcmp.gt.f32.partialorder %v701, 0.0
      %vm704 = vcmp.gt.f32.partialorder %v702, 0.0
      %v705 = vmul.f32 %v701, 0.2
      %v706 = vmul.f32 %v702, 0.2
      %v707 = vsel %vm703, %v701, %v705
      %v708 = vsel %vm704, %v702, %v706
      %v709 = vadd.f32 %v667, %v699
      %v710 = vadd.f32 %v670, %v700
      %vm711 = vcmp.gt.f32.partialorder %v709, 0.0
      %vm712 = vcmp.gt.f32.partialorder %v710, 0.0
      %v713 = vmul.f32 %v709, 0.2
      %v714 = vmul.f32 %v710, 0.2
      %v715 = vsel %vm711, %v709, %v713
      %v716 = vsel %vm712, %v710, %v714
      %v717 = vmax.f32 %v707, %v715
      %v718 = vmax.f32 %v708, %v716
      %v719 = vadd.f32 %v675, %v699
      %v720 = vadd.f32 %v678, %v700
      %vm721 = vcmp.gt.f32.partialorder %v719, 0.0
      %vm722 = vcmp.gt.f32.partialorder %v720, 0.0
      %v723 = vmul.f32 %v719, 0.2
      %v724 = vmul.f32 %v720, 0.2
      %v725 = vsel %vm721, %v719, %v723
      %v726 = vsel %vm722, %v720, %v724
      %v727 = vmax.f32 %v717, %v725
      %v728 = vmax.f32 %v718, %v726
      %v729 = vadd.f32 %v683, %v699
      %v730 = vadd.f32 %v686, %v700
      %vm731 = vcmp.gt.f32.partialorder %v729, 0.0
      %vm732 = vcmp.gt.f32.partialorder %v730, 0.0
      %v733 = vmul.f32 %v729, 0.2
      %v734 = vmul.f32 %v730, 0.2
      %v735 = vsel %vm731, %v729, %v733
      %v736 = vsel %vm732, %v730, %v734
      %v737 = vmax.f32 %v727, %v735
      %v738 = vmax.f32 %v728, %v736
      %vm739 = vcmask 261120
      %740 = vst.msk [vmem:[%s192] sm:$0xff] %vm739, %v737
      %741 = vst.msk [vmem:[%s192 + $0x8] sm:$0xff] %vm739, %v738
      %s742 = smul.u32 2, %s19
      %p743 = scmp.lt.s32.totalorder %s18, 1
      %s744 = scalar_select %p743, %s18, 1
      %p745 = scmp.lt.s32.totalorder %s742, 1
      %s746 = scalar_select %p745, %s742, 1
      %s747 = smul.addr %s744, 2
      %s748 = sadd.s32 %s746, %s747
      %s749 = smul.addr %s748, 8
      %s750 = scalar_lea.vmem %s3, %s749
      // Predicated region
      $region37: #{forward.6} parent=31 // pred_check
        %p751 = pneg %p114
      $region38: #{forward.6} parent=31 // pred_check_branch
        %753 = sbr.rel (%p751) target = $region40
      $region39: #{forward.6} parent=31 // pred_region
        %s754 = smul.u32 2, %s19
      $region40: #{forward.6} parent=31 // pred_fallthru
        _
    $region32: #{forward.6} parent=5 // pred_fallthru
      _
    %p755 = scmp.le.s32.totalorder 2, %s9
    // Predicated region
    $region41: #{forward.6} parent=5 // pred_check
      %p756 = pneg %p755
    $region42: #{forward.6} parent=5 // pred_check_branch
      %758 = sbr.rel (%p756) target = $region44
    $region43: #{forward.6} parent=5 // pred_region
      %s759 = ssub.s32 %s9, 2
      // Predicated region
      $region45: #{forward.6} parent=43 // pred_check
        %p760 = pneg %p120
      $region46: #{forward.6} parent=43 // pred_check_branch
        %762 = sbr.rel (%p760) target = $region48
      $region47: #{forward.6} parent=43 // pred_region
        %s763 = smul.u32 2, %s21
        %p764 = scmp.lt.s32.totalorder %s20, 1
        %s765 = scalar_select %p764, %s20, 1
        %p766 = scmp.lt.s32.totalorder %s763, 1
        %s767 = scalar_select %p766, %s763, 1
        %s768 = smul.addr %s765, 2
        %s769 = sadd.s32 %s767, %s768
        %s770 = smul.addr %s769, 8
        %s771 = scalar_lea.vmem %s3, %s770
      $region48: #{forward.6} parent=43 // pred_fallthru
        _
    $region44: #{forward.6} parent=5 // pred_fallthru
      _
  $region6: #{forward.6} parent=0 // loop_footer
    %s13 = sadd.s32 1, %s9
  $region7: #{forward.6} parent=0 // loop_footer_branch
    %8 = sbr.rel target = $region3
  $region8: #{forward.6} parent=0 // loop_exit
    _

// kernel: forward.8
$region0: #{forward.8}
  #allocation0 [shape = 'u32[]', space=smem, size = 0x4, offset = 0x4, fixed_abs, tag = 'smem constant byte address 0x4 - core index']
  #allocation1 [shape = 'u32[144,128]{1,0:T(1,128)}', space=vmem, size = 0x12000, scoped, tag = 'internal scratch']
  #allocation2 [shape = 'bf16[16,64]{1,0:T(16,128)(2,1)}', space=vmem, size = 0x1000, scoped, tag = 'scratch operand']
  #allocation3 [shape = 'f32[16,64]{1,0:T(8,128)}', space=vmem, size = 0x2000, scoped, tag = 'scratch operand']
  #allocation4 [shape = 'f32[1,16]{1,0:T(1,128)}', space=vmem, size = 0x200, scoped, tag = 'scratch operand']
  %s0 = inlined_call_operand.vmem [shape: f32[2,16,32], index: 0, kind: input, shape index: {}]
  %s1 = inlined_call_operand.vmem [shape: f32[32,128], index: 1, kind: input, shape index: {}]
  %s2 = inlined_call_operand.vmem [shape: f32[1,64], index: 2, kind: input, shape index: {}]
  %s3 = inlined_call_operand.vmem [shape: f32[2,16,64], index: 3, kind: output, shape index: {}]
  %s4 = sld [smem:[#allocation0]]
  $region49: #{forward.8} parent=0
    _
  %s6 = ssub.s32 1, %s4
  %s7 = scalar_select 0, %s6, %s4
  loop: start=0, step=1, limit=4
  $region2: #{forward.8} parent=0 // loop_pre_header
    _
  $region3: #{forward.8} parent=0 // loop_header
    %s9 = sphi 0, %s13
    %p10 = scmp.ge.s32.totalorder %s9, 4
    %s16 = sphi 0, %s28
    %s17 = sphi 0, %s24
    %s18 = sphi 0, %s16
    %s19 = sphi 0, %s17
    %s20 = sphi 0, %s18
    %s21 = sphi 0, %s19
    %s31 = sphi 0, %s33
    %s34 = sphi 0, %s31
    %s35 = sphi 0, %s34
    %s51 = sphi 0, %s35
    %s55 = sphi 0, %s55
    %s57 = sphi 0, %s55
    %s58 = sphi 0, %s57
    %s72 = sphi 0, %s58
    %s76 = sphi 0, %s76
    %s78 = sphi 0, %s76
    %s79 = sphi 0, %s78
    %s93 = sphi 0, %s79
    %s101 = sphi 0, %s103
    %s104 = sphi 0, %s101
    %s105 = sphi 0, %s104
    %s121 = sphi 0, %s105
  $region4: #{forward.8} parent=0 // loop_header_branch
    %12 = sbr.rel (%p10) target = $region8
  $region5: #{forward.8} parent=0 // loop_body
    %s14 = ssub.s32 %s9, 1
    %s15 = ssub.s32 %s9, 2
    %s22 = sadd.s32 1, %s17
    %p23 = scmp.ge.s32.totalorder %s22, 1
    %s24 = scalar_select %p23, 0, %s22
    %s25 = sadd.s32 1, %s16
    %s26 = scalar_select %p23, %s25, %s16
    %p27 = scmp.ge.s32.totalorder %s26, 2
    %s28 = scalar_select %p27, 0, %s26
    %s29 = ssub.s32 %s16, %s28
    %p30 = scmp.eq.s32.totalorder %s29, 0
    %s32 = sadd.s32 %s31, 1
    %s33 = scalar_select %p30, %s31, %s32
    %p36 = pneg %p30
    %p37 = scmp.eq.s32.totalorder %s9, 1
    %p38 = por %p36, %p37
    %p39 = scmp.ne.s32.totalorder %s31, %s34
    %p40 = scmp.eq.s32.totalorder %s9, 0
    %p41 = por %p39, %p40
    %p42 = scmp.ne.s32.totalorder %s31, %s34
    %p43 = scmp.eq.s32.totalorder %s14, 1
    %p44 = por %p42, %p43
    %p45 = scmp.ne.s32.totalorder %s34, %s35
    %p46 = scmp.eq.s32.totalorder %s14, 0
    %p47 = por %p45, %p46
    %p48 = scmp.ne.s32.totalorder %s34, %s35
    %p49 = scmp.eq.s32.totalorder %s15, 1
    %p50 = por %p48, %p49
    %p52 = scmp.ne.s32.totalorder %s35, %s51
    %p53 = scmp.eq.s32.totalorder %s15, 0
    %p54 = por %p52, %p53
    %s56 = sadd.s32 %s55, 1
    %p59 = scmp.eq.s32.totalorder %s9, 1
    %p60 = scmp.ne.s32.totalorder %s55, %s57
    %p61 = scmp.eq.s32.totalorder %s9, 0
    %p62 = por %p60, %p61
    %p63 = scmp.ne.s32.totalorder %s55, %s57
    %p64 = scmp.eq.s32.totalorder %s14, 1
    %p65 = por %p63, %p64
    %p66 = scmp.ne.s32.totalorder %s57, %s58
    %p67 = scmp.eq.s32.totalorder %s14, 0
    %p68 = por %p66, %p67
    %p69 = scmp.ne.s32.totalorder %s57, %s58
    %p70 = scmp.eq.s32.totalorder %s15, 1
    %p71 = por %p69, %p70
    %p73 = scmp.ne.s32.totalorder %s58, %s72
    %p74 = scmp.eq.s32.totalorder %s15, 0
    %p75 = por %p73, %p74
    %s77 = sadd.s32 %s76, 1
    %p80 = scmp.eq.s32.totalorder %s9, 1
    %p81 = scmp.ne.s32.totalorder %s76, %s78
    %p82 = scmp.eq.s32.totalorder %s9, 0
    %p83 = por %p81, %p82
    %p84 = scmp.ne.s32.totalorder %s76, %s78
    %p85 = scmp.eq.s32.totalorder %s14, 1
    %p86 = por %p84, %p85
    %p87 = scmp.ne.s32.totalorder %s78, %s79
    %p88 = scmp.eq.s32.totalorder %s14, 0
    %p89 = por %p87, %p88
    %p90 = scmp.ne.s32.totalorder %s78, %s79
    %p91 = scmp.eq.s32.totalorder %s15, 1
    %p92 = por %p90, %p91
    %p94 = scmp.ne.s32.totalorder %s79, %s93
    %p95 = scmp.eq.s32.totalorder %s15, 0
    %p96 = por %p94, %p95
    %s97 = ssub.s32 %s16, %s28
    %s98 = ssub.s32 %s17, %s24
    %s99 = sor.u32 %s97, %s98
    %p100 = scmp.eq.s32.totalorder %s99, 0
    %s102 = sadd.s32 %s101, 1
    %s103 = scalar_select %p100, %s101, %s102
    %p106 = pneg %p100
    %p107 = scmp.eq.s32.totalorder %s9, 1
    %p108 = por %p106, %p107
    %p109 = scmp.ne.s32.totalorder %s101, %s104
    %p110 = scmp.eq.s32.totalorder %s9, 0
    %p111 = por %p109, %p110
    %p112 = scmp.ne.s32.totalorder %s101, %s104
    %p113 = scmp.eq.s32.totalorder %s14, 1
    %p114 = por %p112, %p113
    %p115 = scmp.ne.s32.totalorder %s104, %s105
    %p116 = scmp.eq.s32.totalorder %s14, 0
    %p117 = por %p115, %p116
    %p118 = scmp.ne.s32.totalorder %s104, %s105
    %p119 = scmp.eq.s32.totalorder %s15, 1
    %p120 = por %p118, %p119
    %p122 = scmp.ne.s32.totalorder %s105, %s121
    %p123 = scmp.eq.s32.totalorder %s15, 0
    %p124 = por %p122, %p123
    %p125 = scmp.le.s32.totalorder 1, %s9
    %p126 = scmp.lt.s32.totalorder %s9, 3
    %p127 = pnand %p125, %p126
    %p128 = pneg %p127
    // Predicated region
    $region9: #{forward.8} parent=5 // pred_check
      _
    $region10: #{forward.8} parent=5 // pred_check_branch
      %130 = sbr.rel (%p127) target = $region12
    $region11: #{forward.8} parent=5 // pred_region
      %s131 = ssub.s32 %s9, 1
      // Predicated region
      $region13: #{forward.8} parent=11 // pred_check
        %p132 = pneg %p68
      $region14: #{forward.8} parent=11 // pred_check_branch
        %134 = sbr.rel (%p132) target = $region16
      $region15: #{forward.8} parent=11 // pred_region
        _
      $region16: #{forward.8} parent=11 // pred_fallthru
        _
      // Predicated region
      $region17: #{forward.8} parent=11 // pred_check
        %p135 = pneg %p89
      $region18: #{forward.8} parent=11 // pred_check_branch
        %137 = sbr.rel (%p135) target = $region20
      $region19: #{forward.8} parent=11 // pred_region
        _
      $region20: #{forward.8} parent=11 // pred_fallthru
        _
    $region12: #{forward.8} parent=5 // pred_fallthru
      _
    %p138 = scmp.lt.s32.totalorder %s9, 2
    // Predicated region
    $region21: #{forward.8} parent=5 // pred_check
      %p139 = pneg %p138
    $region22: #{forward.8} parent=5 // pred_check_branch
      %141 = sbr.rel (%p139) target = $region24
    $region23: #{forward.8} parent=5 // pred_region
      // Predicated region
      $region25: #{forward.8} parent=23 // pred_check
        %p142 = pneg %p41
      $region26: #{forward.8} parent=23 // pred_check_branch
        %144 = sbr.rel (%p142) target = $region28
      $region27: #{forward.8} parent=23 // pred_region
        %p145 = scmp.lt.s32.totalorder %s16, 1
        %s146 = scalar_select %p145, %s16, 1
        %s147 = smul.addr %s146, 2
        %s148 = smul.addr %s147, 8
        %s149 = scalar_lea.vmem %s0, %s148
      $region28: #{forward.8} parent=23 // pred_fallthru
        _
    $region24: #{forward.8} parent=5 // pred_fallthru
      _
    %p150 = scmp.le.s32.totalorder 1, %s9
    %p151 = scmp.lt.s32.totalorder %s9, 3
    %p152 = pnand %p150, %p151
    %p153 = pneg %p152
    // Predicated region
    $region29: #{forward.8} parent=5 // pred_check
      _
    $region30: #{forward.8} parent=5 // pred_check_branch
      %155 = sbr.rel (%p152) target = $region32
    $region31: #{forward.8} parent=5 // pred_region
      %s156 = ssub.s32 %s9, 1
      %p157 = scmp.lt.s32.totalorder %s18, 1
      %s158 = scalar_select %p157, %s18, 1
      %s159 = smul.addr %s158, 2
      %s160 = smul.addr %s159, 8
      %s161 = scalar_lea.vmem %s0, %s160
      %p162 = pneg %p47
      %p163 = pneg %p44
      %p164 = pneg %p68
      %p165 = pneg %p65
      %p166 = pneg %p89
      %p167 = pneg %p86
      %p168 = pneg %p117
      %p169 = pneg %p114
      %s170 = smul.u32 2, %s19
      %p171 = scmp.lt.s32.totalorder %s18, 1
      %s172 = scalar_select %p171, %s18, 1
      %p173 = scmp.lt.s32.totalorder %s170, 1
      %s174 = scalar_select %p173, %s170, 1
      %s175 = smul.addr %s172, 2
      %s176 = sadd.s32 %s174, %s175
      %s177 = smul.addr %s176, 8
      %s178 = scalar_lea.vmem %s3, %s177
      %p179 = scmp.lt.s32.totalorder %s18, 1
      %s180 = scalar_select %p179, %s18, 1
      %s181 = smul.addr %s180, 2
      %s182 = smul.addr %s181, 8
      %s183 = scalar_lea.vmem %s0, %s182
      %s184 = smul.u32 2, %s19
      %p185 = scmp.lt.s32.totalorder %s18, 1
      %s186 = scalar_select %p185, %s18, 1
      %p187 = scmp.lt.s32.totalorder %s184, 1
      %s188 = scalar_select %p187, %s184, 1
      %s189 = smul.addr %s186, 2
      %s190 = sadd.s32 %s188, %s189
      %s191 = smul.addr %s190, 8
      %s192 = scalar_lea.vmem %s3, %s191
      %s193 = smul.u32 2, %s19
      %v195 = vld [vmem:[%s183] sm:$0xff]
      %v196 = vld [vmem:[%s183 + $0x8] sm:$0xff]
      %p197 = scmp.eq.s32.totalorder %s19, 0
      // Predicated region
      $region33: #{forward.8} parent=31 // pred_check
        %p198 = pneg %p197
      $region34: #{forward.8} parent=31 // pred_check_branch
        %200 = sbr.rel (%p198) target = $region36
      $region35: #{forward.8} parent=31 // pred_region
        %v201 = vpack.c.bf16 %v196, %v195
        %v202 = vld [vmem:[%s1] sm:$0xff]
        %v203 = vld [vmem:[%s1 + $0x8] sm:$0xff]
        %v204 = vld [vmem:[%s1 + $0x10] sm:$0xff]
        %v205 = vld [vmem:[%s1 + $0x18] sm:$0xff]
        %v206 = vpack.c.bf16 %v203, %v202
        %v207 = vpack.c.bf16 %v205, %v204
        %vm208 = vcmask 261120
        %v210 = vsel %vm208, %v201, 0
        %212 = vmatprep.subr.bf16.mxu0 0
        %213 = vmatpush1.bf16.msra.mxu0 %v206
        %214 = vmatprep.subr.bf16.mxu0 0
        %215 = vmatpush1.bf16.msra.mxu0 %v207
        %216 = vmatprep.subr.bf16.mxu0 0
        %217 = vmatpush1.bf16.msra.mxu0 0
        %218 = vmatprep.subr.bf16.mxu0 0
        %219 = vmatpush1.bf16.msra.mxu0 0
        %220 = vmatprep.subr.bf16.mxu0 0
        %221 = vmatpush1.bf16.msra.mxu0 0
        %222 = vmatprep.subr.bf16.mxu0 0
        %223 = vmatpush1.bf16.msra.mxu0 0
        %224 = vmatprep.subr.bf16.mxu0 0
        %225 = vmatpush1.bf16.msra.mxu0 0
        %226 = vmatprep.subr.bf16.mxu0 0
        %227 = vmatpush1.bf16.msra.mxu0 0
        %228 = vmatprep.subr.bf16.mxu0 0
        %229 = vmatpush1.bf16.msra.mxu0 0
        %230 = vmatprep.subr.bf16.mxu0 0
        %231 = vmatpush1.bf16.msra.mxu0 0
        %232 = vmatprep.subr.bf16.mxu0 0
        %233 = vmatpush1.bf16.msra.mxu0 0
        %234 = vmatprep.subr.bf16.mxu0 0
        %235 = vmatpush1.bf16.msra.mxu0 0
        %236 = vmatprep.subr.bf16.mxu0 0
        %237 = vmatpush1.bf16.msra.mxu0 0
        %238 = vmatprep.subr.bf16.mxu0 0
        %239 = vmatpush1.bf16.msra.mxu0 0
        %240 = vmatprep.subr.bf16.mxu0 0
        %241 = vmatpush1.bf16.msra.mxu0 0
        %242 = vmatprep.subr.bf16.mxu0 0
        %243 = vmatpush1.bf16.msra.mxu0 0
        %244 = vmatprep.mubr.bf16.mxu0 0
        %245 = vmatmul.mubr.bf16.gmra.mrb[0].mxu0 %v210
        %v246 = vpop.f32.mrb[0].mxu0
        %v247 = vadd.f32 0.0, %v246
        %v248 = vpop.f32.mrb[0].mxu0
        %v249 = vpop.f32.mrb[0].mxu0
        %v250 = vadd.f32 0.0, %v249
        %v251 = vpop.f32.mrb[0].mxu0
        %252 = vdwg.mxu0
        %v253 = vpack.c.bf16 %v250, %v247
        %vm254 = vcmask 523264
        %255 = vst.msk [vmem:[#allocation2] sm:$0xff] %vm254, %v253
        %258 = vrot.lane.b32.xlu0 %v247, 64
        %v259 = vpop.permute.xlu0 %258
        %260 = vrot.lane.b32.xlu0 %v250, 64
        %v261 = vpop.permute.xlu0 %260
        %264 = vst.msk [vmem:[#allocation3] sm:$0xff] %vm254, %v259
        %265 = vst.msk [vmem:[#allocation3 + $0x8] sm:$0xff] %vm254, %v261
        %v266 = vmul.f32 %v195, %v195
        %v267 = vmul.f32 %v196, %v196
        %v268 = vsel %vm208, %v266, 0.0
        %269 = vadd.xlane.f32.xlu0 %v268
        %v270 = vpop.xlane.xlu0 %269
        %v271 = vsel %vm208, %v267, 0.0
        %272 = vadd.xlane.f32.xlu0 %v271
        %v273 = vpop.xlane.xlu0 %272
        %274 = vxpose.xlu0.b32.start [1/16] %v270, 128
        %275 = vxpose.xlu0.b32.cont [2/16] %v273, 128
        %276 = vxpose.xlu0.b32.cont [3/16] 0.0, 128
        %277 = vxpose.xlu0.b32.cont [4/16] 0.0, 128
        %278 = vxpose.xlu0.b32.cont [5/16] 0.0, 128
        %279 = vxpose.xlu0.b32.cont [6/16] 0.0, 128
        %280 = vxpose.xlu0.b32.cont [7/16] 0.0, 128
        %281 = vxpose.xlu0.b32.cont [8/16] 0.0, 128
        %282 = vxpose.xlu0.b32.cont [9/16] 0.0, 128
        %283 = vxpose.xlu0.b32.cont [10/16] 0.0, 128
        %284 = vxpose.xlu0.b32.cont [11/16] 0.0, 128
        %285 = vxpose.xlu0.b32.cont [12/16] 0.0, 128
        %286 = vxpose.xlu0.b32.cont [13/16] 0.0, 128
        %287 = vxpose.xlu0.b32.cont [14/16] 0.0, 128
        %288 = vxpose.xlu0.b32.cont [15/16] 0.0, 128
        %289 = vxpose.xlu0.b32.end [16/16] 0.0, 128
        %v290 = vpop.trf.xlu0
        %v291 = vpop.trf.xlu0
        %v292 = vpop.trf.xlu0
        %v293 = vpop.trf.xlu0
        %v294 = vpop.trf.xlu0
        %v295 = vpop.trf.xlu0
        %v296 = vpop.trf.xlu0
        %v297 = vpop.trf.xlu0
        %v298 = vpop.trf.xlu0
        %v299 = vpop.trf.xlu0
        %v300 = vpop.trf.xlu0
        %v301 = vpop.trf.xlu0
        %v302 = vpop.trf.xlu0
        %v303 = vpop.trf.xlu0
        %v304 = vpop.trf.xlu0
        %v305 = vpop.trf.xlu0
        %vm306 = vcmask 122880
        %307 = vst.msk [vmem:[#allocation4] sm:$0x1] %vm306, %v290
      $region36: #{forward.8} parent=31 // pred_fallthru
        _
      %s308 = smul.u32 %s19, 16
      %s309 = scalar_lea.vmem %s183, %s308
      %v310 = vld [vmem:[%s309] sm:$0xff]
      %v311 = vld [vmem:[%s309 + $0x8] sm:$0xff]
      %vm312 = vcmask 261120
      %v314 = vsel %vm312, %v310, 0
      %v317 = vsel %vm312, %v311, 0
      %v320 = vsel %vm312, %v195, 0
      %v323 = vsel %vm312, %v196, 0
      %325 = vmatprep.subr.mxu0 0.0
      %326 = vmatpush1.xpose.msra.mxu0 %v320
      %327 = vmatprep.subr.mxu0 0.0
      %328 = vmatpush1.xpose.msra.mxu0 %v323
      %329 = vmatprep.subr.mxu0 0.0
      %330 = vmatpush1.xpose.msra.mxu0 0.0
      %331 = vmatprep.subr.mxu0 0.0
      %332 = vmatpush1.xpose.msra.mxu0 0.0
      %333 = vmatprep.subr.mxu0 0.0
      %334 = vmatpush1.xpose.msra.mxu0 0.0
      %335 = vmatprep.subr.mxu0 0.0
      %336 = vmatpush1.xpose.msra.mxu0 0.0
      %337 = vmatprep.subr.mxu0 0.0
      %338 = vmatpush1.xpose.msra.mxu0 0.0
      %339 = vmatprep.subr.mxu0 0.0
      %340 = vmatpush1.xpose.msra.mxu0 0.0
      %341 = vmatprep.subr.mxu0 0.0
      %342 = vmatpush1.xpose.msra.mxu0 0.0
      %343 = vmatprep.subr.mxu0 0.0
      %344 = vmatpush1.xpose.msra.mxu0 0.0
      %345 = vmatprep.subr.mxu0 0.0
      %346 = vmatpush1.xpose.msra.mxu0 0.0
      %347 = vmatprep.subr.mxu0 0.0
      %348 = vmatpush1.xpose.msra.mxu0 0.0
      %349 = vmatprep.subr.mxu0 0.0
      %350 = vmatpush1.xpose.msra.mxu0 0.0
      %351 = vmatprep.subr.mxu0 0.0
      %352 = vmatpush1.xpose.msra.mxu0 0.0
      %353 = vmatprep.subr.mxu0 0.0
      %354 = vmatpush1.xpose.msra.mxu0 0.0
      %355 = vmatprep.subr.mxu0 0.0
      %356 = vmatpush1.xpose.msra.mxu0 0.0
      %357 = vmatprep.subr.mxu0 0.0
      %358 = vmatpush1.xpose.msra.mxu0 0.0
      %359 = vmatprep.subr.mxu0 0.0
      %360 = vmatpush1.xpose.msra.mxu0 0.0
      %361 = vmatprep.subr.mxu0 0.0
      %362 = vmatpush1.xpose.msra.mxu0 0.0
      %363 = vmatprep.subr.mxu0 0.0
      %364 = vmatpush1.xpose.msra.mxu0 0.0
      %365 = vmatprep.subr.mxu0 0.0
      %366 = vmatpush1.xpose.msra.mxu0 0.0
      %367 = vmatprep.subr.mxu0 0.0
      %368 = vmatpush1.xpose.msra.mxu0 0.0
      %369 = vmatprep.subr.mxu0 0.0
      %370 = vmatpush1.xpose.msra.mxu0 0.0
      %371 = vmatprep.subr.mxu0 0.0
      %372 = vmatpush1.xpose.msra.mxu0 0.0
      %373 = vmatprep.subr.mxu0 0.0
      %374 = vmatpush1.xpose.msra.mxu0 0.0
      %375 = vmatprep.subr.mxu0 0.0
      %376 = vmatpush1.xpose.msra.mxu0 0.0
      %377 = vmatprep.subr.mxu0 0.0
      %378 = vmatpush1.xpose.msra.mxu0 0.0
      %379 = vmatprep.subr.mxu0 0.0
      %380 = vmatpush1.xpose.msra.mxu0 0.0
      %381 = vmatprep.subr.mxu0 0.0
      %382 = vmatpush1.xpose.msra.mxu0 0.0
      %383 = vmatprep.subr.mxu0 0.0
      %384 = vmatpush1.xpose.msra.mxu0 0.0
      %385 = vmatprep.subr.mxu0 0.0
      %386 = vmatpush1.xpose.msra.mxu0 0.0
      %387 = vmatprep.subr.mxu0 0.0
      %388 = vmatpush1.xpose.msra.mxu0 0.0
      %389 = vmatprep.mubr.f32.mxu0 0.0
      %390 = vmatmul.mubr.f32.gmra.mrb[0].mxu0 %v314
      %v391 = vpop.f32.mrb[0].mxu0
      %v392 = vadd.f32 0.0, %v391
      %v393 = vpop.f32.mrb[0].mxu0
      %394 = vmatprep.mubr.f32.mxu0 0.0
      %395 = vmatmul.mubr.f32.gmra.mrb[0].mxu0 %v317
      %v396 = vpop.f32.mrb[0].mxu0
      %v397 = vadd.f32 0.0, %v396
      %v398 = vpop.f32.mrb[0].mxu0
      %399 = vdwg.mxu0
      %v400 = vmul.f32 %v392, 2.0
      %v401 = vmul.f32 %v397, 2.0
      %v402 = vld [vmem:[#allocation4] sm:$0x1]
      %v404 = vlaneseq
      %v405 = vshrl.u32 %v404, 7
      %v406 = vsub.s32 0, %v405
      %v407 = vrot.slane %v402, %v406
      %v409 = vsub.f32 %v400, %v407
      %v410 = vsub.f32 %v401, %v407
      %v411 = vlaneseq
      %v412 = vand.u32 %v411, 127
      %vm413 = vcmask 130048
      %v414 = vsel %vm413, %v409, -inf
      %415 = vmax.xlane.f32.xlu0 %v414
      %v416 = vpop.xlane.xlu0 %415
      %v417 = vsel %vm413, %v410, -inf
      %418 = vmax.xlane.f32.xlu0 %v417
      %v419 = vpop.xlane.xlu0 %418
      %vm420 = vcmp.eq.f32.partialorder %v409, %v416
      %vm421 = vcmp.eq.f32.partialorder %v410, %v419
      %v422 = vsel %vm420, %v412, 16
      %v423 = vsel %vm421, %v412, 16
      %v424 = vsel %vm413, %v422, 2147483647
      %v425 = vand.u32 %v424, 65535
      %v426 = vshra.s32 %v424, 16
      %v427 = vcvt.s32.f32 %v425
      %v428 = vcvt.s32.f32 %v426
      %429 = vmin.xlane.f32.xlu0 %v428
      %v430 = vpop.xlane.xlu0 %429
      %vm431 = vcmp.eq.f32.partialorder %v428, %v430
      %v432 = vsel %vm431, %v427, inf
      %433 = vmin.xlane.f32.xlu0 %v432
      %v434 = vpop.xlane.xlu0 %433
      %v435 = vcvt.f32.s32 %v434
      %v436 = vcvt.f32.s32 %v430
      %v437 = vshll.u32 %v436, 16
      %v438 = vadd.s32 %v437, %v435
      %v439 = vsel %vm413, %v423, 2147483647
      %v440 = vand.u32 %v439, 65535
      %v441 = vshra.s32 %v439, 16
      %v442 = vcvt.s32.f32 %v440
      %v443 = vcvt.s32.f32 %v441
      %444 = vmin.xlane.f32.xlu0 %v443
      %v445 = vpop.xlane.xlu0 %444
      %vm446 = vcmp.eq.f32.partialorder %v443, %v445
      %v447 = vsel %vm446, %v442, inf
      %448 = vmin.xlane.f32.xlu0 %v447
      %v449 = vpop.xlane.xlu0 %448
      %v450 = vcvt.f32.s32 %v449
      %v451 = vcvt.f32.s32 %v445
      %v452 = vshll.u32 %v451, 16
      %v453 = vadd.s32 %v452, %v450
      %vm454 = vcmp.eq.s32.totalorder %v412, %v438
      %vm455 = vcmp.eq.s32.totalorder %v412, %v453
      %v456 = vsel %vm454, 1, 0
      %v457 = vsel %vm455, 1, 0
      %v458 = vcvt.s32.f32 %v456
      %v459 = vcvt.s32.f32 %v457
      %v460 = vpack.c.bf16 %v459, %v458
      %v461 = vsel %vm454, -1e+30, %v409
      %v462 = vsel %vm455, -1e+30, %v410
      %v463 = vsel %vm413, %v461, -inf
      %464 = vmax.xlane.f32.xlu0 %v463
      %v465 = vpop.xlane.xlu0 %464
      %v466 = vsel %vm413, %v462, -inf
      %467 = vmax.xlane.f32.xlu0 %v466
      %v468 = vpop.xlane.xlu0 %467
      %vm469 = vcmp.eq.f32.partialorder %v461, %v465
      %vm470 = vcmp.eq.f32.partialorder %v462, %v468
      %v471 = vsel %vm469, %v412, 16
      %v472 = vsel %vm470, %v412, 16
      %v473 = vsel %vm413, %v471, 2147483647
      %v474 = vand.u32 %v473, 65535
      %v475 = vshra.s32 %v473, 16
      %v476 = vcvt.s32.f32 %v474
      %v477 = vcvt.s32.f32 %v475
      %478 = vmin.xlane.f32.xlu0 %v477
      %v479 = vpop.xlane.xlu0 %478
      %vm480 = vcmp.eq.f32.partialorder %v477, %v479
      %v481 = vsel %vm480, %v476, inf
      %482 = vmin.xlane.f32.xlu0 %v481
      %v483 = vpop.xlane.xlu0 %482
      %v484 = vcvt.f32.s32 %v483
      %v485 = vcvt.f32.s32 %v479
      %v486 = vshll.u32 %v485, 16
      %v487 = vadd.s32 %v486, %v484
      %v488 = vsel %vm413, %v472, 2147483647
      %v489 = vand.u32 %v488, 65535
      %v490 = vshra.s32 %v488, 16
      %v491 = vcvt.s32.f32 %v489
      %v492 = vcvt.s32.f32 %v490
      %493 = vmin.xlane.f32.xlu0 %v492
      %v494 = vpop.xlane.xlu0 %493
      %vm495 = vcmp.eq.f32.partialorder %v492, %v494
      %v496 = vsel %vm495, %v491, inf
      %497 = vmin.xlane.f32.xlu0 %v496
      %v498 = vpop.xlane.xlu0 %497
      %v499 = vcvt.f32.s32 %v498
      %v500 = vcvt.f32.s32 %v494
      %v501 = vshll.u32 %v500, 16
      %v502 = vadd.s32 %v501, %v499
      %vm503 = vcmp.eq.s32.totalorder %v412, %v487
      %vm504 = vcmp.eq.s32.totalorder %v412, %v502
      %v505 = vsel %vm503, 1, 0
      %v506 = vsel %vm504, 1, 0
      %v507 = vcvt.s32.f32 %v505
      %v508 = vcvt.s32.f32 %v506
      %v509 = vpack.c.bf16 %v508, %v507
      %v510 = vsel %vm503, -1e+30, %v461
      %v511 = vsel %vm504, -1e+30, %v462
      %v512 = vsel %vm413, %v510, -inf
      %513 = vmax.xlane.f32.xlu0 %v512
      %v514 = vpop.xlane.xlu0 %513
      %v515 = vsel %vm413, %v511, -inf
      %516 = vmax.xlane.f32.xlu0 %v515
      %v517 = vpop.xlane.xlu0 %516
      %vm518 = vcmp.eq.f32.partialorder %v510, %v514
      %vm519 = vcmp.eq.f32.partialorder %v511, %v517
      %v520 = vsel %vm518, %v412, 16
      %v521 = vsel %vm519, %v412, 16
      %v522 = vsel %vm413, %v520, 2147483647
      %v523 = vand.u32 %v522, 65535
      %v524 = vshra.s32 %v522, 16
      %v525 = vcvt.s32.f32 %v523
      %v526 = vcvt.s32.f32 %v524
      %527 = vmin.xlane.f32.xlu0 %v526
      %v528 = vpop.xlane.xlu0 %527
      %vm529 = vcmp.eq.f32.partialorder %v526, %v528
      %v530 = vsel %vm529, %v525, inf
      %531 = vmin.xlane.f32.xlu0 %v530
      %v532 = vpop.xlane.xlu0 %531
      %v533 = vcvt.f32.s32 %v532
      %v534 = vcvt.f32.s32 %v528
      %v535 = vshll.u32 %v534, 16
      %v536 = vadd.s32 %v535, %v533
      %v537 = vsel %vm413, %v521, 2147483647
      %v538 = vand.u32 %v537, 65535
      %v539 = vshra.s32 %v537, 16
      %v540 = vcvt.s32.f32 %v538
      %v541 = vcvt.s32.f32 %v539
      %542 = vmin.xlane.f32.xlu0 %v541
      %v543 = vpop.xlane.xlu0 %542
      %vm544 = vcmp.eq.f32.partialorder %v541, %v543
      %v545 = vsel %vm544, %v540, inf
      %546 = vmin.xlane.f32.xlu0 %v545
      %v547 = vpop.xlane.xlu0 %546
      %v548 = vcvt.f32.s32 %v547
      %v549 = vcvt.f32.s32 %v543
      %v550 = vshll.u32 %v549, 16
      %v551 = vadd.s32 %v550, %v548
      %vm552 = vcmp.eq.s32.totalorder %v412, %v536
      %vm553 = vcmp.eq.s32.totalorder %v412, %v551
      %v554 = vsel %vm552, 1, 0
      %v555 = vsel %vm553, 1, 0
      %v556 = vcvt.s32.f32 %v554
      %v557 = vcvt.s32.f32 %v555
      %v558 = vpack.c.bf16 %v557, %v556
      %v559 = vsel %vm552, -1e+30, %v510
      %v560 = vsel %vm553, -1e+30, %v511
      %v561 = vsel %vm413, %v559, -inf
      %562 = vmax.xlane.f32.xlu0 %v561
      %v563 = vpop.xlane.xlu0 %562
      %v564 = vsel %vm413, %v560, -inf
      %565 = vmax.xlane.f32.xlu0 %v564
      %v566 = vpop.xlane.xlu0 %565
      %vm567 = vcmp.eq.f32.partialorder %v559, %v563
      %vm568 = vcmp.eq.f32.partialorder %v560, %v566
      %v569 = vsel %vm567, %v412, 16
      %v570 = vsel %vm568, %v412, 16
      %v571 = vsel %vm413, %v569, 2147483647
      %v572 = vand.u32 %v571, 65535
      %v573 = vshra.s32 %v571, 16
      %v574 = vcvt.s32.f32 %v572
      %v575 = vcvt.s32.f32 %v573
      %576 = vmin.xlane.f32.xlu0 %v575
      %v577 = vpop.xlane.xlu0 %576
      %vm578 = vcmp.eq.f32.partialorder %v575, %v577
      %v579 = vsel %vm578, %v574, inf
      %580 = vmin.xlane.f32.xlu0 %v579
      %v581 = vpop.xlane.xlu0 %580
      %v582 = vcvt.f32.s32 %v581
      %v583 = vcvt.f32.s32 %v577
      %v584 = vshll.u32 %v583, 16
      %v585 = vadd.s32 %v584, %v582
      %v586 = vsel %vm413, %v570, 2147483647
      %v587 = vand.u32 %v586, 65535
      %v588 = vshra.s32 %v586, 16
      %v589 = vcvt.s32.f32 %v587
      %v590 = vcvt.s32.f32 %v588
      %591 = vmin.xlane.f32.xlu0 %v590
      %v592 = vpop.xlane.xlu0 %591
      %vm593 = vcmp.eq.f32.partialorder %v590, %v592
      %v594 = vsel %vm593, %v589, inf
      %595 = vmin.xlane.f32.xlu0 %v594
      %v596 = vpop.xlane.xlu0 %595
      %v597 = vcvt.f32.s32 %v596
      %v598 = vcvt.f32.s32 %v592
      %v599 = vshll.u32 %v598, 16
      %v600 = vadd.s32 %v599, %v597
      %vm601 = vcmp.eq.s32.totalorder %v412, %v585
      %vm602 = vcmp.eq.s32.totalorder %v412, %v600
      %v603 = vsel %vm601, 1, 0
      %v604 = vsel %vm602, 1, 0
      %v605 = vcvt.s32.f32 %v603
      %v606 = vcvt.s32.f32 %v604
      %v607 = vpack.c.bf16 %v606, %v605
      %v608 = vld [vmem:[#allocation2] sm:$0xff]
      %v610 = vsel %vm413, %v460, 0
      %v613 = vsel %vm413, %v509, 0
      %v616 = vsel %vm413, %v558, 0
      %v619 = vsel %vm413, %v607, 0
      %621 = vmatprep.subr.bf16.mxu0 0
      %622 = vmatpush1.bf16.msra.mxu0 %v608
      %623 = vmatprep.subr.bf16.mxu0 0
      %624 = vmatpush1.bf16.msra.mxu0 0
      %625 = vmatprep.subr.bf16.mxu0 0
      %626 = vmatpush1.bf16.msra.mxu0 0
      %627 = vmatprep.subr.bf16.mxu0 0
      %628 = vmatpush1.bf16.msra.mxu0 0
      %629 = vmatprep.subr.bf16.mxu0 0
      %630 = vmatpush1.bf16.msra.mxu0 0
      %631 = vmatprep.subr.bf16.mxu0 0
      %632 = vmatpush1.bf16.msra.mxu0 0
      %633 = vmatprep.subr.bf16.mxu0 0
      %634 = vmatpush1.bf16.msra.mxu0 0
      %635 = vmatprep.subr.bf16.mxu0 0
      %636 = vmatpush1.bf16.msra.mxu0 0
      %637 = vmatprep.subr.bf16.mxu0 0
      %638 = vmatpush1.bf16.msra.mxu0 0
      %639 = vmatprep.subr.bf16.mxu0 0
      %640 = vmatpush1.bf16.msra.mxu0 0
      %641 = vmatprep.subr.bf16.mxu0 0
      %642 = vmatpush1.bf16.msra.mxu0 0
      %643 = vmatprep.subr.bf16.mxu0 0
      %644 = vmatpush1.bf16.msra.mxu0 0
      %645 = vmatprep.subr.bf16.mxu0 0
      %646 = vmatpush1.bf16.msra.mxu0 0
      %647 = vmatprep.subr.bf16.mxu0 0
      %648 = vmatpush1.bf16.msra.mxu0 0
      %649 = vmatprep.subr.bf16.mxu0 0
      %650 = vmatpush1.bf16.msra.mxu0 0
      %651 = vmatprep.subr.bf16.mxu0 0
      %652 = vmatpush1.bf16.msra.mxu0 0
      %653 = vmatprep.mubr.bf16.mxu0 0
      %654 = vmatmul.mubr.bf16.gmra.mrb[0].mxu0 %v610
      %v655 = vpop.f32.mrb[0].mxu0
      %v656 = vadd.f32 0.0, %v655
      %v657 = vpop.f32.mrb[0].mxu0
      %v658 = vpop.f32.mrb[0].mxu0
      %v659 = vadd.f32 0.0, %v658
      %v660 = vpop.f32.mrb[0].mxu0
      %661 = vmatprep.mubr.bf16.mxu0 0
      %662 = vmatmul.mubr.bf16.gmra.mrb[0].mxu0 %v613
      %v663 = vpop.f32.mrb[0].mxu0
      %v664 = vadd.f32 0.0, %v663
      %v665 = vpop.f32.mrb[0].mxu0
      %v666 = vpop.f32.mrb[0].mxu0
      %v667 = vadd.f32 0.0, %v666
      %v668 = vpop.f32.mrb[0].mxu0
      %669 = vmatprep.mubr.bf16.mxu0 0
      %670 = vmatmul.mubr.bf16.gmra.mrb[0].mxu0 %v616
      %v671 = vpop.f32.mrb[0].mxu0
      %v672 = vadd.f32 0.0, %v671
      %v673 = vpop.f32.mrb[0].mxu0
      %v674 = vpop.f32.mrb[0].mxu0
      %v675 = vadd.f32 0.0, %v674
      %v676 = vpop.f32.mrb[0].mxu0
      %677 = vmatprep.mubr.bf16.mxu0 0
      %678 = vmatmul.mubr.bf16.gmra.mrb[0].mxu0 %v619
      %v679 = vpop.f32.mrb[0].mxu0
      %v680 = vadd.f32 0.0, %v679
      %v681 = vpop.f32.mrb[0].mxu0
      %v682 = vpop.f32.mrb[0].mxu0
      %v683 = vadd.f32 0.0, %v682
      %v684 = vpop.f32.mrb[0].mxu0
      %685 = vdwg.mxu0
      %s686 = scalar_lea.vmem [#allocation3], %s308
      %v687 = vld [vmem:[%s686] sm:$0xff]
      %v688 = vld [vmem:[%s686 + $0x8] sm:$0xff]
      %v689 = vld [vmem:[%s2] sm:$0x1]
      %v691 = vlaneseq
      %v692 = vshrl.u32 %v691, 7
      %v693 = vsub.s32 0, %v692
      %v694 = vrot.slane %v689, %v693
      %v696 = vadd.f32 %v687, %v694
      %v697 = vadd.f32 %v688, %v694
      %v698 = vadd.f32 %v656, %v696
      %v699 = vadd.f32 %v659, %v697
      %vm700 = vcmp.gt.f32.partialorder %v698, 0.0
      %vm701 = vcmp.gt.f32.partialorder %v699, 0.0
      %v702 = vmul.f32 %v698, 0.2
      %v703 = vmul.f32 %v699, 0.2
      %v704 = vsel %vm700, %v698, %v702
      %v705 = vsel %vm701, %v699, %v703
      %v706 = vadd.f32 %v664, %v696
      %v707 = vadd.f32 %v667, %v697
      %vm708 = vcmp.gt.f32.partialorder %v706, 0.0
      %vm709 = vcmp.gt.f32.partialorder %v707, 0.0
      %v710 = vmul.f32 %v706, 0.2
      %v711 = vmul.f32 %v707, 0.2
      %v712 = vsel %vm708, %v706, %v710
      %v713 = vsel %vm709, %v707, %v711
      %v714 = vmax.f32 %v704, %v712
      %v715 = vmax.f32 %v705, %v713
      %v716 = vadd.f32 %v672, %v696
      %v717 = vadd.f32 %v675, %v697
      %vm718 = vcmp.gt.f32.partialorder %v716, 0.0
      %vm719 = vcmp.gt.f32.partialorder %v717, 0.0
      %v720 = vmul.f32 %v716, 0.2
      %v721 = vmul.f32 %v717, 0.2
      %v722 = vsel %vm718, %v716, %v720
      %v723 = vsel %vm719, %v717, %v721
      %v724 = vmax.f32 %v714, %v722
      %v725 = vmax.f32 %v715, %v723
      %v726 = vadd.f32 %v680, %v696
      %v727 = vadd.f32 %v683, %v697
      %vm728 = vcmp.gt.f32.partialorder %v726, 0.0
      %vm729 = vcmp.gt.f32.partialorder %v727, 0.0
      %v730 = vmul.f32 %v726, 0.2
      %v731 = vmul.f32 %v727, 0.2
      %v732 = vsel %vm728, %v726, %v730
      %v733 = vsel %vm729, %v727, %v731
      %v734 = vmax.f32 %v724, %v732
      %v735 = vmax.f32 %v725, %v733
      %vm736 = vcmask 523264
      %737 = vst.msk [vmem:[%s192] sm:$0xff] %vm736, %v734
      %738 = vst.msk [vmem:[%s192 + $0x8] sm:$0xff] %vm736, %v735
      %s739 = smul.u32 2, %s19
      %p740 = scmp.lt.s32.totalorder %s18, 1
      %s741 = scalar_select %p740, %s18, 1
      %p742 = scmp.lt.s32.totalorder %s739, 1
      %s743 = scalar_select %p742, %s739, 1
      %s744 = smul.addr %s741, 2
      %s745 = sadd.s32 %s743, %s744
      %s746 = smul.addr %s745, 8
      %s747 = scalar_lea.vmem %s3, %s746
      // Predicated region
      $region37: #{forward.8} parent=31 // pred_check
        %p748 = pneg %p114
      $region38: #{forward.8} parent=31 // pred_check_branch
        %750 = sbr.rel (%p748) target = $region40
      $region39: #{forward.8} parent=31 // pred_region
        %s751 = smul.u32 2, %s19
      $region40: #{forward.8} parent=31 // pred_fallthru
        _
    $region32: #{forward.8} parent=5 // pred_fallthru
      _
    %p752 = scmp.le.s32.totalorder 2, %s9
    // Predicated region
    $region41: #{forward.8} parent=5 // pred_check
      %p753 = pneg %p752
    $region42: #{forward.8} parent=5 // pred_check_branch
      %755 = sbr.rel (%p753) target = $region44
    $region43: #{forward.8} parent=5 // pred_region
      %s756 = ssub.s32 %s9, 2
      // Predicated region
      $region45: #{forward.8} parent=43 // pred_check
        %p757 = pneg %p120
      $region46: #{forward.8} parent=43 // pred_check_branch
        %759 = sbr.rel (%p757) target = $region48
      $region47: #{forward.8} parent=43 // pred_region
        %s760 = smul.u32 2, %s21
        %p761 = scmp.lt.s32.totalorder %s20, 1
        %s762 = scalar_select %p761, %s20, 1
        %p763 = scmp.lt.s32.totalorder %s760, 1
        %s764 = scalar_select %p763, %s760, 1
        %s765 = smul.addr %s762, 2
        %s766 = sadd.s32 %s764, %s765
        %s767 = smul.addr %s766, 8
        %s768 = scalar_lea.vmem %s3, %s767
      $region48: #{forward.8} parent=43 // pred_fallthru
        _
    $region44: #{forward.8} parent=5 // pred_fallthru
      _
  $region6: #{forward.8} parent=0 // loop_footer
    %s13 = sadd.s32 1, %s9
  $region7: #{forward.8} parent=0 // loop_footer_branch
    %8 = sbr.rel target = $region3
  $region8: #{forward.8} parent=0 // loop_exit
    _

// kernel: forward.9
$region0: #{forward.9}
  #allocation0 [shape = 'u32[]', space=smem, size = 0x4, offset = 0x4, fixed_abs, tag = 'smem constant byte address 0x4 - core index']
  #allocation1 [shape = 'u32[144,128]{1,0:T(1,128)}', space=vmem, size = 0x12000, scoped, tag = 'internal scratch']
  #allocation2 [shape = 'bf16[16,64]{1,0:T(16,128)(2,1)}', space=vmem, size = 0x1000, scoped, tag = 'scratch operand']
  #allocation3 [shape = 'f32[16,64]{1,0:T(8,128)}', space=vmem, size = 0x2000, scoped, tag = 'scratch operand']
  #allocation4 [shape = 'f32[1,16]{1,0:T(1,128)}', space=vmem, size = 0x200, scoped, tag = 'scratch operand']
  %s0 = inlined_call_operand.vmem [shape: f32[2,16,64], index: 0, kind: input, shape index: {}]
  %s1 = inlined_call_operand.vmem [shape: f32[64,128], index: 1, kind: input, shape index: {}]
  %s2 = inlined_call_operand.vmem [shape: f32[1,64], index: 2, kind: input, shape index: {}]
  %s3 = inlined_call_operand.vmem [shape: f32[2,16,64], index: 3, kind: output, shape index: {}]
  %s4 = sld [smem:[#allocation0]]
  $region49: #{forward.9} parent=0
    _
  %s6 = ssub.s32 1, %s4
  %s7 = scalar_select 0, %s6, %s4
  loop: start=0, step=1, limit=4
  $region2: #{forward.9} parent=0 // loop_pre_header
    _
  $region3: #{forward.9} parent=0 // loop_header
    %s9 = sphi 0, %s13
    %p10 = scmp.ge.s32.totalorder %s9, 4
    %s16 = sphi 0, %s28
    %s17 = sphi 0, %s24
    %s18 = sphi 0, %s16
    %s19 = sphi 0, %s17
    %s20 = sphi 0, %s18
    %s21 = sphi 0, %s19
    %s31 = sphi 0, %s33
    %s34 = sphi 0, %s31
    %s35 = sphi 0, %s34
    %s51 = sphi 0, %s35
    %s55 = sphi 0, %s55
    %s57 = sphi 0, %s55
    %s58 = sphi 0, %s57
    %s72 = sphi 0, %s58
    %s76 = sphi 0, %s76
    %s78 = sphi 0, %s76
    %s79 = sphi 0, %s78
    %s93 = sphi 0, %s79
    %s101 = sphi 0, %s103
    %s104 = sphi 0, %s101
    %s105 = sphi 0, %s104
    %s121 = sphi 0, %s105
  $region4: #{forward.9} parent=0 // loop_header_branch
    %12 = sbr.rel (%p10) target = $region8
  $region5: #{forward.9} parent=0 // loop_body
    %s14 = ssub.s32 %s9, 1
    %s15 = ssub.s32 %s9, 2
    %s22 = sadd.s32 1, %s17
    %p23 = scmp.ge.s32.totalorder %s22, 1
    %s24 = scalar_select %p23, 0, %s22
    %s25 = sadd.s32 1, %s16
    %s26 = scalar_select %p23, %s25, %s16
    %p27 = scmp.ge.s32.totalorder %s26, 2
    %s28 = scalar_select %p27, 0, %s26
    %s29 = ssub.s32 %s16, %s28
    %p30 = scmp.eq.s32.totalorder %s29, 0
    %s32 = sadd.s32 %s31, 1
    %s33 = scalar_select %p30, %s31, %s32
    %p36 = pneg %p30
    %p37 = scmp.eq.s32.totalorder %s9, 1
    %p38 = por %p36, %p37
    %p39 = scmp.ne.s32.totalorder %s31, %s34
    %p40 = scmp.eq.s32.totalorder %s9, 0
    %p41 = por %p39, %p40
    %p42 = scmp.ne.s32.totalorder %s31, %s34
    %p43 = scmp.eq.s32.totalorder %s14, 1
    %p44 = por %p42, %p43
    %p45 = scmp.ne.s32.totalorder %s34, %s35
    %p46 = scmp.eq.s32.totalorder %s14, 0
    %p47 = por %p45, %p46
    %p48 = scmp.ne.s32.totalorder %s34, %s35
    %p49 = scmp.eq.s32.totalorder %s15, 1
    %p50 = por %p48, %p49
    %p52 = scmp.ne.s32.totalorder %s35, %s51
    %p53 = scmp.eq.s32.totalorder %s15, 0
    %p54 = por %p52, %p53
    %s56 = sadd.s32 %s55, 1
    %p59 = scmp.eq.s32.totalorder %s9, 1
    %p60 = scmp.ne.s32.totalorder %s55, %s57
    %p61 = scmp.eq.s32.totalorder %s9, 0
    %p62 = por %p60, %p61
    %p63 = scmp.ne.s32.totalorder %s55, %s57
    %p64 = scmp.eq.s32.totalorder %s14, 1
    %p65 = por %p63, %p64
    %p66 = scmp.ne.s32.totalorder %s57, %s58
    %p67 = scmp.eq.s32.totalorder %s14, 0
    %p68 = por %p66, %p67
    %p69 = scmp.ne.s32.totalorder %s57, %s58
    %p70 = scmp.eq.s32.totalorder %s15, 1
    %p71 = por %p69, %p70
    %p73 = scmp.ne.s32.totalorder %s58, %s72
    %p74 = scmp.eq.s32.totalorder %s15, 0
    %p75 = por %p73, %p74
    %s77 = sadd.s32 %s76, 1
    %p80 = scmp.eq.s32.totalorder %s9, 1
    %p81 = scmp.ne.s32.totalorder %s76, %s78
    %p82 = scmp.eq.s32.totalorder %s9, 0
    %p83 = por %p81, %p82
    %p84 = scmp.ne.s32.totalorder %s76, %s78
    %p85 = scmp.eq.s32.totalorder %s14, 1
    %p86 = por %p84, %p85
    %p87 = scmp.ne.s32.totalorder %s78, %s79
    %p88 = scmp.eq.s32.totalorder %s14, 0
    %p89 = por %p87, %p88
    %p90 = scmp.ne.s32.totalorder %s78, %s79
    %p91 = scmp.eq.s32.totalorder %s15, 1
    %p92 = por %p90, %p91
    %p94 = scmp.ne.s32.totalorder %s79, %s93
    %p95 = scmp.eq.s32.totalorder %s15, 0
    %p96 = por %p94, %p95
    %s97 = ssub.s32 %s16, %s28
    %s98 = ssub.s32 %s17, %s24
    %s99 = sor.u32 %s97, %s98
    %p100 = scmp.eq.s32.totalorder %s99, 0
    %s102 = sadd.s32 %s101, 1
    %s103 = scalar_select %p100, %s101, %s102
    %p106 = pneg %p100
    %p107 = scmp.eq.s32.totalorder %s9, 1
    %p108 = por %p106, %p107
    %p109 = scmp.ne.s32.totalorder %s101, %s104
    %p110 = scmp.eq.s32.totalorder %s9, 0
    %p111 = por %p109, %p110
    %p112 = scmp.ne.s32.totalorder %s101, %s104
    %p113 = scmp.eq.s32.totalorder %s14, 1
    %p114 = por %p112, %p113
    %p115 = scmp.ne.s32.totalorder %s104, %s105
    %p116 = scmp.eq.s32.totalorder %s14, 0
    %p117 = por %p115, %p116
    %p118 = scmp.ne.s32.totalorder %s104, %s105
    %p119 = scmp.eq.s32.totalorder %s15, 1
    %p120 = por %p118, %p119
    %p122 = scmp.ne.s32.totalorder %s105, %s121
    %p123 = scmp.eq.s32.totalorder %s15, 0
    %p124 = por %p122, %p123
    %p125 = scmp.le.s32.totalorder 1, %s9
    %p126 = scmp.lt.s32.totalorder %s9, 3
    %p127 = pnand %p125, %p126
    %p128 = pneg %p127
    // Predicated region
    $region9: #{forward.9} parent=5 // pred_check
      _
    $region10: #{forward.9} parent=5 // pred_check_branch
      %130 = sbr.rel (%p127) target = $region12
    $region11: #{forward.9} parent=5 // pred_region
      %s131 = ssub.s32 %s9, 1
      // Predicated region
      $region13: #{forward.9} parent=11 // pred_check
        %p132 = pneg %p68
      $region14: #{forward.9} parent=11 // pred_check_branch
        %134 = sbr.rel (%p132) target = $region16
      $region15: #{forward.9} parent=11 // pred_region
        _
      $region16: #{forward.9} parent=11 // pred_fallthru
        _
      // Predicated region
      $region17: #{forward.9} parent=11 // pred_check
        %p135 = pneg %p89
      $region18: #{forward.9} parent=11 // pred_check_branch
        %137 = sbr.rel (%p135) target = $region20
      $region19: #{forward.9} parent=11 // pred_region
        _
      $region20: #{forward.9} parent=11 // pred_fallthru
        _
    $region12: #{forward.9} parent=5 // pred_fallthru
      _
    %p138 = scmp.lt.s32.totalorder %s9, 2
    // Predicated region
    $region21: #{forward.9} parent=5 // pred_check
      %p139 = pneg %p138
    $region22: #{forward.9} parent=5 // pred_check_branch
      %141 = sbr.rel (%p139) target = $region24
    $region23: #{forward.9} parent=5 // pred_region
      // Predicated region
      $region25: #{forward.9} parent=23 // pred_check
        %p142 = pneg %p41
      $region26: #{forward.9} parent=23 // pred_check_branch
        %144 = sbr.rel (%p142) target = $region28
      $region27: #{forward.9} parent=23 // pred_region
        %p145 = scmp.lt.s32.totalorder %s16, 1
        %s146 = scalar_select %p145, %s16, 1
        %s147 = smul.addr %s146, 2
        %s148 = smul.addr %s147, 8
        %s149 = scalar_lea.vmem %s0, %s148
      $region28: #{forward.9} parent=23 // pred_fallthru
        _
    $region24: #{forward.9} parent=5 // pred_fallthru
      _
    %p150 = scmp.le.s32.totalorder 1, %s9
    %p151 = scmp.lt.s32.totalorder %s9, 3
    %p152 = pnand %p150, %p151
    %p153 = pneg %p152
    // Predicated region
    $region29: #{forward.9} parent=5 // pred_check
      _
    $region30: #{forward.9} parent=5 // pred_check_branch
      %155 = sbr.rel (%p152) target = $region32
    $region31: #{forward.9} parent=5 // pred_region
      %s156 = ssub.s32 %s9, 1
      %p157 = scmp.lt.s32.totalorder %s18, 1
      %s158 = scalar_select %p157, %s18, 1
      %s159 = smul.addr %s158, 2
      %s160 = smul.addr %s159, 8
      %s161 = scalar_lea.vmem %s0, %s160
      %p162 = pneg %p47
      %p163 = pneg %p44
      %p164 = pneg %p68
      %p165 = pneg %p65
      %p166 = pneg %p89
      %p167 = pneg %p86
      %p168 = pneg %p117
      %p169 = pneg %p114
      %s170 = smul.u32 2, %s19
      %p171 = scmp.lt.s32.totalorder %s18, 1
      %s172 = scalar_select %p171, %s18, 1
      %p173 = scmp.lt.s32.totalorder %s170, 1
      %s174 = scalar_select %p173, %s170, 1
      %s175 = smul.addr %s172, 2
      %s176 = sadd.s32 %s174, %s175
      %s177 = smul.addr %s176, 8
      %s178 = scalar_lea.vmem %s3, %s177
      %p179 = scmp.lt.s32.totalorder %s18, 1
      %s180 = scalar_select %p179, %s18, 1
      %s181 = smul.addr %s180, 2
      %s182 = smul.addr %s181, 8
      %s183 = scalar_lea.vmem %s0, %s182
      %s184 = smul.u32 2, %s19
      %p185 = scmp.lt.s32.totalorder %s18, 1
      %s186 = scalar_select %p185, %s18, 1
      %p187 = scmp.lt.s32.totalorder %s184, 1
      %s188 = scalar_select %p187, %s184, 1
      %s189 = smul.addr %s186, 2
      %s190 = sadd.s32 %s188, %s189
      %s191 = smul.addr %s190, 8
      %s192 = scalar_lea.vmem %s3, %s191
      %s193 = smul.u32 2, %s19
      %v195 = vld [vmem:[%s183] sm:$0xff]
      %v196 = vld [vmem:[%s183 + $0x8] sm:$0xff]
      %p197 = scmp.eq.s32.totalorder %s19, 0
      // Predicated region
      $region33: #{forward.9} parent=31 // pred_check
        %p198 = pneg %p197
      $region34: #{forward.9} parent=31 // pred_check_branch
        %200 = sbr.rel (%p198) target = $region36
      $region35: #{forward.9} parent=31 // pred_region
        %v201 = vpack.c.bf16 %v196, %v195
        %v202 = vld [vmem:[%s1] sm:$0xff]
        %v203 = vld [vmem:[%s1 + $0x8] sm:$0xff]
        %v204 = vld [vmem:[%s1 + $0x10] sm:$0xff]
        %v205 = vld [vmem:[%s1 + $0x18] sm:$0xff]
        %v206 = vld [vmem:[%s1 + $0x20] sm:$0xff]
        %v207 = vld [vmem:[%s1 + $0x28] sm:$0xff]
        %v208 = vld [vmem:[%s1 + $0x30] sm:$0xff]
        %v209 = vld [vmem:[%s1 + $0x38] sm:$0xff]
        %v210 = vpack.c.bf16 %v203, %v202
        %v211 = vpack.c.bf16 %v205, %v204
        %v212 = vpack.c.bf16 %v207, %v206
        %v213 = vpack.c.bf16 %v209, %v208
        %vm214 = vcmask 523264
        %v216 = vsel %vm214, %v201, 0
        %218 = vmatprep.subr.bf16.mxu0 0
        %219 = vmatpush1.bf16.msra.mxu0 %v210
        %220 = vmatprep.subr.bf16.mxu0 0
        %221 = vmatpush1.bf16.msra.mxu0 %v211
        %222 = vmatprep.subr.bf16.mxu0 0
        %223 = vmatpush1.bf16.msra.mxu0 %v212
        %224 = vmatprep.subr.bf16.mxu0 0
        %225 = vmatpush1.bf16.msra.mxu0 %v213
        %226 = vmatprep.subr.bf16.mxu0 0
        %227 = vmatpush1.bf16.msra.mxu0 0
        %228 = vmatprep.subr.bf16.mxu0 0
        %229 = vmatpush1.bf16.msra.mxu0 0
        %230 = vmatprep.subr.bf16.mxu0 0
        %231 = vmatpush1.bf16.msra.mxu0 0
        %232 = vmatprep.subr.bf16.mxu0 0
        %233 = vmatpush1.bf16.msra.mxu0 0
        %234 = vmatprep.subr.bf16.mxu0 0
        %235 = vmatpush1.bf16.msra.mxu0 0
        %236 = vmatprep.subr.bf16.mxu0 0
        %237 = vmatpush1.bf16.msra.mxu0 0
        %238 = vmatprep.subr.bf16.mxu0 0
        %239 = vmatpush1.bf16.msra.mxu0 0
        %240 = vmatprep.subr.bf16.mxu0 0
        %241 = vmatpush1.bf16.msra.mxu0 0
        %242 = vmatprep.subr.bf16.mxu0 0
        %243 = vmatpush1.bf16.msra.mxu0 0
        %244 = vmatprep.subr.bf16.mxu0 0
        %245 = vmatpush1.bf16.msra.mxu0 0
        %246 = vmatprep.subr.bf16.mxu0 0
        %247 = vmatpush1.bf16.msra.mxu0 0
        %248 = vmatprep.subr.bf16.mxu0 0
        %249 = vmatpush1.bf16.msra.mxu0 0
        %250 = vmatprep.mubr.bf16.mxu0 0
        %251 = vmatmul.mubr.bf16.gmra.mrb[0].mxu0 %v216
        %v252 = vpop.f32.mrb[0].mxu0
        %v253 = vadd.f32 0.0, %v252
        %v254 = vpop.f32.mrb[0].mxu0
        %v255 = vpop.f32.mrb[0].mxu0
        %v256 = vadd.f32 0.0, %v255
        %v257 = vpop.f32.mrb[0].mxu0
        %258 = vdwg.mxu0
        %v259 = vpack.c.bf16 %v256, %v253
        %260 = vst.msk [vmem:[#allocation2] sm:$0xff] %vm214, %v259
        %263 = vrot.lane.b32.xlu0 %v253, 64
        %v264 = vpop.permute.xlu0 %263
        %265 = vrot.lane.b32.xlu0 %v256, 64
        %v266 = vpop.permute.xlu0 %265
        %269 = vst.msk [vmem:[#allocation3] sm:$0xff] %vm214, %v264
        %270 = vst.msk [vmem:[#allocation3 + $0x8] sm:$0xff] %vm214, %v266
        %v271 = vmul.f32 %v195, %v195
        %v272 = vmul.f32 %v196, %v196
        %v273 = vsel %vm214, %v271, 0.0
        %274 = vadd.xlane.f32.xlu0 %v273
        %v275 = vpop.xlane.xlu0 %274
        %v276 = vsel %vm214, %v272, 0.0
        %277 = vadd.xlane.f32.xlu0 %v276
        %v278 = vpop.xlane.xlu0 %277
        %279 = vxpose.xlu0.b32.start [1/16] %v275, 128
        %280 = vxpose.xlu0.b32.cont [2/16] %v278, 128
        %281 = vxpose.xlu0.b32.cont [3/16] 0.0, 128
        %282 = vxpose.xlu0.b32.cont [4/16] 0.0, 128
        %283 = vxpose.xlu0.b32.cont [5/16] 0.0, 128
        %284 = vxpose.xlu0.b32.cont [6/16] 0.0, 128
        %285 = vxpose.xlu0.b32.cont [7/16] 0.0, 128
        %286 = vxpose.xlu0.b32.cont [8/16] 0.0, 128
        %287 = vxpose.xlu0.b32.cont [9/16] 0.0, 128
        %288 = vxpose.xlu0.b32.cont [10/16] 0.0, 128
        %289 = vxpose.xlu0.b32.cont [11/16] 0.0, 128
        %290 = vxpose.xlu0.b32.cont [12/16] 0.0, 128
        %291 = vxpose.xlu0.b32.cont [13/16] 0.0, 128
        %292 = vxpose.xlu0.b32.cont [14/16] 0.0, 128
        %293 = vxpose.xlu0.b32.cont [15/16] 0.0, 128
        %294 = vxpose.xlu0.b32.end [16/16] 0.0, 128
        %v295 = vpop.trf.xlu0
        %v296 = vpop.trf.xlu0
        %v297 = vpop.trf.xlu0
        %v298 = vpop.trf.xlu0
        %v299 = vpop.trf.xlu0
        %v300 = vpop.trf.xlu0
        %v301 = vpop.trf.xlu0
        %v302 = vpop.trf.xlu0
        %v303 = vpop.trf.xlu0
        %v304 = vpop.trf.xlu0
        %v305 = vpop.trf.xlu0
        %v306 = vpop.trf.xlu0
        %v307 = vpop.trf.xlu0
        %v308 = vpop.trf.xlu0
        %v309 = vpop.trf.xlu0
        %v310 = vpop.trf.xlu0
        %vm311 = vcmask 122880
        %312 = vst.msk [vmem:[#allocation4] sm:$0x1] %vm311, %v295
      $region36: #{forward.9} parent=31 // pred_fallthru
        _
      %s313 = smul.u32 %s19, 16
      %s314 = scalar_lea.vmem %s183, %s313
      %v315 = vld [vmem:[%s314] sm:$0xff]
      %v316 = vld [vmem:[%s314 + $0x8] sm:$0xff]
      %vm317 = vcmask 523264
      %v319 = vsel %vm317, %v315, 0
      %v322 = vsel %vm317, %v316, 0
      %v325 = vsel %vm317, %v195, 0
      %v328 = vsel %vm317, %v196, 0
      %330 = vmatprep.subr.mxu0 0.0
      %331 = vmatpush1.xpose.msra.mxu0 %v325
      %332 = vmatprep.subr.mxu0 0.0
      %333 = vmatpush1.xpose.msra.mxu0 %v328
      %334 = vmatprep.subr.mxu0 0.0
      %335 = vmatpush1.xpose.msra.mxu0 0.0
      %336 = vmatprep.subr.mxu0 0.0
      %337 = vmatpush1.xpose.msra.mxu0 0.0
      %338 = vmatprep.subr.mxu0 0.0
      %339 = vmatpush1.xpose.msra.mxu0 0.0
      %340 = vmatprep.subr.mxu0 0.0
      %341 = vmatpush1.xpose.msra.mxu0 0.0
      %342 = vmatprep.subr.mxu0 0.0
      %343 = vmatpush1.xpose.msra.mxu0 0.0
      %344 = vmatprep.subr.mxu0 0.0
      %345 = vmatpush1.xpose.msra.mxu0 0.0
      %346 = vmatprep.subr.mxu0 0.0
      %347 = vmatpush1.xpose.msra.mxu0 0.0
      %348 = vmatprep.subr.mxu0 0.0
      %349 = vmatpush1.xpose.msra.mxu0 0.0
      %350 = vmatprep.subr.mxu0 0.0
      %351 = vmatpush1.xpose.msra.mxu0 0.0
      %352 = vmatprep.subr.mxu0 0.0
      %353 = vmatpush1.xpose.msra.mxu0 0.0
      %354 = vmatprep.subr.mxu0 0.0
      %355 = vmatpush1.xpose.msra.mxu0 0.0
      %356 = vmatprep.subr.mxu0 0.0
      %357 = vmatpush1.xpose.msra.mxu0 0.0
      %358 = vmatprep.subr.mxu0 0.0
      %359 = vmatpush1.xpose.msra.mxu0 0.0
      %360 = vmatprep.subr.mxu0 0.0
      %361 = vmatpush1.xpose.msra.mxu0 0.0
      %362 = vmatprep.subr.mxu0 0.0
      %363 = vmatpush1.xpose.msra.mxu0 0.0
      %364 = vmatprep.subr.mxu0 0.0
      %365 = vmatpush1.xpose.msra.mxu0 0.0
      %366 = vmatprep.subr.mxu0 0.0
      %367 = vmatpush1.xpose.msra.mxu0 0.0
      %368 = vmatprep.subr.mxu0 0.0
      %369 = vmatpush1.xpose.msra.mxu0 0.0
      %370 = vmatprep.subr.mxu0 0.0
      %371 = vmatpush1.xpose.msra.mxu0 0.0
      %372 = vmatprep.subr.mxu0 0.0
      %373 = vmatpush1.xpose.msra.mxu0 0.0
      %374 = vmatprep.subr.mxu0 0.0
      %375 = vmatpush1.xpose.msra.mxu0 0.0
      %376 = vmatprep.subr.mxu0 0.0
      %377 = vmatpush1.xpose.msra.mxu0 0.0
      %378 = vmatprep.subr.mxu0 0.0
      %379 = vmatpush1.xpose.msra.mxu0 0.0
      %380 = vmatprep.subr.mxu0 0.0
      %381 = vmatpush1.xpose.msra.mxu0 0.0
      %382 = vmatprep.subr.mxu0 0.0
      %383 = vmatpush1.xpose.msra.mxu0 0.0
      %384 = vmatprep.subr.mxu0 0.0
      %385 = vmatpush1.xpose.msra.mxu0 0.0
      %386 = vmatprep.subr.mxu0 0.0
      %387 = vmatpush1.xpose.msra.mxu0 0.0
      %388 = vmatprep.subr.mxu0 0.0
      %389 = vmatpush1.xpose.msra.mxu0 0.0
      %390 = vmatprep.subr.mxu0 0.0
      %391 = vmatpush1.xpose.msra.mxu0 0.0
      %392 = vmatprep.subr.mxu0 0.0
      %393 = vmatpush1.xpose.msra.mxu0 0.0
      %394 = vmatprep.mubr.f32.mxu0 0.0
      %395 = vmatmul.mubr.f32.gmra.mrb[0].mxu0 %v319
      %v396 = vpop.f32.mrb[0].mxu0
      %v397 = vadd.f32 0.0, %v396
      %v398 = vpop.f32.mrb[0].mxu0
      %399 = vmatprep.mubr.f32.mxu0 0.0
      %400 = vmatmul.mubr.f32.gmra.mrb[0].mxu0 %v322
      %v401 = vpop.f32.mrb[0].mxu0
      %v402 = vadd.f32 0.0, %v401
      %v403 = vpop.f32.mrb[0].mxu0
      %404 = vdwg.mxu0
      %v405 = vmul.f32 %v397, 2.0
      %v406 = vmul.f32 %v402, 2.0
      %v407 = vld [vmem:[#allocation4] sm:$0x1]
      %v409 = vlaneseq
      %v410 = vshrl.u32 %v409, 7
      %v411 = vsub.s32 0, %v410
      %v412 = vrot.slane %v407, %v411
      %v414 = vsub.f32 %v405, %v412
      %v415 = vsub.f32 %v406, %v412
      %v416 = vlaneseq
      %v417 = vand.u32 %v416, 127
      %vm418 = vcmask 130048
      %v419 = vsel %vm418, %v414, -inf
      %420 = vmax.xlane.f32.xlu0 %v419
      %v421 = vpop.xlane.xlu0 %420
      %v422 = vsel %vm418, %v415, -inf
      %423 = vmax.xlane.f32.xlu0 %v422
      %v424 = vpop.xlane.xlu0 %423
      %vm425 = vcmp.eq.f32.partialorder %v414, %v421
      %vm426 = vcmp.eq.f32.partialorder %v415, %v424
      %v427 = vsel %vm425, %v417, 16
      %v428 = vsel %vm426, %v417, 16
      %v429 = vsel %vm418, %v427, 2147483647
      %v430 = vand.u32 %v429, 65535
      %v431 = vshra.s32 %v429, 16
      %v432 = vcvt.s32.f32 %v430
      %v433 = vcvt.s32.f32 %v431
      %434 = vmin.xlane.f32.xlu0 %v433
      %v435 = vpop.xlane.xlu0 %434
      %vm436 = vcmp.eq.f32.partialorder %v433, %v435
      %v437 = vsel %vm436, %v432, inf
      %438 = vmin.xlane.f32.xlu0 %v437
      %v439 = vpop.xlane.xlu0 %438
      %v440 = vcvt.f32.s32 %v439
      %v441 = vcvt.f32.s32 %v435
      %v442 = vshll.u32 %v441, 16
      %v443 = vadd.s32 %v442, %v440
      %v444 = vsel %vm418, %v428, 2147483647
      %v445 = vand.u32 %v444, 65535
      %v446 = vshra.s32 %v444, 16
      %v447 = vcvt.s32.f32 %v445
      %v448 = vcvt.s32.f32 %v446
      %449 = vmin.xlane.f32.xlu0 %v448
      %v450 = vpop.xlane.xlu0 %449
      %vm451 = vcmp.eq.f32.partialorder %v448, %v450
      %v452 = vsel %vm451, %v447, inf
      %453 = vmin.xlane.f32.xlu0 %v452
      %v454 = vpop.xlane.xlu0 %453
      %v455 = vcvt.f32.s32 %v454
      %v456 = vcvt.f32.s32 %v450
      %v457 = vshll.u32 %v456, 16
      %v458 = vadd.s32 %v457, %v455
      %vm459 = vcmp.eq.s32.totalorder %v417, %v443
      %vm460 = vcmp.eq.s32.totalorder %v417, %v458
      %v461 = vsel %vm459, 1, 0
      %v462 = vsel %vm460, 1, 0
      %v463 = vcvt.s32.f32 %v461
      %v464 = vcvt.s32.f32 %v462
      %v465 = vpack.c.bf16 %v464, %v463
      %v466 = vsel %vm459, -1e+30, %v414
      %v467 = vsel %vm460, -1e+30, %v415
      %v468 = vsel %vm418, %v466, -inf
      %469 = vmax.xlane.f32.xlu0 %v468
      %v470 = vpop.xlane.xlu0 %469
      %v471 = vsel %vm418, %v467, -inf
      %472 = vmax.xlane.f32.xlu0 %v471
      %v473 = vpop.xlane.xlu0 %472
      %vm474 = vcmp.eq.f32.partialorder %v466, %v470
      %vm475 = vcmp.eq.f32.partialorder %v467, %v473
      %v476 = vsel %vm474, %v417, 16
      %v477 = vsel %vm475, %v417, 16
      %v478 = vsel %vm418, %v476, 2147483647
      %v479 = vand.u32 %v478, 65535
      %v480 = vshra.s32 %v478, 16
      %v481 = vcvt.s32.f32 %v479
      %v482 = vcvt.s32.f32 %v480
      %483 = vmin.xlane.f32.xlu0 %v482
      %v484 = vpop.xlane.xlu0 %483
      %vm485 = vcmp.eq.f32.partialorder %v482, %v484
      %v486 = vsel %vm485, %v481, inf
      %487 = vmin.xlane.f32.xlu0 %v486
      %v488 = vpop.xlane.xlu0 %487
      %v489 = vcvt.f32.s32 %v488
      %v490 = vcvt.f32.s32 %v484
      %v491 = vshll.u32 %v490, 16
      %v492 = vadd.s32 %v491, %v489
      %v493 = vsel %vm418, %v477, 2147483647
      %v494 = vand.u32 %v493, 65535
      %v495 = vshra.s32 %v493, 16
      %v496 = vcvt.s32.f32 %v494
      %v497 = vcvt.s32.f32 %v495
      %498 = vmin.xlane.f32.xlu0 %v497
      %v499 = vpop.xlane.xlu0 %498
      %vm500 = vcmp.eq.f32.partialorder %v497, %v499
      %v501 = vsel %vm500, %v496, inf
      %502 = vmin.xlane.f32.xlu0 %v501
      %v503 = vpop.xlane.xlu0 %502
      %v504 = vcvt.f32.s32 %v503
      %v505 = vcvt.f32.s32 %v499
      %v506 = vshll.u32 %v505, 16
      %v507 = vadd.s32 %v506, %v504
      %vm508 = vcmp.eq.s32.totalorder %v417, %v492
      %vm509 = vcmp.eq.s32.totalorder %v417, %v507
      %v510 = vsel %vm508, 1, 0
      %v511 = vsel %vm509, 1, 0
      %v512 = vcvt.s32.f32 %v510
      %v513 = vcvt.s32.f32 %v511
      %v514 = vpack.c.bf16 %v513, %v512
      %v515 = vsel %vm508, -1e+30, %v466
      %v516 = vsel %vm509, -1e+30, %v467
      %v517 = vsel %vm418, %v515, -inf
      %518 = vmax.xlane.f32.xlu0 %v517
      %v519 = vpop.xlane.xlu0 %518
      %v520 = vsel %vm418, %v516, -inf
      %521 = vmax.xlane.f32.xlu0 %v520
      %v522 = vpop.xlane.xlu0 %521
      %vm523 = vcmp.eq.f32.partialorder %v515, %v519
      %vm524 = vcmp.eq.f32.partialorder %v516, %v522
      %v525 = vsel %vm523, %v417, 16
      %v526 = vsel %vm524, %v417, 16
      %v527 = vsel %vm418, %v525, 2147483647
      %v528 = vand.u32 %v527, 65535
      %v529 = vshra.s32 %v527, 16
      %v530 = vcvt.s32.f32 %v528
      %v531 = vcvt.s32.f32 %v529
      %532 = vmin.xlane.f32.xlu0 %v531
      %v533 = vpop.xlane.xlu0 %532
      %vm534 = vcmp.eq.f32.partialorder %v531, %v533
      %v535 = vsel %vm534, %v530, inf
      %536 = vmin.xlane.f32.xlu0 %v535
      %v537 = vpop.xlane.xlu0 %536
      %v538 = vcvt.f32.s32 %v537
      %v539 = vcvt.f32.s32 %v533
      %v540 = vshll.u32 %v539, 16
      %v541 = vadd.s32 %v540, %v538
      %v542 = vsel %vm418, %v526, 2147483647
      %v543 = vand.u32 %v542, 65535
      %v544 = vshra.s32 %v542, 16
      %v545 = vcvt.s32.f32 %v543
      %v546 = vcvt.s32.f32 %v544
      %547 = vmin.xlane.f32.xlu0 %v546
      %v548 = vpop.xlane.xlu0 %547
      %vm549 = vcmp.eq.f32.partialorder %v546, %v548
      %v550 = vsel %vm549, %v545, inf
      %551 = vmin.xlane.f32.xlu0 %v550
      %v552 = vpop.xlane.xlu0 %551
      %v553 = vcvt.f32.s32 %v552
      %v554 = vcvt.f32.s32 %v548
      %v555 = vshll.u32 %v554, 16
      %v556 = vadd.s32 %v555, %v553
      %vm557 = vcmp.eq.s32.totalorder %v417, %v541
      %vm558 = vcmp.eq.s32.totalorder %v417, %v556
      %v559 = vsel %vm557, 1, 0
      %v560 = vsel %vm558, 1, 0
      %v561 = vcvt.s32.f32 %v559
      %v562 = vcvt.s32.f32 %v560
      %v563 = vpack.c.bf16 %v562, %v561
      %v564 = vsel %vm557, -1e+30, %v515
      %v565 = vsel %vm558, -1e+30, %v516
      %v566 = vsel %vm418, %v564, -inf
      %567 = vmax.xlane.f32.xlu0 %v566
      %v568 = vpop.xlane.xlu0 %567
      %v569 = vsel %vm418, %v565, -inf
      %570 = vmax.xlane.f32.xlu0 %v569
      %v571 = vpop.xlane.xlu0 %570
      %vm572 = vcmp.eq.f32.partialorder %v564, %v568
      %vm573 = vcmp.eq.f32.partialorder %v565, %v571
      %v574 = vsel %vm572, %v417, 16
      %v575 = vsel %vm573, %v417, 16
      %v576 = vsel %vm418, %v574, 2147483647
      %v577 = vand.u32 %v576, 65535
      %v578 = vshra.s32 %v576, 16
      %v579 = vcvt.s32.f32 %v577
      %v580 = vcvt.s32.f32 %v578
      %581 = vmin.xlane.f32.xlu0 %v580
      %v582 = vpop.xlane.xlu0 %581
      %vm583 = vcmp.eq.f32.partialorder %v580, %v582
      %v584 = vsel %vm583, %v579, inf
      %585 = vmin.xlane.f32.xlu0 %v584
      %v586 = vpop.xlane.xlu0 %585
      %v587 = vcvt.f32.s32 %v586
      %v588 = vcvt.f32.s32 %v582
      %v589 = vshll.u32 %v588, 16
      %v590 = vadd.s32 %v589, %v587
      %v591 = vsel %vm418, %v575, 2147483647
      %v592 = vand.u32 %v591, 65535
      %v593 = vshra.s32 %v591, 16
      %v594 = vcvt.s32.f32 %v592
      %v595 = vcvt.s32.f32 %v593
      %596 = vmin.xlane.f32.xlu0 %v595
      %v597 = vpop.xlane.xlu0 %596
      %vm598 = vcmp.eq.f32.partialorder %v595, %v597
      %v599 = vsel %vm598, %v594, inf
      %600 = vmin.xlane.f32.xlu0 %v599
      %v601 = vpop.xlane.xlu0 %600
      %v602 = vcvt.f32.s32 %v601
      %v603 = vcvt.f32.s32 %v597
      %v604 = vshll.u32 %v603, 16
      %v605 = vadd.s32 %v604, %v602
      %vm606 = vcmp.eq.s32.totalorder %v417, %v590
      %vm607 = vcmp.eq.s32.totalorder %v417, %v605
      %v608 = vsel %vm606, 1, 0
      %v609 = vsel %vm607, 1, 0
      %v610 = vcvt.s32.f32 %v608
      %v611 = vcvt.s32.f32 %v609
      %v612 = vpack.c.bf16 %v611, %v610
      %v613 = vld [vmem:[#allocation2] sm:$0xff]
      %v615 = vsel %vm418, %v465, 0
      %v618 = vsel %vm418, %v514, 0
      %v621 = vsel %vm418, %v563, 0
      %v624 = vsel %vm418, %v612, 0
      %626 = vmatprep.subr.bf16.mxu0 0
      %627 = vmatpush1.bf16.msra.mxu0 %v613
      %628 = vmatprep.subr.bf16.mxu0 0
      %629 = vmatpush1.bf16.msra.mxu0 0
      %630 = vmatprep.subr.bf16.mxu0 0
      %631 = vmatpush1.bf16.msra.mxu0 0
      %632 = vmatprep.subr.bf16.mxu0 0
      %633 = vmatpush1.bf16.msra.mxu0 0
      %634 = vmatprep.subr.bf16.mxu0 0
      %635 = vmatpush1.bf16.msra.mxu0 0
      %636 = vmatprep.subr.bf16.mxu0 0
      %637 = vmatpush1.bf16.msra.mxu0 0
      %638 = vmatprep.subr.bf16.mxu0 0
      %639 = vmatpush1.bf16.msra.mxu0 0
      %640 = vmatprep.subr.bf16.mxu0 0
      %641 = vmatpush1.bf16.msra.mxu0 0
      %642 = vmatprep.subr.bf16.mxu0 0
      %643 = vmatpush1.bf16.msra.mxu0 0
      %644 = vmatprep.subr.bf16.mxu0 0
      %645 = vmatpush1.bf16.msra.mxu0 0
      %646 = vmatprep.subr.bf16.mxu0 0
      %647 = vmatpush1.bf16.msra.mxu0 0
      %648 = vmatprep.subr.bf16.mxu0 0
      %649 = vmatpush1.bf16.msra.mxu0 0
      %650 = vmatprep.subr.bf16.mxu0 0
      %651 = vmatpush1.bf16.msra.mxu0 0
      %652 = vmatprep.subr.bf16.mxu0 0
      %653 = vmatpush1.bf16.msra.mxu0 0
      %654 = vmatprep.subr.bf16.mxu0 0
      %655 = vmatpush1.bf16.msra.mxu0 0
      %656 = vmatprep.subr.bf16.mxu0 0
      %657 = vmatpush1.bf16.msra.mxu0 0
      %658 = vmatprep.mubr.bf16.mxu0 0
      %659 = vmatmul.mubr.bf16.gmra.mrb[0].mxu0 %v615
      %v660 = vpop.f32.mrb[0].mxu0
      %v661 = vadd.f32 0.0, %v660
      %v662 = vpop.f32.mrb[0].mxu0
      %v663 = vpop.f32.mrb[0].mxu0
      %v664 = vadd.f32 0.0, %v663
      %v665 = vpop.f32.mrb[0].mxu0
      %666 = vmatprep.mubr.bf16.mxu0 0
      %667 = vmatmul.mubr.bf16.gmra.mrb[0].mxu0 %v618
      %v668 = vpop.f32.mrb[0].mxu0
      %v669 = vadd.f32 0.0, %v668
      %v670 = vpop.f32.mrb[0].mxu0
      %v671 = vpop.f32.mrb[0].mxu0
      %v672 = vadd.f32 0.0, %v671
      %v673 = vpop.f32.mrb[0].mxu0
      %674 = vmatprep.mubr.bf16.mxu0 0
      %675 = vmatmul.mubr.bf16.gmra.mrb[0].mxu0 %v621
      %v676 = vpop.f32.mrb[0].mxu0
      %v677 = vadd.f32 0.0, %v676
      %v678 = vpop.f32.mrb[0].mxu0
      %v679 = vpop.f32.mrb[0].mxu0
      %v680 = vadd.f32 0.0, %v679
      %v681 = vpop.f32.mrb[0].mxu0
      %682 = vmatprep.mubr.bf16.mxu0 0
      %683 = vmatmul.mubr.bf16.gmra.mrb[0].mxu0 %v624
      %v684 = vpop.f32.mrb[0].mxu0
      %v685 = vadd.f32 0.0, %v684
      %v686 = vpop.f32.mrb[0].mxu0
      %v687 = vpop.f32.mrb[0].mxu0
      %v688 = vadd.f32 0.0, %v687
      %v689 = vpop.f32.mrb[0].mxu0
      %690 = vdwg.mxu0
      %s691 = scalar_lea.vmem [#allocation3], %s313
      %v692 = vld [vmem:[%s691] sm:$0xff]
      %v693 = vld [vmem:[%s691 + $0x8] sm:$0xff]
      %v694 = vld [vmem:[%s2] sm:$0x1]
      %v696 = vlaneseq
      %v697 = vshrl.u32 %v696, 7
      %v698 = vsub.s32 0, %v697
      %v699 = vrot.slane %v694, %v698
      %v701 = vadd.f32 %v692, %v699
      %v702 = vadd.f32 %v693, %v699
      %v703 = vadd.f32 %v661, %v701
      %v704 = vadd.f32 %v664, %v702
      %vm705 = vcmp.gt.f32.partialorder %v703, 0.0
      %vm706 = vcmp.gt.f32.partialorder %v704, 0.0
      %v707 = vmul.f32 %v703, 0.2
      %v708 = vmul.f32 %v704, 0.2
      %v709 = vsel %vm705, %v703, %v707
      %v710 = vsel %vm706, %v704, %v708
      %v711 = vadd.f32 %v669, %v701
      %v712 = vadd.f32 %v672, %v702
      %vm713 = vcmp.gt.f32.partialorder %v711, 0.0
      %vm714 = vcmp.gt.f32.partialorder %v712, 0.0
      %v715 = vmul.f32 %v711, 0.2
      %v716 = vmul.f32 %v712, 0.2
      %v717 = vsel %vm713, %v711, %v715
      %v718 = vsel %vm714, %v712, %v716
      %v719 = vmax.f32 %v709, %v717
      %v720 = vmax.f32 %v710, %v718
      %v721 = vadd.f32 %v677, %v701
      %v722 = vadd.f32 %v680, %v702
      %vm723 = vcmp.gt.f32.partialorder %v721, 0.0
      %vm724 = vcmp.gt.f32.partialorder %v722, 0.0
      %v725 = vmul.f32 %v721, 0.2
      %v726 = vmul.f32 %v722, 0.2
      %v727 = vsel %vm723, %v721, %v725
      %v728 = vsel %vm724, %v722, %v726
      %v729 = vmax.f32 %v719, %v727
      %v730 = vmax.f32 %v720, %v728
      %v731 = vadd.f32 %v685, %v701
      %v732 = vadd.f32 %v688, %v702
      %vm733 = vcmp.gt.f32.partialorder %v731, 0.0
      %vm734 = vcmp.gt.f32.partialorder %v732, 0.0
      %v735 = vmul.f32 %v731, 0.2
      %v736 = vmul.f32 %v732, 0.2
      %v737 = vsel %vm733, %v731, %v735
      %v738 = vsel %vm734, %v732, %v736
      %v739 = vmax.f32 %v729, %v737
      %v740 = vmax.f32 %v730, %v738
      %741 = vst.msk [vmem:[%s192] sm:$0xff] %vm317, %v739
      %742 = vst.msk [vmem:[%s192 + $0x8] sm:$0xff] %vm317, %v740
      %s743 = smul.u32 2, %s19
      %p744 = scmp.lt.s32.totalorder %s18, 1
      %s745 = scalar_select %p744, %s18, 1
      %p746 = scmp.lt.s32.totalorder %s743, 1
      %s747 = scalar_select %p746, %s743, 1
      %s748 = smul.addr %s745, 2
      %s749 = sadd.s32 %s747, %s748
      %s750 = smul.addr %s749, 8
      %s751 = scalar_lea.vmem %s3, %s750
      // Predicated region
      $region37: #{forward.9} parent=31 // pred_check
        %p752 = pneg %p114
      $region38: #{forward.9} parent=31 // pred_check_branch
        %754 = sbr.rel (%p752) target = $region40
      $region39: #{forward.9} parent=31 // pred_region
        %s755 = smul.u32 2, %s19
      $region40: #{forward.9} parent=31 // pred_fallthru
        _
    $region32: #{forward.9} parent=5 // pred_fallthru
      _
    %p756 = scmp.le.s32.totalorder 2, %s9
    // Predicated region
    $region41: #{forward.9} parent=5 // pred_check
      %p757 = pneg %p756
    $region42: #{forward.9} parent=5 // pred_check_branch
      %759 = sbr.rel (%p757) target = $region44
    $region43: #{forward.9} parent=5 // pred_region
      %s760 = ssub.s32 %s9, 2
      // Predicated region
      $region45: #{forward.9} parent=43 // pred_check
        %p761 = pneg %p120
      $region46: #{forward.9} parent=43 // pred_check_branch
        %763 = sbr.rel (%p761) target = $region48
      $region47: #{forward.9} parent=43 // pred_region
        %s764 = smul.u32 2, %s21
        %p765 = scmp.lt.s32.totalorder %s20, 1
        %s766 = scalar_select %p765, %s20, 1
        %p767 = scmp.lt.s32.totalorder %s764, 1
        %s768 = scalar_select %p767, %s764, 1
        %s769 = smul.addr %s766, 2
        %s770 = sadd.s32 %s768, %s769
        %s771 = smul.addr %s770, 8
        %s772 = scalar_lea.vmem %s3, %s771
      $region48: #{forward.9} parent=43 // pred_fallthru
        _
    $region44: #{forward.9} parent=5 // pred_fallthru
      _
  $region6: #{forward.9} parent=0 // loop_footer
    %s13 = sadd.s32 1, %s9
  $region7: #{forward.9} parent=0 // loop_footer_branch
    %8 = sbr.rel target = $region3
  $region8: #{forward.9} parent=0 // loop_exit
    _

// kernel: forward.10
$region0: #{forward.10}
  #allocation0 [shape = 'u32[]', space=smem, size = 0x4, offset = 0x4, fixed_abs, tag = 'smem constant byte address 0x4 - core index']
  #allocation1 [shape = 'u32[144,128]{1,0:T(1,128)}', space=vmem, size = 0x12000, scoped, tag = 'internal scratch']
  #allocation2 [shape = 'f32[1,128]{1,0:T(1,128)}', space=vmem, size = 0x200, scoped, tag = 'scratch operand']
  #allocation3 [shape = 'f32[1,128]{1,0:T(1,128)}', space=vmem, size = 0x200, scoped, tag = 'scratch operand']
  %s0 = inlined_call_operand.vmem [shape: f32[2,16,32], index: 0, kind: input, shape index: {}]
  %s1 = inlined_call_operand.vmem [shape: f32[2,16,32], index: 1, kind: input, shape index: {}]
  %s2 = inlined_call_operand.vmem [shape: f32[2,16,64], index: 2, kind: input, shape index: {}]
  %s3 = inlined_call_operand.vmem [shape: f32[2,16,64], index: 3, kind: input, shape index: {}]
  %s4 = inlined_call_operand.vmem [shape: f32[192,128], index: 4, kind: input, shape index: {}]
  %s5 = inlined_call_operand.vmem [shape: f32[1,128], index: 5, kind: input, shape index: {}]
  %s6 = inlined_call_operand.vmem [shape: f32[2,1,256], index: 6, kind: output, shape index: {}]
  %s7 = sld [smem:[#allocation0]]
  $region65: #{forward.10} parent=0
    _
  %s9 = ssub.s32 1, %s7
  %s10 = scalar_select 0, %s9, %s7
  loop: start=0, step=1, limit=4
  $region2: #{forward.10} parent=0 // loop_pre_header
    _
  $region3: #{forward.10} parent=0 // loop_header
    %s12 = sphi 0, %s16
    %p13 = scmp.ge.s32.totalorder %s12, 4
    %s19 = sphi 0, %s31
    %s20 = sphi 0, %s27
    %s21 = sphi 0, %s19
    %s22 = sphi 0, %s20
    %s23 = sphi 0, %s21
    %s24 = sphi 0, %s22
    %s36 = sphi 0, %s38
    %s39 = sphi 0, %s36
    %s40 = sphi 0, %s39
    %s56 = sphi 0, %s40
    %s64 = sphi 0, %s66
    %s67 = sphi 0, %s64
    %s68 = sphi 0, %s67
    %s84 = sphi 0, %s68
    %s92 = sphi 0, %s94
    %s95 = sphi 0, %s92
    %s96 = sphi 0, %s95
    %s112 = sphi 0, %s96
    %s120 = sphi 0, %s122
    %s123 = sphi 0, %s120
    %s124 = sphi 0, %s123
    %s140 = sphi 0, %s124
    %s144 = sphi 0, %s144
    %s146 = sphi 0, %s144
    %s147 = sphi 0, %s146
    %s161 = sphi 0, %s147
    %s165 = sphi 0, %s165
    %s167 = sphi 0, %s165
    %s168 = sphi 0, %s167
    %s182 = sphi 0, %s168
    %s188 = sphi 0, %s190
    %s191 = sphi 0, %s188
    %s192 = sphi 0, %s191
    %s208 = sphi 0, %s192
  $region4: #{forward.10} parent=0 // loop_header_branch
    %15 = sbr.rel (%p13) target = $region8
  $region5: #{forward.10} parent=0 // loop_body
    %s17 = ssub.s32 %s12, 1
    %s18 = ssub.s32 %s12, 2
    %s25 = sadd.s32 1, %s20
    %p26 = scmp.ge.s32.totalorder %s25, 1
    %s27 = scalar_select %p26, 0, %s25
    %s28 = sadd.s32 1, %s19
    %s29 = scalar_select %p26, %s28, %s19
    %p30 = scmp.ge.s32.totalorder %s29, 2
    %s31 = scalar_select %p30, 0, %s29
    %s32 = ssub.s32 %s19, %s31
    %s33 = ssub.s32 %s20, %s27
    %s34 = sor.u32 %s32, %s33
    %p35 = scmp.eq.s32.totalorder %s34, 0
    %s37 = sadd.s32 %s36, 1
    %s38 = scalar_select %p35, %s36, %s37
    %p41 = pneg %p35
    %p42 = scmp.eq.s32.totalorder %s12, 1
    %p43 = por %p41, %p42
    %p44 = scmp.ne.s32.totalorder %s36, %s39
    %p45 = scmp.eq.s32.totalorder %s12, 0
    %p46 = por %p44, %p45
    %p47 = scmp.ne.s32.totalorder %s36, %s39
    %p48 = scmp.eq.s32.totalorder %s17, 1
    %p49 = por %p47, %p48
    %p50 = scmp.ne.s32.totalorder %s39, %s40
    %p51 = scmp.eq.s32.totalorder %s17, 0
    %p52 = por %p50, %p51
    %p53 = scmp.ne.s32.totalorder %s39, %s40
    %p54 = scmp.eq.s32.totalorder %s18, 1
    %p55 = por %p53, %p54
    %p57 = scmp.ne.s32.totalorder %s40, %s56
    %p58 = scmp.eq.s32.totalorder %s18, 0
    %p59 = por %p57, %p58
    %s60 = ssub.s32 %s19, %s31
    %s61 = ssub.s32 %s20, %s27
    %s62 = sor.u32 %s60, %s61
    %p63 = scmp.eq.s32.totalorder %s62, 0
    %s65 = sadd.s32 %s64, 1
    %s66 = scalar_select %p63, %s64, %s65
    %p69 = pneg %p63
    %p70 = scmp.eq.s32.totalorder %s12, 1
    %p71 = por %p69, %p70
    %p72 = scmp.ne.s32.totalorder %s64, %s67
    %p73 = scmp.eq.s32.totalorder %s12, 0
    %p74 = por %p72, %p73
    %p75 = scmp.ne.s32.totalorder %s64, %s67
    %p76 = scmp.eq.s32.totalorder %s17, 1
    %p77 = por %p75, %p76
    %p78 = scmp.ne.s32.totalorder %s67, %s68
    %p79 = scmp.eq.s32.totalorder %s17, 0
    %p80 = por %p78, %p79
    %p81 = scmp.ne.s32.totalorder %s67, %s68
    %p82 = scmp.eq.s32.totalorder %s18, 1
    %p83 = por %p81, %p82
    %p85 = scmp.ne.s32.totalorder %s68, %s84
    %p86 = scmp.eq.s32.totalorder %s18, 0
    %p87 = por %p85, %p86
    %s88 = ssub.s32 %s19, %s31
    %s89 = ssub.s32 %s20, %s27
    %s90 = sor.u32 %s88, %s89
    %p91 = scmp.eq.s32.totalorder %s90, 0
    %s93 = sadd.s32 %s92, 1
    %s94 = scalar_select %p91, %s92, %s93
    %p97 = pneg %p91
    %p98 = scmp.eq.s32.totalorder %s12, 1
    %p99 = por %p97, %p98
    %p100 = scmp.ne.s32.totalorder %s92, %s95
    %p101 = scmp.eq.s32.totalorder %s12, 0
    %p102 = por %p100, %p101
    %p103 = scmp.ne.s32.totalorder %s92, %s95
    %p104 = scmp.eq.s32.totalorder %s17, 1
    %p105 = por %p103, %p104
    %p106 = scmp.ne.s32.totalorder %s95, %s96
    %p107 = scmp.eq.s32.totalorder %s17, 0
    %p108 = por %p106, %p107
    %p109 = scmp.ne.s32.totalorder %s95, %s96
    %p110 = scmp.eq.s32.totalorder %s18, 1
    %p111 = por %p109, %p110
    %p113 = scmp.ne.s32.totalorder %s96, %s112
    %p114 = scmp.eq.s32.totalorder %s18, 0
    %p115 = por %p113, %p114
    %s116 = ssub.s32 %s19, %s31
    %s117 = ssub.s32 %s20, %s27
    %s118 = sor.u32 %s116, %s117
    %p119 = scmp.eq.s32.totalorder %s118, 0
    %s121 = sadd.s32 %s120, 1
    %s122 = scalar_select %p119, %s120, %s121
    %p125 = pneg %p119
    %p126 = scmp.eq.s32.totalorder %s12, 1
    %p127 = por %p125, %p126
    %p128 = scmp.ne.s32.totalorder %s120, %s123
    %p129 = scmp.eq.s32.totalorder %s12, 0
    %p130 = por %p128, %p129
    %p131 = scmp.ne.s32.totalorder %s120, %s123
    %p132 = scmp.eq.s32.totalorder %s17, 1
    %p133 = por %p131, %p132
    %p134 = scmp.ne.s32.totalorder %s123, %s124
    %p135 = scmp.eq.s32.totalorder %s17, 0
    %p136 = por %p134, %p135
    %p137 = scmp.ne.s32.totalorder %s123, %s124
    %p138 = scmp.eq.s32.totalorder %s18, 1
    %p139 = por %p137, %p138
    %p141 = scmp.ne.s32.totalorder %s124, %s140
    %p142 = scmp.eq.s32.totalorder %s18, 0
    %p143 = por %p141, %p142
    %s145 = sadd.s32 %s144, 1
    %p148 = scmp.eq.s32.totalorder %s12, 1
    %p149 = scmp.ne.s32.totalorder %s144, %s146
    %p150 = scmp.eq.s32.totalorder %s12, 0
    %p151 = por %p149, %p150
    %p152 = scmp.ne.s32.totalorder %s144, %s146
    %p153 = scmp.eq.s32.totalorder %s17, 1
    %p154 = por %p152, %p153
    %p155 = scmp.ne.s32.totalorder %s146, %s147
    %p156 = scmp.eq.s32.totalorder %s17, 0
    %p157 = por %p155, %p156
    %p158 = scmp.ne.s32.totalorder %s146, %s147
    %p159 = scmp.eq.s32.totalorder %s18, 1
    %p160 = por %p158, %p159
    %p162 = scmp.ne.s32.totalorder %s147, %s161
    %p163 = scmp.eq.s32.totalorder %s18, 0
    %p164 = por %p162, %p163
    %s166 = sadd.s32 %s165, 1
    %p169 = scmp.eq.s32.totalorder %s12, 1
    %p170 = scmp.ne.s32.totalorder %s165, %s167
    %p171 = scmp.eq.s32.totalorder %s12, 0
    %p172 = por %p170, %p171
    %p173 = scmp.ne.s32.totalorder %s165, %s167
    %p174 = scmp.eq.s32.totalorder %s17, 1
    %p175 = por %p173, %p174
    %p176 = scmp.ne.s32.totalorder %s167, %s168
    %p177 = scmp.eq.s32.totalorder %s17, 0
    %p178 = por %p176, %p177
    %p179 = scmp.ne.s32.totalorder %s167, %s168
    %p180 = scmp.eq.s32.totalorder %s18, 1
    %p181 = por %p179, %p180
    %p183 = scmp.ne.s32.totalorder %s168, %s182
    %p184 = scmp.eq.s32.totalorder %s18, 0
    %p185 = por %p183, %p184
    %s186 = ssub.s32 %s19, %s31
    %p187 = scmp.eq.s32.totalorder %s186, 0
    %s189 = sadd.s32 %s188, 1
    %s190 = scalar_select %p187, %s188, %s189
    %p193 = pneg %p187
    %p194 = scmp.eq.s32.totalorder %s12, 1
    %p195 = por %p193, %p194
    %p196 = scmp.ne.s32.totalorder %s188, %s191
    %p197 = scmp.eq.s32.totalorder %s12, 0
    %p198 = por %p196, %p197
    %p199 = scmp.ne.s32.totalorder %s188, %s191
    %p200 = scmp.eq.s32.totalorder %s17, 1
    %p201 = por %p199, %p200
    %p202 = scmp.ne.s32.totalorder %s191, %s192
    %p203 = scmp.eq.s32.totalorder %s17, 0
    %p204 = por %p202, %p203
    %p205 = scmp.ne.s32.totalorder %s191, %s192
    %p206 = scmp.eq.s32.totalorder %s18, 1
    %p207 = por %p205, %p206
    %p209 = scmp.ne.s32.totalorder %s192, %s208
    %p210 = scmp.eq.s32.totalorder %s18, 0
    %p211 = por %p209, %p210
    %p212 = scmp.le.s32.totalorder 1, %s12
    %p213 = scmp.lt.s32.totalorder %s12, 3
    %p214 = pnand %p212, %p213
    %p215 = pneg %p214
    // Predicated region
    $region9: #{forward.10} parent=5 // pred_check
      _
    $region10: #{forward.10} parent=5 // pred_check_branch
      %217 = sbr.rel (%p214) target = $region12
    $region11: #{forward.10} parent=5 // pred_region
      %s218 = ssub.s32 %s12, 1
      // Predicated region
      $region13: #{forward.10} parent=11 // pred_check
        %p219 = pneg %p157
      $region14: #{forward.10} parent=11 // pred_check_branch
        %221 = sbr.rel (%p219) target = $region16
      $region15: #{forward.10} parent=11 // pred_region
        _
      $region16: #{forward.10} parent=11 // pred_fallthru
        _
      // Predicated region
      $region17: #{forward.10} parent=11 // pred_check
        %p222 = pneg %p178
      $region18: #{forward.10} parent=11 // pred_check_branch
        %224 = sbr.rel (%p222) target = $region20
      $region19: #{forward.10} parent=11 // pred_region
        _
      $region20: #{forward.10} parent=11 // pred_fallthru
        _
    $region12: #{forward.10} parent=5 // pred_fallthru
      _
    %p225 = scmp.lt.s32.totalorder %s12, 2
    // Predicated region
    $region21: #{forward.10} parent=5 // pred_check
      %p226 = pneg %p225
    $region22: #{forward.10} parent=5 // pred_check_branch
      %228 = sbr.rel (%p226) target = $region24
    $region23: #{forward.10} parent=5 // pred_region
      // Predicated region
      $region25: #{forward.10} parent=23 // pred_check
        %p229 = pneg %p46
      $region26: #{forward.10} parent=23 // pred_check_branch
        %231 = sbr.rel (%p229) target = $region28
      $region27: #{forward.10} parent=23 // pred_region
        %s232 = smul.u32 2, %s20
        %p233 = scmp.lt.s32.totalorder %s19, 1
        %s234 = scalar_select %p233, %s19, 1
        %p235 = scmp.lt.s32.totalorder %s232, 1
        %s236 = scalar_select %p235, %s232, 1
        %s237 = smul.addr %s234, 2
        %s238 = sadd.s32 %s236, %s237
        %s239 = smul.addr %s238, 8
        %s240 = scalar_lea.vmem %s0, %s239
        %s241 = smul.u32 2, %s20
      $region28: #{forward.10} parent=23 // pred_fallthru
        _
      // Predicated region
      $region29: #{forward.10} parent=23 // pred_check
        %p242 = pneg %p74
      $region30: #{forward.10} parent=23 // pred_check_branch
        %244 = sbr.rel (%p242) target = $region32
      $region31: #{forward.10} parent=23 // pred_region
        %s245 = smul.u32 2, %s20
        %p246 = scmp.lt.s32.totalorder %s19, 1
        %s247 = scalar_select %p246, %s19, 1
        %p248 = scmp.lt.s32.totalorder %s245, 1
        %s249 = scalar_select %p248, %s245, 1
        %s250 = smul.addr %s247, 2
        %s251 = sadd.s32 %s249, %s250
        %s252 = smul.addr %s251, 8
        %s253 = scalar_lea.vmem %s1, %s252
        %s254 = smul.u32 2, %s20
      $region32: #{forward.10} parent=23 // pred_fallthru
        _
      // Predicated region
      $region33: #{forward.10} parent=23 // pred_check
        %p255 = pneg %p102
      $region34: #{forward.10} parent=23 // pred_check_branch
        %257 = sbr.rel (%p255) target = $region36
      $region35: #{forward.10} parent=23 // pred_region
        %s258 = smul.u32 2, %s20
        %p259 = scmp.lt.s32.totalorder %s19, 1
        %s260 = scalar_select %p259, %s19, 1
        %p261 = scmp.lt.s32.totalorder %s258, 1
        %s262 = scalar_select %p261, %s258, 1
        %s263 = smul.addr %s260, 2
        %s264 = sadd.s32 %s262, %s263
        %s265 = smul.addr %s264, 8
        %s266 = scalar_lea.vmem %s2, %s265
        %s267 = smul.u32 2, %s20
      $region36: #{forward.10} parent=23 // pred_fallthru
        _
      // Predicated region
      $region37: #{forward.10} parent=23 // pred_check
        %p268 = pneg %p130
      $region38: #{forward.10} parent=23 // pred_check_branch
        %270 = sbr.rel (%p268) target = $region40
      $region39: #{forward.10} parent=23 // pred_region
        %s271 = smul.u32 2, %s20
        %p272 = scmp.lt.s32.totalorder %s19, 1
        %s273 = scalar_select %p272, %s19, 1
        %p274 = scmp.lt.s32.totalorder %s271, 1
        %s275 = scalar_select %p274, %s271, 1
        %s276 = smul.addr %s273, 2
        %s277 = sadd.s32 %s275, %s276
        %s278 = smul.addr %s277, 8
        %s279 = scalar_lea.vmem %s3, %s278
        %s280 = smul.u32 2, %s20
      $region40: #{forward.10} parent=23 // pred_fallthru
        _
    $region24: #{forward.10} parent=5 // pred_fallthru
      _
    %p281 = scmp.le.s32.totalorder 1, %s12
    %p282 = scmp.lt.s32.totalorder %s12, 3
    %p283 = pnand %p281, %p282
    %p284 = pneg %p283
    // Predicated region
    $region41: #{forward.10} parent=5 // pred_check
      _
    $region42: #{forward.10} parent=5 // pred_check_branch
      %286 = sbr.rel (%p283) target = $region44
    $region43: #{forward.10} parent=5 // pred_region
      %s287 = ssub.s32 %s12, 1
      %s288 = smul.u32 2, %s22
      %p289 = scmp.lt.s32.totalorder %s21, 1
      %s290 = scalar_select %p289, %s21, 1
      %p291 = scmp.lt.s32.totalorder %s288, 1
      %s292 = scalar_select %p291, %s288, 1
      %s293 = smul.addr %s290, 2
      %s294 = sadd.s32 %s292, %s293
      %s295 = smul.addr %s294, 8
      %s296 = scalar_lea.vmem %s0, %s295
      %p297 = pneg %p52
      %p298 = pneg %p49
      %s299 = smul.u32 2, %s22
      %p300 = scmp.lt.s32.totalorder %s21, 1
      %s301 = scalar_select %p300, %s21, 1
      %p302 = scmp.lt.s32.totalorder %s299, 1
      %s303 = scalar_select %p302, %s299, 1
      %s304 = smul.addr %s301, 2
      %s305 = sadd.s32 %s303, %s304
      %s306 = smul.addr %s305, 8
      %s307 = scalar_lea.vmem %s1, %s306
      %p308 = pneg %p80
      %p309 = pneg %p77
      %s310 = smul.u32 2, %s22
      %p311 = scmp.lt.s32.totalorder %s21, 1
      %s312 = scalar_select %p311, %s21, 1
      %p313 = scmp.lt.s32.totalorder %s310, 1
      %s314 = scalar_select %p313, %s310, 1
      %s315 = smul.addr %s312, 2
      %s316 = sadd.s32 %s314, %s315
      %s317 = smul.addr %s316, 8
      %s318 = scalar_lea.vmem %s2, %s317
      %p319 = pneg %p108
      %p320 = pneg %p105
      %s321 = smul.u32 2, %s22
      %p322 = scmp.lt.s32.totalorder %s21, 1
      %s323 = scalar_select %p322, %s21, 1
      %p324 = scmp.lt.s32.totalorder %s321, 1
      %s325 = scalar_select %p324, %s321, 1
      %s326 = smul.addr %s323, 2
      %s327 = sadd.s32 %s325, %s326
      %s328 = smul.addr %s327, 8
      %s329 = scalar_lea.vmem %s3, %s328
      %p330 = pneg %p136
      %p331 = pneg %p133
      %p332 = pneg %p157
      %p333 = pneg %p154
      %p334 = pneg %p178
      %p335 = pneg %p175
      %p336 = pneg %p204
      %p337 = pneg %p201
      %p338 = scmp.lt.s32.totalorder %s21, 1
      %s339 = scalar_select %p338, %s21, 1
      %s340 = smul.addr %s339, 2
      %s341 = scalar_lea.vmem %s6, %s340
      %s342 = smul.u32 2, %s22
      %p343 = scmp.lt.s32.totalorder %s21, 1
      %s344 = scalar_select %p343, %s21, 1
      %p345 = scmp.lt.s32.totalorder %s342, 1
      %s346 = scalar_select %p345, %s342, 1
      %s347 = smul.addr %s344, 2
      %s348 = sadd.s32 %s346, %s347
      %s349 = smul.addr %s348, 8
      %s350 = scalar_lea.vmem %s0, %s349
      %s351 = smul.u32 2, %s22
      %s352 = smul.u32 2, %s22
      %p353 = scmp.lt.s32.totalorder %s21, 1
      %s354 = scalar_select %p353, %s21, 1
      %p355 = scmp.lt.s32.totalorder %s352, 1
      %s356 = scalar_select %p355, %s352, 1
      %s357 = smul.addr %s354, 2
      %s358 = sadd.s32 %s356, %s357
      %s359 = smul.addr %s358, 8
      %s360 = scalar_lea.vmem %s1, %s359
      %s361 = smul.u32 2, %s22
      %s362 = smul.u32 2, %s22
      %p363 = scmp.lt.s32.totalorder %s21, 1
      %s364 = scalar_select %p363, %s21, 1
      %p365 = scmp.lt.s32.totalorder %s362, 1
      %s366 = scalar_select %p365, %s362, 1
      %s367 = smul.addr %s364, 2
      %s368 = sadd.s32 %s366, %s367
      %s369 = smul.addr %s368, 8
      %s370 = scalar_lea.vmem %s2, %s369
      %s371 = smul.u32 2, %s22
      %s372 = smul.u32 2, %s22
      %p373 = scmp.lt.s32.totalorder %s21, 1
      %s374 = scalar_select %p373, %s21, 1
      %p375 = scmp.lt.s32.totalorder %s372, 1
      %s376 = scalar_select %p375, %s372, 1
      %s377 = smul.addr %s374, 2
      %s378 = sadd.s32 %s376, %s377
      %s379 = smul.addr %s378, 8
      %s380 = scalar_lea.vmem %s3, %s379
      %s381 = smul.u32 2, %s22
      %p382 = scmp.lt.s32.totalorder %s21, 1
      %s383 = scalar_select %p382, %s21, 1
      %s384 = smul.addr %s383, 2
      %s385 = scalar_lea.vmem %s6, %s384
      %p387 = scmp.eq.s32.totalorder %s22, 0
      // Predicated region
      $region45: #{forward.10} parent=43 // pred_check
        %p388 = pneg %p387
      $region46: #{forward.10} parent=43 // pred_check_branch
        %390 = sbr.rel (%p388) target = $region48
      $region47: #{forward.10} parent=43 // pred_region
        %391 = vst [vmem:[#allocation2] sm:$0x1] -inf
        %392 = vst [vmem:[#allocation3] sm:$0x1] 0.0
      $region48: #{forward.10} parent=43 // pred_fallthru
        _
      %v393 = vld [vmem:[%s350] sm:$0xff]
      %v394 = vld [vmem:[%s350 + $0x8] sm:$0xff]
      %v395 = vld [vmem:[%s360] sm:$0xff]
      %v396 = vld [vmem:[%s360 + $0x8] sm:$0xff]
      %v397 = vld [vmem:[%s370] sm:$0xff]
      %v398 = vld [vmem:[%s370 + $0x8] sm:$0xff]
      %v399 = vld [vmem:[%s380] sm:$0xff]
      %v400 = vld [vmem:[%s380 + $0x8] sm:$0xff]
      %403 = vrot.lane.b32.xlu0 %v395, 32
      %v404 = vpop.permute.xlu0 %403
      %405 = vrot.lane.b32.xlu0 %v396, 32
      %v406 = vpop.permute.xlu0 %405
      %411 = vrot.lane.b32.xlu0 %v397, 64
      %v412 = vpop.permute.xlu0 %411
      %413 = vrot.lane.b32.xlu0 %v398, 64
      %v414 = vpop.permute.xlu0 %413
      %vm417 = vcmask 261120
      %v418 = vsel %vm417, %v393, %v404
      %v419 = vsel %vm417, %v394, %v406
      %vm420 = vcmask 523264
      %v421 = vsel %vm420, %v418, %v412
      %v422 = vsel %vm420, %v419, %v414
      %v423 = vpack.c.bf16 %v422, %v421
      %v424 = vpack.c.bf16 %v400, %v399
      %v425 = vld [vmem:[%s4] sm:$0xff]
      %v426 = vld [vmem:[%s4 + $0x8] sm:$0xff]
      %v427 = vld [vmem:[%s4 + $0x10] sm:$0xff]
      %v428 = vld [vmem:[%s4 + $0x18] sm:$0xff]
      %v429 = vld [vmem:[%s4 + $0x20] sm:$0xff]
      %v430 = vld [vmem:[%s4 + $0x28] sm:$0xff]
      %v431 = vld [vmem:[%s4 + $0x30] sm:$0xff]
      %v432 = vld [vmem:[%s4 + $0x38] sm:$0xff]
      %v433 = vld [vmem:[%s4 + $0x40] sm:$0xff]
      %v434 = vld [vmem:[%s4 + $0x48] sm:$0xff]
      %v435 = vld [vmem:[%s4 + $0x50] sm:$0xff]
      %v436 = vld [vmem:[%s4 + $0x58] sm:$0xff]
      %v437 = vld [vmem:[%s4 + $0x60] sm:$0xff]
      %v438 = vld [vmem:[%s4 + $0x68] sm:$0xff]
      %v439 = vld [vmem:[%s4 + $0x70] sm:$0xff]
      %v440 = vld [vmem:[%s4 + $0x78] sm:$0xff]
      %v441 = vld [vmem:[%s4 + $0x80] sm:$0xff]
      %v442 = vld [vmem:[%s4 + $0x88] sm:$0xff]
      %v443 = vld [vmem:[%s4 + $0x90] sm:$0xff]
      %v444 = vld [vmem:[%s4 + $0x98] sm:$0xff]
      %v445 = vld [vmem:[%s4 + $0xa0] sm:$0xff]
      %v446 = vld [vmem:[%s4 + $0xa8] sm:$0xff]
      %v447 = vld [vmem:[%s4 + $0xb0] sm:$0xff]
      %v448 = vld [vmem:[%s4 + $0xb8] sm:$0xff]
      %v449 = vpack.c.bf16 %v426, %v425
      %v450 = vpack.c.bf16 %v428, %v427
      %v451 = vpack.c.bf16 %v430, %v429
      %v452 = vpack.c.bf16 %v432, %v431
      %v453 = vpack.c.bf16 %v434, %v433
      %v454 = vpack.c.bf16 %v436, %v435
      %v455 = vpack.c.bf16 %v438, %v437
      %v456 = vpack.c.bf16 %v440, %v439
      %v457 = vpack.c.bf16 %v442, %v441
      %v458 = vpack.c.bf16 %v444, %v443
      %v459 = vpack.c.bf16 %v446, %v445
      %v460 = vpack.c.bf16 %v448, %v447
      %v461 = vld [vmem:[%s5] sm:$0x1]
      %v463 = vlaneseq
      %v464 = vshrl.u32 %v463, 7
      %v465 = vsub.s32 0, %v464
      %v466 = vrot.slane %v461, %v465
      %v469 = vsel %vm420, %v424, 0
      %471 = vmatprep.subr.bf16.mxu0 0
      %472 = vmatpush1.bf16.msra.mxu0 %v449
      %473 = vmatprep.subr.bf16.mxu0 0
      %474 = vmatpush1.bf16.msra.mxu0 %v450
      %475 = vmatprep.subr.bf16.mxu0 0
      %476 = vmatpush1.bf16.msra.mxu0 %v451
      %477 = vmatprep.subr.bf16.mxu0 0
      %478 = vmatpush1.bf16.msra.mxu0 %v452
      %479 = vmatprep.subr.bf16.mxu0 0
      %480 = vmatpush1.bf16.msra.mxu0 %v453
      %481 = vmatprep.subr.bf16.mxu0 0
      %482 = vmatpush1.bf16.msra.mxu0 %v454
      %483 = vmatprep.subr.bf16.mxu0 0
      %484 = vmatpush1.bf16.msra.mxu0 %v455
      %485 = vmatprep.subr.bf16.mxu0 0
      %486 = vmatpush1.bf16.msra.mxu0 %v456
      %487 = vmatprep.subr.bf16.mxu0 0
      %488 = vmatpush1.bf16.msra.mxu0 %v457
      %489 = vmatprep.subr.bf16.mxu0 0
      %490 = vmatpush1.bf16.msra.mxu0 %v458
      %491 = vmatprep.subr.bf16.mxu0 0
      %492 = vmatpush1.bf16.msra.mxu0 %v459
      %493 = vmatprep.subr.bf16.mxu0 0
      %494 = vmatpush1.bf16.msra.mxu0 %v460
      %495 = vmatprep.subr.bf16.mxu0 0
      %496 = vmatpush1.bf16.msra.mxu0 0
      %497 = vmatprep.subr.bf16.mxu0 0
      %498 = vmatpush1.bf16.msra.mxu0 0
      %499 = vmatprep.subr.bf16.mxu0 0
      %500 = vmatpush1.bf16.msra.mxu0 0
      %501 = vmatprep.subr.bf16.mxu0 0
      %502 = vmatpush1.bf16.msra.mxu0 0
      %503 = vmatprep.mubr.bf16.mxu0 %v469
      %504 = vmatmul.mubr.bf16.gmra.mrb[0].mxu0 %v423
      %v505 = vpop.f32.mrb[0].mxu0
      %v506 = vadd.f32 %v466, %v505
      %v507 = vpop.f32.mrb[0].mxu0
      %v508 = vpop.f32.mrb[0].mxu0
      %v509 = vadd.f32 %v466, %v508
      %v510 = vpop.f32.mrb[0].mxu0
      %511 = vdwg.mxu0
      %vm512 = vcmp.gt.f32.partialorder %v506, 0.0
      %vm513 = vcmp.gt.f32.partialorder %v509, 0.0
      %v514 = vmul.f32 %v506, 0.2
      %v515 = vmul.f32 %v509, 0.2
      %v516 = vsel %vm512, %v506, %v514
      %v517 = vsel %vm513, %v509, %v515
      %v518 = vld [vmem:[#allocation2] sm:$0x1]
      %v519 = vmax.f32 %v516, %v517
      %v520 = vrot.slane %v519, 4
      %v521 = vmax.f32 %v519, %v520
      %v522 = vrot.slane %v521, 2
      %v523 = vmax.f32 %v521, %v522
      %v524 = vrot.slane %v523, 1
      %v525 = vmax.f32 %v523, %v524
      %v526 = vmax.f32 %v518, %v525
      %527 = vst [vmem:[#allocation2] sm:$0x1] %v526
      %v528 = vld [vmem:[#allocation3] sm:$0x1]
      %v529 = vadd.f32 %v516, %v517
      %v530 = vrot.slane %v529, 4
      %v531 = vadd.f32 %v529, %v530
      %v532 = vrot.slane %v531, 2
      %v533 = vadd.f32 %v531, %v532
      %v534 = vrot.slane %v533, 1
      %v535 = vadd.f32 %v533, %v534
      %v536 = vadd.f32 %v528, %v535
      %537 = vst [vmem:[#allocation3] sm:$0x1] %v536
      // Predicated region
      $region49: #{forward.10} parent=43 // pred_check
        %p538 = pneg %p387
      $region50: #{forward.10} parent=43 // pred_check_branch
        %540 = sbr.rel (%p538) target = $region52
      $region51: #{forward.10} parent=43 // pred_region
        %v541 = vld [vmem:[#allocation2] sm:$0x1]
        %v542 = vld [vmem:[#allocation3] sm:$0x1]
        %v543 = vmul.f32 %v542, 0.0625
        %v546 = vcombine.low %v541, %v543
        %v548 = vunpack.c.l.s4 1966171168
        %v549 = vunpack.c.0.s8 %v548
        %v550 = vlaneseq
        %v551 = vshrl.u32 %v550, 7
        %v552 = vsub.s32 %v549, %v551
        %v553 = vrot.slane %v546, %v552
        %v555 = vunpack.c.l.s4 1966171168
        %v556 = vunpack.c.0.s8 %v555
        %v557 = vlaneseq
        %v558 = vshrl.u32 %v557, 7
        %v559 = vsub.s32 %v556, %v558
        %v560 = vrot.slane %v553, %v559
        %v562 = vlaneseq
        %vm563 = vcmp.ge.s32.totalorder %v562, 0
        %vm564 = vcmp.lt.s32.totalorder %v562, 256
        %vm565 = vmand %vm563, %vm564
        %566 = vst.msk [vmem:[%s385] sm:$0x3] %vm565, %v560
      $region52: #{forward.10} parent=43 // pred_fallthru
        _
      %p567 = scmp.lt.s32.totalorder %s21, 1
      %s568 = scalar_select %p567, %s21, 1
      %s569 = smul.addr %s568, 2
      %s570 = scalar_lea.vmem %s6, %s569
      // Predicated region
      $region53: #{forward.10} parent=43 // pred_check
        %p571 = pneg %p201
      $region54: #{forward.10} parent=43 // pred_check_branch
        %573 = sbr.rel (%p571) target = $region56
      $region55: #{forward.10} parent=43 // pred_region
        _
      $region56: #{forward.10} parent=43 // pred_fallthru
        _
    $region44: #{forward.10} parent=5 // pred_fallthru
      _
    %p574 = scmp.le.s32.totalorder 2, %s12
    // Predicated region
    $region57: #{forward.10} parent=5 // pred_check
      %p575 = pneg %p574
    $region58: #{forward.10} parent=5 // pred_check_branch
      %577 = sbr.rel (%p575) target = $region60
    $region59: #{forward.10} parent=5 // pred_region
      %s578 = ssub.s32 %s12, 2
      // Predicated region
      $region61: #{forward.10} parent=59 // pred_check
        %p579 = pneg %p207
      $region62: #{forward.10} parent=59 // pred_check_branch
        %581 = sbr.rel (%p579) target = $region64
      $region63: #{forward.10} parent=59 // pred_region
        %p582 = scmp.lt.s32.totalorder %s23, 1
        %s583 = scalar_select %p582, %s23, 1
        %s584 = smul.addr %s583, 2
        %s585 = scalar_lea.vmem %s6, %s584
      $region64: #{forward.10} parent=59 // pred_fallthru
        _
    $region60: #{forward.10} parent=5 // pred_fallthru
      _
  $region6: #{forward.10} parent=0 // loop_footer
    %s16 = sadd.s32 1, %s12
  $region7: #{forward.10} parent=0 // loop_footer_branch
    %11 = sbr.rel target = $region3
  $region8: #{forward.10} parent=0 // loop_exit
    _

// kernel: forward.11
$region0: #{forward.11}
  #allocation0 [shape = 'u32[]', space=smem, size = 0x4, offset = 0x4, fixed_abs, tag = 'smem constant byte address 0x4 - core index']
  #allocation1 [shape = 'u32[144,128]{1,0:T(1,128)}', space=vmem, size = 0x12000, scoped, tag = 'internal scratch']
  %s0 = inlined_call_operand.vmem [shape: f32[2,256], index: 0, kind: input, shape index: {}]
  %s1 = inlined_call_operand.vmem [shape: f32[256,128], index: 1, kind: input, shape index: {}]
  %s2 = inlined_call_operand.vmem [shape: f32[1,128], index: 2, kind: input, shape index: {}]
  %s3 = inlined_call_operand.vmem [shape: f32[1,128], index: 3, kind: input, shape index: {}]
  %s4 = inlined_call_operand.vmem [shape: f32[128,64], index: 4, kind: input, shape index: {}]
  %s5 = inlined_call_operand.vmem [shape: f32[1,64], index: 5, kind: input, shape index: {}]
  %s6 = inlined_call_operand.vmem [shape: f32[1,64], index: 6, kind: input, shape index: {}]
  %s7 = inlined_call_operand.vmem [shape: f32[64,10], index: 7, kind: input, shape index: {}]
  %s8 = inlined_call_operand.vmem [shape: f32[1,10], index: 8, kind: input, shape index: {}]
  %s9 = inlined_call_operand.vmem [shape: f32[256,512], index: 9, kind: input, shape index: {}]
  %s10 = inlined_call_operand.vmem [shape: f32[1,512], index: 10, kind: input, shape index: {}]
  %s11 = inlined_call_operand.vmem [shape: f32[1,512], index: 11, kind: input, shape index: {}]
  %s12 = inlined_call_operand.vmem [shape: f32[512,256], index: 12, kind: input, shape index: {}]
  %s13 = inlined_call_operand.vmem [shape: f32[1,256], index: 13, kind: input, shape index: {}]
  %s14 = inlined_call_operand.vmem [shape: f32[1,256], index: 14, kind: input, shape index: {}]
  %s15 = inlined_call_operand.vmem [shape: f32[256,10], index: 15, kind: input, shape index: {}]
  %s16 = inlined_call_operand.vmem [shape: f32[1,10], index: 16, kind: input, shape index: {}]
  %s17 = inlined_call_operand.hbm [shape: f32[2,10], index: 17, kind: output, shape index: {0}]
  %s18 = inlined_call_operand.hbm [shape: f32[2,10], index: 18, kind: output, shape index: {1}]
  %19 = xla_tuple %s17, %s18
  %s20 = sld [smem:[#allocation0]]
  $region86: #{forward.11} parent=0
    _
  %s22 = ssub.s32 1, %s20
  %s23 = scalar_select 0, %s22, %s20
  $region1: #{forward.11} parent=0
    #allocation2 [shape = 'u8[1024]{0}', space=vmem, size = 0x400, scoped, tag = 'output window, operand 0, single buffered']
    #allocation3 [shape = 's32[1]{0}', space=sflag, size = 0x4, scoped, tag = 'scoped memory for forward.11']
    #allocation4 [shape = 'u8[1024]{0}', space=vmem, size = 0x400, scoped, tag = 'output window, operand 1, single buffered']
    #allocation5 [shape = 's32[1]{0}', space=sflag, size = 0x4, scoped, tag = 'scoped memory for forward.11']
    %24 = vsyncpa [#allocation3], 0
    %25 = vsyncpa [#allocation5], 0
    // Predicated region
    $region2: #{forward.11} parent=1 // pred_check
      _
    $region3: #{forward.11} parent=1 // pred_check_branch
      %27 = sbr.rel (0) target = $region5
    $region4: #{forward.11} parent=1 // pred_region
      _
    $region5: #{forward.11} parent=1 // pred_fallthru
      _
    // Predicated region
    $region6: #{forward.11} parent=1 // pred_check
      _
    $region7: #{forward.11} parent=1 // pred_check_branch
      %29 = sbr.rel (0) target = $region9
    $region8: #{forward.11} parent=1 // pred_region
      _
    $region9: #{forward.11} parent=1 // pred_fallthru
      _
    // Predicated region
    $region10: #{forward.11} parent=1 // pred_check
      _
    $region11: #{forward.11} parent=1 // pred_check_branch
      %31 = sbr.rel (0) target = $region13
    $region12: #{forward.11} parent=1 // pred_region
      _
    $region13: #{forward.11} parent=1 // pred_fallthru
      _
    // Predicated region
    $region14: #{forward.11} parent=1 // pred_check
      _
    $region15: #{forward.11} parent=1 // pred_check_branch
      %33 = sbr.rel (0) target = $region17
    $region16: #{forward.11} parent=1 // pred_region
      _
    $region17: #{forward.11} parent=1 // pred_fallthru
      _
    // Predicated region
    $region18: #{forward.11} parent=1 // pred_check
      _
    $region19: #{forward.11} parent=1 // pred_check_branch
      %35 = sbr.rel (0) target = $region21
    $region20: #{forward.11} parent=1 // pred_region
      _
    $region21: #{forward.11} parent=1 // pred_fallthru
      _
    // Predicated region
    $region22: #{forward.11} parent=1 // pred_check
      _
    $region23: #{forward.11} parent=1 // pred_check_branch
      %37 = sbr.rel (0) target = $region25
    $region24: #{forward.11} parent=1 // pred_region
      _
    $region25: #{forward.11} parent=1 // pred_fallthru
      _
    // Predicated region
    $region26: #{forward.11} parent=1 // pred_check
      _
    $region27: #{forward.11} parent=1 // pred_check_branch
      %39 = sbr.rel (0) target = $region29
    $region28: #{forward.11} parent=1 // pred_region
      _
    $region29: #{forward.11} parent=1 // pred_fallthru
      _
    // Predicated region
    $region30: #{forward.11} parent=1 // pred_check
      _
    $region31: #{forward.11} parent=1 // pred_check_branch
      %41 = sbr.rel (0) target = $region33
    $region32: #{forward.11} parent=1 // pred_region
      _
    $region33: #{forward.11} parent=1 // pred_fallthru
      _
    // Predicated region
    $region34: #{forward.11} parent=1 // pred_check
      _
    $region35: #{forward.11} parent=1 // pred_check_branch
      %43 = sbr.rel (0) target = $region37
    $region36: #{forward.11} parent=1 // pred_region
      _
    $region37: #{forward.11} parent=1 // pred_fallthru
      _
    // Predicated region
    $region38: #{forward.11} parent=1 // pred_check
      _
    $region39: #{forward.11} parent=1 // pred_check_branch
      %45 = sbr.rel (0) target = $region41
    $region40: #{forward.11} parent=1 // pred_region
      _
    $region41: #{forward.11} parent=1 // pred_fallthru
      _
    // Predicated region
    $region42: #{forward.11} parent=1 // pred_check
      _
    $region43: #{forward.11} parent=1 // pred_check_branch
      %47 = sbr.rel (0) target = $region45
    $region44: #{forward.11} parent=1 // pred_region
      _
    $region45: #{forward.11} parent=1 // pred_fallthru
      _
    // Predicated region
    $region46: #{forward.11} parent=1 // pred_check
      _
    $region47: #{forward.11} parent=1 // pred_check_branch
      %49 = sbr.rel (0) target = $region49
    $region48: #{forward.11} parent=1 // pred_region
      _
    $region49: #{forward.11} parent=1 // pred_fallthru
      _
    // Predicated region
    $region50: #{forward.11} parent=1 // pred_check
      _
    $region51: #{forward.11} parent=1 // pred_check_branch
      %51 = sbr.rel (0) target = $region53
    $region52: #{forward.11} parent=1 // pred_region
      _
    $region53: #{forward.11} parent=1 // pred_fallthru
      _
    // Predicated region
    $region54: #{forward.11} parent=1 // pred_check
      _
    $region55: #{forward.11} parent=1 // pred_check_branch
      %53 = sbr.rel (0) target = $region57
    $region56: #{forward.11} parent=1 // pred_region
      _
    $region57: #{forward.11} parent=1 // pred_fallthru
      _
    // Predicated region
    $region58: #{forward.11} parent=1 // pred_check
      _
    $region59: #{forward.11} parent=1 // pred_check_branch
      %55 = sbr.rel (0) target = $region61
    $region60: #{forward.11} parent=1 // pred_region
      _
    $region61: #{forward.11} parent=1 // pred_fallthru
      _
    // Predicated region
    $region62: #{forward.11} parent=1 // pred_check
      _
    $region63: #{forward.11} parent=1 // pred_check_branch
      %57 = sbr.rel (0) target = $region65
    $region64: #{forward.11} parent=1 // pred_region
      _
    $region65: #{forward.11} parent=1 // pred_fallthru
      _
    // Predicated region
    $region66: #{forward.11} parent=1 // pred_check
      _
    $region67: #{forward.11} parent=1 // pred_check_branch
      %59 = sbr.rel (0) target = $region69
    $region68: #{forward.11} parent=1 // pred_region
      _
    $region69: #{forward.11} parent=1 // pred_fallthru
      _
    %v60 = vld [vmem:[%s0] sm:$0xf]
    %v61 = vld [vmem:[%s1] sm:$0xff]
    %v62 = vld [vmem:[%s1 + $0x8] sm:$0xff]
    %v63 = vld [vmem:[%s1 + $0x10] sm:$0xff]
    %v64 = vld [vmem:[%s1 + $0x18] sm:$0xff]
    %v65 = vld [vmem:[%s1 + $0x20] sm:$0xff]
    %v66 = vld [vmem:[%s1 + $0x28] sm:$0xff]
    %v67 = vld [vmem:[%s1 + $0x30] sm:$0xff]
    %v68 = vld [vmem:[%s1 + $0x38] sm:$0xff]
    %v69 = vld [vmem:[%s1 + $0x40] sm:$0xff]
    %v70 = vld [vmem:[%s1 + $0x48] sm:$0xff]
    %v71 = vld [vmem:[%s1 + $0x50] sm:$0xff]
    %v72 = vld [vmem:[%s1 + $0x58] sm:$0xff]
    %v73 = vld [vmem:[%s1 + $0x60] sm:$0xff]
    %v74 = vld [vmem:[%s1 + $0x68] sm:$0xff]
    %v75 = vld [vmem:[%s1 + $0x70] sm:$0xff]
    %v76 = vld [vmem:[%s1 + $0x78] sm:$0xff]
    %v77 = vld [vmem:[%s1 + $0x80] sm:$0xff]
    %v78 = vld [vmem:[%s1 + $0x88] sm:$0xff]
    %v79 = vld [vmem:[%s1 + $0x90] sm:$0xff]
    %v80 = vld [vmem:[%s1 + $0x98] sm:$0xff]
    %v81 = vld [vmem:[%s1 + $0xa0] sm:$0xff]
    %v82 = vld [vmem:[%s1 + $0xa8] sm:$0xff]
    %v83 = vld [vmem:[%s1 + $0xb0] sm:$0xff]
    %v84 = vld [vmem:[%s1 + $0xb8] sm:$0xff]
    %v85 = vld [vmem:[%s1 + $0xc0] sm:$0xff]
    %v86 = vld [vmem:[%s1 + $0xc8] sm:$0xff]
    %v87 = vld [vmem:[%s1 + $0xd0] sm:$0xff]
    %v88 = vld [vmem:[%s1 + $0xd8] sm:$0xff]
    %v89 = vld [vmem:[%s1 + $0xe0] sm:$0xff]
    %v90 = vld [vmem:[%s1 + $0xe8] sm:$0xff]
    %v91 = vld [vmem:[%s1 + $0xf0] sm:$0xff]
    %v92 = vld [vmem:[%s1 + $0xf8] sm:$0xff]
    %v95 = vunpack.c.l.s4 1983009808
    %v96 = vunpack.c.0.s8 %v95
    %v97 = vlaneseq
    %v98 = vshrl.u32 %v97, 7
    %v99 = vsub.s32 %v96, %v98
    %v100 = vrot.slane %v60, %v99
    %v101 = vcombine.high %v100, %v100
    %104 = vmatprep.subr.mxu0 0.0
    %105 = vmatpush1.msra.mxu0 %v61
    %106 = vmatprep.subr.mxu0 0.0
    %107 = vmatpush1.msra.mxu0 %v62
    %108 = vmatprep.subr.mxu0 0.0
    %109 = vmatpush1.msra.mxu0 %v63
    %110 = vmatprep.subr.mxu0 0.0
    %111 = vmatpush1.msra.mxu0 %v64
    %112 = vmatprep.subr.mxu0 0.0
    %113 = vmatpush1.msra.mxu0 %v65
    %114 = vmatprep.subr.mxu0 0.0
    %115 = vmatpush1.msra.mxu0 %v66
    %116 = vmatprep.subr.mxu0 0.0
    %117 = vmatpush1.msra.mxu0 %v67
    %118 = vmatprep.subr.mxu0 0.0
    %119 = vmatpush1.msra.mxu0 %v68
    %120 = vmatprep.subr.mxu0 0.0
    %121 = vmatpush1.msra.mxu0 %v69
    %122 = vmatprep.subr.mxu0 0.0
    %123 = vmatpush1.msra.mxu0 %v70
    %124 = vmatprep.subr.mxu0 0.0
    %125 = vmatpush1.msra.mxu0 %v71
    %126 = vmatprep.subr.mxu0 0.0
    %127 = vmatpush1.msra.mxu0 %v72
    %128 = vmatprep.subr.mxu0 0.0
    %129 = vmatpush1.msra.mxu0 %v73
    %130 = vmatprep.subr.mxu0 0.0
    %131 = vmatpush1.msra.mxu0 %v74
    %132 = vmatprep.subr.mxu0 0.0
    %133 = vmatpush1.msra.mxu0 %v75
    %134 = vmatprep.subr.mxu0 0.0
    %135 = vmatpush1.msra.mxu0 %v76
    %136 = vmatprep.subr.mxu0 0.0
    %137 = vmatpush1.msra.mxu0 %v77
    %138 = vmatprep.subr.mxu0 0.0
    %139 = vmatpush1.msra.mxu0 %v78
    %140 = vmatprep.subr.mxu0 0.0
    %141 = vmatpush1.msra.mxu0 %v79
    %142 = vmatprep.subr.mxu0 0.0
    %143 = vmatpush1.msra.mxu0 %v80
    %144 = vmatprep.subr.mxu0 0.0
    %145 = vmatpush1.msra.mxu0 %v81
    %146 = vmatprep.subr.mxu0 0.0
    %147 = vmatpush1.msra.mxu0 %v82
    %148 = vmatprep.subr.mxu0 0.0
    %149 = vmatpush1.msra.mxu0 %v83
    %150 = vmatprep.subr.mxu0 0.0
    %151 = vmatpush1.msra.mxu0 %v84
    %152 = vmatprep.subr.mxu0 0.0
    %153 = vmatpush1.msra.mxu0 %v85
    %154 = vmatprep.subr.mxu0 0.0
    %155 = vmatpush1.msra.mxu0 %v86
    %156 = vmatprep.subr.mxu0 0.0
    %157 = vmatpush1.msra.mxu0 %v87
    %158 = vmatprep.subr.mxu0 0.0
    %159 = vmatpush1.msra.mxu0 %v88
    %160 = vmatprep.subr.mxu0 0.0
    %161 = vmatpush1.msra.mxu0 %v89
    %162 = vmatprep.subr.mxu0 0.0
    %163 = vmatpush1.msra.mxu0 %v90
    %164 = vmatprep.subr.mxu0 0.0
    %165 = vmatpush1.msra.mxu0 %v91
    %166 = vmatprep.subr.mxu0 0.0
    %167 = vmatpush1.msra.mxu0 %v92
    %168 = vmatprep.mubr.f32.mxu0 %v101
    %169 = vmatmul.mubr.f32.gmra.mrb[0].mxu0 %v100
    %v170 = vpop.f32.mrb[0].mxu0
    %v171 = vadd.f32 0.0, %v170
    %v172 = vpop.f32.mrb[0].mxu0
    %173 = vdwg.mxu0
    %v174 = vld [vmem:[%s2] sm:$0x1]
    %v176 = vlaneseq
    %v177 = vshrl.u32 %v176, 7
    %v178 = vsub.s32 0, %v177
    %v179 = vrot.slane %v174, %v178
    %v181 = vmul.f32 %v171, %v179
    %v182 = vld [vmem:[%s3] sm:$0x1]
    %v184 = vlaneseq
    %v185 = vshrl.u32 %v184, 7
    %v186 = vsub.s32 0, %v185
    %v187 = vrot.slane %v182, %v186
    %v189 = vadd.f32 %v181, %v187
    %vm190 = vcmp.gt.f32.partialorder %v189, 0.0
    %v191 = vmul.f32 %v189, 0.2
    %v192 = vsel %vm190, %v189, %v191
    %v193 = vld [vmem:[%s4] sm:$0xff]
    %v194 = vld [vmem:[%s4 + $0x8] sm:$0xff]
    %v195 = vld [vmem:[%s4 + $0x10] sm:$0xff]
    %v196 = vld [vmem:[%s4 + $0x18] sm:$0xff]
    %v197 = vld [vmem:[%s4 + $0x20] sm:$0xff]
    %v198 = vld [vmem:[%s4 + $0x28] sm:$0xff]
    %v199 = vld [vmem:[%s4 + $0x30] sm:$0xff]
    %v200 = vld [vmem:[%s4 + $0x38] sm:$0xff]
    %v201 = vld [vmem:[%s4 + $0x40] sm:$0xff]
    %v202 = vld [vmem:[%s4 + $0x48] sm:$0xff]
    %v203 = vld [vmem:[%s4 + $0x50] sm:$0xff]
    %v204 = vld [vmem:[%s4 + $0x58] sm:$0xff]
    %v205 = vld [vmem:[%s4 + $0x60] sm:$0xff]
    %v206 = vld [vmem:[%s4 + $0x68] sm:$0xff]
    %v207 = vld [vmem:[%s4 + $0x70] sm:$0xff]
    %v208 = vld [vmem:[%s4 + $0x78] sm:$0xff]
    %209 = vmatprep.subr.mxu0 0.0
    %210 = vmatpush1.msra.mxu0 %v193
    %211 = vmatprep.subr.mxu0 0.0
    %212 = vmatpush1.msra.mxu0 %v194
    %213 = vmatprep.subr.mxu0 0.0
    %214 = vmatpush1.msra.mxu0 %v195
    %215 = vmatprep.subr.mxu0 0.0
    %216 = vmatpush1.msra.mxu0 %v196
    %217 = vmatprep.subr.mxu0 0.0
    %218 = vmatpush1.msra.mxu0 %v197
    %219 = vmatprep.subr.mxu0 0.0
    %220 = vmatpush1.msra.mxu0 %v198
    %221 = vmatprep.subr.mxu0 0.0
    %222 = vmatpush1.msra.mxu0 %v199
    %223 = vmatprep.subr.mxu0 0.0
    %224 = vmatpush1.msra.mxu0 %v200
    %225 = vmatprep.subr.mxu0 0.0
    %226 = vmatpush1.msra.mxu0 %v201
    %227 = vmatprep.subr.mxu0 0.0
    %228 = vmatpush1.msra.mxu0 %v202
    %229 = vmatprep.subr.mxu0 0.0
    %230 = vmatpush1.msra.mxu0 %v203
    %231 = vmatprep.subr.mxu0 0.0
    %232 = vmatpush1.msra.mxu0 %v204
    %233 = vmatprep.subr.mxu0 0.0
    %234 = vmatpush1.msra.mxu0 %v205
    %235 = vmatprep.subr.mxu0 0.0
    %236 = vmatpush1.msra.mxu0 %v206
    %237 = vmatprep.subr.mxu0 0.0
    %238 = vmatpush1.msra.mxu0 %v207
    %239 = vmatprep.subr.mxu0 0.0
    %240 = vmatpush1.msra.mxu0 %v208
    %241 = vmatprep.subr.mxu0 0.0
    %242 = vmatpush1.msra.mxu0 0.0
    %243 = vmatprep.subr.mxu0 0.0
    %244 = vmatpush1.msra.mxu0 0.0
    %245 = vmatprep.subr.mxu0 0.0
    %246 = vmatpush1.msra.mxu0 0.0
    %247 = vmatprep.subr.mxu0 0.0
    %248 = vmatpush1.msra.mxu0 0.0
    %249 = vmatprep.subr.mxu0 0.0
    %250 = vmatpush1.msra.mxu0 0.0
    %251 = vmatprep.subr.mxu0 0.0
    %252 = vmatpush1.msra.mxu0 0.0
    %253 = vmatprep.subr.mxu0 0.0
    %254 = vmatpush1.msra.mxu0 0.0
    %255 = vmatprep.subr.mxu0 0.0
    %256 = vmatpush1.msra.mxu0 0.0
    %257 = vmatprep.subr.mxu0 0.0
    %258 = vmatpush1.msra.mxu0 0.0
    %259 = vmatprep.subr.mxu0 0.0
    %260 = vmatpush1.msra.mxu0 0.0
    %261 = vmatprep.subr.mxu0 0.0
    %262 = vmatpush1.msra.mxu0 0.0
    %263 = vmatprep.subr.mxu0 0.0
    %264 = vmatpush1.msra.mxu0 0.0
    %265 = vmatprep.subr.mxu0 0.0
    %266 = vmatpush1.msra.mxu0 0.0
    %267 = vmatprep.subr.mxu0 0.0
    %268 = vmatpush1.msra.mxu0 0.0
    %269 = vmatprep.subr.mxu0 0.0
    %270 = vmatpush1.msra.mxu0 0.0
    %271 = vmatprep.subr.mxu0 0.0
    %272 = vmatpush1.msra.mxu0 0.0
    %273 = vmatprep.mubr.f32.mxu0 0.0
    %274 = vmatmul.mubr.f32.gmra.mrb[0].mxu0 %v192
    %v275 = vpop.f32.mrb[0].mxu0
    %v276 = vadd.f32 0.0, %v275
    %v277 = vpop.f32.mrb[0].mxu0
    %278 = vdwg.mxu0
    %v279 = vld [vmem:[%s5] sm:$0x1]
    %v281 = vlaneseq
    %v282 = vshrl.u32 %v281, 7
    %v283 = vsub.s32 0, %v282
    %v284 = vrot.slane %v279, %v283
    %v286 = vmul.f32 %v276, %v284
    %v287 = vld [vmem:[%s6] sm:$0x1]
    %v289 = vlaneseq
    %v290 = vshrl.u32 %v289, 7
    %v291 = vsub.s32 0, %v290
    %v292 = vrot.slane %v287, %v291
    %v294 = vadd.f32 %v286, %v292
    %vm295 = vcmp.gt.f32.partialorder %v294, 0.0
    %v296 = vmul.f32 %v294, 0.2
    %v297 = vsel %vm295, %v294, %v296
    %v298 = vld [vmem:[%s7] sm:$0xff]
    %v299 = vld [vmem:[%s7 + $0x8] sm:$0xff]
    %v300 = vld [vmem:[%s7 + $0x10] sm:$0xff]
    %v301 = vld [vmem:[%s7 + $0x18] sm:$0xff]
    %v302 = vld [vmem:[%s7 + $0x20] sm:$0xff]
    %v303 = vld [vmem:[%s7 + $0x28] sm:$0xff]
    %v304 = vld [vmem:[%s7 + $0x30] sm:$0xff]
    %v305 = vld [vmem:[%s7 + $0x38] sm:$0xff]
    %v306 = vld [vmem:[%s8] sm:$0x1]
    %v308 = vlaneseq
    %v309 = vshrl.u32 %v308, 7
    %v310 = vsub.s32 0, %v309
    %v311 = vrot.slane %v306, %v310
    %vm313 = vcmask 523264
    %v315 = vsel %vm313, %v297, 0
    %317 = vmatprep.subr.mxu0 0.0
    %318 = vmatpush1.msra.mxu0 %v298
    %319 = vmatprep.subr.mxu0 0.0
    %320 = vmatpush1.msra.mxu0 %v299
    %321 = vmatprep.subr.mxu0 0.0
    %322 = vmatpush1.msra.mxu0 %v300
    %323 = vmatprep.subr.mxu0 0.0
    %324 = vmatpush1.msra.mxu0 %v301
    %325 = vmatprep.subr.mxu0 0.0
    %326 = vmatpush1.msra.mxu0 %v302
    %327 = vmatprep.subr.mxu0 0.0
    %328 = vmatpush1.msra.mxu0 %v303
    %329 = vmatprep.subr.mxu0 0.0
    %330 = vmatpush1.msra.mxu0 %v304
    %331 = vmatprep.subr.mxu0 0.0
    %332 = vmatpush1.msra.mxu0 %v305
    %333 = vmatprep.subr.mxu0 0.0
    %334 = vmatpush1.msra.mxu0 0.0
    %335 = vmatprep.subr.mxu0 0.0
    %336 = vmatpush1.msra.mxu0 0.0
    %337 = vmatprep.subr.mxu0 0.0
    %338 = vmatpush1.msra.mxu0 0.0
    %339 = vmatprep.subr.mxu0 0.0
    %340 = vmatpush1.msra.mxu0 0.0
    %341 = vmatprep.subr.mxu0 0.0
    %342 = vmatpush1.msra.mxu0 0.0
    %343 = vmatprep.subr.mxu0 0.0
    %344 = vmatpush1.msra.mxu0 0.0
    %345 = vmatprep.subr.mxu0 0.0
    %346 = vmatpush1.msra.mxu0 0.0
    %347 = vmatprep.subr.mxu0 0.0
    %348 = vmatpush1.msra.mxu0 0.0
    %349 = vmatprep.subr.mxu0 0.0
    %350 = vmatpush1.msra.mxu0 0.0
    %351 = vmatprep.subr.mxu0 0.0
    %352 = vmatpush1.msra.mxu0 0.0
    %353 = vmatprep.subr.mxu0 0.0
    %354 = vmatpush1.msra.mxu0 0.0
    %355 = vmatprep.subr.mxu0 0.0
    %356 = vmatpush1.msra.mxu0 0.0
    %357 = vmatprep.subr.mxu0 0.0
    %358 = vmatpush1.msra.mxu0 0.0
    %359 = vmatprep.subr.mxu0 0.0
    %360 = vmatpush1.msra.mxu0 0.0
    %361 = vmatprep.subr.mxu0 0.0
    %362 = vmatpush1.msra.mxu0 0.0
    %363 = vmatprep.subr.mxu0 0.0
    %364 = vmatpush1.msra.mxu0 0.0
    %365 = vmatprep.subr.mxu0 0.0
    %366 = vmatpush1.msra.mxu0 0.0
    %367 = vmatprep.subr.mxu0 0.0
    %368 = vmatpush1.msra.mxu0 0.0
    %369 = vmatprep.subr.mxu0 0.0
    %370 = vmatpush1.msra.mxu0 0.0
    %371 = vmatprep.subr.mxu0 0.0
    %372 = vmatpush1.msra.mxu0 0.0
    %373 = vmatprep.subr.mxu0 0.0
    %374 = vmatpush1.msra.mxu0 0.0
    %375 = vmatprep.subr.mxu0 0.0
    %376 = vmatpush1.msra.mxu0 0.0
    %377 = vmatprep.subr.mxu0 0.0
    %378 = vmatpush1.msra.mxu0 0.0
    %379 = vmatprep.subr.mxu0 0.0
    %380 = vmatpush1.msra.mxu0 0.0
    %381 = vmatprep.mubr.f32.mxu0 0.0
    %382 = vmatmul.mubr.f32.gmra.mrb[0].mxu0 %v315
    %v383 = vpop.f32.mrb[0].mxu0
    %v384 = vadd.f32 %v311, %v383
    %v385 = vpop.f32.mrb[0].mxu0
    %386 = vdwg.mxu0
    %vm387 = vcmask 74752
    %388 = vst.msk [vmem:[#allocation2] sm:$0x3] %vm387, %v384
    %v389 = vld [vmem:[%s9] sm:$0xff]
    %v390 = vld [vmem:[%s9 + $0x8] sm:$0xff]
    %v391 = vld [vmem:[%s9 + $0x10] sm:$0xff]
    %v392 = vld [vmem:[%s9 + $0x18] sm:$0xff]
    %v393 = vld [vmem:[%s9 + $0x20] sm:$0xff]
    %v394 = vld [vmem:[%s9 + $0x28] sm:$0xff]
    %v395 = vld [vmem:[%s9 + $0x30] sm:$0xff]
    %v396 = vld [vmem:[%s9 + $0x38] sm:$0xff]
    %v397 = vld [vmem:[%s9 + $0x40] sm:$0xff]
    %v398 = vld [vmem:[%s9 + $0x48] sm:$0xff]
    %v399 = vld [vmem:[%s9 + $0x50] sm:$0xff]
    %v400 = vld [vmem:[%s9 + $0x58] sm:$0xff]
    %v401 = vld [vmem:[%s9 + $0x60] sm:$0xff]
    %v402 = vld [vmem:[%s9 + $0x68] sm:$0xff]
    %v403 = vld [vmem:[%s9 + $0x70] sm:$0xff]
    %v404 = vld [vmem:[%s9 + $0x78] sm:$0xff]
    %v405 = vld [vmem:[%s9 + $0x80] sm:$0xff]
    %v406 = vld [vmem:[%s9 + $0x88] sm:$0xff]
    %v407 = vld [vmem:[%s9 + $0x90] sm:$0xff]
    %v408 = vld [vmem:[%s9 + $0x98] sm:$0xff]
    %v409 = vld [vmem:[%s9 + $0xa0] sm:$0xff]
    %v410 = vld [vmem:[%s9 + $0xa8] sm:$0xff]
    %v411 = vld [vmem:[%s9 + $0xb0] sm:$0xff]
    %v412 = vld [vmem:[%s9 + $0xb8] sm:$0xff]
    %v413 = vld [vmem:[%s9 + $0xc0] sm:$0xff]
    %v414 = vld [vmem:[%s9 + $0xc8] sm:$0xff]
    %v415 = vld [vmem:[%s9 + $0xd0] sm:$0xff]
    %v416 = vld [vmem:[%s9 + $0xd8] sm:$0xff]
    %v417 = vld [vmem:[%s9 + $0xe0] sm:$0xff]
    %v418 = vld [vmem:[%s9 + $0xe8] sm:$0xff]
    %v419 = vld [vmem:[%s9 + $0xf0] sm:$0xff]
    %v420 = vld [vmem:[%s9 + $0xf8] sm:$0xff]
    %v421 = vld [vmem:[%s9 + $0x100] sm:$0xff]
    %v422 = vld [vmem:[%s9 + $0x108] sm:$0xff]
    %v423 = vld [vmem:[%s9 + $0x110] sm:$0xff]
    %v424 = vld [vmem:[%s9 + $0x118] sm:$0xff]
    %v425 = vld [vmem:[%s9 + $0x120] sm:$0xff]
    %v426 = vld [vmem:[%s9 + $0x128] sm:$0xff]
    %v427 = vld [vmem:[%s9 + $0x130] sm:$0xff]
    %v428 = vld [vmem:[%s9 + $0x138] sm:$0xff]
    %v429 = vld [vmem:[%s9 + $0x140] sm:$0xff]
    %v430 = vld [vmem:[%s9 + $0x148] sm:$0xff]
    %v431 = vld [vmem:[%s9 + $0x150] sm:$0xff]
    %v432 = vld [vmem:[%s9 + $0x158] sm:$0xff]
    %v433 = vld [vmem:[%s9 + $0x160] sm:$0xff]
    %v434 = vld [vmem:[%s9 + $0x168] sm:$0xff]
    %v435 = vld [vmem:[%s9 + $0x170] sm:$0xff]
    %v436 = vld [vmem:[%s9 + $0x178] sm:$0xff]
    %v437 = vld [vmem:[%s9 + $0x180] sm:$0xff]
    %v438 = vld [vmem:[%s9 + $0x188] sm:$0xff]
    %v439 = vld [vmem:[%s9 + $0x190] sm:$0xff]
    %v440 = vld [vmem:[%s9 + $0x198] sm:$0xff]
    %v441 = vld [vmem:[%s9 + $0x1a0] sm:$0xff]
    %v442 = vld [vmem:[%s9 + $0x1a8] sm:$0xff]
    %v443 = vld [vmem:[%s9 + $0x1b0] sm:$0xff]
    %v444 = vld [vmem:[%s9 + $0x1b8] sm:$0xff]
    %v445 = vld [vmem:[%s9 + $0x1c0] sm:$0xff]
    %v446 = vld [vmem:[%s9 + $0x1c8] sm:$0xff]
    %v447 = vld [vmem:[%s9 + $0x1d0] sm:$0xff]
    %v448 = vld [vmem:[%s9 + $0x1d8] sm:$0xff]
    %v449 = vld [vmem:[%s9 + $0x1e0] sm:$0xff]
    %v450 = vld [vmem:[%s9 + $0x1e8] sm:$0xff]
    %v451 = vld [vmem:[%s9 + $0x1f0] sm:$0xff]
    %v452 = vld [vmem:[%s9 + $0x1f8] sm:$0xff]
    %v453 = vld [vmem:[%s9 + $0x200] sm:$0xff]
    %v454 = vld [vmem:[%s9 + $0x208] sm:$0xff]
    %v455 = vld [vmem:[%s9 + $0x210] sm:$0xff]
    %v456 = vld [vmem:[%s9 + $0x218] sm:$0xff]
    %v457 = vld [vmem:[%s9 + $0x220] sm:$0xff]
    %v458 = vld [vmem:[%s9 + $0x228] sm:$0xff]
    %v459 = vld [vmem:[%s9 + $0x230] sm:$0xff]
    %v460 = vld [vmem:[%s9 + $0x238] sm:$0xff]
    %v461 = vld [vmem:[%s9 + $0x240] sm:$0xff]
    %v462 = vld [vmem:[%s9 + $0x248] sm:$0xff]
    %v463 = vld [vmem:[%s9 + $0x250] sm:$0xff]
    %v464 = vld [vmem:[%s9 + $0x258] sm:$0xff]
    %v465 = vld [vmem:[%s9 + $0x260] sm:$0xff]
    %v466 = vld [vmem:[%s9 + $0x268] sm:$0xff]
    %v467 = vld [vmem:[%s9 + $0x270] sm:$0xff]
    %v468 = vld [vmem:[%s9 + $0x278] sm:$0xff]
    %v469 = vld [vmem:[%s9 + $0x280] sm:$0xff]
    %v470 = vld [vmem:[%s9 + $0x288] sm:$0xff]
    %v471 = vld [vmem:[%s9 + $0x290] sm:$0xff]
    %v472 = vld [vmem:[%s9 + $0x298] sm:$0xff]
    %v473 = vld [vmem:[%s9 + $0x2a0] sm:$0xff]
    %v474 = vld [vmem:[%s9 + $0x2a8] sm:$0xff]
    %v475 = vld [vmem:[%s9 + $0x2b0] sm:$0xff]
    %v476 = vld [vmem:[%s9 + $0x2b8] sm:$0xff]
    %v477 = vld [vmem:[%s9 + $0x2c0] sm:$0xff]
    %v478 = vld [vmem:[%s9 + $0x2c8] sm:$0xff]
    %v479 = vld [vmem:[%s9 + $0x2d0] sm:$0xff]
    %v480 = vld [vmem:[%s9 + $0x2d8] sm:$0xff]
    %v481 = vld [vmem:[%s9 + $0x2e0] sm:$0xff]
    %v482 = vld [vmem:[%s9 + $0x2e8] sm:$0xff]
    %v483 = vld [vmem:[%s9 + $0x2f0] sm:$0xff]
    %v484 = vld [vmem:[%s9 + $0x2f8] sm:$0xff]
    %v485 = vld [vmem:[%s9 + $0x300] sm:$0xff]
    %v486 = vld [vmem:[%s9 + $0x308] sm:$0xff]
    %v487 = vld [vmem:[%s9 + $0x310] sm:$0xff]
    %v488 = vld [vmem:[%s9 + $0x318] sm:$0xff]
    %v489 = vld [vmem:[%s9 + $0x320] sm:$0xff]
    %v490 = vld [vmem:[%s9 + $0x328] sm:$0xff]
    %v491 = vld [vmem:[%s9 + $0x330] sm:$0xff]
    %v492 = vld [vmem:[%s9 + $0x338] sm:$0xff]
    %v493 = vld [vmem:[%s9 + $0x340] sm:$0xff]
    %v494 = vld [vmem:[%s9 + $0x348] sm:$0xff]
    %v495 = vld [vmem:[%s9 + $0x350] sm:$0xff]
    %v496 = vld [vmem:[%s9 + $0x358] sm:$0xff]
    %v497 = vld [vmem:[%s9 + $0x360] sm:$0xff]
    %v498 = vld [vmem:[%s9 + $0x368] sm:$0xff]
    %v499 = vld [vmem:[%s9 + $0x370] sm:$0xff]
    %v500 = vld [vmem:[%s9 + $0x378] sm:$0xff]
    %v501 = vld [vmem:[%s9 + $0x380] sm:$0xff]
    %v502 = vld [vmem:[%s9 + $0x388] sm:$0xff]
    %v503 = vld [vmem:[%s9 + $0x390] sm:$0xff]
    %v504 = vld [vmem:[%s9 + $0x398] sm:$0xff]
    %v505 = vld [vmem:[%s9 + $0x3a0] sm:$0xff]
    %v506 = vld [vmem:[%s9 + $0x3a8] sm:$0xff]
    %v507 = vld [vmem:[%s9 + $0x3b0] sm:$0xff]
    %v508 = vld [vmem:[%s9 + $0x3b8] sm:$0xff]
    %v509 = vld [vmem:[%s9 + $0x3c0] sm:$0xff]
    %v510 = vld [vmem:[%s9 + $0x3c8] sm:$0xff]
    %v511 = vld [vmem:[%s9 + $0x3d0] sm:$0xff]
    %v512 = vld [vmem:[%s9 + $0x3d8] sm:$0xff]
    %v513 = vld [vmem:[%s9 + $0x3e0] sm:$0xff]
    %v514 = vld [vmem:[%s9 + $0x3e8] sm:$0xff]
    %v515 = vld [vmem:[%s9 + $0x3f0] sm:$0xff]
    %v516 = vld [vmem:[%s9 + $0x3f8] sm:$0xff]
    %517 = vmatprep.subr.mxu0 %v390
    %518 = vmatpush1.msra.mxu0 %v389
    %519 = vmatprep.subr.mxu0 %v394
    %520 = vmatpush1.msra.mxu0 %v393
    %521 = vmatprep.subr.mxu0 %v398
    %522 = vmatpush1.msra.mxu0 %v397
    %523 = vmatprep.subr.mxu0 %v402
    %524 = vmatpush1.msra.mxu0 %v401
    %525 = vmatprep.subr.mxu0 %v406
    %526 = vmatpush1.msra.mxu0 %v405
    %527 = vmatprep.subr.mxu0 %v410
    %528 = vmatpush1.msra.mxu0 %v409
    %529 = vmatprep.subr.mxu0 %v414
    %530 = vmatpush1.msra.mxu0 %v413
    %531 = vmatprep.subr.mxu0 %v418
    %532 = vmatpush1.msra.mxu0 %v417
    %533 = vmatprep.subr.mxu0 %v422
    %534 = vmatpush1.msra.mxu0 %v421
    %535 = vmatprep.subr.mxu0 %v426
    %536 = vmatpush1.msra.mxu0 %v425
    %537 = vmatprep.subr.mxu0 %v430
    %538 = vmatpush1.msra.mxu0 %v429
    %539 = vmatprep.subr.mxu0 %v434
    %540 = vmatpush1.msra.mxu0 %v433
    %541 = vmatprep.subr.mxu0 %v438
    %542 = vmatpush1.msra.mxu0 %v437
    %543 = vmatprep.subr.mxu0 %v442
    %544 = vmatpush1.msra.mxu0 %v441
    %545 = vmatprep.subr.mxu0 %v446
    %546 = vmatpush1.msra.mxu0 %v445
    %547 = vmatprep.subr.mxu0 %v450
    %548 = vmatpush1.msra.mxu0 %v449
    %549 = vmatprep.subr.mxu0 %v454
    %550 = vmatpush1.msra.mxu0 %v453
    %551 = vmatprep.subr.mxu0 %v458
    %552 = vmatpush1.msra.mxu0 %v457
    %553 = vmatprep.subr.mxu0 %v462
    %554 = vmatpush1.msra.mxu0 %v461
    %555 = vmatprep.subr.mxu0 %v466
    %556 = vmatpush1.msra.mxu0 %v465
    %557 = vmatprep.subr.mxu0 %v470
    %558 = vmatpush1.msra.mxu0 %v469
    %559 = vmatprep.subr.mxu0 %v474
    %560 = vmatpush1.msra.mxu0 %v473
    %561 = vmatprep.subr.mxu0 %v478
    %562 = vmatpush1.msra.mxu0 %v477
    %563 = vmatprep.subr.mxu0 %v482
    %564 = vmatpush1.msra.mxu0 %v481
    %565 = vmatprep.subr.mxu0 %v486
    %566 = vmatpush1.msra.mxu0 %v485
    %567 = vmatprep.subr.mxu0 %v490
    %568 = vmatpush1.msra.mxu0 %v489
    %569 = vmatprep.subr.mxu0 %v494
    %570 = vmatpush1.msra.mxu0 %v493
    %571 = vmatprep.subr.mxu0 %v498
    %572 = vmatpush1.msra.mxu0 %v497
    %573 = vmatprep.subr.mxu0 %v502
    %574 = vmatpush1.msra.mxu0 %v501
    %575 = vmatprep.subr.mxu0 %v506
    %576 = vmatpush1.msra.mxu0 %v505
    %577 = vmatprep.subr.mxu0 %v510
    %578 = vmatpush1.msra.mxu0 %v509
    %579 = vmatprep.subr.mxu0 %v514
    %580 = vmatpush1.msra.mxu0 %v513
    %581 = vmatprep.mubr.f32.mxu0 %v101
    %582 = vmatmul.mubr.f32.gmra.mrb[0].mxu0 %v100
    %v583 = vpop.f32.mrb[0].mxu0
    %v584 = vadd.f32 0.0, %v583
    %v585 = vpop.f32.mrb[0].mxu0
    %v586 = vadd.f32 0.0, %v585
    %587 = vdwg.mxu0
    %588 = vmatprep.subr.mxu0 %v392
    %589 = vmatpush1.msra.mxu0 %v391
    %590 = vmatprep.subr.mxu0 %v396
    %591 = vmatpush1.msra.mxu0 %v395
    %592 = vmatprep.subr.mxu0 %v400
    %593 = vmatpush1.msra.mxu0 %v399
    %594 = vmatprep.subr.mxu0 %v404
    %595 = vmatpush1.msra.mxu0 %v403
    %596 = vmatprep.subr.mxu0 %v408
    %597 = vmatpush1.msra.mxu0 %v407
    %598 = vmatprep.subr.mxu0 %v412
    %599 = vmatpush1.msra.mxu0 %v411
    %600 = vmatprep.subr.mxu0 %v416
    %601 = vmatpush1.msra.mxu0 %v415
    %602 = vmatprep.subr.mxu0 %v420
    %603 = vmatpush1.msra.mxu0 %v419
    %604 = vmatprep.subr.mxu0 %v424
    %605 = vmatpush1.msra.mxu0 %v423
    %606 = vmatprep.subr.mxu0 %v428
    %607 = vmatpush1.msra.mxu0 %v427
    %608 = vmatprep.subr.mxu0 %v432
    %609 = vmatpush1.msra.mxu0 %v431
    %610 = vmatprep.subr.mxu0 %v436
    %611 = vmatpush1.msra.mxu0 %v435
    %612 = vmatprep.subr.mxu0 %v440
    %613 = vmatpush1.msra.mxu0 %v439
    %614 = vmatprep.subr.mxu0 %v444
    %615 = vmatpush1.msra.mxu0 %v443
    %616 = vmatprep.subr.mxu0 %v448
    %617 = vmatpush1.msra.mxu0 %v447
    %618 = vmatprep.subr.mxu0 %v452
    %619 = vmatpush1.msra.mxu0 %v451
    %620 = vmatprep.subr.mxu0 %v456
    %621 = vmatpush1.msra.mxu0 %v455
    %622 = vmatprep.subr.mxu0 %v460
    %623 = vmatpush1.msra.mxu0 %v459
    %624 = vmatprep.subr.mxu0 %v464
    %625 = vmatpush1.msra.mxu0 %v463
    %626 = vmatprep.subr.mxu0 %v468
    %627 = vmatpush1.msra.mxu0 %v467
    %628 = vmatprep.subr.mxu0 %v472
    %629 = vmatpush1.msra.mxu0 %v471
    %630 = vmatprep.subr.mxu0 %v476
    %631 = vmatpush1.msra.mxu0 %v475
    %632 = vmatprep.subr.mxu0 %v480
    %633 = vmatpush1.msra.mxu0 %v479
    %634 = vmatprep.subr.mxu0 %v484
    %635 = vmatpush1.msra.mxu0 %v483
    %636 = vmatprep.subr.mxu0 %v488
    %637 = vmatpush1.msra.mxu0 %v487
    %638 = vmatprep.subr.mxu0 %v492
    %639 = vmatpush1.msra.mxu0 %v491
    %640 = vmatprep.subr.mxu0 %v496
    %641 = vmatpush1.msra.mxu0 %v495
    %642 = vmatprep.subr.mxu0 %v500
    %643 = vmatpush1.msra.mxu0 %v499
    %644 = vmatprep.subr.mxu0 %v504
    %645 = vmatpush1.msra.mxu0 %v503
    %646 = vmatprep.subr.mxu0 %v508
    %647 = vmatpush1.msra.mxu0 %v507
    %648 = vmatprep.subr.mxu0 %v512
    %649 = vmatpush1.msra.mxu0 %v511
    %650 = vmatprep.subr.mxu0 %v516
    %651 = vmatpush1.msra.mxu0 %v515
    %652 = vmatprep.mubr.f32.mxu0 %v101
    %653 = vmatmul.mubr.f32.gmra.mrb[0].mxu0 %v100
    %v654 = vpop.f32.mrb[0].mxu0
    %v655 = vadd.f32 0.0, %v654
    %v656 = vpop.f32.mrb[0].mxu0
    %v657 = vadd.f32 0.0, %v656
    %658 = vdwg.mxu0
    %v659 = vld [vmem:[%s10] sm:$0xf]
    %v661 = vlaneseq
    %v662 = vshrl.u32 %v661, 7
    %v663 = vsub.s32 0, %v662
    %v664 = vrot.slane %v659, %v663
    %v665 = vlaneseq
    %v666 = vshrl.u32 %v665, 7
    %v667 = vsub.s32 1, %v666
    %v668 = vrot.slane %v659, %v667
    %v669 = vlaneseq
    %v670 = vshrl.u32 %v669, 7
    %v671 = vsub.s32 2, %v670
    %v672 = vrot.slane %v659, %v671
    %v673 = vlaneseq
    %v674 = vshrl.u32 %v673, 7
    %v675 = vsub.s32 3, %v674
    %v676 = vrot.slane %v659, %v675
    %v681 = vmul.f32 %v584, %v664
    %v682 = vmul.f32 %v586, %v668
    %v683 = vmul.f32 %v655, %v672
    %v684 = vmul.f32 %v657, %v676
    %v685 = vld [vmem:[%s11] sm:$0xf]
    %v687 = vlaneseq
    %v688 = vshrl.u32 %v687, 7
    %v689 = vsub.s32 0, %v688
    %v690 = vrot.slane %v685, %v689
    %v691 = vlaneseq
    %v692 = vshrl.u32 %v691, 7
    %v693 = vsub.s32 1, %v692
    %v694 = vrot.slane %v685, %v693
    %v695 = vlaneseq
    %v696 = vshrl.u32 %v695, 7
    %v697 = vsub.s32 2, %v696
    %v698 = vrot.slane %v685, %v697
    %v699 = vlaneseq
    %v700 = vshrl.u32 %v699, 7
    %v701 = vsub.s32 3, %v700
    %v702 = vrot.slane %v685, %v701
    %v707 = vadd.f32 %v681, %v690
    %v708 = vadd.f32 %v682, %v694
    %v709 = vadd.f32 %v683, %v698
    %v710 = vadd.f32 %v684, %v702
    %vm711 = vcmp.gt.f32.partialorder %v707, 0.0
    %vm712 = vcmp.gt.f32.partialorder %v708, 0.0
    %vm713 = vcmp.gt.f32.partialorder %v709, 0.0
    %vm714 = vcmp.gt.f32.partialorder %v710, 0.0
    %v715 = vmul.f32 %v707, 0.2
    %v716 = vmul.f32 %v708, 0.2
    %v717 = vmul.f32 %v709, 0.2
    %v718 = vmul.f32 %v710, 0.2
    %v719 = vsel %vm711, %v707, %v715
    %v720 = vsel %vm712, %v708, %v716
    %v721 = vsel %vm713, %v709, %v717
    %v722 = vsel %vm714, %v710, %v718
    %v723 = vld [vmem:[%s12] sm:$0xff]
    %v724 = vld [vmem:[%s12 + $0x8] sm:$0xff]
    %v725 = vld [vmem:[%s12 + $0x10] sm:$0xff]
    %v726 = vld [vmem:[%s12 + $0x18] sm:$0xff]
    %v727 = vld [vmem:[%s12 + $0x20] sm:$0xff]
    %v728 = vld [vmem:[%s12 + $0x28] sm:$0xff]
    %v729 = vld [vmem:[%s12 + $0x30] sm:$0xff]
    %v730 = vld [vmem:[%s12 + $0x38] sm:$0xff]
    %v731 = vld [vmem:[%s12 + $0x40] sm:$0xff]
    %v732 = vld [vmem:[%s12 + $0x48] sm:$0xff]
    %v733 = vld [vmem:[%s12 + $0x50] sm:$0xff]
    %v734 = vld [vmem:[%s12 + $0x58] sm:$0xff]
    %v735 = vld [vmem:[%s12 + $0x60] sm:$0xff]
    %v736 = vld [vmem:[%s12 + $0x68] sm:$0xff]
    %v737 = vld [vmem:[%s12 + $0x70] sm:$0xff]
    %v738 = vld [vmem:[%s12 + $0x78] sm:$0xff]
    %v739 = vld [vmem:[%s12 + $0x80] sm:$0xff]
    %v740 = vld [vmem:[%s12 + $0x88] sm:$0xff]
    %v741 = vld [vmem:[%s12 + $0x90] sm:$0xff]
    %v742 = vld [vmem:[%s12 + $0x98] sm:$0xff]
    %v743 = vld [vmem:[%s12 + $0xa0] sm:$0xff]
    %v744 = vld [vmem:[%s12 + $0xa8] sm:$0xff]
    %v745 = vld [vmem:[%s12 + $0xb0] sm:$0xff]
    %v746 = vld [vmem:[%s12 + $0xb8] sm:$0xff]
    %v747 = vld [vmem:[%s12 + $0xc0] sm:$0xff]
    %v748 = vld [vmem:[%s12 + $0xc8] sm:$0xff]
    %v749 = vld [vmem:[%s12 + $0xd0] sm:$0xff]
    %v750 = vld [vmem:[%s12 + $0xd8] sm:$0xff]
    %v751 = vld [vmem:[%s12 + $0xe0] sm:$0xff]
    %v752 = vld [vmem:[%s12 + $0xe8] sm:$0xff]
    %v753 = vld [vmem:[%s12 + $0xf0] sm:$0xff]
    %v754 = vld [vmem:[%s12 + $0xf8] sm:$0xff]
    %v755 = vld [vmem:[%s12 + $0x100] sm:$0xff]
    %v756 = vld [vmem:[%s12 + $0x108] sm:$0xff]
    %v757 = vld [vmem:[%s12 + $0x110] sm:$0xff]
    %v758 = vld [vmem:[%s12 + $0x118] sm:$0xff]
    %v759 = vld [vmem:[%s12 + $0x120] sm:$0xff]
    %v760 = vld [vmem:[%s12 + $0x128] sm:$0xff]
    %v761 = vld [vmem:[%s12 + $0x130] sm:$0xff]
    %v762 = vld [vmem:[%s12 + $0x138] sm:$0xff]
    %v763 = vld [vmem:[%s12 + $0x140] sm:$0xff]
    %v764 = vld [vmem:[%s12 + $0x148] sm:$0xff]
    %v765 = vld [vmem:[%s12 + $0x150] sm:$0xff]
    %v766 = vld [vmem:[%s12 + $0x158] sm:$0xff]
    %v767 = vld [vmem:[%s12 + $0x160] sm:$0xff]
    %v768 = vld [vmem:[%s12 + $0x168] sm:$0xff]
    %v769 = vld [vmem:[%s12 + $0x170] sm:$0xff]
    %v770 = vld [vmem:[%s12 + $0x178] sm:$0xff]
    %v771 = vld [vmem:[%s12 + $0x180] sm:$0xff]
    %v772 = vld [vmem:[%s12 + $0x188] sm:$0xff]
    %v773 = vld [vmem:[%s12 + $0x190] sm:$0xff]
    %v774 = vld [vmem:[%s12 + $0x198] sm:$0xff]
    %v775 = vld [vmem:[%s12 + $0x1a0] sm:$0xff]
    %v776 = vld [vmem:[%s12 + $0x1a8] sm:$0xff]
    %v777 = vld [vmem:[%s12 + $0x1b0] sm:$0xff]
    %v778 = vld [vmem:[%s12 + $0x1b8] sm:$0xff]
    %v779 = vld [vmem:[%s12 + $0x1c0] sm:$0xff]
    %v780 = vld [vmem:[%s12 + $0x1c8] sm:$0xff]
    %v781 = vld [vmem:[%s12 + $0x1d0] sm:$0xff]
    %v782 = vld [vmem:[%s12 + $0x1d8] sm:$0xff]
    %v783 = vld [vmem:[%s12 + $0x1e0] sm:$0xff]
    %v784 = vld [vmem:[%s12 + $0x1e8] sm:$0xff]
    %v785 = vld [vmem:[%s12 + $0x1f0] sm:$0xff]
    %v786 = vld [vmem:[%s12 + $0x1f8] sm:$0xff]
    %v787 = vld [vmem:[%s12 + $0x200] sm:$0xff]
    %v788 = vld [vmem:[%s12 + $0x208] sm:$0xff]
    %v789 = vld [vmem:[%s12 + $0x210] sm:$0xff]
    %v790 = vld [vmem:[%s12 + $0x218] sm:$0xff]
    %v791 = vld [vmem:[%s12 + $0x220] sm:$0xff]
    %v792 = vld [vmem:[%s12 + $0x228] sm:$0xff]
    %v793 = vld [vmem:[%s12 + $0x230] sm:$0xff]
    %v794 = vld [vmem:[%s12 + $0x238] sm:$0xff]
    %v795 = vld [vmem:[%s12 + $0x240] sm:$0xff]
    %v796 = vld [vmem:[%s12 + $0x248] sm:$0xff]
    %v797 = vld [vmem:[%s12 + $0x250] sm:$0xff]
    %v798 = vld [vmem:[%s12 + $0x258] sm:$0xff]
    %v799 = vld [vmem:[%s12 + $0x260] sm:$0xff]
    %v800 = vld [vmem:[%s12 + $0x268] sm:$0xff]
    %v801 = vld [vmem:[%s12 + $0x270] sm:$0xff]
    %v802 = vld [vmem:[%s12 + $0x278] sm:$0xff]
    %v803 = vld [vmem:[%s12 + $0x280] sm:$0xff]
    %v804 = vld [vmem:[%s12 + $0x288] sm:$0xff]
    %v805 = vld [vmem:[%s12 + $0x290] sm:$0xff]
    %v806 = vld [vmem:[%s12 + $0x298] sm:$0xff]
    %v807 = vld [vmem:[%s12 + $0x2a0] sm:$0xff]
    %v808 = vld [vmem:[%s12 + $0x2a8] sm:$0xff]
    %v809 = vld [vmem:[%s12 + $0x2b0] sm:$0xff]
    %v810 = vld [vmem:[%s12 + $0x2b8] sm:$0xff]
    %v811 = vld [vmem:[%s12 + $0x2c0] sm:$0xff]
    %v812 = vld [vmem:[%s12 + $0x2c8] sm:$0xff]
    %v813 = vld [vmem:[%s12 + $0x2d0] sm:$0xff]
    %v814 = vld [vmem:[%s12 + $0x2d8] sm:$0xff]
    %v815 = vld [vmem:[%s12 + $0x2e0] sm:$0xff]
    %v816 = vld [vmem:[%s12 + $0x2e8] sm:$0xff]
    %v817 = vld [vmem:[%s12 + $0x2f0] sm:$0xff]
    %v818 = vld [vmem:[%s12 + $0x2f8] sm:$0xff]
    %v819 = vld [vmem:[%s12 + $0x300] sm:$0xff]
    %v820 = vld [vmem:[%s12 + $0x308] sm:$0xff]
    %v821 = vld [vmem:[%s12 + $0x310] sm:$0xff]
    %v822 = vld [vmem:[%s12 + $0x318] sm:$0xff]
    %v823 = vld [vmem:[%s12 + $0x320] sm:$0xff]
    %v824 = vld [vmem:[%s12 + $0x328] sm:$0xff]
    %v825 = vld [vmem:[%s12 + $0x330] sm:$0xff]
    %v826 = vld [vmem:[%s12 + $0x338] sm:$0xff]
    %v827 = vld [vmem:[%s12 + $0x340] sm:$0xff]
    %v828 = vld [vmem:[%s12 + $0x348] sm:$0xff]
    %v829 = vld [vmem:[%s12 + $0x350] sm:$0xff]
    %v830 = vld [vmem:[%s12 + $0x358] sm:$0xff]
    %v831 = vld [vmem:[%s12 + $0x360] sm:$0xff]
    %v832 = vld [vmem:[%s12 + $0x368] sm:$0xff]
    %v833 = vld [vmem:[%s12 + $0x370] sm:$0xff]
    %v834 = vld [vmem:[%s12 + $0x378] sm:$0xff]
    %v835 = vld [vmem:[%s12 + $0x380] sm:$0xff]
    %v836 = vld [vmem:[%s12 + $0x388] sm:$0xff]
    %v837 = vld [vmem:[%s12 + $0x390] sm:$0xff]
    %v838 = vld [vmem:[%s12 + $0x398] sm:$0xff]
    %v839 = vld [vmem:[%s12 + $0x3a0] sm:$0xff]
    %v840 = vld [vmem:[%s12 + $0x3a8] sm:$0xff]
    %v841 = vld [vmem:[%s12 + $0x3b0] sm:$0xff]
    %v842 = vld [vmem:[%s12 + $0x3b8] sm:$0xff]
    %v843 = vld [vmem:[%s12 + $0x3c0] sm:$0xff]
    %v844 = vld [vmem:[%s12 + $0x3c8] sm:$0xff]
    %v845 = vld [vmem:[%s12 + $0x3d0] sm:$0xff]
    %v846 = vld [vmem:[%s12 + $0x3d8] sm:$0xff]
    %v847 = vld [vmem:[%s12 + $0x3e0] sm:$0xff]
    %v848 = vld [vmem:[%s12 + $0x3e8] sm:$0xff]
    %v849 = vld [vmem:[%s12 + $0x3f0] sm:$0xff]
    %v850 = vld [vmem:[%s12 + $0x3f8] sm:$0xff]
    %851 = vmatprep.subr.mxu0 %v724
    %852 = vmatpush1.msra.mxu0 %v723
    %853 = vmatprep.subr.mxu0 %v726
    %854 = vmatpush1.msra.mxu0 %v725
    %855 = vmatprep.subr.mxu0 %v728
    %856 = vmatpush1.msra.mxu0 %v727
    %857 = vmatprep.subr.mxu0 %v730
    %858 = vmatpush1.msra.mxu0 %v729
    %859 = vmatprep.subr.mxu0 %v732
    %860 = vmatpush1.msra.mxu0 %v731
    %861 = vmatprep.subr.mxu0 %v734
    %862 = vmatpush1.msra.mxu0 %v733
    %863 = vmatprep.subr.mxu0 %v736
    %864 = vmatpush1.msra.mxu0 %v735
    %865 = vmatprep.subr.mxu0 %v738
    %866 = vmatpush1.msra.mxu0 %v737
    %867 = vmatprep.subr.mxu0 %v740
    %868 = vmatpush1.msra.mxu0 %v739
    %869 = vmatprep.subr.mxu0 %v742
    %870 = vmatpush1.msra.mxu0 %v741
    %871 = vmatprep.subr.mxu0 %v744
    %872 = vmatpush1.msra.mxu0 %v743
    %873 = vmatprep.subr.mxu0 %v746
    %874 = vmatpush1.msra.mxu0 %v745
    %875 = vmatprep.subr.mxu0 %v748
    %876 = vmatpush1.msra.mxu0 %v747
    %877 = vmatprep.subr.mxu0 %v750
    %878 = vmatpush1.msra.mxu0 %v749
    %879 = vmatprep.subr.mxu0 %v752
    %880 = vmatpush1.msra.mxu0 %v751
    %881 = vmatprep.subr.mxu0 %v754
    %882 = vmatpush1.msra.mxu0 %v753
    %883 = vmatprep.subr.mxu0 %v756
    %884 = vmatpush1.msra.mxu0 %v755
    %885 = vmatprep.subr.mxu0 %v758
    %886 = vmatpush1.msra.mxu0 %v757
    %887 = vmatprep.subr.mxu0 %v760
    %888 = vmatpush1.msra.mxu0 %v759
    %889 = vmatprep.subr.mxu0 %v762
    %890 = vmatpush1.msra.mxu0 %v761
    %891 = vmatprep.subr.mxu0 %v764
    %892 = vmatpush1.msra.mxu0 %v763
    %893 = vmatprep.subr.mxu0 %v766
    %894 = vmatpush1.msra.mxu0 %v765
    %895 = vmatprep.subr.mxu0 %v768
    %896 = vmatpush1.msra.mxu0 %v767
    %897 = vmatprep.subr.mxu0 %v770
    %898 = vmatpush1.msra.mxu0 %v769
    %899 = vmatprep.subr.mxu0 %v772
    %900 = vmatpush1.msra.mxu0 %v771
    %901 = vmatprep.subr.mxu0 %v774
    %902 = vmatpush1.msra.mxu0 %v773
    %903 = vmatprep.subr.mxu0 %v776
    %904 = vmatpush1.msra.mxu0 %v775
    %905 = vmatprep.subr.mxu0 %v778
    %906 = vmatpush1.msra.mxu0 %v777
    %907 = vmatprep.subr.mxu0 %v780
    %908 = vmatpush1.msra.mxu0 %v779
    %909 = vmatprep.subr.mxu0 %v782
    %910 = vmatpush1.msra.mxu0 %v781
    %911 = vmatprep.subr.mxu0 %v784
    %912 = vmatpush1.msra.mxu0 %v783
    %913 = vmatprep.subr.mxu0 %v786
    %914 = vmatpush1.msra.mxu0 %v785
    %915 = vmatprep.mubr.f32.mxu0 %v720
    %916 = vmatmul.mubr.f32.gmra.mrb[0].mxu0 %v719
    %v917 = vpop.f32.mrb[0].mxu0
    %v918 = vadd.f32 0.0, %v917
    %v919 = vpop.f32.mrb[0].mxu0
    %v920 = vadd.f32 0.0, %v919
    %921 = vdwg.mxu0
    %922 = vmatprep.subr.mxu0 %v788
    %923 = vmatpush1.msra.mxu0 %v787
    %924 = vmatprep.subr.mxu0 %v790
    %925 = vmatpush1.msra.mxu0 %v789
    %926 = vmatprep.subr.mxu0 %v792
    %927 = vmatpush1.msra.mxu0 %v791
    %928 = vmatprep.subr.mxu0 %v794
    %929 = vmatpush1.msra.mxu0 %v793
    %930 = vmatprep.subr.mxu0 %v796
    %931 = vmatpush1.msra.mxu0 %v795
    %932 = vmatprep.subr.mxu0 %v798
    %933 = vmatpush1.msra.mxu0 %v797
    %934 = vmatprep.subr.mxu0 %v800
    %935 = vmatpush1.msra.mxu0 %v799
    %936 = vmatprep.subr.mxu0 %v802
    %937 = vmatpush1.msra.mxu0 %v801
    %938 = vmatprep.subr.mxu0 %v804
    %939 = vmatpush1.msra.mxu0 %v803
    %940 = vmatprep.subr.mxu0 %v806
    %941 = vmatpush1.msra.mxu0 %v805
    %942 = vmatprep.subr.mxu0 %v808
    %943 = vmatpush1.msra.mxu0 %v807
    %944 = vmatprep.subr.mxu0 %v810
    %945 = vmatpush1.msra.mxu0 %v809
    %946 = vmatprep.subr.mxu0 %v812
    %947 = vmatpush1.msra.mxu0 %v811
    %948 = vmatprep.subr.mxu0 %v814
    %949 = vmatpush1.msra.mxu0 %v813
    %950 = vmatprep.subr.mxu0 %v816
    %951 = vmatpush1.msra.mxu0 %v815
    %952 = vmatprep.subr.mxu0 %v818
    %953 = vmatpush1.msra.mxu0 %v817
    %954 = vmatprep.subr.mxu0 %v820
    %955 = vmatpush1.msra.mxu0 %v819
    %956 = vmatprep.subr.mxu0 %v822
    %957 = vmatpush1.msra.mxu0 %v821
    %958 = vmatprep.subr.mxu0 %v824
    %959 = vmatpush1.msra.mxu0 %v823
    %960 = vmatprep.subr.mxu0 %v826
    %961 = vmatpush1.msra.mxu0 %v825
    %962 = vmatprep.subr.mxu0 %v828
    %963 = vmatpush1.msra.mxu0 %v827
    %964 = vmatprep.subr.mxu0 %v830
    %965 = vmatpush1.msra.mxu0 %v829
    %966 = vmatprep.subr.mxu0 %v832
    %967 = vmatpush1.msra.mxu0 %v831
    %968 = vmatprep.subr.mxu0 %v834
    %969 = vmatpush1.msra.mxu0 %v833
    %970 = vmatprep.subr.mxu0 %v836
    %971 = vmatpush1.msra.mxu0 %v835
    %972 = vmatprep.subr.mxu0 %v838
    %973 = vmatpush1.msra.mxu0 %v837
    %974 = vmatprep.subr.mxu0 %v840
    %975 = vmatpush1.msra.mxu0 %v839
    %976 = vmatprep.subr.mxu0 %v842
    %977 = vmatpush1.msra.mxu0 %v841
    %978 = vmatprep.subr.mxu0 %v844
    %979 = vmatpush1.msra.mxu0 %v843
    %980 = vmatprep.subr.mxu0 %v846
    %981 = vmatpush1.msra.mxu0 %v845
    %982 = vmatprep.subr.mxu0 %v848
    %983 = vmatpush1.msra.mxu0 %v847
    %984 = vmatprep.subr.mxu0 %v850
    %985 = vmatpush1.msra.mxu0 %v849
    %986 = vmatprep.mubr.f32.mxu0 %v722
    %987 = vmatmul.mubr.f32.gmra.mrb[0].mxu0 %v721
    %v988 = vpop.f32.mrb[0].mxu0
    %v989 = vadd.f32 %v918, %v988
    %v990 = vpop.f32.mrb[0].mxu0
    %v991 = vadd.f32 %v920, %v990
    %992 = vdwg.mxu0
    %v993 = vld [vmem:[%s13] sm:$0x3]
    %v995 = vlaneseq
    %v996 = vshrl.u32 %v995, 7
    %v997 = vsub.s32 0, %v996
    %v998 = vrot.slane %v993, %v997
    %v999 = vlaneseq
    %v1000 = vshrl.u32 %v999, 7
    %v1001 = vsub.s32 1, %v1000
    %v1002 = vrot.slane %v993, %v1001
    %v1005 = vmul.f32 %v989, %v998
    %v1006 = vmul.f32 %v991, %v1002
    %v1007 = vld [vmem:[%s14] sm:$0x3]
    %v1009 = vlaneseq
    %v1010 = vshrl.u32 %v1009, 7
    %v1011 = vsub.s32 0, %v1010
    %v1012 = vrot.slane %v1007, %v1011
    %v1013 = vlaneseq
    %v1014 = vshrl.u32 %v1013, 7
    %v1015 = vsub.s32 1, %v1014
    %v1016 = vrot.slane %v1007, %v1015
    %v1019 = vadd.f32 %v1005, %v1012
    %v1020 = vadd.f32 %v1006, %v1016
    %vm1021 = vcmp.gt.f32.partialorder %v1019, 0.0
    %vm1022 = vcmp.gt.f32.partialorder %v1020, 0.0
    %v1023 = vmul.f32 %v1019, 0.2
    %v1024 = vmul.f32 %v1020, 0.2
    %v1025 = vsel %vm1021, %v1019, %v1023
    %v1026 = vsel %vm1022, %v1020, %v1024
    %v1027 = vld [vmem:[%s15] sm:$0xff]
    %v1028 = vld [vmem:[%s15 + $0x8] sm:$0xff]
    %v1029 = vld [vmem:[%s15 + $0x10] sm:$0xff]
    %v1030 = vld [vmem:[%s15 + $0x18] sm:$0xff]
    %v1031 = vld [vmem:[%s15 + $0x20] sm:$0xff]
    %v1032 = vld [vmem:[%s15 + $0x28] sm:$0xff]
    %v1033 = vld [vmem:[%s15 + $0x30] sm:$0xff]
    %v1034 = vld [vmem:[%s15 + $0x38] sm:$0xff]
    %v1035 = vld [vmem:[%s15 + $0x40] sm:$0xff]
    %v1036 = vld [vmem:[%s15 + $0x48] sm:$0xff]
    %v1037 = vld [vmem:[%s15 + $0x50] sm:$0xff]
    %v1038 = vld [vmem:[%s15 + $0x58] sm:$0xff]
    %v1039 = vld [vmem:[%s15 + $0x60] sm:$0xff]
    %v1040 = vld [vmem:[%s15 + $0x68] sm:$0xff]
    %v1041 = vld [vmem:[%s15 + $0x70] sm:$0xff]
    %v1042 = vld [vmem:[%s15 + $0x78] sm:$0xff]
    %v1043 = vld [vmem:[%s15 + $0x80] sm:$0xff]
    %v1044 = vld [vmem:[%s15 + $0x88] sm:$0xff]
    %v1045 = vld [vmem:[%s15 + $0x90] sm:$0xff]
    %v1046 = vld [vmem:[%s15 + $0x98] sm:$0xff]
    %v1047 = vld [vmem:[%s15 + $0xa0] sm:$0xff]
    %v1048 = vld [vmem:[%s15 + $0xa8] sm:$0xff]
    %v1049 = vld [vmem:[%s15 + $0xb0] sm:$0xff]
    %v1050 = vld [vmem:[%s15 + $0xb8] sm:$0xff]
    %v1051 = vld [vmem:[%s15 + $0xc0] sm:$0xff]
    %v1052 = vld [vmem:[%s15 + $0xc8] sm:$0xff]
    %v1053 = vld [vmem:[%s15 + $0xd0] sm:$0xff]
    %v1054 = vld [vmem:[%s15 + $0xd8] sm:$0xff]
    %v1055 = vld [vmem:[%s15 + $0xe0] sm:$0xff]
    %v1056 = vld [vmem:[%s15 + $0xe8] sm:$0xff]
    %v1057 = vld [vmem:[%s15 + $0xf0] sm:$0xff]
    %v1058 = vld [vmem:[%s15 + $0xf8] sm:$0xff]
    %v1059 = vld [vmem:[%s16] sm:$0x1]
    %v1061 = vlaneseq
    %v1062 = vshrl.u32 %v1061, 7
    %v1063 = vsub.s32 0, %v1062
    %v1064 = vrot.slane %v1059, %v1063
    %1066 = vmatprep.subr.mxu0 0.0
    %1067 = vmatpush1.msra.mxu0 %v1027
    %1068 = vmatprep.subr.mxu0 0.0
    %1069 = vmatpush1.msra.mxu0 %v1028
    %1070 = vmatprep.subr.mxu0 0.0
    %1071 = vmatpush1.msra.mxu0 %v1029
    %1072 = vmatprep.subr.mxu0 0.0
    %1073 = vmatpush1.msra.mxu0 %v1030
    %1074 = vmatprep.subr.mxu0 0.0
    %1075 = vmatpush1.msra.mxu0 %v1031
    %1076 = vmatprep.subr.mxu0 0.0
    %1077 = vmatpush1.msra.mxu0 %v1032
    %1078 = vmatprep.subr.mxu0 0.0
    %1079 = vmatpush1.msra.mxu0 %v1033
    %1080 = vmatprep.subr.mxu0 0.0
    %1081 = vmatpush1.msra.mxu0 %v1034
    %1082 = vmatprep.subr.mxu0 0.0
    %1083 = vmatpush1.msra.mxu0 %v1035
    %1084 = vmatprep.subr.mxu0 0.0
    %1085 = vmatpush1.msra.mxu0 %v1036
    %1086 = vmatprep.subr.mxu0 0.0
    %1087 = vmatpush1.msra.mxu0 %v1037
    %1088 = vmatprep.subr.mxu0 0.0
    %1089 = vmatpush1.msra.mxu0 %v1038
    %1090 = vmatprep.subr.mxu0 0.0
    %1091 = vmatpush1.msra.mxu0 %v1039
    %1092 = vmatprep.subr.mxu0 0.0
    %1093 = vmatpush1.msra.mxu0 %v1040
    %1094 = vmatprep.subr.mxu0 0.0
    %1095 = vmatpush1.msra.mxu0 %v1041
    %1096 = vmatprep.subr.mxu0 0.0
    %1097 = vmatpush1.msra.mxu0 %v1042
    %1098 = vmatprep.subr.mxu0 0.0
    %1099 = vmatpush1.msra.mxu0 %v1043
    %1100 = vmatprep.subr.mxu0 0.0
    %1101 = vmatpush1.msra.mxu0 %v1044
    %1102 = vmatprep.subr.mxu0 0.0
    %1103 = vmatpush1.msra.mxu0 %v1045
    %1104 = vmatprep.subr.mxu0 0.0
    %1105 = vmatpush1.msra.mxu0 %v1046
    %1106 = vmatprep.subr.mxu0 0.0
    %1107 = vmatpush1.msra.mxu0 %v1047
    %1108 = vmatprep.subr.mxu0 0.0
    %1109 = vmatpush1.msra.mxu0 %v1048
    %1110 = vmatprep.subr.mxu0 0.0
    %1111 = vmatpush1.msra.mxu0 %v1049
    %1112 = vmatprep.subr.mxu0 0.0
    %1113 = vmatpush1.msra.mxu0 %v1050
    %1114 = vmatprep.subr.mxu0 0.0
    %1115 = vmatpush1.msra.mxu0 %v1051
    %1116 = vmatprep.subr.mxu0 0.0
    %1117 = vmatpush1.msra.mxu0 %v1052
    %1118 = vmatprep.subr.mxu0 0.0
    %1119 = vmatpush1.msra.mxu0 %v1053
    %1120 = vmatprep.subr.mxu0 0.0
    %1121 = vmatpush1.msra.mxu0 %v1054
    %1122 = vmatprep.subr.mxu0 0.0
    %1123 = vmatpush1.msra.mxu0 %v1055
    %1124 = vmatprep.subr.mxu0 0.0
    %1125 = vmatpush1.msra.mxu0 %v1056
    %1126 = vmatprep.subr.mxu0 0.0
    %1127 = vmatpush1.msra.mxu0 %v1057
    %1128 = vmatprep.subr.mxu0 0.0
    %1129 = vmatpush1.msra.mxu0 %v1058
    %1130 = vmatprep.mubr.f32.mxu0 %v1026
    %1131 = vmatmul.mubr.f32.gmra.mrb[0].mxu0 %v1025
    %v1132 = vpop.f32.mrb[0].mxu0
    %v1133 = vadd.f32 %v1064, %v1132
    %v1134 = vpop.f32.mrb[0].mxu0
    %1135 = vdwg.mxu0
    %1136 = vst.msk [vmem:[#allocation4] sm:$0x3] %vm387, %v1133
    // Predicated region
    $region70: #{forward.11} parent=1 // pred_check
      _
    $region71: #{forward.11} parent=1 // pred_check_branch
      %1138 = sbr.rel (0) target = $region73
    $region72: #{forward.11} parent=1 // pred_region
      %s1140 = ssub.s32 32, 32
      %1141 = vsyncadd [#allocation3], %s1140
      %s1143 = sshll.u32 [#allocation2], 4
      %s1144 = int_to_ptr.vmem [resolvable:$true] %s1143
      %1146 = dma.vmem_to_hbm [thread:$0]  %s1144, 32, %s17, [#allocation3]
    $region73: #{forward.11} parent=1 // pred_fallthru
      _
    // Predicated region
    $region74: #{forward.11} parent=1 // pred_check
      _
    $region75: #{forward.11} parent=1 // pred_check_branch
      %1148 = sbr.rel (0) target = $region77
    $region76: #{forward.11} parent=1 // pred_region
      %s1150 = ssub.s32 32, 32
      %1151 = vsyncadd [#allocation5], %s1150
      %s1153 = sshll.u32 [#allocation4], 4
      %s1154 = int_to_ptr.vmem [resolvable:$true] %s1153
      %1156 = dma.vmem_to_hbm [thread:$0]  %s1154, 32, %s18, [#allocation5]
    $region77: #{forward.11} parent=1 // pred_fallthru
      _
    // Predicated region
    $region78: #{forward.11} parent=1 // pred_check
      _
    $region79: #{forward.11} parent=1 // pred_check_branch
      %1158 = sbr.rel (0) target = $region81
    $region80: #{forward.11} parent=1 // pred_region
      %1159 = dma.done [#allocation3], 32
    $region81: #{forward.11} parent=1 // pred_fallthru
      _
    // Predicated region
    $region82: #{forward.11} parent=1 // pred_check
      _
    $region83: #{forward.11} parent=1 // pred_check_branch
      %1161 = sbr.rel (0) target = $region85
    $region84: #{forward.11} parent=1 // pred_region
      %1162 = dma.done [#allocation5], 32
    $region85: #{forward.11} parent=1 // pred_fallthru
      _
    %1163 = vsyncpa [#allocation3], 1
    %1164 = vsyncpa [#allocation5], 1

</llo_original>
